<compile_context>
chip_gen: v5e
topology: v5e:2x2
jax: 0.10.0
libtpu: 0.0.40
codegen_flags: <defaults>
</compile_context>

<pallas_src>
import functools

import jax
import jax.numpy as jnp
from jax.experimental import pallas as pl
from jax.experimental.pallas import tpu as pltpu

LANES = 128  # channel lanes per pixel row (Cin/Cout padded up to this -> lane-dense)

# (cout, kernel_size, stride) for the 10 synthetic backbone blocks
LAYER_CFG = [
    (8, 3, 2), (16, 3, 2), (16, 3, 1), (16, 3, 1), (32, 3, 2),
    (32, 3, 1), (32, 3, 1), (64, 3, 2), (64, 3, 1), (64, 1, 1),
]


def _round8(x):
    return ((x + 7) // 8) * 8


def _layer_metas(cfg, cin0, h0, w0):
    """Static per-layer geometry (all Python ints, baked into the kernel trace)."""
    metas = []
    widx = 0
    h, w, cin = h0, w0, cin0
    for li, (cout, k, s) in enumerate(cfg):
        pad = k // 2
        h_out = (h + 2 * pad - k) // s + 1
        w_out = (w + 2 * pad - k) // s + 1
        pad_out = (cfg[li + 1][1] // 2) if li + 1 < len(cfg) else 0
        hp_in, wp_in = h + 2 * pad, w + 2 * pad
        patched = (li == 0)  # layer 0 consumes wrapper-built im2col patches
        if patched:
            assert k * k * cin <= LANES, "layer-0 im2col patch must fit in 128 lanes"
            n_blocks = 1
            tap_offsets = (0,)
            tap_stride = 1
            row_stride = w_out          # valid rows are contiguous per output row
            t_rows = h_out * w_out      # no junk rows
        else:
            n_blocks = k * k
            tap_offsets = tuple(ki * wp_in + kj for ki in range(k) for kj in range(k))
            tap_stride = s
            row_stride = wp_in
            t_rows = (h_out - 1) * wp_in + w_out
        metas.append(dict(
            li=li, cin=cin, cout=cout, k=k, s=s, patched=patched,
            widx0=widx, n_blocks=n_blocks, tap_offsets=tap_offsets,
            tap_stride=tap_stride, t_rows=t_rows, row_stride=row_stride,
            h_out=h_out, w_out=w_out, pad_out=pad_out,
            hp_out=h_out + 2 * pad_out, wp_out=w_out + 2 * pad_out))
        widx += n_blocks
        h, w, cin = h_out, w_out, cout
    return metas, widx


def _conv_silu_layer(in_ref, out_ref, w_ref, b_ref, m, zero_rows):
    """One Conv2d + bias + SiLU for a single image, fully in VMEM.

    Input layout : (rows, 128) lane-dense pixel rows (padded ring already zero).
    Output layout: (rows, 128) padded for the NEXT layer; only the rows the next layer
    reads are zeroed/written here.
    """
    li = m["li"]
    h_out, w_out = m["h_out"], m["w_out"]
    t_rows, row_stride = m["t_rows"], m["row_stride"]
    pad_out, wp_out = m["pad_out"], m["wp_out"]
    widx0, s = m["widx0"], m["tap_stride"]

    # Zero only the rows the next layer will actually read (pad ring + interior).
    out_ref[pl.ds(0, zero_rows), :] = jnp.zeros((zero_rows, LANES), out_ref.dtype)

    acc = jnp.zeros((t_rows, LANES), jnp.float32)
    for t, off in enumerate(m["tap_offsets"]):
        if s == 1:
            xs = in_ref[pl.ds(off, t_rows), :]
        else:
            xs = in_ref[pl.ds(off, t_rows, stride=s), :]
        acc = acc + jnp.dot(xs.astype(jnp.bfloat16), w_ref[widx0 + t],
                            preferred_element_type=jnp.float32)

    bias = b_ref[pl.ds(li, 1), :]  # (1, 128) f32
    # Bias + SiLU only on valid rows; junk strided rows are never activated or stored.
    for i in range(h_out):
        rows = acc[i * row_stride:i * row_stride + w_out, :] + bias
        rows = rows * jax.nn.sigmoid(rows)  # SiLU in f32 (EUP)
        dst = (i + pad_out) * wp_out + pad_out
        out_ref[pl.ds(dst, w_out), :] = rows.astype(out_ref.dtype)


def _backbone_kernel(x_ref, w_ref, b_ref, o_ref, buf_a, buf_b, *, metas):
    """All 10 conv+SiLU layers for ONE image; activations ping-pong between VMEM bufs."""
    bufs = (buf_a, buf_b)
    last = len(metas) - 1
    cur_in = x_ref
    for li, m in enumerate(metas):
        cur_out = o_ref if li == last else bufs[li % 2]
        zero_rows = min(cur_out.shape[0], _round8(m["hp_out"] * m["wp_out"]))
        _conv_silu_layer(cur_in, cur_out, w_ref, b_ref, m, zero_rows)
        cur_in = cur_out


def pack_params(params, metas):
    """Pack conv weights/biases into lane-padded bf16/f32 tables resident in VMEM."""
    blocks, b_rows = [], []
    for m, (w, b, _s) in zip(metas, params):
        k, _, cin, cout = w.shape
        if m["patched"]:
            blk = jnp.zeros((1, LANES, LANES), jnp.float32)
            blk = blk.at[0, :k * k * cin, :cout].set(w.reshape(k * k * cin, cout))
        else:
            blk = jnp.zeros((k * k, LANES, LANES), jnp.float32)
            blk = blk.at[:, :cin, :cout].set(w.reshape(k * k, cin, cout))
        blocks.append(blk)
        b_rows.append(jnp.pad(b, (0, LANES - cout)))
    w_packed = jnp.concatenate(blocks, axis=0).astype(jnp.bfloat16)   # (blocks, 128, 128)
    b_packed = jnp.stack(b_rows, axis=0).astype(jnp.float32)          # (layers, 128)
    b_packed = jnp.pad(b_packed, ((0, -b_packed.shape[0] % 8), (0, 0)))
    return w_packed, b_packed


def _prep_patched_input(x_nhwc, k, s):
    """Wrapper-side im2col for layer 0 only (layout plumbing on a tiny tensor)."""
    n, h, w, c = x_nhwc.shape
    pad = k // 2
    h_out = (h + 2 * pad - k) // s + 1
    w_out = (w + 2 * pad - k) // s + 1
    xp = jnp.pad(x_nhwc, ((0, 0), (pad, pad), (pad, pad), (0, 0)))
    taps = [xp[:, ki:ki + s * h_out:s, kj:kj + s * w_out:s, :]
            for ki in range(k) for kj in range(k)]
    patches = jnp.concatenate(taps, axis=-1)                 # (N, h_out, w_out, k*k*c)
    rows = patches.reshape(n, h_out * w_out, k * k * c)
    in_rows = _round8(h_out * w_out)                         # per-image block rows (mult of 8)
    rows = jnp.pad(rows, ((0, 0), (0, in_rows - h_out * w_out), (0, LANES - k * k * c)))
    return rows.reshape(n * in_rows, LANES).astype(jnp.bfloat16), in_rows


def cam_wrapper_forward(x_nchw, params):
    """Mirrors CAMWrapper.forward: run the (synthetic) backbone. NCHW in, NCHW out."""
    x = jnp.transpose(x_nchw, (0, 2, 3, 1))  # NCHW -> NHWC
    n, h, w, cin = x.shape
    cfg = [(int(wt.shape[3]), int(wt.shape[0]), s) for (wt, _b, s) in params]
    metas, _ = _layer_metas(cfg, cin, h, w)

    x2d, in_rows = _prep_patched_input(x, metas[0]["k"], metas[0]["s"])
    w_packed, b_packed = pack_params(params, metas)

    last = metas[-1]
    hw_last = last["h_out"] * last["w_out"]
    out_rows = _round8(hw_last)
    buf_rows = max(_round8(m["hp_out"] * m["wp_out"]) for m in metas[:-1])

    flops = sum(2 * n * m["h_out"] * m["w_out"] * m["k"] * m["k"] * m["cin"] * m["cout"]
                for m in metas)
    trans = sum(n * m["h_out"] * m["w_out"] * m["cout"] for m in metas)
    bytes_accessed = (x2d.size * 2 + w_packed.size * 2 + b_packed.size * 4
                      + n * out_rows * LANES * 4)

    kernel = functools.partial(_backbone_kernel, metas=metas)

    o2d = pl.pallas_call(
        kernel,
        out_shape=jax.ShapeDtypeStruct((n * out_rows, LANES), jnp.float32),
        grid_spec=pltpu.PrefetchScalarGridSpec(
            num_scalar_prefetch=0,
            grid=(n,),  # one image per grid step: megacore sharding + DMA/compute overlap
            in_specs=[
                pl.BlockSpec((in_rows, LANES), lambda b: (b, 0)),    # per-image patch rows
                pl.BlockSpec(w_packed.shape, lambda b: (0, 0, 0)),   # weights fetched once
                pl.BlockSpec(b_packed.shape, lambda b: (0, 0)),      # biases fetched once
            ],
            out_specs=pl.BlockSpec((out_rows, LANES), lambda b: (b, 0)),
            scratch_shapes=[pltpu.VMEM((buf_rows, LANES), jnp.float32),
                            pltpu.VMEM((buf_rows, LANES), jnp.float32)],
        ),
        compiler_params=pltpu.CompilerParams(dimension_semantics=("parallel",)),
        cost_estimate=pl.CostEstimate(flops=flops, transcendentals=trans,
                                      bytes_accessed=bytes_accessed),
    )(x2d, w_packed, b_packed)

    out = o2d.reshape(n, out_rows, LANES)[:, :hw_last, :last["cout"]]
    out = out.reshape(n, last["h_out"], last["w_out"], last["cout"])
    return jnp.transpose(out, (0, 3, 1, 2))  # NHWC -> NCHW


def init_backbone_params(key, cin):
    params = []
    for cout, k, s in LAYER_CFG:
        key, kw, kb = jax.random.split(key, 3)
        w = jax.random.normal(kw, (k, k, cin, cout), jnp.float32)
        w = w * (2.0 / (k * k * cin)) ** 0.5
        b = jax.random.normal(kb, (cout,), jnp.float32) * 0.01
        params.append((w, b, s))
        cin = cout
    return params


def reference_forward(x_nchw, params):
    """Pure-JAX reference (same bf16 operand / f32 accumulate convention)."""
    x = jnp.transpose(x_nchw, (0, 2, 3, 1)).astype(jnp.float32)
    for w, b, s in params:
        k = w.shape[0]
        pad = k // 2
        y = jax.lax.conv_general_dilated(
            x.astype(jnp.bfloat16), w.astype(jnp.bfloat16),
            window_strides=(s, s), padding=((pad, pad), (pad, pad)),
            dimension_numbers=("NHWC", "HWIO", "NHWC"),
            preferred_element_type=jnp.float32)
        y = y + b
        x = y * jax.nn.sigmoid(y)
    return jnp.transpose(x, (0, 3, 1, 2))


if __name__ == "__main__":
    key = jax.random.PRNGKey(0)
    kx, kp = jax.random.split(key)

    # PyTorch-style NCHW input: batch=2, channels=4, 16x16 spatial.
    x = jax.random.normal(kx, (2, 4, 16, 16), jnp.float32)
    params = init_backbone_params(kp, cin=4)

    fwd = jax.jit(functools.partial(cam_wrapper_forward, params=params))
    y = fwd(x)
    jax.block_until_ready(y)

    assert y.shape == (2, 64, 1, 1), y.shape
    assert y.dtype == jnp.float32

    y_ref = jax.jit(functools.partial(reference_forward, params=params))(x)
    jax.block_until_ready(y_ref)
    err = float(jnp.max(jnp.abs(y - y_ref)))
    scale = float(jnp.max(jnp.abs(y_ref)))
    assert err <= 5e-2 * scale + 1e-3, (err, scale)

    print("KERNEL_OK")
</pallas_src>

<mosaic_0001>
module attributes {stable_mosaic.version = 11 : i64} {
  func.func @_backbone_kernel(%arg0: i32, %arg1: memref<64x128xbf16, #tpu.memory_space<vmem>>, %arg2: memref<74x128x128xbf16, #tpu.memory_space<vmem>>, %arg3: memref<16x128xf32, #tpu.memory_space<vmem>>, %arg4: memref<8x128xf32, #tpu.memory_space<vmem>>, %arg5: memref<104x128xf32, #tpu.memory_space<vmem>>, %arg6: memref<104x128xf32, #tpu.memory_space<vmem>>) attributes {dimension_semantics = [#tpu.dimension_semantics<parallel>], iteration_bounds = array<i64: 2>, scalar_prefetch = 0 : i64, scratch_operands = 2 : i64, tpu.core_type = #tpu.core_type<tc>, window_params = [{transform_indices = @transform_0, window_bounds = array<i64: 64, 128>}, {pipeline_mode = #tpu.pipeline_mode<synchronous>, transform_indices = @transform_1, window_bounds = array<i64: 74, 128, 128>}, {pipeline_mode = #tpu.pipeline_mode<synchronous>, transform_indices = @transform_2, window_bounds = array<i64: 16, 128>}, {transform_indices = @transform_3, window_bounds = array<i64: 8, 128>}]} {
    %cst = arith.constant 0.000000e+00 : f32
    %0 = vector.broadcast %cst : f32 to vector<104x128xf32>
    %c0 = arith.constant 0 : index
    %c0_0 = arith.constant 0 : index
    %1 = vector.load %arg5[%c0, %c0_0] : memref<104x128xf32, #tpu.memory_space<vmem>>, vector<104x128xf32>
    tpu.vector_store %arg5[%c0, %c0_0], %0 {strides = array<i32>} : memref<104x128xf32, #tpu.memory_space<vmem>>, vector<104x128xf32>,
    %cst_1 = arith.constant 0.000000e+00 : f32
    %2 = vector.broadcast %cst_1 : f32 to vector<64x128xf32>
    %c0_2 = arith.constant 0 : index
    %c0_3 = arith.constant 0 : index
    %3 = vector.load %arg1[%c0_2, %c0_3] : memref<64x128xbf16, #tpu.memory_space<vmem>>, vector<64x128xbf16>
    %c0_4 = arith.constant 0 : index
    %c0_5 = arith.constant 0 : index
    %c0_6 = arith.constant 0 : index
    %4 = vector.load %arg2[%c0_4, %c0_5, %c0_6] : memref<74x128x128xbf16, #tpu.memory_space<vmem>>, vector<1x128x128xbf16>
    %5 = vector.shape_cast %4 : vector<1x128x128xbf16> to vector<128x128xbf16>
    %cst_7 = arith.constant dense<0.000000e+00> : vector<64x128xf32>
    %6 = tpu.matmul %3, %5, %cst_7 {dimension_numbers = #tpu.dot_dimension_numbers<[1], [0], [0], [1], [0, 0, 1, 1], [], []>} : vector<64x128xbf16>, vector<128x128xbf16>, vector<64x128xf32> -> vector<64x128xf32>
    %7 = arith.addf %2, %6 : vector<64x128xf32>
    %c0_8 = arith.constant 0 : index
    %c0_9 = arith.constant 0 : index
    %8 = vector.load %arg3[%c0_8, %c0_9] : memref<16x128xf32, #tpu.memory_space<vmem>>, vector<1x128xf32>
    %9 = vector.extract_strided_slice %7 {offsets = [0, 0], sizes = [8, 128], strides = [1, 1]} : vector<64x128xf32> to vector<8x128xf32>
    %10 = vector.broadcast %8 : vector<1x128xf32> to vector<8x128xf32>
    %11 = arith.addf %9, %10 : vector<8x128xf32>
    %12 = arith.negf %11 : vector<8x128xf32>
    %13 = math.exp %12 : vector<8x128xf32>
    %cst_10 = arith.constant 1.000000e+00 : f32
    %14 = vector.broadcast %cst_10 : f32 to vector<8x128xf32>
    %15 = arith.addf %14, %13 : vector<8x128xf32>
    %16 = arith.divf %14, %15 : vector<8x128xf32>
    %17 = arith.mulf %11, %16 : vector<8x128xf32>
    %c11 = arith.constant 11 : index
    %c0_11 = arith.constant 0 : index
    %18 = vector.load %arg5[%c11, %c0_11] : memref<104x128xf32, #tpu.memory_space<vmem>>, vector<8x128xf32>
    tpu.vector_store %arg5[%c11, %c0_11], %17 {strides = array<i32>} : memref<104x128xf32, #tpu.memory_space<vmem>>, vector<8x128xf32>,
    %19 = vector.extract_strided_slice %7 {offsets = [8, 0], sizes = [8, 128], strides = [1, 1]} : vector<64x128xf32> to vector<8x128xf32>
    %20 = vector.broadcast %8 : vector<1x128xf32> to vector<8x128xf32>
    %21 = arith.addf %19, %20 : vector<8x128xf32>
    %22 = arith.negf %21 : vector<8x128xf32>
    %23 = math.exp %22 : vector<8x128xf32>
    %cst_12 = arith.constant 1.000000e+00 : f32
    %24 = vector.broadcast %cst_12 : f32 to vector<8x128xf32>
    %25 = arith.addf %24, %23 : vector<8x128xf32>
    %26 = arith.divf %24, %25 : vector<8x128xf32>
    %27 = arith.mulf %21, %26 : vector<8x128xf32>
    %c21 = arith.constant 21 : index
    %c0_13 = arith.constant 0 : index
    %28 = vector.load %arg5[%c21, %c0_13] : memref<104x128xf32, #tpu.memory_space<vmem>>, vector<8x128xf32>
    tpu.vector_store %arg5[%c21, %c0_13], %27 {strides = array<i32>} : memref<104x128xf32, #tpu.memory_space<vmem>>, vector<8x128xf32>,
    %29 = vector.extract_strided_slice %7 {offsets = [16, 0], sizes = [8, 128], strides = [1, 1]} : vector<64x128xf32> to vector<8x128xf32>
    %30 = vector.broadcast %8 : vector<1x128xf32> to vector<8x128xf32>
    %31 = arith.addf %29, %30 : vector<8x128xf32>
    %32 = arith.negf %31 : vector<8x128xf32>
    %33 = math.exp %32 : vector<8x128xf32>
    %cst_14 = arith.constant 1.000000e+00 : f32
    %34 = vector.broadcast %cst_14 : f32 to vector<8x128xf32>
    %35 = arith.addf %34, %33 : vector<8x128xf32>
    %36 = arith.divf %34, %35 : vector<8x128xf32>
    %37 = arith.mulf %31, %36 : vector<8x128xf32>
    %c31 = arith.constant 31 : index
    %c0_15 = arith.constant 0 : index
    %38 = vector.load %arg5[%c31, %c0_15] : memref<104x128xf32, #tpu.memory_space<vmem>>, vector<8x128xf32>
    tpu.vector_store %arg5[%c31, %c0_15], %37 {strides = array<i32>} : memref<104x128xf32, #tpu.memory_space<vmem>>, vector<8x128xf32>,
    %39 = vector.extract_strided_slice %7 {offsets = [24, 0], sizes = [8, 128], strides = [1, 1]} : vector<64x128xf32> to vector<8x128xf32>
    %40 = vector.broadcast %8 : vector<1x128xf32> to vector<8x128xf32>
    %41 = arith.addf %39, %40 : vector<8x128xf32>
    %42 = arith.negf %41 : vector<8x128xf32>
    %43 = math.exp %42 : vector<8x128xf32>
    %cst_16 = arith.constant 1.000000e+00 : f32
    %44 = vector.broadcast %cst_16 : f32 to vector<8x128xf32>
    %45 = arith.addf %44, %43 : vector<8x128xf32>
    %46 = arith.divf %44, %45 : vector<8x128xf32>
    %47 = arith.mulf %41, %46 : vector<8x128xf32>
    %c41 = arith.constant 41 : index
    %c0_17 = arith.constant 0 : index
    %48 = vector.load %arg5[%c41, %c0_17] : memref<104x128xf32, #tpu.memory_space<vmem>>, vector<8x128xf32>
    tpu.vector_store %arg5[%c41, %c0_17], %47 {strides = array<i32>} : memref<104x128xf32, #tpu.memory_space<vmem>>, vector<8x128xf32>,
    %49 = vector.extract_strided_slice %7 {offsets = [32, 0], sizes = [8, 128], strides = [1, 1]} : vector<64x128xf32> to vector<8x128xf32>
    %50 = vector.broadcast %8 : vector<1x128xf32> to vector<8x128xf32>
    %51 = arith.addf %49, %50 : vector<8x128xf32>
    %52 = arith.negf %51 : vector<8x128xf32>
    %53 = math.exp %52 : vector<8x128xf32>
    %cst_18 = arith.constant 1.000000e+00 : f32
    %54 = vector.broadcast %cst_18 : f32 to vector<8x128xf32>
    %55 = arith.addf %54, %53 : vector<8x128xf32>
    %56 = arith.divf %54, %55 : vector<8x128xf32>
    %57 = arith.mulf %51, %56 : vector<8x128xf32>
    %c51 = arith.constant 51 : index
    %c0_19 = arith.constant 0 : index
    %58 = vector.load %arg5[%c51, %c0_19] : memref<104x128xf32, #tpu.memory_space<vmem>>, vector<8x128xf32>
    tpu.vector_store %arg5[%c51, %c0_19], %57 {strides = array<i32>} : memref<104x128xf32, #tpu.memory_space<vmem>>, vector<8x128xf32>,
    %59 = vector.extract_strided_slice %7 {offsets = [40, 0], sizes = [8, 128], strides = [1, 1]} : vector<64x128xf32> to vector<8x128xf32>
    %60 = vector.broadcast %8 : vector<1x128xf32> to vector<8x128xf32>
    %61 = arith.addf %59, %60 : vector<8x128xf32>
    %62 = arith.negf %61 : vector<8x128xf32>
    %63 = math.exp %62 : vector<8x128xf32>
    %cst_20 = arith.constant 1.000000e+00 : f32
    %64 = vector.broadcast %cst_20 : f32 to vector<8x128xf32>
    %65 = arith.addf %64, %63 : vector<8x128xf32>
    %66 = arith.divf %64, %65 : vector<8x128xf32>
    %67 = arith.mulf %61, %66 : vector<8x128xf32>
    %c61 = arith.constant 61 : index
    %c0_21 = arith.constant 0 : index
    %68 = vector.load %arg5[%c61, %c0_21] : memref<104x128xf32, #tpu.memory_space<vmem>>, vector<8x128xf32>
    tpu.vector_store %arg5[%c61, %c0_21], %67 {strides = array<i32>} : memref<104x128xf32, #tpu.memory_space<vmem>>, vector<8x128xf32>,
    %69 = vector.extract_strided_slice %7 {offsets = [48, 0], sizes = [8, 128], strides = [1, 1]} : vector<64x128xf32> to vector<8x128xf32>
    %70 = vector.broadcast %8 : vector<1x128xf32> to vector<8x128xf32>
    %71 = arith.addf %69, %70 : vector<8x128xf32>
    %72 = arith.negf %71 : vector<8x128xf32>
    %73 = math.exp %72 : vector<8x128xf32>
    %cst_22 = arith.constant 1.000000e+00 : f32
    %74 = vector.broadcast %cst_22 : f32 to vector<8x128xf32>
    %75 = arith.addf %74, %73 : vector<8x128xf32>
    %76 = arith.divf %74, %75 : vector<8x128xf32>
    %77 = arith.mulf %71, %76 : vector<8x128xf32>
    %c71 = arith.constant 71 : index
    %c0_23 = arith.constant 0 : index
    %78 = vector.load %arg5[%c71, %c0_23] : memref<104x128xf32, #tpu.memory_space<vmem>>, vector<8x128xf32>
    tpu.vector_store %arg5[%c71, %c0_23], %77 {strides = array<i32>} : memref<104x128xf32, #tpu.memory_space<vmem>>, vector<8x128xf32>,
    %79 = vector.extract_strided_slice %7 {offsets = [56, 0], sizes = [8, 128], strides = [1, 1]} : vector<64x128xf32> to vector<8x128xf32>
    %80 = vector.broadcast %8 : vector<1x128xf32> to vector<8x128xf32>
    %81 = arith.addf %79, %80 : vector<8x128xf32>
    %82 = arith.negf %81 : vector<8x128xf32>
    %83 = math.exp %82 : vector<8x128xf32>
    %cst_24 = arith.constant 1.000000e+00 : f32
    %84 = vector.broadcast %cst_24 : f32 to vector<8x128xf32>
    %85 = arith.addf %84, %83 : vector<8x128xf32>
    %86 = arith.divf %84, %85 : vector<8x128xf32>
    %87 = arith.mulf %81, %86 : vector<8x128xf32>
    %c81 = arith.constant 81 : index
    %c0_25 = arith.constant 0 : index
    %88 = vector.load %arg5[%c81, %c0_25] : memref<104x128xf32, #tpu.memory_space<vmem>>, vector<8x128xf32>
    tpu.vector_store %arg5[%c81, %c0_25], %87 {strides = array<i32>} : memref<104x128xf32, #tpu.memory_space<vmem>>, vector<8x128xf32>,
    %cst_26 = arith.constant 0.000000e+00 : f32
    %89 = vector.broadcast %cst_26 : f32 to vector<40x128xf32>
    %c0_27 = arith.constant 0 : index
    %c0_28 = arith.constant 0 : index
    %90 = vector.load %arg6[%c0_27, %c0_28] : memref<104x128xf32, #tpu.memory_space<vmem>>, vector<40x128xf32>
    tpu.vector_store %arg6[%c0_27, %c0_28], %89 {strides = array<i32>} : memref<104x128xf32, #tpu.memory_space<vmem>>, vector<40x128xf32>,
    %cst_29 = arith.constant 0.000000e+00 : f32
    %91 = vector.broadcast %cst_29 : f32 to vector<34x128xf32>
    %c0_30 = arith.constant 0 : index
    %c0_31 = arith.constant 0 : index
    %92 = tpu.strided_load %arg5[%c0_30, %c0_31] {strides = array<i32: 2, 1>} : memref<104x128xf32, #tpu.memory_space<vmem>>, vector<34x128xf32>
    %93 = arith.truncf %92 : vector<34x128xf32> to vector<34x128xbf16>
    %c1 = arith.constant 1 : index
    %c0_32 = arith.constant 0 : index
    %c0_33 = arith.constant 0 : index
    %94 = vector.load %arg2[%c1, %c0_32, %c0_33] : memref<74x128x128xbf16, #tpu.memory_space<vmem>>, vector<1x128x128xbf16>
    %95 = vector.shape_cast %94 : vector<1x128x128xbf16> to vector<128x128xbf16>
    %cst_34 = arith.constant dense<0.000000e+00> : vector<34x128xf32>
    %96 = tpu.matmul %93, %95, %cst_34 {dimension_numbers = #tpu.dot_dimension_numbers<[1], [0], [0], [1], [0, 0, 1, 1], [], []>} : vector<34x128xbf16>, vector<128x128xbf16>, vector<34x128xf32> -> vector<34x128xf32>
    %97 = arith.addf %91, %96 : vector<34x128xf32>
    %c1_35 = arith.constant 1 : index
    %c0_36 = arith.constant 0 : index
    %98 = tpu.strided_load %arg5[%c1_35, %c0_36] {strides = array<i32: 2, 1>} : memref<104x128xf32, #tpu.memory_space<vmem>>, vector<34x128xf32>
    %99 = arith.truncf %98 : vector<34x128xf32> to vector<34x128xbf16>
    %c2 = arith.constant 2 : index
    %c0_37 = arith.constant 0 : index
    %c0_38 = arith.constant 0 : index
    %100 = vector.load %arg2[%c2, %c0_37, %c0_38] : memref<74x128x128xbf16, #tpu.memory_space<vmem>>, vector<1x128x128xbf16>
    %101 = vector.shape_cast %100 : vector<1x128x128xbf16> to vector<128x128xbf16>
    %cst_39 = arith.constant dense<0.000000e+00> : vector<34x128xf32>
    %102 = tpu.matmul %99, %101, %cst_39 {dimension_numbers = #tpu.dot_dimension_numbers<[1], [0], [0], [1], [0, 0, 1, 1], [], []>} : vector<34x128xbf16>, vector<128x128xbf16>, vector<34x128xf32> -> vector<34x128xf32>
    %103 = arith.addf %97, %102 : vector<34x128xf32>
    %c2_40 = arith.constant 2 : index
    %c0_41 = arith.constant 0 : index
    %104 = tpu.strided_load %arg5[%c2_40, %c0_41] {strides = array<i32: 2, 1>} : memref<104x128xf32, #tpu.memory_space<vmem>>, vector<34x128xf32>
    %105 = arith.truncf %104 : vector<34x128xf32> to vector<34x128xbf16>
    %c3 = arith.constant 3 : index
    %c0_42 = arith.constant 0 : index
    %c0_43 = arith.constant 0 : index
    %106 = vector.load %arg2[%c3, %c0_42, %c0_43] : memref<74x128x128xbf16, #tpu.memory_space<vmem>>, vector<1x128x128xbf16>
    %107 = vector.shape_cast %106 : vector<1x128x128xbf16> to vector<128x128xbf16>
    %cst_44 = arith.constant dense<0.000000e+00> : vector<34x128xf32>
    %108 = tpu.matmul %105, %107, %cst_44 {dimension_numbers = #tpu.dot_dimension_numbers<[1], [0], [0], [1], [0, 0, 1, 1], [], []>} : vector<34x128xbf16>, vector<128x128xbf16>, vector<34x128xf32> -> vector<34x128xf32>
    %109 = arith.addf %103, %108 : vector<34x128xf32>
    %c10 = arith.constant 10 : index
    %c0_45 = arith.constant 0 : index
    %110 = tpu.strided_load %arg5[%c10, %c0_45] {strides = array<i32: 2, 1>} : memref<104x128xf32, #tpu.memory_space<vmem>>, vector<34x128xf32>
    %111 = arith.truncf %110 : vector<34x128xf32> to vector<34x128xbf16>
    %c4 = arith.constant 4 : index
    %c0_46 = arith.constant 0 : index
    %c0_47 = arith.constant 0 : index
    %112 = vector.load %arg2[%c4, %c0_46, %c0_47] : memref<74x128x128xbf16, #tpu.memory_space<vmem>>, vector<1x128x128xbf16>
    %113 = vector.shape_cast %112 : vector<1x128x128xbf16> to vector<128x128xbf16>
    %cst_48 = arith.constant dense<0.000000e+00> : vector<34x128xf32>
    %114 = tpu.matmul %111, %113, %cst_48 {dimension_numbers = #tpu.dot_dimension_numbers<[1], [0], [0], [1], [0, 0, 1, 1], [], []>} : vector<34x128xbf16>, vector<128x128xbf16>, vector<34x128xf32> -> vector<34x128xf32>
    %115 = arith.addf %109, %114 : vector<34x128xf32>
    %c11_49 = arith.constant 11 : index
    %c0_50 = arith.constant 0 : index
    %116 = tpu.strided_load %arg5[%c11_49, %c0_50] {strides = array<i32: 2, 1>} : memref<104x128xf32, #tpu.memory_space<vmem>>, vector<34x128xf32>
    %117 = arith.truncf %116 : vector<34x128xf32> to vector<34x128xbf16>
    %c5 = arith.constant 5 : index
    %c0_51 = arith.constant 0 : index
    %c0_52 = arith.constant 0 : index
    %118 = vector.load %arg2[%c5, %c0_51, %c0_52] : memref<74x128x128xbf16, #tpu.memory_space<vmem>>, vector<1x128x128xbf16>
    %119 = vector.shape_cast %118 : vector<1x128x128xbf16> to vector<128x128xbf16>
    %cst_53 = arith.constant dense<0.000000e+00> : vector<34x128xf32>
    %120 = tpu.matmul %117, %119, %cst_53 {dimension_numbers = #tpu.dot_dimension_numbers<[1], [0], [0], [1], [0, 0, 1, 1], [], []>} : vector<34x128xbf16>, vector<128x128xbf16>, vector<34x128xf32> -> vector<34x128xf32>
    %121 = arith.addf %115, %120 : vector<34x128xf32>
    %c12 = arith.constant 12 : index
    %c0_54 = arith.constant 0 : index
    %122 = tpu.strided_load %arg5[%c12, %c0_54] {strides = array<i32: 2, 1>} : memref<104x128xf32, #tpu.memory_space<vmem>>, vector<34x128xf32>
    %123 = arith.truncf %122 : vector<34x128xf32> to vector<34x128xbf16>
    %c6 = arith.constant 6 : index
    %c0_55 = arith.constant 0 : index
    %c0_56 = arith.constant 0 : index
    %124 = vector.load %arg2[%c6, %c0_55, %c0_56] : memref<74x128x128xbf16, #tpu.memory_space<vmem>>, vector<1x128x128xbf16>
    %125 = vector.shape_cast %124 : vector<1x128x128xbf16> to vector<128x128xbf16>
    %cst_57 = arith.constant dense<0.000000e+00> : vector<34x128xf32>
    %126 = tpu.matmul %123, %125, %cst_57 {dimension_numbers = #tpu.dot_dimension_numbers<[1], [0], [0], [1], [0, 0, 1, 1], [], []>} : vector<34x128xbf16>, vector<128x128xbf16>, vector<34x128xf32> -> vector<34x128xf32>
    %127 = arith.addf %121, %126 : vector<34x128xf32>
    %c20 = arith.constant 20 : index
    %c0_58 = arith.constant 0 : index
    %128 = tpu.strided_load %arg5[%c20, %c0_58] {strides = array<i32: 2, 1>} : memref<104x128xf32, #tpu.memory_space<vmem>>, vector<34x128xf32>
    %129 = arith.truncf %128 : vector<34x128xf32> to vector<34x128xbf16>
    %c7 = arith.constant 7 : index
    %c0_59 = arith.constant 0 : index
    %c0_60 = arith.constant 0 : index
    %130 = vector.load %arg2[%c7, %c0_59, %c0_60] : memref<74x128x128xbf16, #tpu.memory_space<vmem>>, vector<1x128x128xbf16>
    %131 = vector.shape_cast %130 : vector<1x128x128xbf16> to vector<128x128xbf16>
    %cst_61 = arith.constant dense<0.000000e+00> : vector<34x128xf32>
    %132 = tpu.matmul %129, %131, %cst_61 {dimension_numbers = #tpu.dot_dimension_numbers<[1], [0], [0], [1], [0, 0, 1, 1], [], []>} : vector<34x128xbf16>, vector<128x128xbf16>, vector<34x128xf32> -> vector<34x128xf32>
    %133 = arith.addf %127, %132 : vector<34x128xf32>
    %c21_62 = arith.constant 21 : index
    %c0_63 = arith.constant 0 : index
    %134 = tpu.strided_load %arg5[%c21_62, %c0_63] {strides = array<i32: 2, 1>} : memref<104x128xf32, #tpu.memory_space<vmem>>, vector<34x128xf32>
    %135 = arith.truncf %134 : vector<34x128xf32> to vector<34x128xbf16>
    %c8 = arith.constant 8 : index
    %c0_64 = arith.constant 0 : index
    %c0_65 = arith.constant 0 : index
    %136 = vector.load %arg2[%c8, %c0_64, %c0_65] : memref<74x128x128xbf16, #tpu.memory_space<vmem>>, vector<1x128x128xbf16>
    %137 = vector.shape_cast %136 : vector<1x128x128xbf16> to vector<128x128xbf16>
    %cst_66 = arith.constant dense<0.000000e+00> : vector<34x128xf32>
    %138 = tpu.matmul %135, %137, %cst_66 {dimension_numbers = #tpu.dot_dimension_numbers<[1], [0], [0], [1], [0, 0, 1, 1], [], []>} : vector<34x128xbf16>, vector<128x128xbf16>, vector<34x128xf32> -> vector<34x128xf32>
    %139 = arith.addf %133, %138 : vector<34x128xf32>
    %c22 = arith.constant 22 : index
    %c0_67 = arith.constant 0 : index
    %140 = tpu.strided_load %arg5[%c22, %c0_67] {strides = array<i32: 2, 1>} : memref<104x128xf32, #tpu.memory_space<vmem>>, vector<34x128xf32>
    %141 = arith.truncf %140 : vector<34x128xf32> to vector<34x128xbf16>
    %c9 = arith.constant 9 : index
    %c0_68 = arith.constant 0 : index
    %c0_69 = arith.constant 0 : index
    %142 = vector.load %arg2[%c9, %c0_68, %c0_69] : memref<74x128x128xbf16, #tpu.memory_space<vmem>>, vector<1x128x128xbf16>
    %143 = vector.shape_cast %142 : vector<1x128x128xbf16> to vector<128x128xbf16>
    %cst_70 = arith.constant dense<0.000000e+00> : vector<34x128xf32>
    %144 = tpu.matmul %141, %143, %cst_70 {dimension_numbers = #tpu.dot_dimension_numbers<[1], [0], [0], [1], [0, 0, 1, 1], [], []>} : vector<34x128xbf16>, vector<128x128xbf16>, vector<34x128xf32> -> vector<34x128xf32>
    %145 = arith.addf %139, %144 : vector<34x128xf32>
    %c1_71 = arith.constant 1 : index
    %c0_72 = arith.constant 0 : index
    %146 = vector.load %arg3[%c1_71, %c0_72] : memref<16x128xf32, #tpu.memory_space<vmem>>, vector<1x128xf32>
    %147 = vector.extract_strided_slice %145 {offsets = [0, 0], sizes = [4, 128], strides = [1, 1]} : vector<34x128xf32> to vector<4x128xf32>
    %148 = vector.broadcast %146 : vector<1x128xf32> to vector<4x128xf32>
    %149 = arith.addf %147, %148 : vector<4x128xf32>
    %150 = arith.negf %149 : vector<4x128xf32>
    %151 = math.exp %150 : vector<4x128xf32>
    %cst_73 = arith.constant 1.000000e+00 : f32
    %152 = vector.broadcast %cst_73 : f32 to vector<4x128xf32>
    %153 = arith.addf %152, %151 : vector<4x128xf32>
    %154 = arith.divf %152, %153 : vector<4x128xf32>
    %155 = arith.mulf %149, %154 : vector<4x128xf32>
    %c7_74 = arith.constant 7 : index
    %c0_75 = arith.constant 0 : index
    %156 = vector.load %arg6[%c7_74, %c0_75] : memref<104x128xf32, #tpu.memory_space<vmem>>, vector<4x128xf32>
    tpu.vector_store %arg6[%c7_74, %c0_75], %155 {strides = array<i32>} : memref<104x128xf32, #tpu.memory_space<vmem>>, vector<4x128xf32>,
    %157 = vector.extract_strided_slice %145 {offsets = [10, 0], sizes = [4, 128], strides = [1, 1]} : vector<34x128xf32> to vector<4x128xf32>
    %158 = vector.broadcast %146 : vector<1x128xf32> to vector<4x128xf32>
    %159 = arith.addf %157, %158 : vector<4x128xf32>
    %160 = arith.negf %159 : vector<4x128xf32>
    %161 = math.exp %160 : vector<4x128xf32>
    %cst_76 = arith.constant 1.000000e+00 : f32
    %162 = vector.broadcast %cst_76 : f32 to vector<4x128xf32>
    %163 = arith.addf %162, %161 : vector<4x128xf32>
    %164 = arith.divf %162, %163 : vector<4x128xf32>
    %165 = arith.mulf %159, %164 : vector<4x128xf32>
    %c13 = arith.constant 13 : index
    %c0_77 = arith.constant 0 : index
    %166 = vector.load %arg6[%c13, %c0_77] : memref<104x128xf32, #tpu.memory_space<vmem>>, vector<4x128xf32>
    tpu.vector_store %arg6[%c13, %c0_77], %165 {strides = array<i32>} : memref<104x128xf32, #tpu.memory_space<vmem>>, vector<4x128xf32>,
    %167 = vector.extract_strided_slice %145 {offsets = [20, 0], sizes = [4, 128], strides = [1, 1]} : vector<34x128xf32> to vector<4x128xf32>
    %168 = vector.broadcast %146 : vector<1x128xf32> to vector<4x128xf32>
    %169 = arith.addf %167, %168 : vector<4x128xf32>
    %170 = arith.negf %169 : vector<4x128xf32>
    %171 = math.exp %170 : vector<4x128xf32>
    %cst_78 = arith.constant 1.000000e+00 : f32
    %172 = vector.broadcast %cst_78 : f32 to vector<4x128xf32>
    %173 = arith.addf %172, %171 : vector<4x128xf32>
    %174 = arith.divf %172, %173 : vector<4x128xf32>
    %175 = arith.mulf %169, %174 : vector<4x128xf32>
    %c19 = arith.constant 19 : index
    %c0_79 = arith.constant 0 : index
    %176 = vector.load %arg6[%c19, %c0_79] : memref<104x128xf32, #tpu.memory_space<vmem>>, vector<4x128xf32>
    tpu.vector_store %arg6[%c19, %c0_79], %175 {strides = array<i32>} : memref<104x128xf32, #tpu.memory_space<vmem>>, vector<4x128xf32>,
    %177 = vector.extract_strided_slice %145 {offsets = [30, 0], sizes = [4, 128], strides = [1, 1]} : vector<34x128xf32> to vector<4x128xf32>
    %178 = vector.broadcast %146 : vector<1x128xf32> to vector<4x128xf32>
    %179 = arith.addf %177, %178 : vector<4x128xf32>
    %180 = arith.negf %179 : vector<4x128xf32>
    %181 = math.exp %180 : vector<4x128xf32>
    %cst_80 = arith.constant 1.000000e+00 : f32
    %182 = vector.broadcast %cst_80 : f32 to vector<4x128xf32>
    %183 = arith.addf %182, %181 : vector<4x128xf32>
    %184 = arith.divf %182, %183 : vector<4x128xf32>
    %185 = arith.mulf %179, %184 : vector<4x128xf32>
    %c25 = arith.constant 25 : index
    %c0_81 = arith.constant 0 : index
    %186 = vector.load %arg6[%c25, %c0_81] : memref<104x128xf32, #tpu.memory_space<vmem>>, vector<4x128xf32>
    tpu.vector_store %arg6[%c25, %c0_81], %185 {strides = array<i32>} : memref<104x128xf32, #tpu.memory_space<vmem>>, vector<4x128xf32>,
    %cst_82 = arith.constant 0.000000e+00 : f32
    %187 = vector.broadcast %cst_82 : f32 to vector<40x128xf32>
    %c0_83 = arith.constant 0 : index
    %c0_84 = arith.constant 0 : index
    %188 = vector.load %arg5[%c0_83, %c0_84] : memref<104x128xf32, #tpu.memory_space<vmem>>, vector<40x128xf32>
    tpu.vector_store %arg5[%c0_83, %c0_84], %187 {strides = array<i32>} : memref<104x128xf32, #tpu.memory_space<vmem>>, vector<40x128xf32>,
    %cst_85 = arith.constant 0.000000e+00 : f32
    %189 = vector.broadcast %cst_85 : f32 to vector<22x128xf32>
    %c0_86 = arith.constant 0 : index
    %c0_87 = arith.constant 0 : index
    %190 = vector.load %arg6[%c0_86, %c0_87] : memref<104x128xf32, #tpu.memory_space<vmem>>, vector<22x128xf32>
    %191 = arith.truncf %190 : vector<22x128xf32> to vector<22x128xbf16>
    %c10_88 = arith.constant 10 : index
    %c0_89 = arith.constant 0 : index
    %c0_90 = arith.constant 0 : index
    %192 = vector.load %arg2[%c10_88, %c0_89, %c0_90] : memref<74x128x128xbf16, #tpu.memory_space<vmem>>, vector<1x128x128xbf16>
    %193 = vector.shape_cast %192 : vector<1x128x128xbf16> to vector<128x128xbf16>
    %cst_91 = arith.constant dense<0.000000e+00> : vector<22x128xf32>
    %194 = tpu.matmul %191, %193, %cst_91 {dimension_numbers = #tpu.dot_dimension_numbers<[1], [0], [0], [1], [0, 0, 1, 1], [], []>} : vector<22x128xbf16>, vector<128x128xbf16>, vector<22x128xf32> -> vector<22x128xf32>
    %195 = arith.addf %189, %194 : vector<22x128xf32>
    %c1_92 = arith.constant 1 : index
    %c0_93 = arith.constant 0 : index
    %196 = vector.load %arg6[%c1_92, %c0_93] : memref<104x128xf32, #tpu.memory_space<vmem>>, vector<22x128xf32>
    %197 = arith.truncf %196 : vector<22x128xf32> to vector<22x128xbf16>
    %c11_94 = arith.constant 11 : index
    %c0_95 = arith.constant 0 : index
    %c0_96 = arith.constant 0 : index
    %198 = vector.load %arg2[%c11_94, %c0_95, %c0_96] : memref<74x128x128xbf16, #tpu.memory_space<vmem>>, vector<1x128x128xbf16>
    %199 = vector.shape_cast %198 : vector<1x128x128xbf16> to vector<128x128xbf16>
    %cst_97 = arith.constant dense<0.000000e+00> : vector<22x128xf32>
    %200 = tpu.matmul %197, %199, %cst_97 {dimension_numbers = #tpu.dot_dimension_numbers<[1], [0], [0], [1], [0, 0, 1, 1], [], []>} : vector<22x128xbf16>, vector<128x128xbf16>, vector<22x128xf32> -> vector<22x128xf32>
    %201 = arith.addf %195, %200 : vector<22x128xf32>
    %c2_98 = arith.constant 2 : index
    %c0_99 = arith.constant 0 : index
    %202 = vector.load %arg6[%c2_98, %c0_99] : memref<104x128xf32, #tpu.memory_space<vmem>>, vector<22x128xf32>
    %203 = arith.truncf %202 : vector<22x128xf32> to vector<22x128xbf16>
    %c12_100 = arith.constant 12 : index
    %c0_101 = arith.constant 0 : index
    %c0_102 = arith.constant 0 : index
    %204 = vector.load %arg2[%c12_100, %c0_101, %c0_102] : memref<74x128x128xbf16, #tpu.memory_space<vmem>>, vector<1x128x128xbf16>
    %205 = vector.shape_cast %204 : vector<1x128x128xbf16> to vector<128x128xbf16>
    %cst_103 = arith.constant dense<0.000000e+00> : vector<22x128xf32>
    %206 = tpu.matmul %203, %205, %cst_103 {dimension_numbers = #tpu.dot_dimension_numbers<[1], [0], [0], [1], [0, 0, 1, 1], [], []>} : vector<22x128xbf16>, vector<128x128xbf16>, vector<22x128xf32> -> vector<22x128xf32>
    %207 = arith.addf %201, %206 : vector<22x128xf32>
    %c6_104 = arith.constant 6 : index
    %c0_105 = arith.constant 0 : index
    %208 = vector.load %arg6[%c6_104, %c0_105] : memref<104x128xf32, #tpu.memory_space<vmem>>, vector<22x128xf32>
    %209 = arith.truncf %208 : vector<22x128xf32> to vector<22x128xbf16>
    %c13_106 = arith.constant 13 : index
    %c0_107 = arith.constant 0 : index
    %c0_108 = arith.constant 0 : index
    %210 = vector.load %arg2[%c13_106, %c0_107, %c0_108] : memref<74x128x128xbf16, #tpu.memory_space<vmem>>, vector<1x128x128xbf16>
    %211 = vector.shape_cast %210 : vector<1x128x128xbf16> to vector<128x128xbf16>
    %cst_109 = arith.constant dense<0.000000e+00> : vector<22x128xf32>
    %212 = tpu.matmul %209, %211, %cst_109 {dimension_numbers = #tpu.dot_dimension_numbers<[1], [0], [0], [1], [0, 0, 1, 1], [], []>} : vector<22x128xbf16>, vector<128x128xbf16>, vector<22x128xf32> -> vector<22x128xf32>
    %213 = arith.addf %207, %212 : vector<22x128xf32>
    %c7_110 = arith.constant 7 : index
    %c0_111 = arith.constant 0 : index
    %214 = vector.load %arg6[%c7_110, %c0_111] : memref<104x128xf32, #tpu.memory_space<vmem>>, vector<22x128xf32>
    %215 = arith.truncf %214 : vector<22x128xf32> to vector<22x128xbf16>
    %c14 = arith.constant 14 : index
    %c0_112 = arith.constant 0 : index
    %c0_113 = arith.constant 0 : index
    %216 = vector.load %arg2[%c14, %c0_112, %c0_113] : memref<74x128x128xbf16, #tpu.memory_space<vmem>>, vector<1x128x128xbf16>
    %217 = vector.shape_cast %216 : vector<1x128x128xbf16> to vector<128x128xbf16>
    %cst_114 = arith.constant dense<0.000000e+00> : vector<22x128xf32>
    %218 = tpu.matmul %215, %217, %cst_114 {dimension_numbers = #tpu.dot_dimension_numbers<[1], [0], [0], [1], [0, 0, 1, 1], [], []>} : vector<22x128xbf16>, vector<128x128xbf16>, vector<22x128xf32> -> vector<22x128xf32>
    %219 = arith.addf %213, %218 : vector<22x128xf32>
    %c8_115 = arith.constant 8 : index
    %c0_116 = arith.constant 0 : index
    %220 = vector.load %arg6[%c8_115, %c0_116] : memref<104x128xf32, #tpu.memory_space<vmem>>, vector<22x128xf32>
    %221 = arith.truncf %220 : vector<22x128xf32> to vector<22x128xbf16>
    %c15 = arith.constant 15 : index
    %c0_117 = arith.constant 0 : index
    %c0_118 = arith.constant 0 : index
    %222 = vector.load %arg2[%c15, %c0_117, %c0_118] : memref<74x128x128xbf16, #tpu.memory_space<vmem>>, vector<1x128x128xbf16>
    %223 = vector.shape_cast %222 : vector<1x128x128xbf16> to vector<128x128xbf16>
    %cst_119 = arith.constant dense<0.000000e+00> : vector<22x128xf32>
    %224 = tpu.matmul %221, %223, %cst_119 {dimension_numbers = #tpu.dot_dimension_numbers<[1], [0], [0], [1], [0, 0, 1, 1], [], []>} : vector<22x128xbf16>, vector<128x128xbf16>, vector<22x128xf32> -> vector<22x128xf32>
    %225 = arith.addf %219, %224 : vector<22x128xf32>
    %c12_120 = arith.constant 12 : index
    %c0_121 = arith.constant 0 : index
    %226 = vector.load %arg6[%c12_120, %c0_121] : memref<104x128xf32, #tpu.memory_space<vmem>>, vector<22x128xf32>
    %227 = arith.truncf %226 : vector<22x128xf32> to vector<22x128xbf16>
    %c16 = arith.constant 16 : index
    %c0_122 = arith.constant 0 : index
    %c0_123 = arith.constant 0 : index
    %228 = vector.load %arg2[%c16, %c0_122, %c0_123] : memref<74x128x128xbf16, #tpu.memory_space<vmem>>, vector<1x128x128xbf16>
    %229 = vector.shape_cast %228 : vector<1x128x128xbf16> to vector<128x128xbf16>
    %cst_124 = arith.constant dense<0.000000e+00> : vector<22x128xf32>
    %230 = tpu.matmul %227, %229, %cst_124 {dimension_numbers = #tpu.dot_dimension_numbers<[1], [0], [0], [1], [0, 0, 1, 1], [], []>} : vector<22x128xbf16>, vector<128x128xbf16>, vector<22x128xf32> -> vector<22x128xf32>
    %231 = arith.addf %225, %230 : vector<22x128xf32>
    %c13_125 = arith.constant 13 : index
    %c0_126 = arith.constant 0 : index
    %232 = vector.load %arg6[%c13_125, %c0_126] : memref<104x128xf32, #tpu.memory_space<vmem>>, vector<22x128xf32>
    %233 = arith.truncf %232 : vector<22x128xf32> to vector<22x128xbf16>
    %c17 = arith.constant 17 : index
    %c0_127 = arith.constant 0 : index
    %c0_128 = arith.constant 0 : index
    %234 = vector.load %arg2[%c17, %c0_127, %c0_128] : memref<74x128x128xbf16, #tpu.memory_space<vmem>>, vector<1x128x128xbf16>
    %235 = vector.shape_cast %234 : vector<1x128x128xbf16> to vector<128x128xbf16>
    %cst_129 = arith.constant dense<0.000000e+00> : vector<22x128xf32>
    %236 = tpu.matmul %233, %235, %cst_129 {dimension_numbers = #tpu.dot_dimension_numbers<[1], [0], [0], [1], [0, 0, 1, 1], [], []>} : vector<22x128xbf16>, vector<128x128xbf16>, vector<22x128xf32> -> vector<22x128xf32>
    %237 = arith.addf %231, %236 : vector<22x128xf32>
    %c14_130 = arith.constant 14 : index
    %c0_131 = arith.constant 0 : index
    %238 = vector.load %arg6[%c14_130, %c0_131] : memref<104x128xf32, #tpu.memory_space<vmem>>, vector<22x128xf32>
    %239 = arith.truncf %238 : vector<22x128xf32> to vector<22x128xbf16>
    %c18 = arith.constant 18 : index
    %c0_132 = arith.constant 0 : index
    %c0_133 = arith.constant 0 : index
    %240 = vector.load %arg2[%c18, %c0_132, %c0_133] : memref<74x128x128xbf16, #tpu.memory_space<vmem>>, vector<1x128x128xbf16>
    %241 = vector.shape_cast %240 : vector<1x128x128xbf16> to vector<128x128xbf16>
    %cst_134 = arith.constant dense<0.000000e+00> : vector<22x128xf32>
    %242 = tpu.matmul %239, %241, %cst_134 {dimension_numbers = #tpu.dot_dimension_numbers<[1], [0], [0], [1], [0, 0, 1, 1], [], []>} : vector<22x128xbf16>, vector<128x128xbf16>, vector<22x128xf32> -> vector<22x128xf32>
    %243 = arith.addf %237, %242 : vector<22x128xf32>
    %c2_135 = arith.constant 2 : index
    %c0_136 = arith.constant 0 : index
    %244 = vector.load %arg3[%c2_135, %c0_136] : memref<16x128xf32, #tpu.memory_space<vmem>>, vector<1x128xf32>
    %245 = vector.extract_strided_slice %243 {offsets = [0, 0], sizes = [4, 128], strides = [1, 1]} : vector<22x128xf32> to vector<4x128xf32>
    %246 = vector.broadcast %244 : vector<1x128xf32> to vector<4x128xf32>
    %247 = arith.addf %245, %246 : vector<4x128xf32>
    %248 = arith.negf %247 : vector<4x128xf32>
    %249 = math.exp %248 : vector<4x128xf32>
    %cst_137 = arith.constant 1.000000e+00 : f32
    %250 = vector.broadcast %cst_137 : f32 to vector<4x128xf32>
    %251 = arith.addf %250, %249 : vector<4x128xf32>
    %252 = arith.divf %250, %251 : vector<4x128xf32>
    %253 = arith.mulf %247, %252 : vector<4x128xf32>
    %c7_138 = arith.constant 7 : index
    %c0_139 = arith.constant 0 : index
    %254 = vector.load %arg5[%c7_138, %c0_139] : memref<104x128xf32, #tpu.memory_space<vmem>>, vector<4x128xf32>
    tpu.vector_store %arg5[%c7_138, %c0_139], %253 {strides = array<i32>} : memref<104x128xf32, #tpu.memory_space<vmem>>, vector<4x128xf32>,
    %255 = vector.extract_strided_slice %243 {offsets = [6, 0], sizes = [4, 128], strides = [1, 1]} : vector<22x128xf32> to vector<4x128xf32>
    %256 = vector.broadcast %244 : vector<1x128xf32> to vector<4x128xf32>
    %257 = arith.addf %255, %256 : vector<4x128xf32>
    %258 = arith.negf %257 : vector<4x128xf32>
    %259 = math.exp %258 : vector<4x128xf32>
    %cst_140 = arith.constant 1.000000e+00 : f32
    %260 = vector.broadcast %cst_140 : f32 to vector<4x128xf32>
    %261 = arith.addf %260, %259 : vector<4x128xf32>
    %262 = arith.divf %260, %261 : vector<4x128xf32>
    %263 = arith.mulf %257, %262 : vector<4x128xf32>
    %c13_141 = arith.constant 13 : index
    %c0_142 = arith.constant 0 : index
    %264 = vector.load %arg5[%c13_141, %c0_142] : memref<104x128xf32, #tpu.memory_space<vmem>>, vector<4x128xf32>
    tpu.vector_store %arg5[%c13_141, %c0_142], %263 {strides = array<i32>} : memref<104x128xf32, #tpu.memory_space<vmem>>, vector<4x128xf32>,
    %265 = vector.extract_strided_slice %243 {offsets = [12, 0], sizes = [4, 128], strides = [1, 1]} : vector<22x128xf32> to vector<4x128xf32>
    %266 = vector.broadcast %244 : vector<1x128xf32> to vector<4x128xf32>
    %267 = arith.addf %265, %266 : vector<4x128xf32>
    %268 = arith.negf %267 : vector<4x128xf32>
    %269 = math.exp %268 : vector<4x128xf32>
    %cst_143 = arith.constant 1.000000e+00 : f32
    %270 = vector.broadcast %cst_143 : f32 to vector<4x128xf32>
    %271 = arith.addf %270, %269 : vector<4x128xf32>
    %272 = arith.divf %270, %271 : vector<4x128xf32>
    %273 = arith.mulf %267, %272 : vector<4x128xf32>
    %c19_144 = arith.constant 19 : index
    %c0_145 = arith.constant 0 : index
    %274 = vector.load %arg5[%c19_144, %c0_145] : memref<104x128xf32, #tpu.memory_space<vmem>>, vector<4x128xf32>
    tpu.vector_store %arg5[%c19_144, %c0_145], %273 {strides = array<i32>} : memref<104x128xf32, #tpu.memory_space<vmem>>, vector<4x128xf32>,
    %275 = vector.extract_strided_slice %243 {offsets = [18, 0], sizes = [4, 128], strides = [1, 1]} : vector<22x128xf32> to vector<4x128xf32>
    %276 = vector.broadcast %244 : vector<1x128xf32> to vector<4x128xf32>
    %277 = arith.addf %275, %276 : vector<4x128xf32>
    %278 = arith.negf %277 : vector<4x128xf32>
    %279 = math.exp %278 : vector<4x128xf32>
    %cst_146 = arith.constant 1.000000e+00 : f32
    %280 = vector.broadcast %cst_146 : f32 to vector<4x128xf32>
    %281 = arith.addf %280, %279 : vector<4x128xf32>
    %282 = arith.divf %280, %281 : vector<4x128xf32>
    %283 = arith.mulf %277, %282 : vector<4x128xf32>
    %c25_147 = arith.constant 25 : index
    %c0_148 = arith.constant 0 : index
    %284 = vector.load %arg5[%c25_147, %c0_148] : memref<104x128xf32, #tpu.memory_space<vmem>>, vector<4x128xf32>
    tpu.vector_store %arg5[%c25_147, %c0_148], %283 {strides = array<i32>} : memref<104x128xf32, #tpu.memory_space<vmem>>, vector<4x128xf32>,
    %cst_149 = arith.constant 0.000000e+00 : f32
    %285 = vector.broadcast %cst_149 : f32 to vector<40x128xf32>
    %c0_150 = arith.constant 0 : index
    %c0_151 = arith.constant 0 : index
    %286 = vector.load %arg6[%c0_150, %c0_151] : memref<104x128xf32, #tpu.memory_space<vmem>>, vector<40x128xf32>
    tpu.vector_store %arg6[%c0_150, %c0_151], %285 {strides = array<i32>} : memref<104x128xf32, #tpu.memory_space<vmem>>, vector<40x128xf32>,
    %cst_152 = arith.constant 0.000000e+00 : f32
    %287 = vector.broadcast %cst_152 : f32 to vector<22x128xf32>
    %c0_153 = arith.constant 0 : index
    %c0_154 = arith.constant 0 : index
    %288 = vector.load %arg5[%c0_153, %c0_154] : memref<104x128xf32, #tpu.memory_space<vmem>>, vector<22x128xf32>
    %289 = arith.truncf %288 : vector<22x128xf32> to vector<22x128xbf16>
    %c19_155 = arith.constant 19 : index
    %c0_156 = arith.constant 0 : index
    %c0_157 = arith.constant 0 : index
    %290 = vector.load %arg2[%c19_155, %c0_156, %c0_157] : memref<74x128x128xbf16, #tpu.memory_space<vmem>>, vector<1x128x128xbf16>
    %291 = vector.shape_cast %290 : vector<1x128x128xbf16> to vector<128x128xbf16>
    %cst_158 = arith.constant dense<0.000000e+00> : vector<22x128xf32>
    %292 = tpu.matmul %289, %291, %cst_158 {dimension_numbers = #tpu.dot_dimension_numbers<[1], [0], [0], [1], [0, 0, 1, 1], [], []>} : vector<22x128xbf16>, vector<128x128xbf16>, vector<22x128xf32> -> vector<22x128xf32>
    %293 = arith.addf %287, %292 : vector<22x128xf32>
    %c1_159 = arith.constant 1 : index
    %c0_160 = arith.constant 0 : index
    %294 = vector.load %arg5[%c1_159, %c0_160] : memref<104x128xf32, #tpu.memory_space<vmem>>, vector<22x128xf32>
    %295 = arith.truncf %294 : vector<22x128xf32> to vector<22x128xbf16>
    %c20_161 = arith.constant 20 : index
    %c0_162 = arith.constant 0 : index
    %c0_163 = arith.constant 0 : index
    %296 = vector.load %arg2[%c20_161, %c0_162, %c0_163] : memref<74x128x128xbf16, #tpu.memory_space<vmem>>, vector<1x128x128xbf16>
    %297 = vector.shape_cast %296 : vector<1x128x128xbf16> to vector<128x128xbf16>
    %cst_164 = arith.constant dense<0.000000e+00> : vector<22x128xf32>
    %298 = tpu.matmul %295, %297, %cst_164 {dimension_numbers = #tpu.dot_dimension_numbers<[1], [0], [0], [1], [0, 0, 1, 1], [], []>} : vector<22x128xbf16>, vector<128x128xbf16>, vector<22x128xf32> -> vector<22x128xf32>
    %299 = arith.addf %293, %298 : vector<22x128xf32>
    %c2_165 = arith.constant 2 : index
    %c0_166 = arith.constant 0 : index
    %300 = vector.load %arg5[%c2_165, %c0_166] : memref<104x128xf32, #tpu.memory_space<vmem>>, vector<22x128xf32>
    %301 = arith.truncf %300 : vector<22x128xf32> to vector<22x128xbf16>
    %c21_167 = arith.constant 21 : index
    %c0_168 = arith.constant 0 : index
    %c0_169 = arith.constant 0 : index
    %302 = vector.load %arg2[%c21_167, %c0_168, %c0_169] : memref<74x128x128xbf16, #tpu.memory_space<vmem>>, vector<1x128x128xbf16>
    %303 = vector.shape_cast %302 : vector<1x128x128xbf16> to vector<128x128xbf16>
    %cst_170 = arith.constant dense<0.000000e+00> : vector<22x128xf32>
    %304 = tpu.matmul %301, %303, %cst_170 {dimension_numbers = #tpu.dot_dimension_numbers<[1], [0], [0], [1], [0, 0, 1, 1], [], []>} : vector<22x128xbf16>, vector<128x128xbf16>, vector<22x128xf32> -> vector<22x128xf32>
    %305 = arith.addf %299, %304 : vector<22x128xf32>
    %c6_171 = arith.constant 6 : index
    %c0_172 = arith.constant 0 : index
    %306 = vector.load %arg5[%c6_171, %c0_172] : memref<104x128xf32, #tpu.memory_space<vmem>>, vector<22x128xf32>
    %307 = arith.truncf %306 : vector<22x128xf32> to vector<22x128xbf16>
    %c22_173 = arith.constant 22 : index
    %c0_174 = arith.constant 0 : index
    %c0_175 = arith.constant 0 : index
    %308 = vector.load %arg2[%c22_173, %c0_174, %c0_175] : memref<74x128x128xbf16, #tpu.memory_space<vmem>>, vector<1x128x128xbf16>
    %309 = vector.shape_cast %308 : vector<1x128x128xbf16> to vector<128x128xbf16>
    %cst_176 = arith.constant dense<0.000000e+00> : vector<22x128xf32>
    %310 = tpu.matmul %307, %309, %cst_176 {dimension_numbers = #tpu.dot_dimension_numbers<[1], [0], [0], [1], [0, 0, 1, 1], [], []>} : vector<22x128xbf16>, vector<128x128xbf16>, vector<22x128xf32> -> vector<22x128xf32>
    %311 = arith.addf %305, %310 : vector<22x128xf32>
    %c7_177 = arith.constant 7 : index
    %c0_178 = arith.constant 0 : index
    %312 = vector.load %arg5[%c7_177, %c0_178] : memref<104x128xf32, #tpu.memory_space<vmem>>, vector<22x128xf32>
    %313 = arith.truncf %312 : vector<22x128xf32> to vector<22x128xbf16>
    %c23 = arith.constant 23 : index
    %c0_179 = arith.constant 0 : index
    %c0_180 = arith.constant 0 : index
    %314 = vector.load %arg2[%c23, %c0_179, %c0_180] : memref<74x128x128xbf16, #tpu.memory_space<vmem>>, vector<1x128x128xbf16>
    %315 = vector.shape_cast %314 : vector<1x128x128xbf16> to vector<128x128xbf16>
    %cst_181 = arith.constant dense<0.000000e+00> : vector<22x128xf32>
    %316 = tpu.matmul %313, %315, %cst_181 {dimension_numbers = #tpu.dot_dimension_numbers<[1], [0], [0], [1], [0, 0, 1, 1], [], []>} : vector<22x128xbf16>, vector<128x128xbf16>, vector<22x128xf32> -> vector<22x128xf32>
    %317 = arith.addf %311, %316 : vector<22x128xf32>
    %c8_182 = arith.constant 8 : index
    %c0_183 = arith.constant 0 : index
    %318 = vector.load %arg5[%c8_182, %c0_183] : memref<104x128xf32, #tpu.memory_space<vmem>>, vector<22x128xf32>
    %319 = arith.truncf %318 : vector<22x128xf32> to vector<22x128xbf16>
    %c24 = arith.constant 24 : index
    %c0_184 = arith.constant 0 : index
    %c0_185 = arith.constant 0 : index
    %320 = vector.load %arg2[%c24, %c0_184, %c0_185] : memref<74x128x128xbf16, #tpu.memory_space<vmem>>, vector<1x128x128xbf16>
    %321 = vector.shape_cast %320 : vector<1x128x128xbf16> to vector<128x128xbf16>
    %cst_186 = arith.constant dense<0.000000e+00> : vector<22x128xf32>
    %322 = tpu.matmul %319, %321, %cst_186 {dimension_numbers = #tpu.dot_dimension_numbers<[1], [0], [0], [1], [0, 0, 1, 1], [], []>} : vector<22x128xbf16>, vector<128x128xbf16>, vector<22x128xf32> -> vector<22x128xf32>
    %323 = arith.addf %317, %322 : vector<22x128xf32>
    %c12_187 = arith.constant 12 : index
    %c0_188 = arith.constant 0 : index
    %324 = vector.load %arg5[%c12_187, %c0_188] : memref<104x128xf32, #tpu.memory_space<vmem>>, vector<22x128xf32>
    %325 = arith.truncf %324 : vector<22x128xf32> to vector<22x128xbf16>
    %c25_189 = arith.constant 25 : index
    %c0_190 = arith.constant 0 : index
    %c0_191 = arith.constant 0 : index
    %326 = vector.load %arg2[%c25_189, %c0_190, %c0_191] : memref<74x128x128xbf16, #tpu.memory_space<vmem>>, vector<1x128x128xbf16>
    %327 = vector.shape_cast %326 : vector<1x128x128xbf16> to vector<128x128xbf16>
    %cst_192 = arith.constant dense<0.000000e+00> : vector<22x128xf32>
    %328 = tpu.matmul %325, %327, %cst_192 {dimension_numbers = #tpu.dot_dimension_numbers<[1], [0], [0], [1], [0, 0, 1, 1], [], []>} : vector<22x128xbf16>, vector<128x128xbf16>, vector<22x128xf32> -> vector<22x128xf32>
    %329 = arith.addf %323, %328 : vector<22x128xf32>
    %c13_193 = arith.constant 13 : index
    %c0_194 = arith.constant 0 : index
    %330 = vector.load %arg5[%c13_193, %c0_194] : memref<104x128xf32, #tpu.memory_space<vmem>>, vector<22x128xf32>
    %331 = arith.truncf %330 : vector<22x128xf32> to vector<22x128xbf16>
    %c26 = arith.constant 26 : index
    %c0_195 = arith.constant 0 : index
    %c0_196 = arith.constant 0 : index
    %332 = vector.load %arg2[%c26, %c0_195, %c0_196] : memref<74x128x128xbf16, #tpu.memory_space<vmem>>, vector<1x128x128xbf16>
    %333 = vector.shape_cast %332 : vector<1x128x128xbf16> to vector<128x128xbf16>
    %cst_197 = arith.constant dense<0.000000e+00> : vector<22x128xf32>
    %334 = tpu.matmul %331, %333, %cst_197 {dimension_numbers = #tpu.dot_dimension_numbers<[1], [0], [0], [1], [0, 0, 1, 1], [], []>} : vector<22x128xbf16>, vector<128x128xbf16>, vector<22x128xf32> -> vector<22x128xf32>
    %335 = arith.addf %329, %334 : vector<22x128xf32>
    %c14_198 = arith.constant 14 : index
    %c0_199 = arith.constant 0 : index
    %336 = vector.load %arg5[%c14_198, %c0_199] : memref<104x128xf32, #tpu.memory_space<vmem>>, vector<22x128xf32>
    %337 = arith.truncf %336 : vector<22x128xf32> to vector<22x128xbf16>
    %c27 = arith.constant 27 : index
    %c0_200 = arith.constant 0 : index
    %c0_201 = arith.constant 0 : index
    %338 = vector.load %arg2[%c27, %c0_200, %c0_201] : memref<74x128x128xbf16, #tpu.memory_space<vmem>>, vector<1x128x128xbf16>
    %339 = vector.shape_cast %338 : vector<1x128x128xbf16> to vector<128x128xbf16>
    %cst_202 = arith.constant dense<0.000000e+00> : vector<22x128xf32>
    %340 = tpu.matmul %337, %339, %cst_202 {dimension_numbers = #tpu.dot_dimension_numbers<[1], [0], [0], [1], [0, 0, 1, 1], [], []>} : vector<22x128xbf16>, vector<128x128xbf16>, vector<22x128xf32> -> vector<22x128xf32>
    %341 = arith.addf %335, %340 : vector<22x128xf32>
    %c3_203 = arith.constant 3 : index
    %c0_204 = arith.constant 0 : index
    %342 = vector.load %arg3[%c3_203, %c0_204] : memref<16x128xf32, #tpu.memory_space<vmem>>, vector<1x128xf32>
    %343 = vector.extract_strided_slice %341 {offsets = [0, 0], sizes = [4, 128], strides = [1, 1]} : vector<22x128xf32> to vector<4x128xf32>
    %344 = vector.broadcast %342 : vector<1x128xf32> to vector<4x128xf32>
    %345 = arith.addf %343, %344 : vector<4x128xf32>
    %346 = arith.negf %345 : vector<4x128xf32>
    %347 = math.exp %346 : vector<4x128xf32>
    %cst_205 = arith.constant 1.000000e+00 : f32
    %348 = vector.broadcast %cst_205 : f32 to vector<4x128xf32>
    %349 = arith.addf %348, %347 : vector<4x128xf32>
    %350 = arith.divf %348, %349 : vector<4x128xf32>
    %351 = arith.mulf %345, %350 : vector<4x128xf32>
    %c7_206 = arith.constant 7 : index
    %c0_207 = arith.constant 0 : index
    %352 = vector.load %arg6[%c7_206, %c0_207] : memref<104x128xf32, #tpu.memory_space<vmem>>, vector<4x128xf32>
    tpu.vector_store %arg6[%c7_206, %c0_207], %351 {strides = array<i32>} : memref<104x128xf32, #tpu.memory_space<vmem>>, vector<4x128xf32>,
    %353 = vector.extract_strided_slice %341 {offsets = [6, 0], sizes = [4, 128], strides = [1, 1]} : vector<22x128xf32> to vector<4x128xf32>
    %354 = vector.broadcast %342 : vector<1x128xf32> to vector<4x128xf32>
    %355 = arith.addf %353, %354 : vector<4x128xf32>
    %356 = arith.negf %355 : vector<4x128xf32>
    %357 = math.exp %356 : vector<4x128xf32>
    %cst_208 = arith.constant 1.000000e+00 : f32
    %358 = vector.broadcast %cst_208 : f32 to vector<4x128xf32>
    %359 = arith.addf %358, %357 : vector<4x128xf32>
    %360 = arith.divf %358, %359 : vector<4x128xf32>
    %361 = arith.mulf %355, %360 : vector<4x128xf32>
    %c13_209 = arith.constant 13 : index
    %c0_210 = arith.constant 0 : index
    %362 = vector.load %arg6[%c13_209, %c0_210] : memref<104x128xf32, #tpu.memory_space<vmem>>, vector<4x128xf32>
    tpu.vector_store %arg6[%c13_209, %c0_210], %361 {strides = array<i32>} : memref<104x128xf32, #tpu.memory_space<vmem>>, vector<4x128xf32>,
    %363 = vector.extract_strided_slice %341 {offsets = [12, 0], sizes = [4, 128], strides = [1, 1]} : vector<22x128xf32> to vector<4x128xf32>
    %364 = vector.broadcast %342 : vector<1x128xf32> to vector<4x128xf32>
    %365 = arith.addf %363, %364 : vector<4x128xf32>
    %366 = arith.negf %365 : vector<4x128xf32>
    %367 = math.exp %366 : vector<4x128xf32>
    %cst_211 = arith.constant 1.000000e+00 : f32
    %368 = vector.broadcast %cst_211 : f32 to vector<4x128xf32>
    %369 = arith.addf %368, %367 : vector<4x128xf32>
    %370 = arith.divf %368, %369 : vector<4x128xf32>
    %371 = arith.mulf %365, %370 : vector<4x128xf32>
    %c19_212 = arith.constant 19 : index
    %c0_213 = arith.constant 0 : index
    %372 = vector.load %arg6[%c19_212, %c0_213] : memref<104x128xf32, #tpu.memory_space<vmem>>, vector<4x128xf32>
    tpu.vector_store %arg6[%c19_212, %c0_213], %371 {strides = array<i32>} : memref<104x128xf32, #tpu.memory_space<vmem>>, vector<4x128xf32>,
    %373 = vector.extract_strided_slice %341 {offsets = [18, 0], sizes = [4, 128], strides = [1, 1]} : vector<22x128xf32> to vector<4x128xf32>
    %374 = vector.broadcast %342 : vector<1x128xf32> to vector<4x128xf32>
    %375 = arith.addf %373, %374 : vector<4x128xf32>
    %376 = arith.negf %375 : vector<4x128xf32>
    %377 = math.exp %376 : vector<4x128xf32>
    %cst_214 = arith.constant 1.000000e+00 : f32
    %378 = vector.broadcast %cst_214 : f32 to vector<4x128xf32>
    %379 = arith.addf %378, %377 : vector<4x128xf32>
    %380 = arith.divf %378, %379 : vector<4x128xf32>
    %381 = arith.mulf %375, %380 : vector<4x128xf32>
    %c25_215 = arith.constant 25 : index
    %c0_216 = arith.constant 0 : index
    %382 = vector.load %arg6[%c25_215, %c0_216] : memref<104x128xf32, #tpu.memory_space<vmem>>, vector<4x128xf32>
    tpu.vector_store %arg6[%c25_215, %c0_216], %381 {strides = array<i32>} : memref<104x128xf32, #tpu.memory_space<vmem>>, vector<4x128xf32>,
    %cst_217 = arith.constant 0.000000e+00 : f32
    %383 = vector.broadcast %cst_217 : f32 to vector<16x128xf32>
    %c0_218 = arith.constant 0 : index
    %c0_219 = arith.constant 0 : index
    %384 = vector.load %arg5[%c0_218, %c0_219] : memref<104x128xf32, #tpu.memory_space<vmem>>, vector<16x128xf32>
    tpu.vector_store %arg5[%c0_218, %c0_219], %383 {strides = array<i32>} : memref<104x128xf32, #tpu.memory_space<vmem>>, vector<16x128xf32>,
    %cst_220 = arith.constant 0.000000e+00 : f32
    %385 = vector.broadcast %cst_220 : f32 to vector<8x128xf32>
    %c0_221 = arith.constant 0 : index
    %c0_222 = arith.constant 0 : index
    %386 = tpu.strided_load %arg6[%c0_221, %c0_222] {strides = array<i32: 2, 1>} : memref<104x128xf32, #tpu.memory_space<vmem>>, vector<8x128xf32>
    %387 = arith.truncf %386 : vector<8x128xf32> to vector<8x128xbf16>
    %c28 = arith.constant 28 : index
    %c0_223 = arith.constant 0 : index
    %c0_224 = arith.constant 0 : index
    %388 = vector.load %arg2[%c28, %c0_223, %c0_224] : memref<74x128x128xbf16, #tpu.memory_space<vmem>>, vector<1x128x128xbf16>
    %389 = vector.shape_cast %388 : vector<1x128x128xbf16> to vector<128x128xbf16>
    %cst_225 = arith.constant dense<0.000000e+00> : vector<8x128xf32>
    %390 = tpu.matmul %387, %389, %cst_225 {dimension_numbers = #tpu.dot_dimension_numbers<[1], [0], [0], [1], [0, 0, 1, 1], [], []>} : vector<8x128xbf16>, vector<128x128xbf16>, vector<8x128xf32> -> vector<8x128xf32>
    %391 = arith.addf %385, %390 : vector<8x128xf32>
    %c1_226 = arith.constant 1 : index
    %c0_227 = arith.constant 0 : index
    %392 = tpu.strided_load %arg6[%c1_226, %c0_227] {strides = array<i32: 2, 1>} : memref<104x128xf32, #tpu.memory_space<vmem>>, vector<8x128xf32>
    %393 = arith.truncf %392 : vector<8x128xf32> to vector<8x128xbf16>
    %c29 = arith.constant 29 : index
    %c0_228 = arith.constant 0 : index
    %c0_229 = arith.constant 0 : index
    %394 = vector.load %arg2[%c29, %c0_228, %c0_229] : memref<74x128x128xbf16, #tpu.memory_space<vmem>>, vector<1x128x128xbf16>
    %395 = vector.shape_cast %394 : vector<1x128x128xbf16> to vector<128x128xbf16>
    %cst_230 = arith.constant dense<0.000000e+00> : vector<8x128xf32>
    %396 = tpu.matmul %393, %395, %cst_230 {dimension_numbers = #tpu.dot_dimension_numbers<[1], [0], [0], [1], [0, 0, 1, 1], [], []>} : vector<8x128xbf16>, vector<128x128xbf16>, vector<8x128xf32> -> vector<8x128xf32>
    %397 = arith.addf %391, %396 : vector<8x128xf32>
    %c2_231 = arith.constant 2 : index
    %c0_232 = arith.constant 0 : index
    %398 = tpu.strided_load %arg6[%c2_231, %c0_232] {strides = array<i32: 2, 1>} : memref<104x128xf32, #tpu.memory_space<vmem>>, vector<8x128xf32>
    %399 = arith.truncf %398 : vector<8x128xf32> to vector<8x128xbf16>
    %c30 = arith.constant 30 : index
    %c0_233 = arith.constant 0 : index
    %c0_234 = arith.constant 0 : index
    %400 = vector.load %arg2[%c30, %c0_233, %c0_234] : memref<74x128x128xbf16, #tpu.memory_space<vmem>>, vector<1x128x128xbf16>
    %401 = vector.shape_cast %400 : vector<1x128x128xbf16> to vector<128x128xbf16>
    %cst_235 = arith.constant dense<0.000000e+00> : vector<8x128xf32>
    %402 = tpu.matmul %399, %401, %cst_235 {dimension_numbers = #tpu.dot_dimension_numbers<[1], [0], [0], [1], [0, 0, 1, 1], [], []>} : vector<8x128xbf16>, vector<128x128xbf16>, vector<8x128xf32> -> vector<8x128xf32>
    %403 = arith.addf %397, %402 : vector<8x128xf32>
    %c6_236 = arith.constant 6 : index
    %c0_237 = arith.constant 0 : index
    %404 = tpu.strided_load %arg6[%c6_236, %c0_237] {strides = array<i32: 2, 1>} : memref<104x128xf32, #tpu.memory_space<vmem>>, vector<8x128xf32>
    %405 = arith.truncf %404 : vector<8x128xf32> to vector<8x128xbf16>
    %c31_238 = arith.constant 31 : index
    %c0_239 = arith.constant 0 : index
    %c0_240 = arith.constant 0 : index
    %406 = vector.load %arg2[%c31_238, %c0_239, %c0_240] : memref<74x128x128xbf16, #tpu.memory_space<vmem>>, vector<1x128x128xbf16>
    %407 = vector.shape_cast %406 : vector<1x128x128xbf16> to vector<128x128xbf16>
    %cst_241 = arith.constant dense<0.000000e+00> : vector<8x128xf32>
    %408 = tpu.matmul %405, %407, %cst_241 {dimension_numbers = #tpu.dot_dimension_numbers<[1], [0], [0], [1], [0, 0, 1, 1], [], []>} : vector<8x128xbf16>, vector<128x128xbf16>, vector<8x128xf32> -> vector<8x128xf32>
    %409 = arith.addf %403, %408 : vector<8x128xf32>
    %c7_242 = arith.constant 7 : index
    %c0_243 = arith.constant 0 : index
    %410 = tpu.strided_load %arg6[%c7_242, %c0_243] {strides = array<i32: 2, 1>} : memref<104x128xf32, #tpu.memory_space<vmem>>, vector<8x128xf32>
    %411 = arith.truncf %410 : vector<8x128xf32> to vector<8x128xbf16>
    %c32 = arith.constant 32 : index
    %c0_244 = arith.constant 0 : index
    %c0_245 = arith.constant 0 : index
    %412 = vector.load %arg2[%c32, %c0_244, %c0_245] : memref<74x128x128xbf16, #tpu.memory_space<vmem>>, vector<1x128x128xbf16>
    %413 = vector.shape_cast %412 : vector<1x128x128xbf16> to vector<128x128xbf16>
    %cst_246 = arith.constant dense<0.000000e+00> : vector<8x128xf32>
    %414 = tpu.matmul %411, %413, %cst_246 {dimension_numbers = #tpu.dot_dimension_numbers<[1], [0], [0], [1], [0, 0, 1, 1], [], []>} : vector<8x128xbf16>, vector<128x128xbf16>, vector<8x128xf32> -> vector<8x128xf32>
    %415 = arith.addf %409, %414 : vector<8x128xf32>
    %c8_247 = arith.constant 8 : index
    %c0_248 = arith.constant 0 : index
    %416 = tpu.strided_load %arg6[%c8_247, %c0_248] {strides = array<i32: 2, 1>} : memref<104x128xf32, #tpu.memory_space<vmem>>, vector<8x128xf32>
    %417 = arith.truncf %416 : vector<8x128xf32> to vector<8x128xbf16>
    %c33 = arith.constant 33 : index
    %c0_249 = arith.constant 0 : index
    %c0_250 = arith.constant 0 : index
    %418 = vector.load %arg2[%c33, %c0_249, %c0_250] : memref<74x128x128xbf16, #tpu.memory_space<vmem>>, vector<1x128x128xbf16>
    %419 = vector.shape_cast %418 : vector<1x128x128xbf16> to vector<128x128xbf16>
    %cst_251 = arith.constant dense<0.000000e+00> : vector<8x128xf32>
    %420 = tpu.matmul %417, %419, %cst_251 {dimension_numbers = #tpu.dot_dimension_numbers<[1], [0], [0], [1], [0, 0, 1, 1], [], []>} : vector<8x128xbf16>, vector<128x128xbf16>, vector<8x128xf32> -> vector<8x128xf32>
    %421 = arith.addf %415, %420 : vector<8x128xf32>
    %c12_252 = arith.constant 12 : index
    %c0_253 = arith.constant 0 : index
    %422 = tpu.strided_load %arg6[%c12_252, %c0_253] {strides = array<i32: 2, 1>} : memref<104x128xf32, #tpu.memory_space<vmem>>, vector<8x128xf32>
    %423 = arith.truncf %422 : vector<8x128xf32> to vector<8x128xbf16>
    %c34 = arith.constant 34 : index
    %c0_254 = arith.constant 0 : index
    %c0_255 = arith.constant 0 : index
    %424 = vector.load %arg2[%c34, %c0_254, %c0_255] : memref<74x128x128xbf16, #tpu.memory_space<vmem>>, vector<1x128x128xbf16>
    %425 = vector.shape_cast %424 : vector<1x128x128xbf16> to vector<128x128xbf16>
    %cst_256 = arith.constant dense<0.000000e+00> : vector<8x128xf32>
    %426 = tpu.matmul %423, %425, %cst_256 {dimension_numbers = #tpu.dot_dimension_numbers<[1], [0], [0], [1], [0, 0, 1, 1], [], []>} : vector<8x128xbf16>, vector<128x128xbf16>, vector<8x128xf32> -> vector<8x128xf32>
    %427 = arith.addf %421, %426 : vector<8x128xf32>
    %c13_257 = arith.constant 13 : index
    %c0_258 = arith.constant 0 : index
    %428 = tpu.strided_load %arg6[%c13_257, %c0_258] {strides = array<i32: 2, 1>} : memref<104x128xf32, #tpu.memory_space<vmem>>, vector<8x128xf32>
    %429 = arith.truncf %428 : vector<8x128xf32> to vector<8x128xbf16>
    %c35 = arith.constant 35 : index
    %c0_259 = arith.constant 0 : index
    %c0_260 = arith.constant 0 : index
    %430 = vector.load %arg2[%c35, %c0_259, %c0_260] : memref<74x128x128xbf16, #tpu.memory_space<vmem>>, vector<1x128x128xbf16>
    %431 = vector.shape_cast %430 : vector<1x128x128xbf16> to vector<128x128xbf16>
    %cst_261 = arith.constant dense<0.000000e+00> : vector<8x128xf32>
    %432 = tpu.matmul %429, %431, %cst_261 {dimension_numbers = #tpu.dot_dimension_numbers<[1], [0], [0], [1], [0, 0, 1, 1], [], []>} : vector<8x128xbf16>, vector<128x128xbf16>, vector<8x128xf32> -> vector<8x128xf32>
    %433 = arith.addf %427, %432 : vector<8x128xf32>
    %c14_262 = arith.constant 14 : index
    %c0_263 = arith.constant 0 : index
    %434 = tpu.strided_load %arg6[%c14_262, %c0_263] {strides = array<i32: 2, 1>} : memref<104x128xf32, #tpu.memory_space<vmem>>, vector<8x128xf32>
    %435 = arith.truncf %434 : vector<8x128xf32> to vector<8x128xbf16>
    %c36 = arith.constant 36 : index
    %c0_264 = arith.constant 0 : index
    %c0_265 = arith.constant 0 : index
    %436 = vector.load %arg2[%c36, %c0_264, %c0_265] : memref<74x128x128xbf16, #tpu.memory_space<vmem>>, vector<1x128x128xbf16>
    %437 = vector.shape_cast %436 : vector<1x128x128xbf16> to vector<128x128xbf16>
    %cst_266 = arith.constant dense<0.000000e+00> : vector<8x128xf32>
    %438 = tpu.matmul %435, %437, %cst_266 {dimension_numbers = #tpu.dot_dimension_numbers<[1], [0], [0], [1], [0, 0, 1, 1], [], []>} : vector<8x128xbf16>, vector<128x128xbf16>, vector<8x128xf32> -> vector<8x128xf32>
    %439 = arith.addf %433, %438 : vector<8x128xf32>
    %c4_267 = arith.constant 4 : index
    %c0_268 = arith.constant 0 : index
    %440 = vector.load %arg3[%c4_267, %c0_268] : memref<16x128xf32, #tpu.memory_space<vmem>>, vector<1x128xf32>
    %441 = vector.extract_strided_slice %439 {offsets = [0, 0], sizes = [2, 128], strides = [1, 1]} : vector<8x128xf32> to vector<2x128xf32>
    %442 = vector.broadcast %440 : vector<1x128xf32> to vector<2x128xf32>
    %443 = arith.addf %441, %442 : vector<2x128xf32>
    %444 = arith.negf %443 : vector<2x128xf32>
    %445 = math.exp %444 : vector<2x128xf32>
    %cst_269 = arith.constant 1.000000e+00 : f32
    %446 = vector.broadcast %cst_269 : f32 to vector<2x128xf32>
    %447 = arith.addf %446, %445 : vector<2x128xf32>
    %448 = arith.divf %446, %447 : vector<2x128xf32>
    %449 = arith.mulf %443, %448 : vector<2x128xf32>
    %c5_270 = arith.constant 5 : index
    %c0_271 = arith.constant 0 : index
    %450 = vector.load %arg5[%c5_270, %c0_271] : memref<104x128xf32, #tpu.memory_space<vmem>>, vector<2x128xf32>
    tpu.vector_store %arg5[%c5_270, %c0_271], %449 {strides = array<i32>} : memref<104x128xf32, #tpu.memory_space<vmem>>, vector<2x128xf32>,
    %451 = vector.extract_strided_slice %439 {offsets = [6, 0], sizes = [2, 128], strides = [1, 1]} : vector<8x128xf32> to vector<2x128xf32>
    %452 = vector.broadcast %440 : vector<1x128xf32> to vector<2x128xf32>
    %453 = arith.addf %451, %452 : vector<2x128xf32>
    %454 = arith.negf %453 : vector<2x128xf32>
    %455 = math.exp %454 : vector<2x128xf32>
    %cst_272 = arith.constant 1.000000e+00 : f32
    %456 = vector.broadcast %cst_272 : f32 to vector<2x128xf32>
    %457 = arith.addf %456, %455 : vector<2x128xf32>
    %458 = arith.divf %456, %457 : vector<2x128xf32>
    %459 = arith.mulf %453, %458 : vector<2x128xf32>
    %c9_273 = arith.constant 9 : index
    %c0_274 = arith.constant 0 : index
    %460 = vector.load %arg5[%c9_273, %c0_274] : memref<104x128xf32, #tpu.memory_space<vmem>>, vector<2x128xf32>
    tpu.vector_store %arg5[%c9_273, %c0_274], %459 {strides = array<i32>} : memref<104x128xf32, #tpu.memory_space<vmem>>, vector<2x128xf32>,
    %cst_275 = arith.constant 0.000000e+00 : f32
    %461 = vector.broadcast %cst_275 : f32 to vector<16x128xf32>
    %c0_276 = arith.constant 0 : index
    %c0_277 = arith.constant 0 : index
    %462 = vector.load %arg6[%c0_276, %c0_277] : memref<104x128xf32, #tpu.memory_space<vmem>>, vector<16x128xf32>
    tpu.vector_store %arg6[%c0_276, %c0_277], %461 {strides = array<i32>} : memref<104x128xf32, #tpu.memory_space<vmem>>, vector<16x128xf32>,
    %cst_278 = arith.constant 0.000000e+00 : f32
    %463 = vector.broadcast %cst_278 : f32 to vector<6x128xf32>
    %c0_279 = arith.constant 0 : index
    %c0_280 = arith.constant 0 : index
    %464 = vector.load %arg5[%c0_279, %c0_280] : memref<104x128xf32, #tpu.memory_space<vmem>>, vector<6x128xf32>
    %465 = arith.truncf %464 : vector<6x128xf32> to vector<6x128xbf16>
    %c37 = arith.constant 37 : index
    %c0_281 = arith.constant 0 : index
    %c0_282 = arith.constant 0 : index
    %466 = vector.load %arg2[%c37, %c0_281, %c0_282] : memref<74x128x128xbf16, #tpu.memory_space<vmem>>, vector<1x128x128xbf16>
    %467 = vector.shape_cast %466 : vector<1x128x128xbf16> to vector<128x128xbf16>
    %cst_283 = arith.constant dense<0.000000e+00> : vector<6x128xf32>
    %468 = tpu.matmul %465, %467, %cst_283 {dimension_numbers = #tpu.dot_dimension_numbers<[1], [0], [0], [1], [0, 0, 1, 1], [], []>} : vector<6x128xbf16>, vector<128x128xbf16>, vector<6x128xf32> -> vector<6x128xf32>
    %469 = arith.addf %463, %468 : vector<6x128xf32>
    %c1_284 = arith.constant 1 : index
    %c0_285 = arith.constant 0 : index
    %470 = vector.load %arg5[%c1_284, %c0_285] : memref<104x128xf32, #tpu.memory_space<vmem>>, vector<6x128xf32>
    %471 = arith.truncf %470 : vector<6x128xf32> to vector<6x128xbf16>
    %c38 = arith.constant 38 : index
    %c0_286 = arith.constant 0 : index
    %c0_287 = arith.constant 0 : index
    %472 = vector.load %arg2[%c38, %c0_286, %c0_287] : memref<74x128x128xbf16, #tpu.memory_space<vmem>>, vector<1x128x128xbf16>
    %473 = vector.shape_cast %472 : vector<1x128x128xbf16> to vector<128x128xbf16>
    %cst_288 = arith.constant dense<0.000000e+00> : vector<6x128xf32>
    %474 = tpu.matmul %471, %473, %cst_288 {dimension_numbers = #tpu.dot_dimension_numbers<[1], [0], [0], [1], [0, 0, 1, 1], [], []>} : vector<6x128xbf16>, vector<128x128xbf16>, vector<6x128xf32> -> vector<6x128xf32>
    %475 = arith.addf %469, %474 : vector<6x128xf32>
    %c2_289 = arith.constant 2 : index
    %c0_290 = arith.constant 0 : index
    %476 = vector.load %arg5[%c2_289, %c0_290] : memref<104x128xf32, #tpu.memory_space<vmem>>, vector<6x128xf32>
    %477 = arith.truncf %476 : vector<6x128xf32> to vector<6x128xbf16>
    %c39 = arith.constant 39 : index
    %c0_291 = arith.constant 0 : index
    %c0_292 = arith.constant 0 : index
    %478 = vector.load %arg2[%c39, %c0_291, %c0_292] : memref<74x128x128xbf16, #tpu.memory_space<vmem>>, vector<1x128x128xbf16>
    %479 = vector.shape_cast %478 : vector<1x128x128xbf16> to vector<128x128xbf16>
    %cst_293 = arith.constant dense<0.000000e+00> : vector<6x128xf32>
    %480 = tpu.matmul %477, %479, %cst_293 {dimension_numbers = #tpu.dot_dimension_numbers<[1], [0], [0], [1], [0, 0, 1, 1], [], []>} : vector<6x128xbf16>, vector<128x128xbf16>, vector<6x128xf32> -> vector<6x128xf32>
    %481 = arith.addf %475, %480 : vector<6x128xf32>
    %c4_294 = arith.constant 4 : index
    %c0_295 = arith.constant 0 : index
    %482 = vector.load %arg5[%c4_294, %c0_295] : memref<104x128xf32, #tpu.memory_space<vmem>>, vector<6x128xf32>
    %483 = arith.truncf %482 : vector<6x128xf32> to vector<6x128xbf16>
    %c40 = arith.constant 40 : index
    %c0_296 = arith.constant 0 : index
    %c0_297 = arith.constant 0 : index
    %484 = vector.load %arg2[%c40, %c0_296, %c0_297] : memref<74x128x128xbf16, #tpu.memory_space<vmem>>, vector<1x128x128xbf16>
    %485 = vector.shape_cast %484 : vector<1x128x128xbf16> to vector<128x128xbf16>
    %cst_298 = arith.constant dense<0.000000e+00> : vector<6x128xf32>
    %486 = tpu.matmul %483, %485, %cst_298 {dimension_numbers = #tpu.dot_dimension_numbers<[1], [0], [0], [1], [0, 0, 1, 1], [], []>} : vector<6x128xbf16>, vector<128x128xbf16>, vector<6x128xf32> -> vector<6x128xf32>
    %487 = arith.addf %481, %486 : vector<6x128xf32>
    %c5_299 = arith.constant 5 : index
    %c0_300 = arith.constant 0 : index
    %488 = vector.load %arg5[%c5_299, %c0_300] : memref<104x128xf32, #tpu.memory_space<vmem>>, vector<6x128xf32>
    %489 = arith.truncf %488 : vector<6x128xf32> to vector<6x128xbf16>
    %c41_301 = arith.constant 41 : index
    %c0_302 = arith.constant 0 : index
    %c0_303 = arith.constant 0 : index
    %490 = vector.load %arg2[%c41_301, %c0_302, %c0_303] : memref<74x128x128xbf16, #tpu.memory_space<vmem>>, vector<1x128x128xbf16>
    %491 = vector.shape_cast %490 : vector<1x128x128xbf16> to vector<128x128xbf16>
    %cst_304 = arith.constant dense<0.000000e+00> : vector<6x128xf32>
    %492 = tpu.matmul %489, %491, %cst_304 {dimension_numbers = #tpu.dot_dimension_numbers<[1], [0], [0], [1], [0, 0, 1, 1], [], []>} : vector<6x128xbf16>, vector<128x128xbf16>, vector<6x128xf32> -> vector<6x128xf32>
    %493 = arith.addf %487, %492 : vector<6x128xf32>
    %c6_305 = arith.constant 6 : index
    %c0_306 = arith.constant 0 : index
    %494 = vector.load %arg5[%c6_305, %c0_306] : memref<104x128xf32, #tpu.memory_space<vmem>>, vector<6x128xf32>
    %495 = arith.truncf %494 : vector<6x128xf32> to vector<6x128xbf16>
    %c42 = arith.constant 42 : index
    %c0_307 = arith.constant 0 : index
    %c0_308 = arith.constant 0 : index
    %496 = vector.load %arg2[%c42, %c0_307, %c0_308] : memref<74x128x128xbf16, #tpu.memory_space<vmem>>, vector<1x128x128xbf16>
    %497 = vector.shape_cast %496 : vector<1x128x128xbf16> to vector<128x128xbf16>
    %cst_309 = arith.constant dense<0.000000e+00> : vector<6x128xf32>
    %498 = tpu.matmul %495, %497, %cst_309 {dimension_numbers = #tpu.dot_dimension_numbers<[1], [0], [0], [1], [0, 0, 1, 1], [], []>} : vector<6x128xbf16>, vector<128x128xbf16>, vector<6x128xf32> -> vector<6x128xf32>
    %499 = arith.addf %493, %498 : vector<6x128xf32>
    %c8_310 = arith.constant 8 : index
    %c0_311 = arith.constant 0 : index
    %500 = vector.load %arg5[%c8_310, %c0_311] : memref<104x128xf32, #tpu.memory_space<vmem>>, vector<6x128xf32>
    %501 = arith.truncf %500 : vector<6x128xf32> to vector<6x128xbf16>
    %c43 = arith.constant 43 : index
    %c0_312 = arith.constant 0 : index
    %c0_313 = arith.constant 0 : index
    %502 = vector.load %arg2[%c43, %c0_312, %c0_313] : memref<74x128x128xbf16, #tpu.memory_space<vmem>>, vector<1x128x128xbf16>
    %503 = vector.shape_cast %502 : vector<1x128x128xbf16> to vector<128x128xbf16>
    %cst_314 = arith.constant dense<0.000000e+00> : vector<6x128xf32>
    %504 = tpu.matmul %501, %503, %cst_314 {dimension_numbers = #tpu.dot_dimension_numbers<[1], [0], [0], [1], [0, 0, 1, 1], [], []>} : vector<6x128xbf16>, vector<128x128xbf16>, vector<6x128xf32> -> vector<6x128xf32>
    %505 = arith.addf %499, %504 : vector<6x128xf32>
    %c9_315 = arith.constant 9 : index
    %c0_316 = arith.constant 0 : index
    %506 = vector.load %arg5[%c9_315, %c0_316] : memref<104x128xf32, #tpu.memory_space<vmem>>, vector<6x128xf32>
    %507 = arith.truncf %506 : vector<6x128xf32> to vector<6x128xbf16>
    %c44 = arith.constant 44 : index
    %c0_317 = arith.constant 0 : index
    %c0_318 = arith.constant 0 : index
    %508 = vector.load %arg2[%c44, %c0_317, %c0_318] : memref<74x128x128xbf16, #tpu.memory_space<vmem>>, vector<1x128x128xbf16>
    %509 = vector.shape_cast %508 : vector<1x128x128xbf16> to vector<128x128xbf16>
    %cst_319 = arith.constant dense<0.000000e+00> : vector<6x128xf32>
    %510 = tpu.matmul %507, %509, %cst_319 {dimension_numbers = #tpu.dot_dimension_numbers<[1], [0], [0], [1], [0, 0, 1, 1], [], []>} : vector<6x128xbf16>, vector<128x128xbf16>, vector<6x128xf32> -> vector<6x128xf32>
    %511 = arith.addf %505, %510 : vector<6x128xf32>
    %c10_320 = arith.constant 10 : index
    %c0_321 = arith.constant 0 : index
    %512 = vector.load %arg5[%c10_320, %c0_321] : memref<104x128xf32, #tpu.memory_space<vmem>>, vector<6x128xf32>
    %513 = arith.truncf %512 : vector<6x128xf32> to vector<6x128xbf16>
    %c45 = arith.constant 45 : index
    %c0_322 = arith.constant 0 : index
    %c0_323 = arith.constant 0 : index
    %514 = vector.load %arg2[%c45, %c0_322, %c0_323] : memref<74x128x128xbf16, #tpu.memory_space<vmem>>, vector<1x128x128xbf16>
    %515 = vector.shape_cast %514 : vector<1x128x128xbf16> to vector<128x128xbf16>
    %cst_324 = arith.constant dense<0.000000e+00> : vector<6x128xf32>
    %516 = tpu.matmul %513, %515, %cst_324 {dimension_numbers = #tpu.dot_dimension_numbers<[1], [0], [0], [1], [0, 0, 1, 1], [], []>} : vector<6x128xbf16>, vector<128x128xbf16>, vector<6x128xf32> -> vector<6x128xf32>
    %517 = arith.addf %511, %516 : vector<6x128xf32>
    %c5_325 = arith.constant 5 : index
    %c0_326 = arith.constant 0 : index
    %518 = vector.load %arg3[%c5_325, %c0_326] : memref<16x128xf32, #tpu.memory_space<vmem>>, vector<1x128xf32>
    %519 = vector.extract_strided_slice %517 {offsets = [0, 0], sizes = [2, 128], strides = [1, 1]} : vector<6x128xf32> to vector<2x128xf32>
    %520 = vector.broadcast %518 : vector<1x128xf32> to vector<2x128xf32>
    %521 = arith.addf %519, %520 : vector<2x128xf32>
    %522 = arith.negf %521 : vector<2x128xf32>
    %523 = math.exp %522 : vector<2x128xf32>
    %cst_327 = arith.constant 1.000000e+00 : f32
    %524 = vector.broadcast %cst_327 : f32 to vector<2x128xf32>
    %525 = arith.addf %524, %523 : vector<2x128xf32>
    %526 = arith.divf %524, %525 : vector<2x128xf32>
    %527 = arith.mulf %521, %526 : vector<2x128xf32>
    %c5_328 = arith.constant 5 : index
    %c0_329 = arith.constant 0 : index
    %528 = vector.load %arg6[%c5_328, %c0_329] : memref<104x128xf32, #tpu.memory_space<vmem>>, vector<2x128xf32>
    tpu.vector_store %arg6[%c5_328, %c0_329], %527 {strides = array<i32>} : memref<104x128xf32, #tpu.memory_space<vmem>>, vector<2x128xf32>,
    %529 = vector.extract_strided_slice %517 {offsets = [4, 0], sizes = [2, 128], strides = [1, 1]} : vector<6x128xf32> to vector<2x128xf32>
    %530 = vector.broadcast %518 : vector<1x128xf32> to vector<2x128xf32>
    %531 = arith.addf %529, %530 : vector<2x128xf32>
    %532 = arith.negf %531 : vector<2x128xf32>
    %533 = math.exp %532 : vector<2x128xf32>
    %cst_330 = arith.constant 1.000000e+00 : f32
    %534 = vector.broadcast %cst_330 : f32 to vector<2x128xf32>
    %535 = arith.addf %534, %533 : vector<2x128xf32>
    %536 = arith.divf %534, %535 : vector<2x128xf32>
    %537 = arith.mulf %531, %536 : vector<2x128xf32>
    %c9_331 = arith.constant 9 : index
    %c0_332 = arith.constant 0 : index
    %538 = vector.load %arg6[%c9_331, %c0_332] : memref<104x128xf32, #tpu.memory_space<vmem>>, vector<2x128xf32>
    tpu.vector_store %arg6[%c9_331, %c0_332], %537 {strides = array<i32>} : memref<104x128xf32, #tpu.memory_space<vmem>>, vector<2x128xf32>,
    %cst_333 = arith.constant 0.000000e+00 : f32
    %539 = vector.broadcast %cst_333 : f32 to vector<16x128xf32>
    %c0_334 = arith.constant 0 : index
    %c0_335 = arith.constant 0 : index
    %540 = vector.load %arg5[%c0_334, %c0_335] : memref<104x128xf32, #tpu.memory_space<vmem>>, vector<16x128xf32>
    tpu.vector_store %arg5[%c0_334, %c0_335], %539 {strides = array<i32>} : memref<104x128xf32, #tpu.memory_space<vmem>>, vector<16x128xf32>,
    %cst_336 = arith.constant 0.000000e+00 : f32
    %541 = vector.broadcast %cst_336 : f32 to vector<6x128xf32>
    %c0_337 = arith.constant 0 : index
    %c0_338 = arith.constant 0 : index
    %542 = vector.load %arg6[%c0_337, %c0_338] : memref<104x128xf32, #tpu.memory_space<vmem>>, vector<6x128xf32>
    %543 = arith.truncf %542 : vector<6x128xf32> to vector<6x128xbf16>
    %c46 = arith.constant 46 : index
    %c0_339 = arith.constant 0 : index
    %c0_340 = arith.constant 0 : index
    %544 = vector.load %arg2[%c46, %c0_339, %c0_340] : memref<74x128x128xbf16, #tpu.memory_space<vmem>>, vector<1x128x128xbf16>
    %545 = vector.shape_cast %544 : vector<1x128x128xbf16> to vector<128x128xbf16>
    %cst_341 = arith.constant dense<0.000000e+00> : vector<6x128xf32>
    %546 = tpu.matmul %543, %545, %cst_341 {dimension_numbers = #tpu.dot_dimension_numbers<[1], [0], [0], [1], [0, 0, 1, 1], [], []>} : vector<6x128xbf16>, vector<128x128xbf16>, vector<6x128xf32> -> vector<6x128xf32>
    %547 = arith.addf %541, %546 : vector<6x128xf32>
    %c1_342 = arith.constant 1 : index
    %c0_343 = arith.constant 0 : index
    %548 = vector.load %arg6[%c1_342, %c0_343] : memref<104x128xf32, #tpu.memory_space<vmem>>, vector<6x128xf32>
    %549 = arith.truncf %548 : vector<6x128xf32> to vector<6x128xbf16>
    %c47 = arith.constant 47 : index
    %c0_344 = arith.constant 0 : index
    %c0_345 = arith.constant 0 : index
    %550 = vector.load %arg2[%c47, %c0_344, %c0_345] : memref<74x128x128xbf16, #tpu.memory_space<vmem>>, vector<1x128x128xbf16>
    %551 = vector.shape_cast %550 : vector<1x128x128xbf16> to vector<128x128xbf16>
    %cst_346 = arith.constant dense<0.000000e+00> : vector<6x128xf32>
    %552 = tpu.matmul %549, %551, %cst_346 {dimension_numbers = #tpu.dot_dimension_numbers<[1], [0], [0], [1], [0, 0, 1, 1], [], []>} : vector<6x128xbf16>, vector<128x128xbf16>, vector<6x128xf32> -> vector<6x128xf32>
    %553 = arith.addf %547, %552 : vector<6x128xf32>
    %c2_347 = arith.constant 2 : index
    %c0_348 = arith.constant 0 : index
    %554 = vector.load %arg6[%c2_347, %c0_348] : memref<104x128xf32, #tpu.memory_space<vmem>>, vector<6x128xf32>
    %555 = arith.truncf %554 : vector<6x128xf32> to vector<6x128xbf16>
    %c48 = arith.constant 48 : index
    %c0_349 = arith.constant 0 : index
    %c0_350 = arith.constant 0 : index
    %556 = vector.load %arg2[%c48, %c0_349, %c0_350] : memref<74x128x128xbf16, #tpu.memory_space<vmem>>, vector<1x128x128xbf16>
    %557 = vector.shape_cast %556 : vector<1x128x128xbf16> to vector<128x128xbf16>
    %cst_351 = arith.constant dense<0.000000e+00> : vector<6x128xf32>
    %558 = tpu.matmul %555, %557, %cst_351 {dimension_numbers = #tpu.dot_dimension_numbers<[1], [0], [0], [1], [0, 0, 1, 1], [], []>} : vector<6x128xbf16>, vector<128x128xbf16>, vector<6x128xf32> -> vector<6x128xf32>
    %559 = arith.addf %553, %558 : vector<6x128xf32>
    %c4_352 = arith.constant 4 : index
    %c0_353 = arith.constant 0 : index
    %560 = vector.load %arg6[%c4_352, %c0_353] : memref<104x128xf32, #tpu.memory_space<vmem>>, vector<6x128xf32>
    %561 = arith.truncf %560 : vector<6x128xf32> to vector<6x128xbf16>
    %c49 = arith.constant 49 : index
    %c0_354 = arith.constant 0 : index
    %c0_355 = arith.constant 0 : index
    %562 = vector.load %arg2[%c49, %c0_354, %c0_355] : memref<74x128x128xbf16, #tpu.memory_space<vmem>>, vector<1x128x128xbf16>
    %563 = vector.shape_cast %562 : vector<1x128x128xbf16> to vector<128x128xbf16>
    %cst_356 = arith.constant dense<0.000000e+00> : vector<6x128xf32>
    %564 = tpu.matmul %561, %563, %cst_356 {dimension_numbers = #tpu.dot_dimension_numbers<[1], [0], [0], [1], [0, 0, 1, 1], [], []>} : vector<6x128xbf16>, vector<128x128xbf16>, vector<6x128xf32> -> vector<6x128xf32>
    %565 = arith.addf %559, %564 : vector<6x128xf32>
    %c5_357 = arith.constant 5 : index
    %c0_358 = arith.constant 0 : index
    %566 = vector.load %arg6[%c5_357, %c0_358] : memref<104x128xf32, #tpu.memory_space<vmem>>, vector<6x128xf32>
    %567 = arith.truncf %566 : vector<6x128xf32> to vector<6x128xbf16>
    %c50 = arith.constant 50 : index
    %c0_359 = arith.constant 0 : index
    %c0_360 = arith.constant 0 : index
    %568 = vector.load %arg2[%c50, %c0_359, %c0_360] : memref<74x128x128xbf16, #tpu.memory_space<vmem>>, vector<1x128x128xbf16>
    %569 = vector.shape_cast %568 : vector<1x128x128xbf16> to vector<128x128xbf16>
    %cst_361 = arith.constant dense<0.000000e+00> : vector<6x128xf32>
    %570 = tpu.matmul %567, %569, %cst_361 {dimension_numbers = #tpu.dot_dimension_numbers<[1], [0], [0], [1], [0, 0, 1, 1], [], []>} : vector<6x128xbf16>, vector<128x128xbf16>, vector<6x128xf32> -> vector<6x128xf32>
    %571 = arith.addf %565, %570 : vector<6x128xf32>
    %c6_362 = arith.constant 6 : index
    %c0_363 = arith.constant 0 : index
    %572 = vector.load %arg6[%c6_362, %c0_363] : memref<104x128xf32, #tpu.memory_space<vmem>>, vector<6x128xf32>
    %573 = arith.truncf %572 : vector<6x128xf32> to vector<6x128xbf16>
    %c51_364 = arith.constant 51 : index
    %c0_365 = arith.constant 0 : index
    %c0_366 = arith.constant 0 : index
    %574 = vector.load %arg2[%c51_364, %c0_365, %c0_366] : memref<74x128x128xbf16, #tpu.memory_space<vmem>>, vector<1x128x128xbf16>
    %575 = vector.shape_cast %574 : vector<1x128x128xbf16> to vector<128x128xbf16>
    %cst_367 = arith.constant dense<0.000000e+00> : vector<6x128xf32>
    %576 = tpu.matmul %573, %575, %cst_367 {dimension_numbers = #tpu.dot_dimension_numbers<[1], [0], [0], [1], [0, 0, 1, 1], [], []>} : vector<6x128xbf16>, vector<128x128xbf16>, vector<6x128xf32> -> vector<6x128xf32>
    %577 = arith.addf %571, %576 : vector<6x128xf32>
    %c8_368 = arith.constant 8 : index
    %c0_369 = arith.constant 0 : index
    %578 = vector.load %arg6[%c8_368, %c0_369] : memref<104x128xf32, #tpu.memory_space<vmem>>, vector<6x128xf32>
    %579 = arith.truncf %578 : vector<6x128xf32> to vector<6x128xbf16>
    %c52 = arith.constant 52 : index
    %c0_370 = arith.constant 0 : index
    %c0_371 = arith.constant 0 : index
    %580 = vector.load %arg2[%c52, %c0_370, %c0_371] : memref<74x128x128xbf16, #tpu.memory_space<vmem>>, vector<1x128x128xbf16>
    %581 = vector.shape_cast %580 : vector<1x128x128xbf16> to vector<128x128xbf16>
    %cst_372 = arith.constant dense<0.000000e+00> : vector<6x128xf32>
    %582 = tpu.matmul %579, %581, %cst_372 {dimension_numbers = #tpu.dot_dimension_numbers<[1], [0], [0], [1], [0, 0, 1, 1], [], []>} : vector<6x128xbf16>, vector<128x128xbf16>, vector<6x128xf32> -> vector<6x128xf32>
    %583 = arith.addf %577, %582 : vector<6x128xf32>
    %c9_373 = arith.constant 9 : index
    %c0_374 = arith.constant 0 : index
    %584 = vector.load %arg6[%c9_373, %c0_374] : memref<104x128xf32, #tpu.memory_space<vmem>>, vector<6x128xf32>
    %585 = arith.truncf %584 : vector<6x128xf32> to vector<6x128xbf16>
    %c53 = arith.constant 53 : index
    %c0_375 = arith.constant 0 : index
    %c0_376 = arith.constant 0 : index
    %586 = vector.load %arg2[%c53, %c0_375, %c0_376] : memref<74x128x128xbf16, #tpu.memory_space<vmem>>, vector<1x128x128xbf16>
    %587 = vector.shape_cast %586 : vector<1x128x128xbf16> to vector<128x128xbf16>
    %cst_377 = arith.constant dense<0.000000e+00> : vector<6x128xf32>
    %588 = tpu.matmul %585, %587, %cst_377 {dimension_numbers = #tpu.dot_dimension_numbers<[1], [0], [0], [1], [0, 0, 1, 1], [], []>} : vector<6x128xbf16>, vector<128x128xbf16>, vector<6x128xf32> -> vector<6x128xf32>
    %589 = arith.addf %583, %588 : vector<6x128xf32>
    %c10_378 = arith.constant 10 : index
    %c0_379 = arith.constant 0 : index
    %590 = vector.load %arg6[%c10_378, %c0_379] : memref<104x128xf32, #tpu.memory_space<vmem>>, vector<6x128xf32>
    %591 = arith.truncf %590 : vector<6x128xf32> to vector<6x128xbf16>
    %c54 = arith.constant 54 : index
    %c0_380 = arith.constant 0 : index
    %c0_381 = arith.constant 0 : index
    %592 = vector.load %arg2[%c54, %c0_380, %c0_381] : memref<74x128x128xbf16, #tpu.memory_space<vmem>>, vector<1x128x128xbf16>
    %593 = vector.shape_cast %592 : vector<1x128x128xbf16> to vector<128x128xbf16>
    %cst_382 = arith.constant dense<0.000000e+00> : vector<6x128xf32>
    %594 = tpu.matmul %591, %593, %cst_382 {dimension_numbers = #tpu.dot_dimension_numbers<[1], [0], [0], [1], [0, 0, 1, 1], [], []>} : vector<6x128xbf16>, vector<128x128xbf16>, vector<6x128xf32> -> vector<6x128xf32>
    %595 = arith.addf %589, %594 : vector<6x128xf32>
    %c6_383 = arith.constant 6 : index
    %c0_384 = arith.constant 0 : index
    %596 = vector.load %arg3[%c6_383, %c0_384] : memref<16x128xf32, #tpu.memory_space<vmem>>, vector<1x128xf32>
    %597 = vector.extract_strided_slice %595 {offsets = [0, 0], sizes = [2, 128], strides = [1, 1]} : vector<6x128xf32> to vector<2x128xf32>
    %598 = vector.broadcast %596 : vector<1x128xf32> to vector<2x128xf32>
    %599 = arith.addf %597, %598 : vector<2x128xf32>
    %600 = arith.negf %599 : vector<2x128xf32>
    %601 = math.exp %600 : vector<2x128xf32>
    %cst_385 = arith.constant 1.000000e+00 : f32
    %602 = vector.broadcast %cst_385 : f32 to vector<2x128xf32>
    %603 = arith.addf %602, %601 : vector<2x128xf32>
    %604 = arith.divf %602, %603 : vector<2x128xf32>
    %605 = arith.mulf %599, %604 : vector<2x128xf32>
    %c5_386 = arith.constant 5 : index
    %c0_387 = arith.constant 0 : index
    %606 = vector.load %arg5[%c5_386, %c0_387] : memref<104x128xf32, #tpu.memory_space<vmem>>, vector<2x128xf32>
    tpu.vector_store %arg5[%c5_386, %c0_387], %605 {strides = array<i32>} : memref<104x128xf32, #tpu.memory_space<vmem>>, vector<2x128xf32>,
    %607 = vector.extract_strided_slice %595 {offsets = [4, 0], sizes = [2, 128], strides = [1, 1]} : vector<6x128xf32> to vector<2x128xf32>
    %608 = vector.broadcast %596 : vector<1x128xf32> to vector<2x128xf32>
    %609 = arith.addf %607, %608 : vector<2x128xf32>
    %610 = arith.negf %609 : vector<2x128xf32>
    %611 = math.exp %610 : vector<2x128xf32>
    %cst_388 = arith.constant 1.000000e+00 : f32
    %612 = vector.broadcast %cst_388 : f32 to vector<2x128xf32>
    %613 = arith.addf %612, %611 : vector<2x128xf32>
    %614 = arith.divf %612, %613 : vector<2x128xf32>
    %615 = arith.mulf %609, %614 : vector<2x128xf32>
    %c9_389 = arith.constant 9 : index
    %c0_390 = arith.constant 0 : index
    %616 = vector.load %arg5[%c9_389, %c0_390] : memref<104x128xf32, #tpu.memory_space<vmem>>, vector<2x128xf32>
    tpu.vector_store %arg5[%c9_389, %c0_390], %615 {strides = array<i32>} : memref<104x128xf32, #tpu.memory_space<vmem>>, vector<2x128xf32>,
    %cst_391 = arith.constant 0.000000e+00 : f32
    %617 = vector.broadcast %cst_391 : f32 to vector<16x128xf32>
    %c0_392 = arith.constant 0 : index
    %c0_393 = arith.constant 0 : index
    %618 = vector.load %arg6[%c0_392, %c0_393] : memref<104x128xf32, #tpu.memory_space<vmem>>, vector<16x128xf32>
    tpu.vector_store %arg6[%c0_392, %c0_393], %617 {strides = array<i32>} : memref<104x128xf32, #tpu.memory_space<vmem>>, vector<16x128xf32>,
    %cst_394 = arith.constant 0.000000e+00 : f32
    %619 = vector.broadcast %cst_394 : f32 to vector<1x128xf32>
    %c0_395 = arith.constant 0 : index
    %c0_396 = arith.constant 0 : index
    %620 = tpu.strided_load %arg5[%c0_395, %c0_396] {strides = array<i32: 2, 1>} : memref<104x128xf32, #tpu.memory_space<vmem>>, vector<1x128xf32>
    %621 = arith.truncf %620 : vector<1x128xf32> to vector<1x128xbf16>
    %c55 = arith.constant 55 : index
    %c0_397 = arith.constant 0 : index
    %c0_398 = arith.constant 0 : index
    %622 = vector.load %arg2[%c55, %c0_397, %c0_398] : memref<74x128x128xbf16, #tpu.memory_space<vmem>>, vector<1x128x128xbf16>
    %623 = vector.shape_cast %622 : vector<1x128x128xbf16> to vector<128x128xbf16>
    %cst_399 = arith.constant dense<0.000000e+00> : vector<1x128xf32>
    %624 = tpu.matmul %621, %623, %cst_399 {dimension_numbers = #tpu.dot_dimension_numbers<[1], [0], [0], [1], [0, 0, 1, 1], [], []>} : vector<1x128xbf16>, vector<128x128xbf16>, vector<1x128xf32> -> vector<1x128xf32>
    %625 = arith.addf %619, %624 : vector<1x128xf32>
    %c1_400 = arith.constant 1 : index
    %c0_401 = arith.constant 0 : index
    %626 = tpu.strided_load %arg5[%c1_400, %c0_401] {strides = array<i32: 2, 1>} : memref<104x128xf32, #tpu.memory_space<vmem>>, vector<1x128xf32>
    %627 = arith.truncf %626 : vector<1x128xf32> to vector<1x128xbf16>
    %c56 = arith.constant 56 : index
    %c0_402 = arith.constant 0 : index
    %c0_403 = arith.constant 0 : index
    %628 = vector.load %arg2[%c56, %c0_402, %c0_403] : memref<74x128x128xbf16, #tpu.memory_space<vmem>>, vector<1x128x128xbf16>
    %629 = vector.shape_cast %628 : vector<1x128x128xbf16> to vector<128x128xbf16>
    %cst_404 = arith.constant dense<0.000000e+00> : vector<1x128xf32>
    %630 = tpu.matmul %627, %629, %cst_404 {dimension_numbers = #tpu.dot_dimension_numbers<[1], [0], [0], [1], [0, 0, 1, 1], [], []>} : vector<1x128xbf16>, vector<128x128xbf16>, vector<1x128xf32> -> vector<1x128xf32>
    %631 = arith.addf %625, %630 : vector<1x128xf32>
    %c2_405 = arith.constant 2 : index
    %c0_406 = arith.constant 0 : index
    %632 = tpu.strided_load %arg5[%c2_405, %c0_406] {strides = array<i32: 2, 1>} : memref<104x128xf32, #tpu.memory_space<vmem>>, vector<1x128xf32>
    %633 = arith.truncf %632 : vector<1x128xf32> to vector<1x128xbf16>
    %c57 = arith.constant 57 : index
    %c0_407 = arith.constant 0 : index
    %c0_408 = arith.constant 0 : index
    %634 = vector.load %arg2[%c57, %c0_407, %c0_408] : memref<74x128x128xbf16, #tpu.memory_space<vmem>>, vector<1x128x128xbf16>
    %635 = vector.shape_cast %634 : vector<1x128x128xbf16> to vector<128x128xbf16>
    %cst_409 = arith.constant dense<0.000000e+00> : vector<1x128xf32>
    %636 = tpu.matmul %633, %635, %cst_409 {dimension_numbers = #tpu.dot_dimension_numbers<[1], [0], [0], [1], [0, 0, 1, 1], [], []>} : vector<1x128xbf16>, vector<128x128xbf16>, vector<1x128xf32> -> vector<1x128xf32>
    %637 = arith.addf %631, %636 : vector<1x128xf32>
    %c4_410 = arith.constant 4 : index
    %c0_411 = arith.constant 0 : index
    %638 = tpu.strided_load %arg5[%c4_410, %c0_411] {strides = array<i32: 2, 1>} : memref<104x128xf32, #tpu.memory_space<vmem>>, vector<1x128xf32>
    %639 = arith.truncf %638 : vector<1x128xf32> to vector<1x128xbf16>
    %c58 = arith.constant 58 : index
    %c0_412 = arith.constant 0 : index
    %c0_413 = arith.constant 0 : index
    %640 = vector.load %arg2[%c58, %c0_412, %c0_413] : memref<74x128x128xbf16, #tpu.memory_space<vmem>>, vector<1x128x128xbf16>
    %641 = vector.shape_cast %640 : vector<1x128x128xbf16> to vector<128x128xbf16>
    %cst_414 = arith.constant dense<0.000000e+00> : vector<1x128xf32>
    %642 = tpu.matmul %639, %641, %cst_414 {dimension_numbers = #tpu.dot_dimension_numbers<[1], [0], [0], [1], [0, 0, 1, 1], [], []>} : vector<1x128xbf16>, vector<128x128xbf16>, vector<1x128xf32> -> vector<1x128xf32>
    %643 = arith.addf %637, %642 : vector<1x128xf32>
    %c5_415 = arith.constant 5 : index
    %c0_416 = arith.constant 0 : index
    %644 = tpu.strided_load %arg5[%c5_415, %c0_416] {strides = array<i32: 2, 1>} : memref<104x128xf32, #tpu.memory_space<vmem>>, vector<1x128xf32>
    %645 = arith.truncf %644 : vector<1x128xf32> to vector<1x128xbf16>
    %c59 = arith.constant 59 : index
    %c0_417 = arith.constant 0 : index
    %c0_418 = arith.constant 0 : index
    %646 = vector.load %arg2[%c59, %c0_417, %c0_418] : memref<74x128x128xbf16, #tpu.memory_space<vmem>>, vector<1x128x128xbf16>
    %647 = vector.shape_cast %646 : vector<1x128x128xbf16> to vector<128x128xbf16>
    %cst_419 = arith.constant dense<0.000000e+00> : vector<1x128xf32>
    %648 = tpu.matmul %645, %647, %cst_419 {dimension_numbers = #tpu.dot_dimension_numbers<[1], [0], [0], [1], [0, 0, 1, 1], [], []>} : vector<1x128xbf16>, vector<128x128xbf16>, vector<1x128xf32> -> vector<1x128xf32>
    %649 = arith.addf %643, %648 : vector<1x128xf32>
    %c6_420 = arith.constant 6 : index
    %c0_421 = arith.constant 0 : index
    %650 = tpu.strided_load %arg5[%c6_420, %c0_421] {strides = array<i32: 2, 1>} : memref<104x128xf32, #tpu.memory_space<vmem>>, vector<1x128xf32>
    %651 = arith.truncf %650 : vector<1x128xf32> to vector<1x128xbf16>
    %c60 = arith.constant 60 : index
    %c0_422 = arith.constant 0 : index
    %c0_423 = arith.constant 0 : index
    %652 = vector.load %arg2[%c60, %c0_422, %c0_423] : memref<74x128x128xbf16, #tpu.memory_space<vmem>>, vector<1x128x128xbf16>
    %653 = vector.shape_cast %652 : vector<1x128x128xbf16> to vector<128x128xbf16>
    %cst_424 = arith.constant dense<0.000000e+00> : vector<1x128xf32>
    %654 = tpu.matmul %651, %653, %cst_424 {dimension_numbers = #tpu.dot_dimension_numbers<[1], [0], [0], [1], [0, 0, 1, 1], [], []>} : vector<1x128xbf16>, vector<128x128xbf16>, vector<1x128xf32> -> vector<1x128xf32>
    %655 = arith.addf %649, %654 : vector<1x128xf32>
    %c8_425 = arith.constant 8 : index
    %c0_426 = arith.constant 0 : index
    %656 = tpu.strided_load %arg5[%c8_425, %c0_426] {strides = array<i32: 2, 1>} : memref<104x128xf32, #tpu.memory_space<vmem>>, vector<1x128xf32>
    %657 = arith.truncf %656 : vector<1x128xf32> to vector<1x128xbf16>
    %c61_427 = arith.constant 61 : index
    %c0_428 = arith.constant 0 : index
    %c0_429 = arith.constant 0 : index
    %658 = vector.load %arg2[%c61_427, %c0_428, %c0_429] : memref<74x128x128xbf16, #tpu.memory_space<vmem>>, vector<1x128x128xbf16>
    %659 = vector.shape_cast %658 : vector<1x128x128xbf16> to vector<128x128xbf16>
    %cst_430 = arith.constant dense<0.000000e+00> : vector<1x128xf32>
    %660 = tpu.matmul %657, %659, %cst_430 {dimension_numbers = #tpu.dot_dimension_numbers<[1], [0], [0], [1], [0, 0, 1, 1], [], []>} : vector<1x128xbf16>, vector<128x128xbf16>, vector<1x128xf32> -> vector<1x128xf32>
    %661 = arith.addf %655, %660 : vector<1x128xf32>
    %c9_431 = arith.constant 9 : index
    %c0_432 = arith.constant 0 : index
    %662 = tpu.strided_load %arg5[%c9_431, %c0_432] {strides = array<i32: 2, 1>} : memref<104x128xf32, #tpu.memory_space<vmem>>, vector<1x128xf32>
    %663 = arith.truncf %662 : vector<1x128xf32> to vector<1x128xbf16>
    %c62 = arith.constant 62 : index
    %c0_433 = arith.constant 0 : index
    %c0_434 = arith.constant 0 : index
    %664 = vector.load %arg2[%c62, %c0_433, %c0_434] : memref<74x128x128xbf16, #tpu.memory_space<vmem>>, vector<1x128x128xbf16>
    %665 = vector.shape_cast %664 : vector<1x128x128xbf16> to vector<128x128xbf16>
    %cst_435 = arith.constant dense<0.000000e+00> : vector<1x128xf32>
    %666 = tpu.matmul %663, %665, %cst_435 {dimension_numbers = #tpu.dot_dimension_numbers<[1], [0], [0], [1], [0, 0, 1, 1], [], []>} : vector<1x128xbf16>, vector<128x128xbf16>, vector<1x128xf32> -> vector<1x128xf32>
    %667 = arith.addf %661, %666 : vector<1x128xf32>
    %c10_436 = arith.constant 10 : index
    %c0_437 = arith.constant 0 : index
    %668 = tpu.strided_load %arg5[%c10_436, %c0_437] {strides = array<i32: 2, 1>} : memref<104x128xf32, #tpu.memory_space<vmem>>, vector<1x128xf32>
    %669 = arith.truncf %668 : vector<1x128xf32> to vector<1x128xbf16>
    %c63 = arith.constant 63 : index
    %c0_438 = arith.constant 0 : index
    %c0_439 = arith.constant 0 : index
    %670 = vector.load %arg2[%c63, %c0_438, %c0_439] : memref<74x128x128xbf16, #tpu.memory_space<vmem>>, vector<1x128x128xbf16>
    %671 = vector.shape_cast %670 : vector<1x128x128xbf16> to vector<128x128xbf16>
    %cst_440 = arith.constant dense<0.000000e+00> : vector<1x128xf32>
    %672 = tpu.matmul %669, %671, %cst_440 {dimension_numbers = #tpu.dot_dimension_numbers<[1], [0], [0], [1], [0, 0, 1, 1], [], []>} : vector<1x128xbf16>, vector<128x128xbf16>, vector<1x128xf32> -> vector<1x128xf32>
    %673 = arith.addf %667, %672 : vector<1x128xf32>
    %c7_441 = arith.constant 7 : index
    %c0_442 = arith.constant 0 : index
    %674 = vector.load %arg3[%c7_441, %c0_442] : memref<16x128xf32, #tpu.memory_space<vmem>>, vector<1x128xf32>
    %675 = arith.addf %673, %674 : vector<1x128xf32>
    %676 = arith.negf %675 : vector<1x128xf32>
    %677 = math.exp %676 : vector<1x128xf32>
    %cst_443 = arith.constant 1.000000e+00 : f32
    %678 = vector.broadcast %cst_443 : f32 to vector<1x128xf32>
    %679 = arith.addf %678, %677 : vector<1x128xf32>
    %680 = arith.divf %678, %679 : vector<1x128xf32>
    %681 = arith.mulf %675, %680 : vector<1x128xf32>
    %c4_444 = arith.constant 4 : index
    %c0_445 = arith.constant 0 : index
    %682 = vector.load %arg6[%c4_444, %c0_445] : memref<104x128xf32, #tpu.memory_space<vmem>>, vector<1x128xf32>
    tpu.vector_store %arg6[%c4_444, %c0_445], %681 {strides = array<i32>} : memref<104x128xf32, #tpu.memory_space<vmem>>, vector<1x128xf32>,
    %cst_446 = arith.constant 0.000000e+00 : f32
    %683 = vector.broadcast %cst_446 : f32 to vector<8x128xf32>
    %c0_447 = arith.constant 0 : index
    %c0_448 = arith.constant 0 : index
    %684 = vector.load %arg5[%c0_447, %c0_448] : memref<104x128xf32, #tpu.memory_space<vmem>>, vector<8x128xf32>
    tpu.vector_store %arg5[%c0_447, %c0_448], %683 {strides = array<i32>} : memref<104x128xf32, #tpu.memory_space<vmem>>, vector<8x128xf32>,
    %cst_449 = arith.constant 0.000000e+00 : f32
    %685 = vector.broadcast %cst_449 : f32 to vector<1x128xf32>
    %c0_450 = arith.constant 0 : index
    %c0_451 = arith.constant 0 : index
    %686 = vector.load %arg6[%c0_450, %c0_451] : memref<104x128xf32, #tpu.memory_space<vmem>>, vector<1x128xf32>
    %687 = arith.truncf %686 : vector<1x128xf32> to vector<1x128xbf16>
    %c64 = arith.constant 64 : index
    %c0_452 = arith.constant 0 : index
    %c0_453 = arith.constant 0 : index
    %688 = vector.load %arg2[%c64, %c0_452, %c0_453] : memref<74x128x128xbf16, #tpu.memory_space<vmem>>, vector<1x128x128xbf16>
    %689 = vector.shape_cast %688 : vector<1x128x128xbf16> to vector<128x128xbf16>
    %cst_454 = arith.constant dense<0.000000e+00> : vector<1x128xf32>
    %690 = tpu.matmul %687, %689, %cst_454 {dimension_numbers = #tpu.dot_dimension_numbers<[1], [0], [0], [1], [0, 0, 1, 1], [], []>} : vector<1x128xbf16>, vector<128x128xbf16>, vector<1x128xf32> -> vector<1x128xf32>
    %691 = arith.addf %685, %690 : vector<1x128xf32>
    %c1_455 = arith.constant 1 : index
    %c0_456 = arith.constant 0 : index
    %692 = vector.load %arg6[%c1_455, %c0_456] : memref<104x128xf32, #tpu.memory_space<vmem>>, vector<1x128xf32>
    %693 = arith.truncf %692 : vector<1x128xf32> to vector<1x128xbf16>
    %c65 = arith.constant 65 : index
    %c0_457 = arith.constant 0 : index
    %c0_458 = arith.constant 0 : index
    %694 = vector.load %arg2[%c65, %c0_457, %c0_458] : memref<74x128x128xbf16, #tpu.memory_space<vmem>>, vector<1x128x128xbf16>
    %695 = vector.shape_cast %694 : vector<1x128x128xbf16> to vector<128x128xbf16>
    %cst_459 = arith.constant dense<0.000000e+00> : vector<1x128xf32>
    %696 = tpu.matmul %693, %695, %cst_459 {dimension_numbers = #tpu.dot_dimension_numbers<[1], [0], [0], [1], [0, 0, 1, 1], [], []>} : vector<1x128xbf16>, vector<128x128xbf16>, vector<1x128xf32> -> vector<1x128xf32>
    %697 = arith.addf %691, %696 : vector<1x128xf32>
    %c2_460 = arith.constant 2 : index
    %c0_461 = arith.constant 0 : index
    %698 = vector.load %arg6[%c2_460, %c0_461] : memref<104x128xf32, #tpu.memory_space<vmem>>, vector<1x128xf32>
    %699 = arith.truncf %698 : vector<1x128xf32> to vector<1x128xbf16>
    %c66 = arith.constant 66 : index
    %c0_462 = arith.constant 0 : index
    %c0_463 = arith.constant 0 : index
    %700 = vector.load %arg2[%c66, %c0_462, %c0_463] : memref<74x128x128xbf16, #tpu.memory_space<vmem>>, vector<1x128x128xbf16>
    %701 = vector.shape_cast %700 : vector<1x128x128xbf16> to vector<128x128xbf16>
    %cst_464 = arith.constant dense<0.000000e+00> : vector<1x128xf32>
    %702 = tpu.matmul %699, %701, %cst_464 {dimension_numbers = #tpu.dot_dimension_numbers<[1], [0], [0], [1], [0, 0, 1, 1], [], []>} : vector<1x128xbf16>, vector<128x128xbf16>, vector<1x128xf32> -> vector<1x128xf32>
    %703 = arith.addf %697, %702 : vector<1x128xf32>
    %c3_465 = arith.constant 3 : index
    %c0_466 = arith.constant 0 : index
    %704 = vector.load %arg6[%c3_465, %c0_466] : memref<104x128xf32, #tpu.memory_space<vmem>>, vector<1x128xf32>
    %705 = arith.truncf %704 : vector<1x128xf32> to vector<1x128xbf16>
    %c67 = arith.constant 67 : index
    %c0_467 = arith.constant 0 : index
    %c0_468 = arith.constant 0 : index
    %706 = vector.load %arg2[%c67, %c0_467, %c0_468] : memref<74x128x128xbf16, #tpu.memory_space<vmem>>, vector<1x128x128xbf16>
    %707 = vector.shape_cast %706 : vector<1x128x128xbf16> to vector<128x128xbf16>
    %cst_469 = arith.constant dense<0.000000e+00> : vector<1x128xf32>
    %708 = tpu.matmul %705, %707, %cst_469 {dimension_numbers = #tpu.dot_dimension_numbers<[1], [0], [0], [1], [0, 0, 1, 1], [], []>} : vector<1x128xbf16>, vector<128x128xbf16>, vector<1x128xf32> -> vector<1x128xf32>
    %709 = arith.addf %703, %708 : vector<1x128xf32>
    %c4_470 = arith.constant 4 : index
    %c0_471 = arith.constant 0 : index
    %710 = vector.load %arg6[%c4_470, %c0_471] : memref<104x128xf32, #tpu.memory_space<vmem>>, vector<1x128xf32>
    %711 = arith.truncf %710 : vector<1x128xf32> to vector<1x128xbf16>
    %c68 = arith.constant 68 : index
    %c0_472 = arith.constant 0 : index
    %c0_473 = arith.constant 0 : index
    %712 = vector.load %arg2[%c68, %c0_472, %c0_473] : memref<74x128x128xbf16, #tpu.memory_space<vmem>>, vector<1x128x128xbf16>
    %713 = vector.shape_cast %712 : vector<1x128x128xbf16> to vector<128x128xbf16>
    %cst_474 = arith.constant dense<0.000000e+00> : vector<1x128xf32>
    %714 = tpu.matmul %711, %713, %cst_474 {dimension_numbers = #tpu.dot_dimension_numbers<[1], [0], [0], [1], [0, 0, 1, 1], [], []>} : vector<1x128xbf16>, vector<128x128xbf16>, vector<1x128xf32> -> vector<1x128xf32>
    %715 = arith.addf %709, %714 : vector<1x128xf32>
    %c5_475 = arith.constant 5 : index
    %c0_476 = arith.constant 0 : index
    %716 = vector.load %arg6[%c5_475, %c0_476] : memref<104x128xf32, #tpu.memory_space<vmem>>, vector<1x128xf32>
    %717 = arith.truncf %716 : vector<1x128xf32> to vector<1x128xbf16>
    %c69 = arith.constant 69 : index
    %c0_477 = arith.constant 0 : index
    %c0_478 = arith.constant 0 : index
    %718 = vector.load %arg2[%c69, %c0_477, %c0_478] : memref<74x128x128xbf16, #tpu.memory_space<vmem>>, vector<1x128x128xbf16>
    %719 = vector.shape_cast %718 : vector<1x128x128xbf16> to vector<128x128xbf16>
    %cst_479 = arith.constant dense<0.000000e+00> : vector<1x128xf32>
    %720 = tpu.matmul %717, %719, %cst_479 {dimension_numbers = #tpu.dot_dimension_numbers<[1], [0], [0], [1], [0, 0, 1, 1], [], []>} : vector<1x128xbf16>, vector<128x128xbf16>, vector<1x128xf32> -> vector<1x128xf32>
    %721 = arith.addf %715, %720 : vector<1x128xf32>
    %c6_480 = arith.constant 6 : index
    %c0_481 = arith.constant 0 : index
    %722 = vector.load %arg6[%c6_480, %c0_481] : memref<104x128xf32, #tpu.memory_space<vmem>>, vector<1x128xf32>
    %723 = arith.truncf %722 : vector<1x128xf32> to vector<1x128xbf16>
    %c70 = arith.constant 70 : index
    %c0_482 = arith.constant 0 : index
    %c0_483 = arith.constant 0 : index
    %724 = vector.load %arg2[%c70, %c0_482, %c0_483] : memref<74x128x128xbf16, #tpu.memory_space<vmem>>, vector<1x128x128xbf16>
    %725 = vector.shape_cast %724 : vector<1x128x128xbf16> to vector<128x128xbf16>
    %cst_484 = arith.constant dense<0.000000e+00> : vector<1x128xf32>
    %726 = tpu.matmul %723, %725, %cst_484 {dimension_numbers = #tpu.dot_dimension_numbers<[1], [0], [0], [1], [0, 0, 1, 1], [], []>} : vector<1x128xbf16>, vector<128x128xbf16>, vector<1x128xf32> -> vector<1x128xf32>
    %727 = arith.addf %721, %726 : vector<1x128xf32>
    %c7_485 = arith.constant 7 : index
    %c0_486 = arith.constant 0 : index
    %728 = vector.load %arg6[%c7_485, %c0_486] : memref<104x128xf32, #tpu.memory_space<vmem>>, vector<1x128xf32>
    %729 = arith.truncf %728 : vector<1x128xf32> to vector<1x128xbf16>
    %c71_487 = arith.constant 71 : index
    %c0_488 = arith.constant 0 : index
    %c0_489 = arith.constant 0 : index
    %730 = vector.load %arg2[%c71_487, %c0_488, %c0_489] : memref<74x128x128xbf16, #tpu.memory_space<vmem>>, vector<1x128x128xbf16>
    %731 = vector.shape_cast %730 : vector<1x128x128xbf16> to vector<128x128xbf16>
    %cst_490 = arith.constant dense<0.000000e+00> : vector<1x128xf32>
    %732 = tpu.matmul %729, %731, %cst_490 {dimension_numbers = #tpu.dot_dimension_numbers<[1], [0], [0], [1], [0, 0, 1, 1], [], []>} : vector<1x128xbf16>, vector<128x128xbf16>, vector<1x128xf32> -> vector<1x128xf32>
    %733 = arith.addf %727, %732 : vector<1x128xf32>
    %c8_491 = arith.constant 8 : index
    %c0_492 = arith.constant 0 : index
    %734 = vector.load %arg6[%c8_491, %c0_492] : memref<104x128xf32, #tpu.memory_space<vmem>>, vector<1x128xf32>
    %735 = arith.truncf %734 : vector<1x128xf32> to vector<1x128xbf16>
    %c72 = arith.constant 72 : index
    %c0_493 = arith.constant 0 : index
    %c0_494 = arith.constant 0 : index
    %736 = vector.load %arg2[%c72, %c0_493, %c0_494] : memref<74x128x128xbf16, #tpu.memory_space<vmem>>, vector<1x128x128xbf16>
    %737 = vector.shape_cast %736 : vector<1x128x128xbf16> to vector<128x128xbf16>
    %cst_495 = arith.constant dense<0.000000e+00> : vector<1x128xf32>
    %738 = tpu.matmul %735, %737, %cst_495 {dimension_numbers = #tpu.dot_dimension_numbers<[1], [0], [0], [1], [0, 0, 1, 1], [], []>} : vector<1x128xbf16>, vector<128x128xbf16>, vector<1x128xf32> -> vector<1x128xf32>
    %739 = arith.addf %733, %738 : vector<1x128xf32>
    %c8_496 = arith.constant 8 : index
    %c0_497 = arith.constant 0 : index
    %740 = vector.load %arg3[%c8_496, %c0_497] : memref<16x128xf32, #tpu.memory_space<vmem>>, vector<1x128xf32>
    %741 = arith.addf %739, %740 : vector<1x128xf32>
    %742 = arith.negf %741 : vector<1x128xf32>
    %743 = math.exp %742 : vector<1x128xf32>
    %cst_498 = arith.constant 1.000000e+00 : f32
    %744 = vector.broadcast %cst_498 : f32 to vector<1x128xf32>
    %745 = arith.addf %744, %743 : vector<1x128xf32>
    %746 = arith.divf %744, %745 : vector<1x128xf32>
    %747 = arith.mulf %741, %746 : vector<1x128xf32>
    %c0_499 = arith.constant 0 : index
    %c0_500 = arith.constant 0 : index
    %748 = vector.load %arg5[%c0_499, %c0_500] : memref<104x128xf32, #tpu.memory_space<vmem>>, vector<1x128xf32>
    tpu.vector_store %arg5[%c0_499, %c0_500], %747 {strides = array<i32>} : memref<104x128xf32, #tpu.memory_space<vmem>>, vector<1x128xf32>,
    %cst_501 = arith.constant 0.000000e+00 : f32
    %749 = vector.broadcast %cst_501 : f32 to vector<8x128xf32>
    %c0_502 = arith.constant 0 : index
    %c0_503 = arith.constant 0 : index
    %750 = vector.load %arg4[%c0_502, %c0_503] : memref<8x128xf32, #tpu.memory_space<vmem>>, vector<8x128xf32>
    tpu.vector_store %arg4[%c0_502, %c0_503], %749 {strides = array<i32>} : memref<8x128xf32, #tpu.memory_space<vmem>>, vector<8x128xf32>,
    %cst_504 = arith.constant 0.000000e+00 : f32
    %751 = vector.broadcast %cst_504 : f32 to vector<1x128xf32>
    %c0_505 = arith.constant 0 : index
    %c0_506 = arith.constant 0 : index
    %752 = vector.load %arg5[%c0_505, %c0_506] : memref<104x128xf32, #tpu.memory_space<vmem>>, vector<1x128xf32>
    %753 = arith.truncf %752 : vector<1x128xf32> to vector<1x128xbf16>
    %c73 = arith.constant 73 : index
    %c0_507 = arith.constant 0 : index
    %c0_508 = arith.constant 0 : index
    %754 = vector.load %arg2[%c73, %c0_507, %c0_508] : memref<74x128x128xbf16, #tpu.memory_space<vmem>>, vector<1x128x128xbf16>
    %755 = vector.shape_cast %754 : vector<1x128x128xbf16> to vector<128x128xbf16>
    %cst_509 = arith.constant dense<0.000000e+00> : vector<1x128xf32>
    %756 = tpu.matmul %753, %755, %cst_509 {dimension_numbers = #tpu.dot_dimension_numbers<[1], [0], [0], [1], [0, 0, 1, 1], [], []>} : vector<1x128xbf16>, vector<128x128xbf16>, vector<1x128xf32> -> vector<1x128xf32>
    %757 = arith.addf %751, %756 : vector<1x128xf32>
    %c9_510 = arith.constant 9 : index
    %c0_511 = arith.constant 0 : index
    %758 = vector.load %arg3[%c9_510, %c0_511] : memref<16x128xf32, #tpu.memory_space<vmem>>, vector<1x128xf32>
    %759 = arith.addf %757, %758 : vector<1x128xf32>
    %760 = arith.negf %759 : vector<1x128xf32>
    %761 = math.exp %760 : vector<1x128xf32>
    %cst_512 = arith.constant 1.000000e+00 : f32
    %762 = vector.broadcast %cst_512 : f32 to vector<1x128xf32>
    %763 = arith.addf %762, %761 : vector<1x128xf32>
    %764 = arith.divf %762, %763 : vector<1x128xf32>
    %765 = arith.mulf %759, %764 : vector<1x128xf32>
    %c0_513 = arith.constant 0 : index
    %c0_514 = arith.constant 0 : index
    %766 = vector.load %arg4[%c0_513, %c0_514] : memref<8x128xf32, #tpu.memory_space<vmem>>, vector<1x128xf32>
    tpu.vector_store %arg4[%c0_513, %c0_514], %765 {strides = array<i32>} : memref<8x128xf32, #tpu.memory_space<vmem>>, vector<1x128xf32>,
    return
  }
  func.func @transform_0(%arg0: i32) -> (i32, i32) {
    %c0_i32 = arith.constant 0 : i32
    %c0_i32_0 = arith.constant 0 : i32
    return %arg0, %c0_i32 : i32, i32
  }
  func.func @transform_1(%arg0: i32) -> (i32, i32, i32) {
    %c0_i32 = arith.constant 0 : i32
    %c0_i32_0 = arith.constant 0 : i32
    %c0_i32_1 = arith.constant 0 : i32
    %c0_i32_2 = arith.constant 0 : i32
    return %c0_i32, %c0_i32_0, %c0_i32_1 : i32, i32, i32
  }
  func.func @transform_2(%arg0: i32) -> (i32, i32) {
    %c0_i32 = arith.constant 0 : i32
    %c0_i32_0 = arith.constant 0 : i32
    %c0_i32_1 = arith.constant 0 : i32
    return %c0_i32, %c0_i32_0 : i32, i32
  }
  func.func @transform_3(%arg0: i32) -> (i32, i32) {
    %c0_i32 = arith.constant 0 : i32
    %c0_i32_0 = arith.constant 0 : i32
    return %arg0, %c0_i32 : i32, i32
  }
}

</mosaic_0001>

<llo_original>
// kernel: cam_wrapper_forward.1
$region0: #{cam_wrapper_forward.1}
  #allocation0 [shape = 'u32[]', space=smem, size = 0x4, offset = 0x4, fixed_abs, tag = 'smem constant byte address 0x4 - core index']
  #allocation1 [shape = 'u32[72,128]{1,0:T(1,128)}', space=vmem, size = 0x9000, scoped, tag = 'internal scratch']
  #allocation2 [shape = 'f32[104,128]{1,0:T(8,128)}', space=vmem, size = 0xd000, scoped, tag = 'scratch operand']
  #allocation3 [shape = 'f32[104,128]{1,0:T(8,128)}', space=vmem, size = 0xd000, scoped, tag = 'scratch operand']
  %s0 = inlined_call_operand.vmem [shape: bf16[128,128], index: 0, kind: input, shape index: {}]
  %s1 = inlined_call_operand.hbm [shape: bf16[74,128,128], index: 1, kind: input, shape index: {}]
  %s2 = inlined_call_operand.hbm [shape: f32[16,128], index: 2, kind: input, shape index: {}]
  %s3 = inlined_call_operand.vmem [shape: f32[16,128], index: 3, kind: output, shape index: {}]
  %s4 = sld [smem:[#allocation0]]
  $region53: #{cam_wrapper_forward.1} parent=0
    _
  %s6 = ssub.s32 1, %s4
  %s7 = scalar_select 0, %s6, %s4
  $region1: #{cam_wrapper_forward.1} parent=0
    #allocation4 [shape = 'u8[2424832]{0}', space=vmem, size = 0x250000, scoped, tag = 'input window, operand 1, single buffered']
    #allocation5 [shape = 's32[2]{0}', space=sflag, size = 0x8, scoped, tag = 'scoped memory for cam_wrapper_forward.1']
    #allocation6 [shape = 'u8[8192]{0}', space=vmem, size = 0x2000, scoped, tag = 'input window, operand 2, single buffered']
    #allocation7 [shape = 's32[1]{0}', space=sflag, size = 0x4, scoped, tag = 'scoped memory for cam_wrapper_forward.1']
    %8 = vsyncpa [#allocation5], 0
    %9 = vsyncpa [#allocation7], 0
    loop: start=0, step=1, limit=4
    $region2: #{cam_wrapper_forward.1} parent=1 // loop_pre_header
      _
    $region3: #{cam_wrapper_forward.1} parent=1 // loop_header
      %s11 = sphi 0, %s15
      %p12 = scmp.ge.s32.totalorder %s11, 4
      %s21 = sphi 0, %s23
      %s24 = sphi 0, %s21
      %s25 = sphi 0, %s24
      %s41 = sphi 0, %s25
      %s45 = sphi 0, %s45
      %s47 = sphi 0, %s45
      %s48 = sphi 0, %s47
      %s62 = sphi 0, %s48
      %s66 = sphi 0, %s66
      %s68 = sphi 0, %s66
      %s69 = sphi 0, %s68
      %s83 = sphi 0, %s69
      %s89 = sphi 0, %s91
      %s92 = sphi 0, %s89
      %s93 = sphi 0, %s92
      %s109 = sphi 0, %s93
    $region4: #{cam_wrapper_forward.1} parent=1 // loop_header_branch
      %14 = sbr.rel (%p12) target = $region8
    $region5: #{cam_wrapper_forward.1} parent=1 // loop_body
      %s16 = ssub.s32 %s11, 1
      %s17 = ssub.s32 %s11, 2
      %s18 = sadd.s32 %s11, 1
      %s19 = ssub.s32 %s11, %s18
      %p20 = scmp.eq.s32.totalorder %s19, 0
      %s22 = sadd.s32 %s21, 1
      %s23 = scalar_select %p20, %s21, %s22
      %p26 = pneg %p20
      %p27 = scmp.eq.s32.totalorder %s11, 1
      %p28 = por %p26, %p27
      %p29 = scmp.ne.s32.totalorder %s21, %s24
      %p30 = scmp.eq.s32.totalorder %s11, 0
      %p31 = por %p29, %p30
      %p32 = scmp.ne.s32.totalorder %s21, %s24
      %p33 = scmp.eq.s32.totalorder %s16, 1
      %p34 = por %p32, %p33
      %p35 = scmp.ne.s32.totalorder %s24, %s25
      %p36 = scmp.eq.s32.totalorder %s16, 0
      %p37 = por %p35, %p36
      %p38 = scmp.ne.s32.totalorder %s24, %s25
      %p39 = scmp.eq.s32.totalorder %s17, 1
      %p40 = por %p38, %p39
      %p42 = scmp.ne.s32.totalorder %s25, %s41
      %p43 = scmp.eq.s32.totalorder %s17, 0
      %p44 = por %p42, %p43
      %s46 = sadd.s32 %s45, 1
      %p49 = scmp.eq.s32.totalorder %s11, 1
      %p50 = scmp.ne.s32.totalorder %s45, %s47
      %p51 = scmp.eq.s32.totalorder %s11, 0
      %p52 = por %p50, %p51
      %p53 = scmp.ne.s32.totalorder %s45, %s47
      %p54 = scmp.eq.s32.totalorder %s16, 1
      %p55 = por %p53, %p54
      %p56 = scmp.ne.s32.totalorder %s47, %s48
      %p57 = scmp.eq.s32.totalorder %s16, 0
      %p58 = por %p56, %p57
      %p59 = scmp.ne.s32.totalorder %s47, %s48
      %p60 = scmp.eq.s32.totalorder %s17, 1
      %p61 = por %p59, %p60
      %p63 = scmp.ne.s32.totalorder %s48, %s62
      %p64 = scmp.eq.s32.totalorder %s17, 0
      %p65 = por %p63, %p64
      %s67 = sadd.s32 %s66, 1
      %p70 = scmp.eq.s32.totalorder %s11, 1
      %p71 = scmp.ne.s32.totalorder %s66, %s68
      %p72 = scmp.eq.s32.totalorder %s11, 0
      %p73 = por %p71, %p72
      %p74 = scmp.ne.s32.totalorder %s66, %s68
      %p75 = scmp.eq.s32.totalorder %s16, 1
      %p76 = por %p74, %p75
      %p77 = scmp.ne.s32.totalorder %s68, %s69
      %p78 = scmp.eq.s32.totalorder %s16, 0
      %p79 = por %p77, %p78
      %p80 = scmp.ne.s32.totalorder %s68, %s69
      %p81 = scmp.eq.s32.totalorder %s17, 1
      %p82 = por %p80, %p81
      %p84 = scmp.ne.s32.totalorder %s69, %s83
      %p85 = scmp.eq.s32.totalorder %s17, 0
      %p86 = por %p84, %p85
      %s87 = ssub.s32 %s11, %s18
      %p88 = scmp.eq.s32.totalorder %s87, 0
      %s90 = sadd.s32 %s89, 1
      %s91 = scalar_select %p88, %s89, %s90
      %p94 = pneg %p88
      %p95 = scmp.eq.s32.totalorder %s11, 1
      %p96 = por %p94, %p95
      %p97 = scmp.ne.s32.totalorder %s89, %s92
      %p98 = scmp.eq.s32.totalorder %s11, 0
      %p99 = por %p97, %p98
      %p100 = scmp.ne.s32.totalorder %s89, %s92
      %p101 = scmp.eq.s32.totalorder %s16, 1
      %p102 = por %p100, %p101
      %p103 = scmp.ne.s32.totalorder %s92, %s93
      %p104 = scmp.eq.s32.totalorder %s16, 0
      %p105 = por %p103, %p104
      %p106 = scmp.ne.s32.totalorder %s92, %s93
      %p107 = scmp.eq.s32.totalorder %s17, 1
      %p108 = por %p106, %p107
      %p110 = scmp.ne.s32.totalorder %s93, %s109
      %p111 = scmp.eq.s32.totalorder %s17, 0
      %p112 = por %p110, %p111
      %p113 = scmp.le.s32.totalorder 1, %s11
      %p114 = scmp.lt.s32.totalorder %s11, 3
      %p115 = pnand %p113, %p114
      %p116 = pneg %p115
      // Predicated region
      $region9: #{cam_wrapper_forward.1} parent=5 // pred_check
        _
      $region10: #{cam_wrapper_forward.1} parent=5 // pred_check_branch
        %118 = sbr.rel (%p115) target = $region12
      $region11: #{cam_wrapper_forward.1} parent=5 // pred_region
        %s119 = ssub.s32 %s11, 1
        // Predicated region
        $region13: #{cam_wrapper_forward.1} parent=11 // pred_check
          %p120 = pneg %p58
        $region14: #{cam_wrapper_forward.1} parent=11 // pred_check_branch
          %122 = sbr.rel (%p120) target = $region16
        $region15: #{cam_wrapper_forward.1} parent=11 // pred_region
          %124 = vsyncadd [#allocation5], 0
          %s125 = sshll.u32 %s1, 4
          %s126 = int_to_ptr.hbm [resolvable:$true] %s125
          %s127 = sshll.u32 [#allocation4], 4
          %s128 = int_to_ptr.vmem [resolvable:$true] %s127
          %133 = dma.hbm_to_vmem [thread:$0]  %s126, 75776, %s128, [#allocation5], 64, 64, 4
        $region16: #{cam_wrapper_forward.1} parent=11 // pred_fallthru
          _
        // Predicated region
        $region17: #{cam_wrapper_forward.1} parent=11 // pred_check
          %p134 = pneg %p79
        $region18: #{cam_wrapper_forward.1} parent=11 // pred_check_branch
          %136 = sbr.rel (%p134) target = $region20
        $region19: #{cam_wrapper_forward.1} parent=11 // pred_region
          %138 = vsyncadd [#allocation7], 0
          %s139 = sshll.u32 %s2, 4
          %s140 = int_to_ptr.hbm [resolvable:$true] %s139
          %s141 = sshll.u32 [#allocation6], 4
          %s142 = int_to_ptr.vmem [resolvable:$true] %s141
          %147 = dma.hbm_to_vmem [thread:$0]  %s140, 256, %s142, [#allocation7], 128, 128, 8
        $region20: #{cam_wrapper_forward.1} parent=11 // pred_fallthru
          _
      $region12: #{cam_wrapper_forward.1} parent=5 // pred_fallthru
        _
      %p148 = scmp.lt.s32.totalorder %s11, 2
      // Predicated region
      $region21: #{cam_wrapper_forward.1} parent=5 // pred_check
        %p149 = pneg %p148
      $region22: #{cam_wrapper_forward.1} parent=5 // pred_check_branch
        %151 = sbr.rel (%p149) target = $region24
      $region23: #{cam_wrapper_forward.1} parent=5 // pred_region
        // Predicated region
        $region25: #{cam_wrapper_forward.1} parent=23 // pred_check
          %p152 = pneg %p31
        $region26: #{cam_wrapper_forward.1} parent=23 // pred_check_branch
          %154 = sbr.rel (%p152) target = $region28
        $region27: #{cam_wrapper_forward.1} parent=23 // pred_region
          %s155 = smul.u32 8, %s11
          %p156 = scmp.lt.s32.totalorder %s155, 15
          %s157 = scalar_select %p156, %s155, 15
          %s158 = smul.addr %s157, 4
          %s159 = scalar_lea.vmem %s0, %s158
          %s160 = smul.u32 8, %s11
        $region28: #{cam_wrapper_forward.1} parent=23 // pred_fallthru
          _
      $region24: #{cam_wrapper_forward.1} parent=5 // pred_fallthru
        _
      %p161 = scmp.le.s32.totalorder 1, %s11
      %p162 = scmp.lt.s32.totalorder %s11, 3
      %p163 = pnand %p161, %p162
      %p164 = pneg %p163
      // Predicated region
      $region29: #{cam_wrapper_forward.1} parent=5 // pred_check
        _
      $region30: #{cam_wrapper_forward.1} parent=5 // pred_check_branch
        %166 = sbr.rel (%p163) target = $region32
      $region31: #{cam_wrapper_forward.1} parent=5 // pred_region
        %s167 = ssub.s32 %s11, 1
        // Predicated region
        $region33: #{cam_wrapper_forward.1} parent=31 // pred_check
          %p168 = pneg %p58
        $region34: #{cam_wrapper_forward.1} parent=31 // pred_check_branch
          %170 = sbr.rel (%p168) target = $region36
        $region35: #{cam_wrapper_forward.1} parent=31 // pred_region
          %172 = dma.done [#allocation5], 75776
        $region36: #{cam_wrapper_forward.1} parent=31 // pred_fallthru
          _
        // Predicated region
        $region37: #{cam_wrapper_forward.1} parent=31 // pred_check
          %p173 = pneg %p79
        $region38: #{cam_wrapper_forward.1} parent=31 // pred_check_branch
          %175 = sbr.rel (%p173) target = $region40
        $region39: #{cam_wrapper_forward.1} parent=31 // pred_region
          %177 = dma.done [#allocation7], 256
        $region40: #{cam_wrapper_forward.1} parent=31 // pred_fallthru
          _
        %s178 = smul.u32 8, %s16
        %p179 = scmp.lt.s32.totalorder %s178, 15
        %s180 = scalar_select %p179, %s178, 15
        %s181 = smul.addr %s180, 4
        %s182 = scalar_lea.vmem %s0, %s181
        %p183 = pneg %p37
        %p184 = pneg %p34
        %p185 = pneg %p58
        %p186 = pneg %p55
        %p187 = pneg %p79
        %p188 = pneg %p76
        %p189 = pneg %p105
        %p190 = pneg %p102
        %p191 = scmp.lt.s32.totalorder %s16, 1
        %s192 = scalar_select %p191, %s16, 1
        %s193 = smul.addr %s192, 8
        %s194 = scalar_lea.vmem %s3, %s193
        %s195 = smul.u32 8, %s16
        %p196 = scmp.lt.s32.totalorder %s195, 15
        %s197 = scalar_select %p196, %s195, 15
        %s198 = smul.addr %s197, 4
        %s199 = scalar_lea.vmem %s0, %s198
        %s200 = smul.u32 8, %s16
        %p201 = scmp.lt.s32.totalorder %s16, 1
        %s202 = scalar_select %p201, %s16, 1
        %s203 = smul.addr %s202, 8
        %s204 = scalar_lea.vmem %s3, %s203
        %205 = vst [vmem:[#allocation2] sm:$0xff] 0.0
        %206 = vst [vmem:[#allocation2 + $0x8] sm:$0xff] 0.0
        %207 = vst [vmem:[#allocation2 + $0x10] sm:$0xff] 0.0
        %208 = vst [vmem:[#allocation2 + $0x18] sm:$0xff] 0.0
        %209 = vst [vmem:[#allocation2 + $0x20] sm:$0xff] 0.0
        %210 = vst [vmem:[#allocation2 + $0x28] sm:$0xff] 0.0
        %211 = vst [vmem:[#allocation2 + $0x30] sm:$0xff] 0.0
        %212 = vst [vmem:[#allocation2 + $0x38] sm:$0xff] 0.0
        %213 = vst [vmem:[#allocation2 + $0x40] sm:$0xff] 0.0
        %214 = vst [vmem:[#allocation2 + $0x48] sm:$0xff] 0.0
        %215 = vst [vmem:[#allocation2 + $0x50] sm:$0xff] 0.0
        %216 = vst [vmem:[#allocation2 + $0x58] sm:$0xff] 0.0
        %217 = vst [vmem:[#allocation2 + $0x60] sm:$0xff] 0.0
        %v218 = vld [vmem:[%s199] sm:$0xf]
        %v219 = vld [vmem:[%s199 + $0x4] sm:$0xf]
        %v220 = vld [vmem:[%s199 + $0x8] sm:$0xf]
        %v221 = vld [vmem:[%s199 + $0xc] sm:$0xf]
        %v222 = vld [vmem:[%s199 + $0x10] sm:$0xf]
        %v223 = vld [vmem:[%s199 + $0x14] sm:$0xf]
        %v224 = vld [vmem:[%s199 + $0x18] sm:$0xf]
        %v225 = vld [vmem:[%s199 + $0x1c] sm:$0xf]
        %v226 = vld [vmem:[#allocation4] sm:$0xf]
        %v227 = vld [vmem:[#allocation4 + $0x4] sm:$0xf]
        %v228 = vld [vmem:[#allocation4 + $0x8] sm:$0xf]
        %v229 = vld [vmem:[#allocation4 + $0xc] sm:$0xf]
        %v230 = vld [vmem:[#allocation4 + $0x10] sm:$0xf]
        %v231 = vld [vmem:[#allocation4 + $0x14] sm:$0xf]
        %v232 = vld [vmem:[#allocation4 + $0x18] sm:$0xf]
        %v233 = vld [vmem:[#allocation4 + $0x1c] sm:$0xf]
        %v234 = vld [vmem:[#allocation4 + $0x20] sm:$0xf]
        %v235 = vld [vmem:[#allocation4 + $0x24] sm:$0xf]
        %v236 = vld [vmem:[#allocation4 + $0x28] sm:$0xf]
        %v237 = vld [vmem:[#allocation4 + $0x2c] sm:$0xf]
        %v238 = vld [vmem:[#allocation4 + $0x30] sm:$0xf]
        %v239 = vld [vmem:[#allocation4 + $0x34] sm:$0xf]
        %v240 = vld [vmem:[#allocation4 + $0x38] sm:$0xf]
        %v241 = vld [vmem:[#allocation4 + $0x3c] sm:$0xf]
        %v250 = vunpack.c.l.b16 %v218
        %v251 = vunpack.c.l.b16 %v219
        %v252 = vunpack.c.l.b16 %v220
        %v253 = vunpack.c.l.b16 %v221
        %v254 = vunpack.c.l.b16 %v222
        %v255 = vunpack.c.l.b16 %v223
        %v256 = vunpack.c.l.b16 %v224
        %v257 = vunpack.c.l.b16 %v225
        %v258 = vpack.c.b16 %v251, %v250
        %v259 = vpack.c.b16 %v253, %v252
        %v260 = vpack.c.b16 %v255, %v254
        %v261 = vpack.c.b16 %v257, %v256
        %v282 = vunpack.c.l.b16 %v226
        %v283 = vunpack.c.l.b16 %v227
        %v284 = vunpack.c.l.b16 %v228
        %v285 = vunpack.c.l.b16 %v229
        %v286 = vunpack.c.l.b16 %v230
        %v287 = vunpack.c.l.b16 %v231
        %v288 = vunpack.c.l.b16 %v232
        %v289 = vunpack.c.l.b16 %v233
        %v290 = vunpack.c.l.b16 %v234
        %v291 = vunpack.c.l.b16 %v235
        %v292 = vunpack.c.l.b16 %v236
        %v293 = vunpack.c.l.b16 %v237
        %v294 = vunpack.c.l.b16 %v238
        %v295 = vunpack.c.l.b16 %v239
        %v296 = vunpack.c.l.b16 %v240
        %v297 = vunpack.c.l.b16 %v241
        %v298 = vpack.c.b16 %v283, %v282
        %v299 = vpack.c.b16 %v285, %v284
        %v300 = vpack.c.b16 %v287, %v286
        %v301 = vpack.c.b16 %v289, %v288
        %v302 = vpack.c.b16 %v291, %v290
        %v303 = vpack.c.b16 %v293, %v292
        %v304 = vpack.c.b16 %v295, %v294
        %v305 = vpack.c.b16 %v297, %v296
        %314 = vmatpush.bf16.msra.mxu0 %v305
        %315 = vmatpush.bf16.msra.mxu0 %v304
        %316 = vmatpush.bf16.msra.mxu0 %v303
        %317 = vmatpush.bf16.msra.mxu0 %v302
        %318 = vmatpush.bf16.msra.mxu0 %v301
        %319 = vmatpush.bf16.msra.mxu0 %v300
        %320 = vmatpush.bf16.msra.mxu0 %v299
        %321 = vmatpush.bf16.msra.mxu0 %v298
        %322 = vmatmul.bf16.gmra.mxu0 %v258
        %v323 = vpop.f32.mrf.mxu0
        %v324 = vadd.f32 0.0, %v323
        %v325 = vpop.f32.mrf.mxu0
        %v326 = vadd.f32 0.0, %v325
        %327 = vmatmul.bf16.gmra.mxu0 %v259
        %v328 = vpop.f32.mrf.mxu0
        %v329 = vadd.f32 0.0, %v328
        %v330 = vpop.f32.mrf.mxu0
        %v331 = vadd.f32 0.0, %v330
        %332 = vmatmul.bf16.gmra.mxu0 %v260
        %v333 = vpop.f32.mrf.mxu0
        %v334 = vadd.f32 0.0, %v333
        %v335 = vpop.f32.mrf.mxu0
        %v336 = vadd.f32 0.0, %v335
        %337 = vmatmul.bf16.gmra.mxu0 %v261
        %v338 = vpop.f32.mrf.mxu0
        %v339 = vadd.f32 0.0, %v338
        %v340 = vpop.f32.mrf.mxu0
        %v341 = vadd.f32 0.0, %v340
        %342 = vdwg.mxu0
        %v343 = vld [vmem:[#allocation6] sm:$0x1]
        %v344 = vperm.slane %v343, 0
        %v345 = vadd.f32 %v324, %v344
        %v346 = vxor.u32 %v345, 2147483648
        %v347 = vmul.f32 %v346, 1.442695
        %v348 = vpow.pop %v347
        %v349 = vadd.f32 %v348, 1.0
        %v350 = vrcp.pop %v349
        %v351 = vmul.f32 %v349, %v350
        %v352 = vsub.f32 1.0, %v351
        %v353 = vmul.f32 %v350, %v352
        %v354 = vadd.f32 %v350, %v353
        %vm355 = vweird.f32 %v349
        %vm356 = vweird.f32 %v350
        %vm357 = vmor %vm355, %vm356
        %v358 = vsel %vm357, %v350, %v354
        %v359 = vand.u32 2147483647, %v349
        %vm360 = vcmp.eq.f32.partialorder %v359, 8.507059e+37
        %v361 = vand.u32 %v349, 2147483648
        %v362 = vor.u32 1.1754944e-38, %v361
        %v363 = vsel %vm360, %v362, %v358
        %v364 = vmul.f32 1.0, %v363
        %v365 = vmul.f32 %v345, %v364
        %366 = vst [vmem:[#allocation2 + $0xb] sm:$0xff] %v365
        %v367 = vadd.f32 %v326, %v344
        %v368 = vxor.u32 %v367, 2147483648
        %v369 = vmul.f32 %v368, 1.442695
        %v370 = vpow.pop %v369
        %v371 = vadd.f32 %v370, 1.0
        %v372 = vrcp.pop %v371
        %v373 = vmul.f32 %v371, %v372
        %v374 = vsub.f32 1.0, %v373
        %v375 = vmul.f32 %v372, %v374
        %v376 = vadd.f32 %v372, %v375
        %vm377 = vweird.f32 %v371
        %vm378 = vweird.f32 %v372
        %vm379 = vmor %vm377, %vm378
        %v380 = vsel %vm379, %v372, %v376
        %v381 = vand.u32 2147483647, %v371
        %vm382 = vcmp.eq.f32.partialorder %v381, 8.507059e+37
        %v383 = vand.u32 %v371, 2147483648
        %v384 = vor.u32 1.1754944e-38, %v383
        %v385 = vsel %vm382, %v384, %v380
        %v386 = vmul.f32 1.0, %v385
        %v387 = vmul.f32 %v367, %v386
        %388 = vst [vmem:[#allocation2 + $0x15] sm:$0xff] %v387
        %v389 = vadd.f32 %v329, %v344
        %v390 = vxor.u32 %v389, 2147483648
        %v391 = vmul.f32 %v390, 1.442695
        %v392 = vpow.pop %v391
        %v393 = vadd.f32 %v392, 1.0
        %v394 = vrcp.pop %v393
        %v395 = vmul.f32 %v393, %v394
        %v396 = vsub.f32 1.0, %v395
        %v397 = vmul.f32 %v394, %v396
        %v398 = vadd.f32 %v394, %v397
        %vm399 = vweird.f32 %v393
        %vm400 = vweird.f32 %v394
        %vm401 = vmor %vm399, %vm400
        %v402 = vsel %vm401, %v394, %v398
        %v403 = vand.u32 2147483647, %v393
        %vm404 = vcmp.eq.f32.partialorder %v403, 8.507059e+37
        %v405 = vand.u32 %v393, 2147483648
        %v406 = vor.u32 1.1754944e-38, %v405
        %v407 = vsel %vm404, %v406, %v402
        %v408 = vmul.f32 1.0, %v407
        %v409 = vmul.f32 %v389, %v408
        %410 = vst [vmem:[#allocation2 + $0x1f] sm:$0xff] %v409
        %v411 = vadd.f32 %v331, %v344
        %v412 = vxor.u32 %v411, 2147483648
        %v413 = vmul.f32 %v412, 1.442695
        %v414 = vpow.pop %v413
        %v415 = vadd.f32 %v414, 1.0
        %v416 = vrcp.pop %v415
        %v417 = vmul.f32 %v415, %v416
        %v418 = vsub.f32 1.0, %v417
        %v419 = vmul.f32 %v416, %v418
        %v420 = vadd.f32 %v416, %v419
        %vm421 = vweird.f32 %v415
        %vm422 = vweird.f32 %v416
        %vm423 = vmor %vm421, %vm422
        %v424 = vsel %vm423, %v416, %v420
        %v425 = vand.u32 2147483647, %v415
        %vm426 = vcmp.eq.f32.partialorder %v425, 8.507059e+37
        %v427 = vand.u32 %v415, 2147483648
        %v428 = vor.u32 1.1754944e-38, %v427
        %v429 = vsel %vm426, %v428, %v424
        %v430 = vmul.f32 1.0, %v429
        %v431 = vmul.f32 %v411, %v430
        %432 = vst [vmem:[#allocation2 + $0x29] sm:$0xff] %v431
        %v433 = vadd.f32 %v334, %v344
        %v434 = vxor.u32 %v433, 2147483648
        %v435 = vmul.f32 %v434, 1.442695
        %v436 = vpow.pop %v435
        %v437 = vadd.f32 %v436, 1.0
        %v438 = vrcp.pop %v437
        %v439 = vmul.f32 %v437, %v438
        %v440 = vsub.f32 1.0, %v439
        %v441 = vmul.f32 %v438, %v440
        %v442 = vadd.f32 %v438, %v441
        %vm443 = vweird.f32 %v437
        %vm444 = vweird.f32 %v438
        %vm445 = vmor %vm443, %vm444
        %v446 = vsel %vm445, %v438, %v442
        %v447 = vand.u32 2147483647, %v437
        %vm448 = vcmp.eq.f32.partialorder %v447, 8.507059e+37
        %v449 = vand.u32 %v437, 2147483648
        %v450 = vor.u32 1.1754944e-38, %v449
        %v451 = vsel %vm448, %v450, %v446
        %v452 = vmul.f32 1.0, %v451
        %v453 = vmul.f32 %v433, %v452
        %454 = vst [vmem:[#allocation2 + $0x33] sm:$0xff] %v453
        %v455 = vadd.f32 %v336, %v344
        %v456 = vxor.u32 %v455, 2147483648
        %v457 = vmul.f32 %v456, 1.442695
        %v458 = vpow.pop %v457
        %v459 = vadd.f32 %v458, 1.0
        %v460 = vrcp.pop %v459
        %v461 = vmul.f32 %v459, %v460
        %v462 = vsub.f32 1.0, %v461
        %v463 = vmul.f32 %v460, %v462
        %v464 = vadd.f32 %v460, %v463
        %vm465 = vweird.f32 %v459
        %vm466 = vweird.f32 %v460
        %vm467 = vmor %vm465, %vm466
        %v468 = vsel %vm467, %v460, %v464
        %v469 = vand.u32 2147483647, %v459
        %vm470 = vcmp.eq.f32.partialorder %v469, 8.507059e+37
        %v471 = vand.u32 %v459, 2147483648
        %v472 = vor.u32 1.1754944e-38, %v471
        %v473 = vsel %vm470, %v472, %v468
        %v474 = vmul.f32 1.0, %v473
        %v475 = vmul.f32 %v455, %v474
        %476 = vst [vmem:[#allocation2 + $0x3d] sm:$0xff] %v475
        %v477 = vadd.f32 %v339, %v344
        %v478 = vxor.u32 %v477, 2147483648
        %v479 = vmul.f32 %v478, 1.442695
        %v480 = vpow.pop %v479
        %v481 = vadd.f32 %v480, 1.0
        %v482 = vrcp.pop %v481
        %v483 = vmul.f32 %v481, %v482
        %v484 = vsub.f32 1.0, %v483
        %v485 = vmul.f32 %v482, %v484
        %v486 = vadd.f32 %v482, %v485
        %vm487 = vweird.f32 %v481
        %vm488 = vweird.f32 %v482
        %vm489 = vmor %vm487, %vm488
        %v490 = vsel %vm489, %v482, %v486
        %v491 = vand.u32 2147483647, %v481
        %vm492 = vcmp.eq.f32.partialorder %v491, 8.507059e+37
        %v493 = vand.u32 %v481, 2147483648
        %v494 = vor.u32 1.1754944e-38, %v493
        %v495 = vsel %vm492, %v494, %v490
        %v496 = vmul.f32 1.0, %v495
        %v497 = vmul.f32 %v477, %v496
        %498 = vst [vmem:[#allocation2 + $0x47] sm:$0xff] %v497
        %v499 = vadd.f32 %v341, %v344
        %v500 = vxor.u32 %v499, 2147483648
        %v501 = vmul.f32 %v500, 1.442695
        %v502 = vpow.pop %v501
        %v503 = vadd.f32 %v502, 1.0
        %v504 = vrcp.pop %v503
        %v505 = vmul.f32 %v503, %v504
        %v506 = vsub.f32 1.0, %v505
        %v507 = vmul.f32 %v504, %v506
        %v508 = vadd.f32 %v504, %v507
        %vm509 = vweird.f32 %v503
        %vm510 = vweird.f32 %v504
        %vm511 = vmor %vm509, %vm510
        %v512 = vsel %vm511, %v504, %v508
        %v513 = vand.u32 2147483647, %v503
        %vm514 = vcmp.eq.f32.partialorder %v513, 8.507059e+37
        %v515 = vand.u32 %v503, 2147483648
        %v516 = vor.u32 1.1754944e-38, %v515
        %v517 = vsel %vm514, %v516, %v512
        %v518 = vmul.f32 1.0, %v517
        %v519 = vmul.f32 %v499, %v518
        %520 = vst [vmem:[#allocation2 + $0x51] sm:$0xff] %v519
        %521 = vst [vmem:[#allocation3] sm:$0xff] 0.0
        %522 = vst [vmem:[#allocation3 + $0x8] sm:$0xff] 0.0
        %523 = vst [vmem:[#allocation3 + $0x10] sm:$0xff] 0.0
        %524 = vst [vmem:[#allocation3 + $0x18] sm:$0xff] 0.0
        %525 = vst [vmem:[#allocation3 + $0x20] sm:$0xff] 0.0
        %v526 = vld [vmem:[#allocation2] ss:$2 sm:$0xff]
        %s527 = scalar_lea.vmem [#allocation2], 16
        %v528 = vld [vmem:[%s527] ss:$2 sm:$0xff]
        %s529 = scalar_lea.vmem [#allocation2], 32
        %v530 = vld [vmem:[%s529] ss:$2 sm:$0xff]
        %s531 = scalar_lea.vmem [#allocation2], 48
        %v532 = vld [vmem:[%s531] ss:$2 sm:$0xff]
        %s533 = scalar_lea.vmem [#allocation2], 64
        %v534 = vld [vmem:[%s533] ss:$2 sm:$0x3]
        %v535 = vpack.c.bf16 %v528, %v526
        %v536 = vpack.c.bf16 %v532, %v530
        %v537 = vpack.c.bf16 %v534, %v534
        %s538 = scalar_lea.vmem [#allocation4], 64
        %v539 = vld [vmem:[%s538] sm:$0xf]
        %v540 = vld [vmem:[%s538 + $0x4] sm:$0xf]
        %v541 = vld [vmem:[%s538 + $0x8] sm:$0xf]
        %v542 = vld [vmem:[%s538 + $0xc] sm:$0xf]
        %v543 = vld [vmem:[%s538 + $0x10] sm:$0xf]
        %v544 = vld [vmem:[%s538 + $0x14] sm:$0xf]
        %v545 = vld [vmem:[%s538 + $0x18] sm:$0xf]
        %v546 = vld [vmem:[%s538 + $0x1c] sm:$0xf]
        %v547 = vld [vmem:[%s538 + $0x20] sm:$0xf]
        %v548 = vld [vmem:[%s538 + $0x24] sm:$0xf]
        %v549 = vld [vmem:[%s538 + $0x28] sm:$0xf]
        %v550 = vld [vmem:[%s538 + $0x2c] sm:$0xf]
        %v551 = vld [vmem:[%s538 + $0x30] sm:$0xf]
        %v552 = vld [vmem:[%s538 + $0x34] sm:$0xf]
        %v553 = vld [vmem:[%s538 + $0x38] sm:$0xf]
        %v554 = vld [vmem:[%s538 + $0x3c] sm:$0xf]
        %s555 = scalar_lea.vmem [#allocation2], 1
        %v556 = vld [vmem:[%s555] ss:$2 sm:$0xff]
        %s557 = scalar_lea.vmem [#allocation2], 17
        %v558 = vld [vmem:[%s557] ss:$2 sm:$0xff]
        %s559 = scalar_lea.vmem [#allocation2], 33
        %v560 = vld [vmem:[%s559] ss:$2 sm:$0xff]
        %s561 = scalar_lea.vmem [#allocation2], 49
        %v562 = vld [vmem:[%s561] ss:$2 sm:$0xff]
        %s563 = scalar_lea.vmem [#allocation2], 65
        %v564 = vld [vmem:[%s563] ss:$2 sm:$0x3]
        %v565 = vpack.c.bf16 %v558, %v556
        %v566 = vpack.c.bf16 %v562, %v560
        %v567 = vpack.c.bf16 %v564, %v564
        %s568 = scalar_lea.vmem [#allocation4], 128
        %v569 = vld [vmem:[%s568] sm:$0xf]
        %v570 = vld [vmem:[%s568 + $0x4] sm:$0xf]
        %v571 = vld [vmem:[%s568 + $0x8] sm:$0xf]
        %v572 = vld [vmem:[%s568 + $0xc] sm:$0xf]
        %v573 = vld [vmem:[%s568 + $0x10] sm:$0xf]
        %v574 = vld [vmem:[%s568 + $0x14] sm:$0xf]
        %v575 = vld [vmem:[%s568 + $0x18] sm:$0xf]
        %v576 = vld [vmem:[%s568 + $0x1c] sm:$0xf]
        %v577 = vld [vmem:[%s568 + $0x20] sm:$0xf]
        %v578 = vld [vmem:[%s568 + $0x24] sm:$0xf]
        %v579 = vld [vmem:[%s568 + $0x28] sm:$0xf]
        %v580 = vld [vmem:[%s568 + $0x2c] sm:$0xf]
        %v581 = vld [vmem:[%s568 + $0x30] sm:$0xf]
        %v582 = vld [vmem:[%s568 + $0x34] sm:$0xf]
        %v583 = vld [vmem:[%s568 + $0x38] sm:$0xf]
        %v584 = vld [vmem:[%s568 + $0x3c] sm:$0xf]
        %v601 = vunpack.c.l.b16 %v569
        %v602 = vunpack.c.l.b16 %v570
        %v603 = vunpack.c.l.b16 %v571
        %v604 = vunpack.c.l.b16 %v572
        %v605 = vunpack.c.l.b16 %v573
        %v606 = vunpack.c.l.b16 %v574
        %v607 = vunpack.c.l.b16 %v575
        %v608 = vunpack.c.l.b16 %v576
        %v609 = vunpack.c.l.b16 %v577
        %v610 = vunpack.c.l.b16 %v578
        %v611 = vunpack.c.l.b16 %v579
        %v612 = vunpack.c.l.b16 %v580
        %v613 = vunpack.c.l.b16 %v581
        %v614 = vunpack.c.l.b16 %v582
        %v615 = vunpack.c.l.b16 %v583
        %v616 = vunpack.c.l.b16 %v584
        %v617 = vpack.c.b16 %v602, %v601
        %v618 = vpack.c.b16 %v604, %v603
        %v619 = vpack.c.b16 %v606, %v605
        %v620 = vpack.c.b16 %v608, %v607
        %v621 = vpack.c.b16 %v610, %v609
        %v622 = vpack.c.b16 %v612, %v611
        %v623 = vpack.c.b16 %v614, %v613
        %v624 = vpack.c.b16 %v616, %v615
        %633 = vmatpush.bf16.msra.mxu0 %v624
        %634 = vmatpush.bf16.msra.mxu0 %v623
        %635 = vmatpush.bf16.msra.mxu0 %v622
        %636 = vmatpush.bf16.msra.mxu0 %v621
        %637 = vmatpush.bf16.msra.mxu0 %v620
        %638 = vmatpush.bf16.msra.mxu0 %v619
        %639 = vmatpush.bf16.msra.mxu0 %v618
        %640 = vmatpush.bf16.msra.mxu0 %v617
        %641 = vmatmul.bf16.gmra.mxu0 %v565
        %v642 = vpop.f32.mrf.mxu0
        %v643 = vadd.f32 0.0, %v642
        %v644 = vpop.f32.mrf.mxu0
        %v645 = vadd.f32 0.0, %v644
        %646 = vmatmul.bf16.gmra.mxu0 %v566
        %v647 = vpop.f32.mrf.mxu0
        %v648 = vadd.f32 0.0, %v647
        %v649 = vpop.f32.mrf.mxu0
        %v650 = vadd.f32 0.0, %v649
        %651 = vmatmul.bf16.gmra.mxu0 %v567
        %v652 = vpop.f32.mrf.mxu0
        %v653 = vadd.f32 0.0, %v652
        %v654 = vpop.f32.mrf.mxu0
        %655 = vdwg.mxu0
        %v672 = vunpack.c.l.b16 %v539
        %v673 = vunpack.c.l.b16 %v540
        %v674 = vunpack.c.l.b16 %v541
        %v675 = vunpack.c.l.b16 %v542
        %v676 = vunpack.c.l.b16 %v543
        %v677 = vunpack.c.l.b16 %v544
        %v678 = vunpack.c.l.b16 %v545
        %v679 = vunpack.c.l.b16 %v546
        %v680 = vunpack.c.l.b16 %v547
        %v681 = vunpack.c.l.b16 %v548
        %v682 = vunpack.c.l.b16 %v549
        %v683 = vunpack.c.l.b16 %v550
        %v684 = vunpack.c.l.b16 %v551
        %v685 = vunpack.c.l.b16 %v552
        %v686 = vunpack.c.l.b16 %v553
        %v687 = vunpack.c.l.b16 %v554
        %v688 = vpack.c.b16 %v673, %v672
        %v689 = vpack.c.b16 %v675, %v674
        %v690 = vpack.c.b16 %v677, %v676
        %v691 = vpack.c.b16 %v679, %v678
        %v692 = vpack.c.b16 %v681, %v680
        %v693 = vpack.c.b16 %v683, %v682
        %v694 = vpack.c.b16 %v685, %v684
        %v695 = vpack.c.b16 %v687, %v686
        %704 = vmatpush.bf16.msra.mxu0 %v695
        %705 = vmatpush.bf16.msra.mxu0 %v694
        %706 = vmatpush.bf16.msra.mxu0 %v693
        %707 = vmatpush.bf16.msra.mxu0 %v692
        %708 = vmatpush.bf16.msra.mxu0 %v691
        %709 = vmatpush.bf16.msra.mxu0 %v690
        %710 = vmatpush.bf16.msra.mxu0 %v689
        %711 = vmatpush.bf16.msra.mxu0 %v688
        %712 = vmatmul.bf16.gmra.mxu0 %v535
        %v713 = vpop.f32.mrf.mxu0
        %v714 = vadd.f32 %v643, %v713
        %v715 = vpop.f32.mrf.mxu0
        %v716 = vadd.f32 %v645, %v715
        %717 = vmatmul.bf16.gmra.mxu0 %v536
        %v718 = vpop.f32.mrf.mxu0
        %v719 = vadd.f32 %v648, %v718
        %v720 = vpop.f32.mrf.mxu0
        %v721 = vadd.f32 %v650, %v720
        %722 = vmatmul.bf16.gmra.mxu0 %v537
        %v723 = vpop.f32.mrf.mxu0
        %v724 = vadd.f32 %v653, %v723
        %v725 = vpop.f32.mrf.mxu0
        %726 = vdwg.mxu0
        %s727 = scalar_lea.vmem [#allocation2], 2
        %v728 = vld [vmem:[%s727] ss:$2 sm:$0xff]
        %s729 = scalar_lea.vmem [#allocation2], 18
        %v730 = vld [vmem:[%s729] ss:$2 sm:$0xff]
        %s731 = scalar_lea.vmem [#allocation2], 34
        %v732 = vld [vmem:[%s731] ss:$2 sm:$0xff]
        %s733 = scalar_lea.vmem [#allocation2], 50
        %v734 = vld [vmem:[%s733] ss:$2 sm:$0xff]
        %s735 = scalar_lea.vmem [#allocation2], 66
        %v736 = vld [vmem:[%s735] ss:$2 sm:$0x3]
        %v737 = vpack.c.bf16 %v730, %v728
        %v738 = vpack.c.bf16 %v734, %v732
        %v739 = vpack.c.bf16 %v736, %v736
        %s740 = scalar_lea.vmem [#allocation4], 192
        %v741 = vld [vmem:[%s740] sm:$0xf]
        %v742 = vld [vmem:[%s740 + $0x4] sm:$0xf]
        %v743 = vld [vmem:[%s740 + $0x8] sm:$0xf]
        %v744 = vld [vmem:[%s740 + $0xc] sm:$0xf]
        %v745 = vld [vmem:[%s740 + $0x10] sm:$0xf]
        %v746 = vld [vmem:[%s740 + $0x14] sm:$0xf]
        %v747 = vld [vmem:[%s740 + $0x18] sm:$0xf]
        %v748 = vld [vmem:[%s740 + $0x1c] sm:$0xf]
        %v749 = vld [vmem:[%s740 + $0x20] sm:$0xf]
        %v750 = vld [vmem:[%s740 + $0x24] sm:$0xf]
        %v751 = vld [vmem:[%s740 + $0x28] sm:$0xf]
        %v752 = vld [vmem:[%s740 + $0x2c] sm:$0xf]
        %v753 = vld [vmem:[%s740 + $0x30] sm:$0xf]
        %v754 = vld [vmem:[%s740 + $0x34] sm:$0xf]
        %v755 = vld [vmem:[%s740 + $0x38] sm:$0xf]
        %v756 = vld [vmem:[%s740 + $0x3c] sm:$0xf]
        %v773 = vunpack.c.l.b16 %v741
        %v774 = vunpack.c.l.b16 %v742
        %v775 = vunpack.c.l.b16 %v743
        %v776 = vunpack.c.l.b16 %v744
        %v777 = vunpack.c.l.b16 %v745
        %v778 = vunpack.c.l.b16 %v746
        %v779 = vunpack.c.l.b16 %v747
        %v780 = vunpack.c.l.b16 %v748
        %v781 = vunpack.c.l.b16 %v749
        %v782 = vunpack.c.l.b16 %v750
        %v783 = vunpack.c.l.b16 %v751
        %v784 = vunpack.c.l.b16 %v752
        %v785 = vunpack.c.l.b16 %v753
        %v786 = vunpack.c.l.b16 %v754
        %v787 = vunpack.c.l.b16 %v755
        %v788 = vunpack.c.l.b16 %v756
        %v789 = vpack.c.b16 %v774, %v773
        %v790 = vpack.c.b16 %v776, %v775
        %v791 = vpack.c.b16 %v778, %v777
        %v792 = vpack.c.b16 %v780, %v779
        %v793 = vpack.c.b16 %v782, %v781
        %v794 = vpack.c.b16 %v784, %v783
        %v795 = vpack.c.b16 %v786, %v785
        %v796 = vpack.c.b16 %v788, %v787
        %805 = vmatpush.bf16.msra.mxu0 %v796
        %806 = vmatpush.bf16.msra.mxu0 %v795
        %807 = vmatpush.bf16.msra.mxu0 %v794
        %808 = vmatpush.bf16.msra.mxu0 %v793
        %809 = vmatpush.bf16.msra.mxu0 %v792
        %810 = vmatpush.bf16.msra.mxu0 %v791
        %811 = vmatpush.bf16.msra.mxu0 %v790
        %812 = vmatpush.bf16.msra.mxu0 %v789
        %813 = vmatmul.bf16.gmra.mxu0 %v737
        %v814 = vpop.f32.mrf.mxu0
        %v815 = vadd.f32 0.0, %v814
        %v816 = vpop.f32.mrf.mxu0
        %v817 = vadd.f32 0.0, %v816
        %818 = vmatmul.bf16.gmra.mxu0 %v738
        %v819 = vpop.f32.mrf.mxu0
        %v820 = vadd.f32 0.0, %v819
        %v821 = vpop.f32.mrf.mxu0
        %v822 = vadd.f32 0.0, %v821
        %823 = vmatmul.bf16.gmra.mxu0 %v739
        %v824 = vpop.f32.mrf.mxu0
        %v825 = vadd.f32 0.0, %v824
        %v826 = vpop.f32.mrf.mxu0
        %827 = vdwg.mxu0
        %v828 = vadd.f32 %v714, %v815
        %v829 = vadd.f32 %v716, %v817
        %v830 = vadd.f32 %v719, %v820
        %v831 = vadd.f32 %v721, %v822
        %v832 = vadd.f32 %v724, %v825
        %s833 = scalar_lea.vmem [#allocation2], 10
        %v834 = vld [vmem:[%s833] ss:$2 sm:$0xff]
        %s835 = scalar_lea.vmem [#allocation2], 26
        %v836 = vld [vmem:[%s835] ss:$2 sm:$0xff]
        %s837 = scalar_lea.vmem [#allocation2], 42
        %v838 = vld [vmem:[%s837] ss:$2 sm:$0xff]
        %s839 = scalar_lea.vmem [#allocation2], 58
        %v840 = vld [vmem:[%s839] ss:$2 sm:$0xff]
        %s841 = scalar_lea.vmem [#allocation2], 74
        %v842 = vld [vmem:[%s841] ss:$2 sm:$0x3]
        %v843 = vpack.c.bf16 %v836, %v834
        %v844 = vpack.c.bf16 %v840, %v838
        %v845 = vpack.c.bf16 %v842, %v842
        %s846 = scalar_lea.vmem [#allocation4], 256
        %v847 = vld [vmem:[%s846] sm:$0xf]
        %v848 = vld [vmem:[%s846 + $0x4] sm:$0xf]
        %v849 = vld [vmem:[%s846 + $0x8] sm:$0xf]
        %v850 = vld [vmem:[%s846 + $0xc] sm:$0xf]
        %v851 = vld [vmem:[%s846 + $0x10] sm:$0xf]
        %v852 = vld [vmem:[%s846 + $0x14] sm:$0xf]
        %v853 = vld [vmem:[%s846 + $0x18] sm:$0xf]
        %v854 = vld [vmem:[%s846 + $0x1c] sm:$0xf]
        %v855 = vld [vmem:[%s846 + $0x20] sm:$0xf]
        %v856 = vld [vmem:[%s846 + $0x24] sm:$0xf]
        %v857 = vld [vmem:[%s846 + $0x28] sm:$0xf]
        %v858 = vld [vmem:[%s846 + $0x2c] sm:$0xf]
        %v859 = vld [vmem:[%s846 + $0x30] sm:$0xf]
        %v860 = vld [vmem:[%s846 + $0x34] sm:$0xf]
        %v861 = vld [vmem:[%s846 + $0x38] sm:$0xf]
        %v862 = vld [vmem:[%s846 + $0x3c] sm:$0xf]
        %v879 = vunpack.c.l.b16 %v847
        %v880 = vunpack.c.l.b16 %v848
        %v881 = vunpack.c.l.b16 %v849
        %v882 = vunpack.c.l.b16 %v850
        %v883 = vunpack.c.l.b16 %v851
        %v884 = vunpack.c.l.b16 %v852
        %v885 = vunpack.c.l.b16 %v853
        %v886 = vunpack.c.l.b16 %v854
        %v887 = vunpack.c.l.b16 %v855
        %v888 = vunpack.c.l.b16 %v856
        %v889 = vunpack.c.l.b16 %v857
        %v890 = vunpack.c.l.b16 %v858
        %v891 = vunpack.c.l.b16 %v859
        %v892 = vunpack.c.l.b16 %v860
        %v893 = vunpack.c.l.b16 %v861
        %v894 = vunpack.c.l.b16 %v862
        %v895 = vpack.c.b16 %v880, %v879
        %v896 = vpack.c.b16 %v882, %v881
        %v897 = vpack.c.b16 %v884, %v883
        %v898 = vpack.c.b16 %v886, %v885
        %v899 = vpack.c.b16 %v888, %v887
        %v900 = vpack.c.b16 %v890, %v889
        %v901 = vpack.c.b16 %v892, %v891
        %v902 = vpack.c.b16 %v894, %v893
        %911 = vmatpush.bf16.msra.mxu0 %v902
        %912 = vmatpush.bf16.msra.mxu0 %v901
        %913 = vmatpush.bf16.msra.mxu0 %v900
        %914 = vmatpush.bf16.msra.mxu0 %v899
        %915 = vmatpush.bf16.msra.mxu0 %v898
        %916 = vmatpush.bf16.msra.mxu0 %v897
        %917 = vmatpush.bf16.msra.mxu0 %v896
        %918 = vmatpush.bf16.msra.mxu0 %v895
        %919 = vmatmul.bf16.gmra.mxu0 %v843
        %v920 = vpop.f32.mrf.mxu0
        %v921 = vadd.f32 0.0, %v920
        %v922 = vpop.f32.mrf.mxu0
        %v923 = vadd.f32 0.0, %v922
        %924 = vmatmul.bf16.gmra.mxu0 %v844
        %v925 = vpop.f32.mrf.mxu0
        %v926 = vadd.f32 0.0, %v925
        %v927 = vpop.f32.mrf.mxu0
        %v928 = vadd.f32 0.0, %v927
        %929 = vmatmul.bf16.gmra.mxu0 %v845
        %v930 = vpop.f32.mrf.mxu0
        %v931 = vadd.f32 0.0, %v930
        %v932 = vpop.f32.mrf.mxu0
        %933 = vdwg.mxu0
        %v934 = vadd.f32 %v828, %v921
        %v935 = vadd.f32 %v829, %v923
        %v936 = vadd.f32 %v830, %v926
        %v937 = vadd.f32 %v831, %v928
        %v938 = vadd.f32 %v832, %v931
        %s939 = scalar_lea.vmem [#allocation2], 11
        %v940 = vld [vmem:[%s939] ss:$2 sm:$0xff]
        %s941 = scalar_lea.vmem [#allocation2], 27
        %v942 = vld [vmem:[%s941] ss:$2 sm:$0xff]
        %s943 = scalar_lea.vmem [#allocation2], 43
        %v944 = vld [vmem:[%s943] ss:$2 sm:$0xff]
        %s945 = scalar_lea.vmem [#allocation2], 59
        %v946 = vld [vmem:[%s945] ss:$2 sm:$0xff]
        %s947 = scalar_lea.vmem [#allocation2], 75
        %v948 = vld [vmem:[%s947] ss:$2 sm:$0x3]
        %v949 = vpack.c.bf16 %v942, %v940
        %v950 = vpack.c.bf16 %v946, %v944
        %v951 = vpack.c.bf16 %v948, %v948
        %s952 = scalar_lea.vmem [#allocation4], 320
        %v953 = vld [vmem:[%s952] sm:$0xf]
        %v954 = vld [vmem:[%s952 + $0x4] sm:$0xf]
        %v955 = vld [vmem:[%s952 + $0x8] sm:$0xf]
        %v956 = vld [vmem:[%s952 + $0xc] sm:$0xf]
        %v957 = vld [vmem:[%s952 + $0x10] sm:$0xf]
        %v958 = vld [vmem:[%s952 + $0x14] sm:$0xf]
        %v959 = vld [vmem:[%s952 + $0x18] sm:$0xf]
        %v960 = vld [vmem:[%s952 + $0x1c] sm:$0xf]
        %v961 = vld [vmem:[%s952 + $0x20] sm:$0xf]
        %v962 = vld [vmem:[%s952 + $0x24] sm:$0xf]
        %v963 = vld [vmem:[%s952 + $0x28] sm:$0xf]
        %v964 = vld [vmem:[%s952 + $0x2c] sm:$0xf]
        %v965 = vld [vmem:[%s952 + $0x30] sm:$0xf]
        %v966 = vld [vmem:[%s952 + $0x34] sm:$0xf]
        %v967 = vld [vmem:[%s952 + $0x38] sm:$0xf]
        %v968 = vld [vmem:[%s952 + $0x3c] sm:$0xf]
        %v985 = vunpack.c.l.b16 %v953
        %v986 = vunpack.c.l.b16 %v954
        %v987 = vunpack.c.l.b16 %v955
        %v988 = vunpack.c.l.b16 %v956
        %v989 = vunpack.c.l.b16 %v957
        %v990 = vunpack.c.l.b16 %v958
        %v991 = vunpack.c.l.b16 %v959
        %v992 = vunpack.c.l.b16 %v960
        %v993 = vunpack.c.l.b16 %v961
        %v994 = vunpack.c.l.b16 %v962
        %v995 = vunpack.c.l.b16 %v963
        %v996 = vunpack.c.l.b16 %v964
        %v997 = vunpack.c.l.b16 %v965
        %v998 = vunpack.c.l.b16 %v966
        %v999 = vunpack.c.l.b16 %v967
        %v1000 = vunpack.c.l.b16 %v968
        %v1001 = vpack.c.b16 %v986, %v985
        %v1002 = vpack.c.b16 %v988, %v987
        %v1003 = vpack.c.b16 %v990, %v989
        %v1004 = vpack.c.b16 %v992, %v991
        %v1005 = vpack.c.b16 %v994, %v993
        %v1006 = vpack.c.b16 %v996, %v995
        %v1007 = vpack.c.b16 %v998, %v997
        %v1008 = vpack.c.b16 %v1000, %v999
        %1017 = vmatpush.bf16.msra.mxu0 %v1008
        %1018 = vmatpush.bf16.msra.mxu0 %v1007
        %1019 = vmatpush.bf16.msra.mxu0 %v1006
        %1020 = vmatpush.bf16.msra.mxu0 %v1005
        %1021 = vmatpush.bf16.msra.mxu0 %v1004
        %1022 = vmatpush.bf16.msra.mxu0 %v1003
        %1023 = vmatpush.bf16.msra.mxu0 %v1002
        %1024 = vmatpush.bf16.msra.mxu0 %v1001
        %1025 = vmatmul.bf16.gmra.mxu0 %v949
        %v1026 = vpop.f32.mrf.mxu0
        %v1027 = vadd.f32 0.0, %v1026
        %v1028 = vpop.f32.mrf.mxu0
        %v1029 = vadd.f32 0.0, %v1028
        %1030 = vmatmul.bf16.gmra.mxu0 %v950
        %v1031 = vpop.f32.mrf.mxu0
        %v1032 = vadd.f32 0.0, %v1031
        %v1033 = vpop.f32.mrf.mxu0
        %v1034 = vadd.f32 0.0, %v1033
        %1035 = vmatmul.bf16.gmra.mxu0 %v951
        %v1036 = vpop.f32.mrf.mxu0
        %v1037 = vadd.f32 0.0, %v1036
        %v1038 = vpop.f32.mrf.mxu0
        %1039 = vdwg.mxu0
        %v1040 = vadd.f32 %v934, %v1027
        %v1041 = vadd.f32 %v935, %v1029
        %v1042 = vadd.f32 %v936, %v1032
        %v1043 = vadd.f32 %v937, %v1034
        %v1044 = vadd.f32 %v938, %v1037
        %s1045 = scalar_lea.vmem [#allocation2], 12
        %v1046 = vld [vmem:[%s1045] ss:$2 sm:$0xff]
        %s1047 = scalar_lea.vmem [#allocation2], 28
        %v1048 = vld [vmem:[%s1047] ss:$2 sm:$0xff]
        %s1049 = scalar_lea.vmem [#allocation2], 44
        %v1050 = vld [vmem:[%s1049] ss:$2 sm:$0xff]
        %s1051 = scalar_lea.vmem [#allocation2], 60
        %v1052 = vld [vmem:[%s1051] ss:$2 sm:$0xff]
        %s1053 = scalar_lea.vmem [#allocation2], 76
        %v1054 = vld [vmem:[%s1053] ss:$2 sm:$0x3]
        %v1055 = vpack.c.bf16 %v1048, %v1046
        %v1056 = vpack.c.bf16 %v1052, %v1050
        %v1057 = vpack.c.bf16 %v1054, %v1054
        %s1058 = scalar_lea.vmem [#allocation4], 384
        %v1059 = vld [vmem:[%s1058] sm:$0xf]
        %v1060 = vld [vmem:[%s1058 + $0x4] sm:$0xf]
        %v1061 = vld [vmem:[%s1058 + $0x8] sm:$0xf]
        %v1062 = vld [vmem:[%s1058 + $0xc] sm:$0xf]
        %v1063 = vld [vmem:[%s1058 + $0x10] sm:$0xf]
        %v1064 = vld [vmem:[%s1058 + $0x14] sm:$0xf]
        %v1065 = vld [vmem:[%s1058 + $0x18] sm:$0xf]
        %v1066 = vld [vmem:[%s1058 + $0x1c] sm:$0xf]
        %v1067 = vld [vmem:[%s1058 + $0x20] sm:$0xf]
        %v1068 = vld [vmem:[%s1058 + $0x24] sm:$0xf]
        %v1069 = vld [vmem:[%s1058 + $0x28] sm:$0xf]
        %v1070 = vld [vmem:[%s1058 + $0x2c] sm:$0xf]
        %v1071 = vld [vmem:[%s1058 + $0x30] sm:$0xf]
        %v1072 = vld [vmem:[%s1058 + $0x34] sm:$0xf]
        %v1073 = vld [vmem:[%s1058 + $0x38] sm:$0xf]
        %v1074 = vld [vmem:[%s1058 + $0x3c] sm:$0xf]
        %v1091 = vunpack.c.l.b16 %v1059
        %v1092 = vunpack.c.l.b16 %v1060
        %v1093 = vunpack.c.l.b16 %v1061
        %v1094 = vunpack.c.l.b16 %v1062
        %v1095 = vunpack.c.l.b16 %v1063
        %v1096 = vunpack.c.l.b16 %v1064
        %v1097 = vunpack.c.l.b16 %v1065
        %v1098 = vunpack.c.l.b16 %v1066
        %v1099 = vunpack.c.l.b16 %v1067
        %v1100 = vunpack.c.l.b16 %v1068
        %v1101 = vunpack.c.l.b16 %v1069
        %v1102 = vunpack.c.l.b16 %v1070
        %v1103 = vunpack.c.l.b16 %v1071
        %v1104 = vunpack.c.l.b16 %v1072
        %v1105 = vunpack.c.l.b16 %v1073
        %v1106 = vunpack.c.l.b16 %v1074
        %v1107 = vpack.c.b16 %v1092, %v1091
        %v1108 = vpack.c.b16 %v1094, %v1093
        %v1109 = vpack.c.b16 %v1096, %v1095
        %v1110 = vpack.c.b16 %v1098, %v1097
        %v1111 = vpack.c.b16 %v1100, %v1099
        %v1112 = vpack.c.b16 %v1102, %v1101
        %v1113 = vpack.c.b16 %v1104, %v1103
        %v1114 = vpack.c.b16 %v1106, %v1105
        %1123 = vmatpush.bf16.msra.mxu0 %v1114
        %1124 = vmatpush.bf16.msra.mxu0 %v1113
        %1125 = vmatpush.bf16.msra.mxu0 %v1112
        %1126 = vmatpush.bf16.msra.mxu0 %v1111
        %1127 = vmatpush.bf16.msra.mxu0 %v1110
        %1128 = vmatpush.bf16.msra.mxu0 %v1109
        %1129 = vmatpush.bf16.msra.mxu0 %v1108
        %1130 = vmatpush.bf16.msra.mxu0 %v1107
        %1131 = vmatmul.bf16.gmra.mxu0 %v1055
        %v1132 = vpop.f32.mrf.mxu0
        %v1133 = vadd.f32 0.0, %v1132
        %v1134 = vpop.f32.mrf.mxu0
        %v1135 = vadd.f32 0.0, %v1134
        %1136 = vmatmul.bf16.gmra.mxu0 %v1056
        %v1137 = vpop.f32.mrf.mxu0
        %v1138 = vadd.f32 0.0, %v1137
        %v1139 = vpop.f32.mrf.mxu0
        %v1140 = vadd.f32 0.0, %v1139
        %1141 = vmatmul.bf16.gmra.mxu0 %v1057
        %v1142 = vpop.f32.mrf.mxu0
        %v1143 = vadd.f32 0.0, %v1142
        %v1144 = vpop.f32.mrf.mxu0
        %1145 = vdwg.mxu0
        %v1146 = vadd.f32 %v1040, %v1133
        %v1147 = vadd.f32 %v1041, %v1135
        %v1148 = vadd.f32 %v1042, %v1138
        %v1149 = vadd.f32 %v1043, %v1140
        %v1150 = vadd.f32 %v1044, %v1143
        %s1151 = scalar_lea.vmem [#allocation2], 20
        %v1152 = vld [vmem:[%s1151] ss:$2 sm:$0xff]
        %s1153 = scalar_lea.vmem [#allocation2], 36
        %v1154 = vld [vmem:[%s1153] ss:$2 sm:$0xff]
        %s1155 = scalar_lea.vmem [#allocation2], 52
        %v1156 = vld [vmem:[%s1155] ss:$2 sm:$0xff]
        %s1157 = scalar_lea.vmem [#allocation2], 68
        %v1158 = vld [vmem:[%s1157] ss:$2 sm:$0xff]
        %s1159 = scalar_lea.vmem [#allocation2], 84
        %v1160 = vld [vmem:[%s1159] ss:$2 sm:$0x3]
        %v1161 = vpack.c.bf16 %v1154, %v1152
        %v1162 = vpack.c.bf16 %v1158, %v1156
        %v1163 = vpack.c.bf16 %v1160, %v1160
        %s1164 = scalar_lea.vmem [#allocation4], 448
        %v1165 = vld [vmem:[%s1164] sm:$0xf]
        %v1166 = vld [vmem:[%s1164 + $0x4] sm:$0xf]
        %v1167 = vld [vmem:[%s1164 + $0x8] sm:$0xf]
        %v1168 = vld [vmem:[%s1164 + $0xc] sm:$0xf]
        %v1169 = vld [vmem:[%s1164 + $0x10] sm:$0xf]
        %v1170 = vld [vmem:[%s1164 + $0x14] sm:$0xf]
        %v1171 = vld [vmem:[%s1164 + $0x18] sm:$0xf]
        %v1172 = vld [vmem:[%s1164 + $0x1c] sm:$0xf]
        %v1173 = vld [vmem:[%s1164 + $0x20] sm:$0xf]
        %v1174 = vld [vmem:[%s1164 + $0x24] sm:$0xf]
        %v1175 = vld [vmem:[%s1164 + $0x28] sm:$0xf]
        %v1176 = vld [vmem:[%s1164 + $0x2c] sm:$0xf]
        %v1177 = vld [vmem:[%s1164 + $0x30] sm:$0xf]
        %v1178 = vld [vmem:[%s1164 + $0x34] sm:$0xf]
        %v1179 = vld [vmem:[%s1164 + $0x38] sm:$0xf]
        %v1180 = vld [vmem:[%s1164 + $0x3c] sm:$0xf]
        %v1197 = vunpack.c.l.b16 %v1165
        %v1198 = vunpack.c.l.b16 %v1166
        %v1199 = vunpack.c.l.b16 %v1167
        %v1200 = vunpack.c.l.b16 %v1168
        %v1201 = vunpack.c.l.b16 %v1169
        %v1202 = vunpack.c.l.b16 %v1170
        %v1203 = vunpack.c.l.b16 %v1171
        %v1204 = vunpack.c.l.b16 %v1172
        %v1205 = vunpack.c.l.b16 %v1173
        %v1206 = vunpack.c.l.b16 %v1174
        %v1207 = vunpack.c.l.b16 %v1175
        %v1208 = vunpack.c.l.b16 %v1176
        %v1209 = vunpack.c.l.b16 %v1177
        %v1210 = vunpack.c.l.b16 %v1178
        %v1211 = vunpack.c.l.b16 %v1179
        %v1212 = vunpack.c.l.b16 %v1180
        %v1213 = vpack.c.b16 %v1198, %v1197
        %v1214 = vpack.c.b16 %v1200, %v1199
        %v1215 = vpack.c.b16 %v1202, %v1201
        %v1216 = vpack.c.b16 %v1204, %v1203
        %v1217 = vpack.c.b16 %v1206, %v1205
        %v1218 = vpack.c.b16 %v1208, %v1207
        %v1219 = vpack.c.b16 %v1210, %v1209
        %v1220 = vpack.c.b16 %v1212, %v1211
        %1229 = vmatpush.bf16.msra.mxu0 %v1220
        %1230 = vmatpush.bf16.msra.mxu0 %v1219
        %1231 = vmatpush.bf16.msra.mxu0 %v1218
        %1232 = vmatpush.bf16.msra.mxu0 %v1217
        %1233 = vmatpush.bf16.msra.mxu0 %v1216
        %1234 = vmatpush.bf16.msra.mxu0 %v1215
        %1235 = vmatpush.bf16.msra.mxu0 %v1214
        %1236 = vmatpush.bf16.msra.mxu0 %v1213
        %1237 = vmatmul.bf16.gmra.mxu0 %v1161
        %v1238 = vpop.f32.mrf.mxu0
        %v1239 = vadd.f32 0.0, %v1238
        %v1240 = vpop.f32.mrf.mxu0
        %v1241 = vadd.f32 0.0, %v1240
        %1242 = vmatmul.bf16.gmra.mxu0 %v1162
        %v1243 = vpop.f32.mrf.mxu0
        %v1244 = vadd.f32 0.0, %v1243
        %v1245 = vpop.f32.mrf.mxu0
        %v1246 = vadd.f32 0.0, %v1245
        %1247 = vmatmul.bf16.gmra.mxu0 %v1163
        %v1248 = vpop.f32.mrf.mxu0
        %v1249 = vadd.f32 0.0, %v1248
        %v1250 = vpop.f32.mrf.mxu0
        %1251 = vdwg.mxu0
        %v1252 = vadd.f32 %v1146, %v1239
        %v1253 = vadd.f32 %v1147, %v1241
        %v1254 = vadd.f32 %v1148, %v1244
        %v1255 = vadd.f32 %v1149, %v1246
        %v1256 = vadd.f32 %v1150, %v1249
        %s1257 = scalar_lea.vmem [#allocation2], 21
        %v1258 = vld [vmem:[%s1257] ss:$2 sm:$0xff]
        %s1259 = scalar_lea.vmem [#allocation2], 37
        %v1260 = vld [vmem:[%s1259] ss:$2 sm:$0xff]
        %s1261 = scalar_lea.vmem [#allocation2], 53
        %v1262 = vld [vmem:[%s1261] ss:$2 sm:$0xff]
        %s1263 = scalar_lea.vmem [#allocation2], 69
        %v1264 = vld [vmem:[%s1263] ss:$2 sm:$0xff]
        %s1265 = scalar_lea.vmem [#allocation2], 85
        %v1266 = vld [vmem:[%s1265] ss:$2 sm:$0x3]
        %v1267 = vpack.c.bf16 %v1260, %v1258
        %v1268 = vpack.c.bf16 %v1264, %v1262
        %v1269 = vpack.c.bf16 %v1266, %v1266
        %s1270 = scalar_lea.vmem [#allocation4], 512
        %v1271 = vld [vmem:[%s1270] sm:$0xf]
        %v1272 = vld [vmem:[%s1270 + $0x4] sm:$0xf]
        %v1273 = vld [vmem:[%s1270 + $0x8] sm:$0xf]
        %v1274 = vld [vmem:[%s1270 + $0xc] sm:$0xf]
        %v1275 = vld [vmem:[%s1270 + $0x10] sm:$0xf]
        %v1276 = vld [vmem:[%s1270 + $0x14] sm:$0xf]
        %v1277 = vld [vmem:[%s1270 + $0x18] sm:$0xf]
        %v1278 = vld [vmem:[%s1270 + $0x1c] sm:$0xf]
        %v1279 = vld [vmem:[%s1270 + $0x20] sm:$0xf]
        %v1280 = vld [vmem:[%s1270 + $0x24] sm:$0xf]
        %v1281 = vld [vmem:[%s1270 + $0x28] sm:$0xf]
        %v1282 = vld [vmem:[%s1270 + $0x2c] sm:$0xf]
        %v1283 = vld [vmem:[%s1270 + $0x30] sm:$0xf]
        %v1284 = vld [vmem:[%s1270 + $0x34] sm:$0xf]
        %v1285 = vld [vmem:[%s1270 + $0x38] sm:$0xf]
        %v1286 = vld [vmem:[%s1270 + $0x3c] sm:$0xf]
        %v1303 = vunpack.c.l.b16 %v1271
        %v1304 = vunpack.c.l.b16 %v1272
        %v1305 = vunpack.c.l.b16 %v1273
        %v1306 = vunpack.c.l.b16 %v1274
        %v1307 = vunpack.c.l.b16 %v1275
        %v1308 = vunpack.c.l.b16 %v1276
        %v1309 = vunpack.c.l.b16 %v1277
        %v1310 = vunpack.c.l.b16 %v1278
        %v1311 = vunpack.c.l.b16 %v1279
        %v1312 = vunpack.c.l.b16 %v1280
        %v1313 = vunpack.c.l.b16 %v1281
        %v1314 = vunpack.c.l.b16 %v1282
        %v1315 = vunpack.c.l.b16 %v1283
        %v1316 = vunpack.c.l.b16 %v1284
        %v1317 = vunpack.c.l.b16 %v1285
        %v1318 = vunpack.c.l.b16 %v1286
        %v1319 = vpack.c.b16 %v1304, %v1303
        %v1320 = vpack.c.b16 %v1306, %v1305
        %v1321 = vpack.c.b16 %v1308, %v1307
        %v1322 = vpack.c.b16 %v1310, %v1309
        %v1323 = vpack.c.b16 %v1312, %v1311
        %v1324 = vpack.c.b16 %v1314, %v1313
        %v1325 = vpack.c.b16 %v1316, %v1315
        %v1326 = vpack.c.b16 %v1318, %v1317
        %1335 = vmatpush.bf16.msra.mxu0 %v1326
        %1336 = vmatpush.bf16.msra.mxu0 %v1325
        %1337 = vmatpush.bf16.msra.mxu0 %v1324
        %1338 = vmatpush.bf16.msra.mxu0 %v1323
        %1339 = vmatpush.bf16.msra.mxu0 %v1322
        %1340 = vmatpush.bf16.msra.mxu0 %v1321
        %1341 = vmatpush.bf16.msra.mxu0 %v1320
        %1342 = vmatpush.bf16.msra.mxu0 %v1319
        %1343 = vmatmul.bf16.gmra.mxu0 %v1267
        %v1344 = vpop.f32.mrf.mxu0
        %v1345 = vadd.f32 0.0, %v1344
        %v1346 = vpop.f32.mrf.mxu0
        %v1347 = vadd.f32 0.0, %v1346
        %1348 = vmatmul.bf16.gmra.mxu0 %v1268
        %v1349 = vpop.f32.mrf.mxu0
        %v1350 = vadd.f32 0.0, %v1349
        %v1351 = vpop.f32.mrf.mxu0
        %v1352 = vadd.f32 0.0, %v1351
        %1353 = vmatmul.bf16.gmra.mxu0 %v1269
        %v1354 = vpop.f32.mrf.mxu0
        %v1355 = vadd.f32 0.0, %v1354
        %v1356 = vpop.f32.mrf.mxu0
        %1357 = vdwg.mxu0
        %v1358 = vadd.f32 %v1252, %v1345
        %v1359 = vadd.f32 %v1253, %v1347
        %v1360 = vadd.f32 %v1254, %v1350
        %v1361 = vadd.f32 %v1255, %v1352
        %v1362 = vadd.f32 %v1256, %v1355
        %s1363 = scalar_lea.vmem [#allocation2], 22
        %v1364 = vld [vmem:[%s1363] ss:$2 sm:$0xff]
        %s1365 = scalar_lea.vmem [#allocation2], 38
        %v1366 = vld [vmem:[%s1365] ss:$2 sm:$0xff]
        %s1367 = scalar_lea.vmem [#allocation2], 54
        %v1368 = vld [vmem:[%s1367] ss:$2 sm:$0xff]
        %s1369 = scalar_lea.vmem [#allocation2], 70
        %v1370 = vld [vmem:[%s1369] ss:$2 sm:$0xff]
        %s1371 = scalar_lea.vmem [#allocation2], 86
        %v1372 = vld [vmem:[%s1371] ss:$2 sm:$0x3]
        %v1373 = vpack.c.bf16 %v1366, %v1364
        %v1374 = vpack.c.bf16 %v1370, %v1368
        %v1375 = vpack.c.bf16 %v1372, %v1372
        %s1376 = scalar_lea.vmem [#allocation4], 576
        %v1377 = vld [vmem:[%s1376] sm:$0xf]
        %v1378 = vld [vmem:[%s1376 + $0x4] sm:$0xf]
        %v1379 = vld [vmem:[%s1376 + $0x8] sm:$0xf]
        %v1380 = vld [vmem:[%s1376 + $0xc] sm:$0xf]
        %v1381 = vld [vmem:[%s1376 + $0x10] sm:$0xf]
        %v1382 = vld [vmem:[%s1376 + $0x14] sm:$0xf]
        %v1383 = vld [vmem:[%s1376 + $0x18] sm:$0xf]
        %v1384 = vld [vmem:[%s1376 + $0x1c] sm:$0xf]
        %v1385 = vld [vmem:[%s1376 + $0x20] sm:$0xf]
        %v1386 = vld [vmem:[%s1376 + $0x24] sm:$0xf]
        %v1387 = vld [vmem:[%s1376 + $0x28] sm:$0xf]
        %v1388 = vld [vmem:[%s1376 + $0x2c] sm:$0xf]
        %v1389 = vld [vmem:[%s1376 + $0x30] sm:$0xf]
        %v1390 = vld [vmem:[%s1376 + $0x34] sm:$0xf]
        %v1391 = vld [vmem:[%s1376 + $0x38] sm:$0xf]
        %v1392 = vld [vmem:[%s1376 + $0x3c] sm:$0xf]
        %v1409 = vunpack.c.l.b16 %v1377
        %v1410 = vunpack.c.l.b16 %v1378
        %v1411 = vunpack.c.l.b16 %v1379
        %v1412 = vunpack.c.l.b16 %v1380
        %v1413 = vunpack.c.l.b16 %v1381
        %v1414 = vunpack.c.l.b16 %v1382
        %v1415 = vunpack.c.l.b16 %v1383
        %v1416 = vunpack.c.l.b16 %v1384
        %v1417 = vunpack.c.l.b16 %v1385
        %v1418 = vunpack.c.l.b16 %v1386
        %v1419 = vunpack.c.l.b16 %v1387
        %v1420 = vunpack.c.l.b16 %v1388
        %v1421 = vunpack.c.l.b16 %v1389
        %v1422 = vunpack.c.l.b16 %v1390
        %v1423 = vunpack.c.l.b16 %v1391
        %v1424 = vunpack.c.l.b16 %v1392
        %v1425 = vpack.c.b16 %v1410, %v1409
        %v1426 = vpack.c.b16 %v1412, %v1411
        %v1427 = vpack.c.b16 %v1414, %v1413
        %v1428 = vpack.c.b16 %v1416, %v1415
        %v1429 = vpack.c.b16 %v1418, %v1417
        %v1430 = vpack.c.b16 %v1420, %v1419
        %v1431 = vpack.c.b16 %v1422, %v1421
        %v1432 = vpack.c.b16 %v1424, %v1423
        %1441 = vmatpush.bf16.msra.mxu0 %v1432
        %1442 = vmatpush.bf16.msra.mxu0 %v1431
        %1443 = vmatpush.bf16.msra.mxu0 %v1430
        %1444 = vmatpush.bf16.msra.mxu0 %v1429
        %1445 = vmatpush.bf16.msra.mxu0 %v1428
        %1446 = vmatpush.bf16.msra.mxu0 %v1427
        %1447 = vmatpush.bf16.msra.mxu0 %v1426
        %1448 = vmatpush.bf16.msra.mxu0 %v1425
        %1449 = vmatmul.bf16.gmra.mxu0 %v1373
        %v1450 = vpop.f32.mrf.mxu0
        %v1451 = vadd.f32 0.0, %v1450
        %v1452 = vpop.f32.mrf.mxu0
        %v1453 = vadd.f32 0.0, %v1452
        %1454 = vmatmul.bf16.gmra.mxu0 %v1374
        %v1455 = vpop.f32.mrf.mxu0
        %v1456 = vadd.f32 0.0, %v1455
        %v1457 = vpop.f32.mrf.mxu0
        %v1458 = vadd.f32 0.0, %v1457
        %1459 = vmatmul.bf16.gmra.mxu0 %v1375
        %v1460 = vpop.f32.mrf.mxu0
        %v1461 = vadd.f32 0.0, %v1460
        %v1462 = vpop.f32.mrf.mxu0
        %1463 = vdwg.mxu0
        %v1464 = vadd.f32 %v1358, %v1451
        %v1465 = vadd.f32 %v1359, %v1453
        %v1466 = vadd.f32 %v1360, %v1456
        %v1467 = vadd.f32 %v1361, %v1458
        %v1468 = vadd.f32 %v1362, %v1461
        %v1469 = vld [vmem:[#allocation6 + $0x1] sm:$0x1]
        %v1470 = vperm.slane %v1469, 0
        %v1471 = vadd.f32 %v1464, %v1470
        %v1472 = vxor.u32 %v1471, 2147483648
        %v1473 = vmul.f32 %v1472, 1.442695
        %v1474 = vpow.pop %v1473
        %v1475 = vadd.f32 %v1474, 1.0
        %v1476 = vrcp.pop %v1475
        %v1477 = vmul.f32 %v1475, %v1476
        %v1478 = vsub.f32 1.0, %v1477
        %v1479 = vmul.f32 %v1476, %v1478
        %v1480 = vadd.f32 %v1476, %v1479
        %vm1481 = vweird.f32 %v1475
        %vm1482 = vweird.f32 %v1476
        %vm1483 = vmor %vm1481, %vm1482
        %v1484 = vsel %vm1483, %v1476, %v1480
        %v1485 = vand.u32 2147483647, %v1475
        %vm1486 = vcmp.eq.f32.partialorder %v1485, 8.507059e+37
        %v1487 = vand.u32 %v1475, 2147483648
        %v1488 = vor.u32 1.1754944e-38, %v1487
        %v1489 = vsel %vm1486, %v1488, %v1484
        %v1490 = vmul.f32 1.0, %v1489
        %v1491 = vmul.f32 %v1471, %v1490
        %1492 = vst [vmem:[#allocation3 + $0x7] sm:$0xf] %v1491
        %v1493 = vadd.f32 %v1465, %v1470
        %v1494 = vxor.u32 %v1493, 2147483648
        %v1495 = vmul.f32 %v1494, 1.442695
        %v1496 = vpow.pop %v1495
        %v1497 = vadd.f32 %v1496, 1.0
        %v1498 = vrcp.pop %v1497
        %v1499 = vmul.f32 %v1497, %v1498
        %v1500 = vsub.f32 1.0, %v1499
        %v1501 = vmul.f32 %v1498, %v1500
        %v1502 = vadd.f32 %v1498, %v1501
        %vm1503 = vweird.f32 %v1497
        %vm1504 = vweird.f32 %v1498
        %vm1505 = vmor %vm1503, %vm1504
        %v1506 = vsel %vm1505, %v1498, %v1502
        %v1507 = vand.u32 2147483647, %v1497
        %vm1508 = vcmp.eq.f32.partialorder %v1507, 8.507059e+37
        %v1509 = vand.u32 %v1497, 2147483648
        %v1510 = vor.u32 1.1754944e-38, %v1509
        %v1511 = vsel %vm1508, %v1510, %v1506
        %v1512 = vmul.f32 1.0, %v1511
        %v1513 = vmul.f32 %v1493, %v1512
        %1514 = vst [vmem:[#allocation3 + $0xb] sm:$0x3c] %v1513
        %v1515 = vadd.f32 %v1466, %v1470
        %v1516 = vxor.u32 %v1515, 2147483648
        %v1517 = vmul.f32 %v1516, 1.442695
        %v1518 = vpow.pop %v1517
        %v1519 = vadd.f32 %v1518, 1.0
        %v1520 = vrcp.pop %v1519
        %v1521 = vmul.f32 %v1519, %v1520
        %v1522 = vsub.f32 1.0, %v1521
        %v1523 = vmul.f32 %v1520, %v1522
        %v1524 = vadd.f32 %v1520, %v1523
        %vm1525 = vweird.f32 %v1519
        %vm1526 = vweird.f32 %v1520
        %vm1527 = vmor %vm1525, %vm1526
        %v1528 = vsel %vm1527, %v1520, %v1524
        %v1529 = vand.u32 2147483647, %v1519
        %vm1530 = vcmp.eq.f32.partialorder %v1529, 8.507059e+37
        %v1531 = vand.u32 %v1519, 2147483648
        %v1532 = vor.u32 1.1754944e-38, %v1531
        %v1533 = vsel %vm1530, %v1532, %v1528
        %v1534 = vmul.f32 1.0, %v1533
        %v1535 = vmul.f32 %v1515, %v1534
        %1536 = vst [vmem:[#allocation3 + $0xf] sm:$0xf0] %v1535
        %v1537 = vadd.f32 %v1467, %v1470
        %v1538 = vadd.f32 %v1468, %v1470
        %v1539 = vxor.u32 %v1537, 2147483648
        %v1540 = vxor.u32 %v1538, 2147483648
        %v1541 = vmul.f32 %v1539, 1.442695
        %v1542 = vpow.pop %v1541
        %v1543 = vmul.f32 %v1540, 1.442695
        %v1544 = vpow.pop %v1543
        %v1545 = vadd.f32 %v1542, 1.0
        %v1546 = vadd.f32 %v1544, 1.0
        %v1547 = vrcp.pop %v1545
        %v1548 = vmul.f32 %v1545, %v1547
        %v1549 = vsub.f32 1.0, %v1548
        %v1550 = vmul.f32 %v1547, %v1549
        %v1551 = vadd.f32 %v1547, %v1550
        %vm1552 = vweird.f32 %v1545
        %vm1553 = vweird.f32 %v1547
        %vm1554 = vmor %vm1552, %vm1553
        %v1555 = vsel %vm1554, %v1547, %v1551
        %v1556 = vand.u32 2147483647, %v1545
        %vm1557 = vcmp.eq.f32.partialorder %v1556, 8.507059e+37
        %v1558 = vand.u32 %v1545, 2147483648
        %v1559 = vor.u32 1.1754944e-38, %v1558
        %v1560 = vsel %vm1557, %v1559, %v1555
        %v1561 = vmul.f32 1.0, %v1560
        %v1562 = vrcp.pop %v1546
        %v1563 = vmul.f32 %v1546, %v1562
        %v1564 = vsub.f32 1.0, %v1563
        %v1565 = vmul.f32 %v1562, %v1564
        %v1566 = vadd.f32 %v1562, %v1565
        %vm1567 = vweird.f32 %v1546
        %vm1568 = vweird.f32 %v1562
        %vm1569 = vmor %vm1567, %vm1568
        %v1570 = vsel %vm1569, %v1562, %v1566
        %v1571 = vand.u32 2147483647, %v1546
        %vm1572 = vcmp.eq.f32.partialorder %v1571, 8.507059e+37
        %v1573 = vand.u32 %v1546, 2147483648
        %v1574 = vor.u32 1.1754944e-38, %v1573
        %v1575 = vsel %vm1572, %v1574, %v1570
        %v1576 = vmul.f32 1.0, %v1575
        %v1577 = vmul.f32 %v1537, %v1561
        %v1578 = vmul.f32 %v1538, %v1576
        %1579 = vst [vmem:[#allocation3 + $0x13] sm:$0xc0] %v1577
        %1580 = vst [vmem:[#allocation3 + $0x1b] sm:$0x3] %v1578
        %1581 = vst [vmem:[#allocation2] sm:$0xff] 0.0
        %1582 = vst [vmem:[#allocation2 + $0x8] sm:$0xff] 0.0
        %1583 = vst [vmem:[#allocation2 + $0x10] sm:$0xff] 0.0
        %1584 = vst [vmem:[#allocation2 + $0x18] sm:$0xff] 0.0
        %1585 = vst [vmem:[#allocation2 + $0x20] sm:$0xff] 0.0
        %v1586 = vld [vmem:[#allocation3] sm:$0xff]
        %v1587 = vld [vmem:[#allocation3 + $0x8] sm:$0xff]
        %v1588 = vld [vmem:[#allocation3 + $0x10] sm:$0x3f]
        %v1589 = vpack.c.bf16 %v1587, %v1586
        %v1590 = vpack.c.bf16 %v1588, %v1588
        %s1591 = scalar_lea.vmem [#allocation4], 640
        %v1592 = vld [vmem:[%s1591] sm:$0xf]
        %v1593 = vld [vmem:[%s1591 + $0x4] sm:$0xf]
        %v1594 = vld [vmem:[%s1591 + $0x8] sm:$0xf]
        %v1595 = vld [vmem:[%s1591 + $0xc] sm:$0xf]
        %v1596 = vld [vmem:[%s1591 + $0x10] sm:$0xf]
        %v1597 = vld [vmem:[%s1591 + $0x14] sm:$0xf]
        %v1598 = vld [vmem:[%s1591 + $0x18] sm:$0xf]
        %v1599 = vld [vmem:[%s1591 + $0x1c] sm:$0xf]
        %v1600 = vld [vmem:[%s1591 + $0x20] sm:$0xf]
        %v1601 = vld [vmem:[%s1591 + $0x24] sm:$0xf]
        %v1602 = vld [vmem:[%s1591 + $0x28] sm:$0xf]
        %v1603 = vld [vmem:[%s1591 + $0x2c] sm:$0xf]
        %v1604 = vld [vmem:[%s1591 + $0x30] sm:$0xf]
        %v1605 = vld [vmem:[%s1591 + $0x34] sm:$0xf]
        %v1606 = vld [vmem:[%s1591 + $0x38] sm:$0xf]
        %v1607 = vld [vmem:[%s1591 + $0x3c] sm:$0xf]
        %v1608 = vld [vmem:[#allocation3 + $0x1] sm:$0xff]
        %v1609 = vld [vmem:[#allocation3 + $0x9] sm:$0xff]
        %v1610 = vld [vmem:[#allocation3 + $0x11] sm:$0x3f]
        %v1611 = vpack.c.bf16 %v1609, %v1608
        %v1612 = vpack.c.bf16 %v1610, %v1610
        %s1613 = scalar_lea.vmem [#allocation4], 704
        %v1614 = vld [vmem:[%s1613] sm:$0xf]
        %v1615 = vld [vmem:[%s1613 + $0x4] sm:$0xf]
        %v1616 = vld [vmem:[%s1613 + $0x8] sm:$0xf]
        %v1617 = vld [vmem:[%s1613 + $0xc] sm:$0xf]
        %v1618 = vld [vmem:[%s1613 + $0x10] sm:$0xf]
        %v1619 = vld [vmem:[%s1613 + $0x14] sm:$0xf]
        %v1620 = vld [vmem:[%s1613 + $0x18] sm:$0xf]
        %v1621 = vld [vmem:[%s1613 + $0x1c] sm:$0xf]
        %v1622 = vld [vmem:[%s1613 + $0x20] sm:$0xf]
        %v1623 = vld [vmem:[%s1613 + $0x24] sm:$0xf]
        %v1624 = vld [vmem:[%s1613 + $0x28] sm:$0xf]
        %v1625 = vld [vmem:[%s1613 + $0x2c] sm:$0xf]
        %v1626 = vld [vmem:[%s1613 + $0x30] sm:$0xf]
        %v1627 = vld [vmem:[%s1613 + $0x34] sm:$0xf]
        %v1628 = vld [vmem:[%s1613 + $0x38] sm:$0xf]
        %v1629 = vld [vmem:[%s1613 + $0x3c] sm:$0xf]
        %v1646 = vunpack.c.l.b16 %v1614
        %v1647 = vunpack.c.l.b16 %v1615
        %v1648 = vunpack.c.l.b16 %v1616
        %v1649 = vunpack.c.l.b16 %v1617
        %v1650 = vunpack.c.l.b16 %v1618
        %v1651 = vunpack.c.l.b16 %v1619
        %v1652 = vunpack.c.l.b16 %v1620
        %v1653 = vunpack.c.l.b16 %v1621
        %v1654 = vunpack.c.l.b16 %v1622
        %v1655 = vunpack.c.l.b16 %v1623
        %v1656 = vunpack.c.l.b16 %v1624
        %v1657 = vunpack.c.l.b16 %v1625
        %v1658 = vunpack.c.l.b16 %v1626
        %v1659 = vunpack.c.l.b16 %v1627
        %v1660 = vunpack.c.l.b16 %v1628
        %v1661 = vunpack.c.l.b16 %v1629
        %v1662 = vpack.c.b16 %v1647, %v1646
        %v1663 = vpack.c.b16 %v1649, %v1648
        %v1664 = vpack.c.b16 %v1651, %v1650
        %v1665 = vpack.c.b16 %v1653, %v1652
        %v1666 = vpack.c.b16 %v1655, %v1654
        %v1667 = vpack.c.b16 %v1657, %v1656
        %v1668 = vpack.c.b16 %v1659, %v1658
        %v1669 = vpack.c.b16 %v1661, %v1660
        %1678 = vmatpush.bf16.msra.mxu0 %v1669
        %1679 = vmatpush.bf16.msra.mxu0 %v1668
        %1680 = vmatpush.bf16.msra.mxu0 %v1667
        %1681 = vmatpush.bf16.msra.mxu0 %v1666
        %1682 = vmatpush.bf16.msra.mxu0 %v1665
        %1683 = vmatpush.bf16.msra.mxu0 %v1664
        %1684 = vmatpush.bf16.msra.mxu0 %v1663
        %1685 = vmatpush.bf16.msra.mxu0 %v1662
        %1686 = vmatmul.bf16.gmra.mxu0 %v1611
        %v1687 = vpop.f32.mrf.mxu0
        %v1688 = vadd.f32 0.0, %v1687
        %v1689 = vpop.f32.mrf.mxu0
        %v1690 = vadd.f32 0.0, %v1689
        %1691 = vmatmul.bf16.gmra.mxu0 %v1612
        %v1692 = vpop.f32.mrf.mxu0
        %v1693 = vadd.f32 0.0, %v1692
        %v1694 = vpop.f32.mrf.mxu0
        %1695 = vdwg.mxu0
        %v1712 = vunpack.c.l.b16 %v1592
        %v1713 = vunpack.c.l.b16 %v1593
        %v1714 = vunpack.c.l.b16 %v1594
        %v1715 = vunpack.c.l.b16 %v1595
        %v1716 = vunpack.c.l.b16 %v1596
        %v1717 = vunpack.c.l.b16 %v1597
        %v1718 = vunpack.c.l.b16 %v1598
        %v1719 = vunpack.c.l.b16 %v1599
        %v1720 = vunpack.c.l.b16 %v1600
        %v1721 = vunpack.c.l.b16 %v1601
        %v1722 = vunpack.c.l.b16 %v1602
        %v1723 = vunpack.c.l.b16 %v1603
        %v1724 = vunpack.c.l.b16 %v1604
        %v1725 = vunpack.c.l.b16 %v1605
        %v1726 = vunpack.c.l.b16 %v1606
        %v1727 = vunpack.c.l.b16 %v1607
        %v1728 = vpack.c.b16 %v1713, %v1712
        %v1729 = vpack.c.b16 %v1715, %v1714
        %v1730 = vpack.c.b16 %v1717, %v1716
        %v1731 = vpack.c.b16 %v1719, %v1718
        %v1732 = vpack.c.b16 %v1721, %v1720
        %v1733 = vpack.c.b16 %v1723, %v1722
        %v1734 = vpack.c.b16 %v1725, %v1724
        %v1735 = vpack.c.b16 %v1727, %v1726
        %1744 = vmatpush.bf16.msra.mxu0 %v1735
        %1745 = vmatpush.bf16.msra.mxu0 %v1734
        %1746 = vmatpush.bf16.msra.mxu0 %v1733
        %1747 = vmatpush.bf16.msra.mxu0 %v1732
        %1748 = vmatpush.bf16.msra.mxu0 %v1731
        %1749 = vmatpush.bf16.msra.mxu0 %v1730
        %1750 = vmatpush.bf16.msra.mxu0 %v1729
        %1751 = vmatpush.bf16.msra.mxu0 %v1728
        %1752 = vmatmul.bf16.gmra.mxu0 %v1589
        %v1753 = vpop.f32.mrf.mxu0
        %v1754 = vadd.f32 %v1688, %v1753
        %v1755 = vpop.f32.mrf.mxu0
        %v1756 = vadd.f32 %v1690, %v1755
        %1757 = vmatmul.bf16.gmra.mxu0 %v1590
        %v1758 = vpop.f32.mrf.mxu0
        %v1759 = vadd.f32 %v1693, %v1758
        %v1760 = vpop.f32.mrf.mxu0
        %1761 = vdwg.mxu0
        %v1762 = vld [vmem:[#allocation3 + $0x2] sm:$0xff]
        %v1763 = vld [vmem:[#allocation3 + $0xa] sm:$0xff]
        %v1764 = vld [vmem:[#allocation3 + $0x12] sm:$0x3f]
        %v1765 = vpack.c.bf16 %v1763, %v1762
        %v1766 = vpack.c.bf16 %v1764, %v1764
        %s1767 = scalar_lea.vmem [#allocation4], 768
        %v1768 = vld [vmem:[%s1767] sm:$0xf]
        %v1769 = vld [vmem:[%s1767 + $0x4] sm:$0xf]
        %v1770 = vld [vmem:[%s1767 + $0x8] sm:$0xf]
        %v1771 = vld [vmem:[%s1767 + $0xc] sm:$0xf]
        %v1772 = vld [vmem:[%s1767 + $0x10] sm:$0xf]
        %v1773 = vld [vmem:[%s1767 + $0x14] sm:$0xf]
        %v1774 = vld [vmem:[%s1767 + $0x18] sm:$0xf]
        %v1775 = vld [vmem:[%s1767 + $0x1c] sm:$0xf]
        %v1776 = vld [vmem:[%s1767 + $0x20] sm:$0xf]
        %v1777 = vld [vmem:[%s1767 + $0x24] sm:$0xf]
        %v1778 = vld [vmem:[%s1767 + $0x28] sm:$0xf]
        %v1779 = vld [vmem:[%s1767 + $0x2c] sm:$0xf]
        %v1780 = vld [vmem:[%s1767 + $0x30] sm:$0xf]
        %v1781 = vld [vmem:[%s1767 + $0x34] sm:$0xf]
        %v1782 = vld [vmem:[%s1767 + $0x38] sm:$0xf]
        %v1783 = vld [vmem:[%s1767 + $0x3c] sm:$0xf]
        %v1800 = vunpack.c.l.b16 %v1768
        %v1801 = vunpack.c.l.b16 %v1769
        %v1802 = vunpack.c.l.b16 %v1770
        %v1803 = vunpack.c.l.b16 %v1771
        %v1804 = vunpack.c.l.b16 %v1772
        %v1805 = vunpack.c.l.b16 %v1773
        %v1806 = vunpack.c.l.b16 %v1774
        %v1807 = vunpack.c.l.b16 %v1775
        %v1808 = vunpack.c.l.b16 %v1776
        %v1809 = vunpack.c.l.b16 %v1777
        %v1810 = vunpack.c.l.b16 %v1778
        %v1811 = vunpack.c.l.b16 %v1779
        %v1812 = vunpack.c.l.b16 %v1780
        %v1813 = vunpack.c.l.b16 %v1781
        %v1814 = vunpack.c.l.b16 %v1782
        %v1815 = vunpack.c.l.b16 %v1783
        %v1816 = vpack.c.b16 %v1801, %v1800
        %v1817 = vpack.c.b16 %v1803, %v1802
        %v1818 = vpack.c.b16 %v1805, %v1804
        %v1819 = vpack.c.b16 %v1807, %v1806
        %v1820 = vpack.c.b16 %v1809, %v1808
        %v1821 = vpack.c.b16 %v1811, %v1810
        %v1822 = vpack.c.b16 %v1813, %v1812
        %v1823 = vpack.c.b16 %v1815, %v1814
        %1832 = vmatpush.bf16.msra.mxu0 %v1823
        %1833 = vmatpush.bf16.msra.mxu0 %v1822
        %1834 = vmatpush.bf16.msra.mxu0 %v1821
        %1835 = vmatpush.bf16.msra.mxu0 %v1820
        %1836 = vmatpush.bf16.msra.mxu0 %v1819
        %1837 = vmatpush.bf16.msra.mxu0 %v1818
        %1838 = vmatpush.bf16.msra.mxu0 %v1817
        %1839 = vmatpush.bf16.msra.mxu0 %v1816
        %1840 = vmatmul.bf16.gmra.mxu0 %v1765
        %v1841 = vpop.f32.mrf.mxu0
        %v1842 = vadd.f32 0.0, %v1841
        %v1843 = vpop.f32.mrf.mxu0
        %v1844 = vadd.f32 0.0, %v1843
        %1845 = vmatmul.bf16.gmra.mxu0 %v1766
        %v1846 = vpop.f32.mrf.mxu0
        %v1847 = vadd.f32 0.0, %v1846
        %v1848 = vpop.f32.mrf.mxu0
        %1849 = vdwg.mxu0
        %v1850 = vadd.f32 %v1754, %v1842
        %v1851 = vadd.f32 %v1756, %v1844
        %v1852 = vadd.f32 %v1759, %v1847
        %v1853 = vld [vmem:[#allocation3 + $0x6] sm:$0xff]
        %v1854 = vld [vmem:[#allocation3 + $0xe] sm:$0xff]
        %v1855 = vld [vmem:[#allocation3 + $0x16] sm:$0x3f]
        %v1856 = vpack.c.bf16 %v1854, %v1853
        %v1857 = vpack.c.bf16 %v1855, %v1855
        %s1858 = scalar_lea.vmem [#allocation4], 832
        %v1859 = vld [vmem:[%s1858] sm:$0xf]
        %v1860 = vld [vmem:[%s1858 + $0x4] sm:$0xf]
        %v1861 = vld [vmem:[%s1858 + $0x8] sm:$0xf]
        %v1862 = vld [vmem:[%s1858 + $0xc] sm:$0xf]
        %v1863 = vld [vmem:[%s1858 + $0x10] sm:$0xf]
        %v1864 = vld [vmem:[%s1858 + $0x14] sm:$0xf]
        %v1865 = vld [vmem:[%s1858 + $0x18] sm:$0xf]
        %v1866 = vld [vmem:[%s1858 + $0x1c] sm:$0xf]
        %v1867 = vld [vmem:[%s1858 + $0x20] sm:$0xf]
        %v1868 = vld [vmem:[%s1858 + $0x24] sm:$0xf]
        %v1869 = vld [vmem:[%s1858 + $0x28] sm:$0xf]
        %v1870 = vld [vmem:[%s1858 + $0x2c] sm:$0xf]
        %v1871 = vld [vmem:[%s1858 + $0x30] sm:$0xf]
        %v1872 = vld [vmem:[%s1858 + $0x34] sm:$0xf]
        %v1873 = vld [vmem:[%s1858 + $0x38] sm:$0xf]
        %v1874 = vld [vmem:[%s1858 + $0x3c] sm:$0xf]
        %v1891 = vunpack.c.l.b16 %v1859
        %v1892 = vunpack.c.l.b16 %v1860
        %v1893 = vunpack.c.l.b16 %v1861
        %v1894 = vunpack.c.l.b16 %v1862
        %v1895 = vunpack.c.l.b16 %v1863
        %v1896 = vunpack.c.l.b16 %v1864
        %v1897 = vunpack.c.l.b16 %v1865
        %v1898 = vunpack.c.l.b16 %v1866
        %v1899 = vunpack.c.l.b16 %v1867
        %v1900 = vunpack.c.l.b16 %v1868
        %v1901 = vunpack.c.l.b16 %v1869
        %v1902 = vunpack.c.l.b16 %v1870
        %v1903 = vunpack.c.l.b16 %v1871
        %v1904 = vunpack.c.l.b16 %v1872
        %v1905 = vunpack.c.l.b16 %v1873
        %v1906 = vunpack.c.l.b16 %v1874
        %v1907 = vpack.c.b16 %v1892, %v1891
        %v1908 = vpack.c.b16 %v1894, %v1893
        %v1909 = vpack.c.b16 %v1896, %v1895
        %v1910 = vpack.c.b16 %v1898, %v1897
        %v1911 = vpack.c.b16 %v1900, %v1899
        %v1912 = vpack.c.b16 %v1902, %v1901
        %v1913 = vpack.c.b16 %v1904, %v1903
        %v1914 = vpack.c.b16 %v1906, %v1905
        %1923 = vmatpush.bf16.msra.mxu0 %v1914
        %1924 = vmatpush.bf16.msra.mxu0 %v1913
        %1925 = vmatpush.bf16.msra.mxu0 %v1912
        %1926 = vmatpush.bf16.msra.mxu0 %v1911
        %1927 = vmatpush.bf16.msra.mxu0 %v1910
        %1928 = vmatpush.bf16.msra.mxu0 %v1909
        %1929 = vmatpush.bf16.msra.mxu0 %v1908
        %1930 = vmatpush.bf16.msra.mxu0 %v1907
        %1931 = vmatmul.bf16.gmra.mxu0 %v1856
        %v1932 = vpop.f32.mrf.mxu0
        %v1933 = vadd.f32 0.0, %v1932
        %v1934 = vpop.f32.mrf.mxu0
        %v1935 = vadd.f32 0.0, %v1934
        %1936 = vmatmul.bf16.gmra.mxu0 %v1857
        %v1937 = vpop.f32.mrf.mxu0
        %v1938 = vadd.f32 0.0, %v1937
        %v1939 = vpop.f32.mrf.mxu0
        %1940 = vdwg.mxu0
        %v1941 = vadd.f32 %v1850, %v1933
        %v1942 = vadd.f32 %v1851, %v1935
        %v1943 = vadd.f32 %v1852, %v1938
        %v1944 = vld [vmem:[#allocation3 + $0x7] sm:$0xff]
        %v1945 = vld [vmem:[#allocation3 + $0xf] sm:$0xff]
        %v1946 = vld [vmem:[#allocation3 + $0x17] sm:$0x3f]
        %v1947 = vpack.c.bf16 %v1945, %v1944
        %v1948 = vpack.c.bf16 %v1946, %v1946
        %s1949 = scalar_lea.vmem [#allocation4], 896
        %v1950 = vld [vmem:[%s1949] sm:$0xf]
        %v1951 = vld [vmem:[%s1949 + $0x4] sm:$0xf]
        %v1952 = vld [vmem:[%s1949 + $0x8] sm:$0xf]
        %v1953 = vld [vmem:[%s1949 + $0xc] sm:$0xf]
        %v1954 = vld [vmem:[%s1949 + $0x10] sm:$0xf]
        %v1955 = vld [vmem:[%s1949 + $0x14] sm:$0xf]
        %v1956 = vld [vmem:[%s1949 + $0x18] sm:$0xf]
        %v1957 = vld [vmem:[%s1949 + $0x1c] sm:$0xf]
        %v1958 = vld [vmem:[%s1949 + $0x20] sm:$0xf]
        %v1959 = vld [vmem:[%s1949 + $0x24] sm:$0xf]
        %v1960 = vld [vmem:[%s1949 + $0x28] sm:$0xf]
        %v1961 = vld [vmem:[%s1949 + $0x2c] sm:$0xf]
        %v1962 = vld [vmem:[%s1949 + $0x30] sm:$0xf]
        %v1963 = vld [vmem:[%s1949 + $0x34] sm:$0xf]
        %v1964 = vld [vmem:[%s1949 + $0x38] sm:$0xf]
        %v1965 = vld [vmem:[%s1949 + $0x3c] sm:$0xf]
        %v1982 = vunpack.c.l.b16 %v1950
        %v1983 = vunpack.c.l.b16 %v1951
        %v1984 = vunpack.c.l.b16 %v1952
        %v1985 = vunpack.c.l.b16 %v1953
        %v1986 = vunpack.c.l.b16 %v1954
        %v1987 = vunpack.c.l.b16 %v1955
        %v1988 = vunpack.c.l.b16 %v1956
        %v1989 = vunpack.c.l.b16 %v1957
        %v1990 = vunpack.c.l.b16 %v1958
        %v1991 = vunpack.c.l.b16 %v1959
        %v1992 = vunpack.c.l.b16 %v1960
        %v1993 = vunpack.c.l.b16 %v1961
        %v1994 = vunpack.c.l.b16 %v1962
        %v1995 = vunpack.c.l.b16 %v1963
        %v1996 = vunpack.c.l.b16 %v1964
        %v1997 = vunpack.c.l.b16 %v1965
        %v1998 = vpack.c.b16 %v1983, %v1982
        %v1999 = vpack.c.b16 %v1985, %v1984
        %v2000 = vpack.c.b16 %v1987, %v1986
        %v2001 = vpack.c.b16 %v1989, %v1988
        %v2002 = vpack.c.b16 %v1991, %v1990
        %v2003 = vpack.c.b16 %v1993, %v1992
        %v2004 = vpack.c.b16 %v1995, %v1994
        %v2005 = vpack.c.b16 %v1997, %v1996
        %2014 = vmatpush.bf16.msra.mxu0 %v2005
        %2015 = vmatpush.bf16.msra.mxu0 %v2004
        %2016 = vmatpush.bf16.msra.mxu0 %v2003
        %2017 = vmatpush.bf16.msra.mxu0 %v2002
        %2018 = vmatpush.bf16.msra.mxu0 %v2001
        %2019 = vmatpush.bf16.msra.mxu0 %v2000
        %2020 = vmatpush.bf16.msra.mxu0 %v1999
        %2021 = vmatpush.bf16.msra.mxu0 %v1998
        %2022 = vmatmul.bf16.gmra.mxu0 %v1947
        %v2023 = vpop.f32.mrf.mxu0
        %v2024 = vadd.f32 0.0, %v2023
        %v2025 = vpop.f32.mrf.mxu0
        %v2026 = vadd.f32 0.0, %v2025
        %2027 = vmatmul.bf16.gmra.mxu0 %v1948
        %v2028 = vpop.f32.mrf.mxu0
        %v2029 = vadd.f32 0.0, %v2028
        %v2030 = vpop.f32.mrf.mxu0
        %2031 = vdwg.mxu0
        %v2032 = vadd.f32 %v1941, %v2024
        %v2033 = vadd.f32 %v1942, %v2026
        %v2034 = vadd.f32 %v1943, %v2029
        %v2035 = vld [vmem:[#allocation3 + $0x8] sm:$0xff]
        %v2036 = vld [vmem:[#allocation3 + $0x10] sm:$0xff]
        %v2037 = vld [vmem:[#allocation3 + $0x18] sm:$0x3f]
        %v2038 = vpack.c.bf16 %v2036, %v2035
        %v2039 = vpack.c.bf16 %v2037, %v2037
        %s2040 = scalar_lea.vmem [#allocation4], 960
        %v2041 = vld [vmem:[%s2040] sm:$0xf]
        %v2042 = vld [vmem:[%s2040 + $0x4] sm:$0xf]
        %v2043 = vld [vmem:[%s2040 + $0x8] sm:$0xf]
        %v2044 = vld [vmem:[%s2040 + $0xc] sm:$0xf]
        %v2045 = vld [vmem:[%s2040 + $0x10] sm:$0xf]
        %v2046 = vld [vmem:[%s2040 + $0x14] sm:$0xf]
        %v2047 = vld [vmem:[%s2040 + $0x18] sm:$0xf]
        %v2048 = vld [vmem:[%s2040 + $0x1c] sm:$0xf]
        %v2049 = vld [vmem:[%s2040 + $0x20] sm:$0xf]
        %v2050 = vld [vmem:[%s2040 + $0x24] sm:$0xf]
        %v2051 = vld [vmem:[%s2040 + $0x28] sm:$0xf]
        %v2052 = vld [vmem:[%s2040 + $0x2c] sm:$0xf]
        %v2053 = vld [vmem:[%s2040 + $0x30] sm:$0xf]
        %v2054 = vld [vmem:[%s2040 + $0x34] sm:$0xf]
        %v2055 = vld [vmem:[%s2040 + $0x38] sm:$0xf]
        %v2056 = vld [vmem:[%s2040 + $0x3c] sm:$0xf]
        %v2073 = vunpack.c.l.b16 %v2041
        %v2074 = vunpack.c.l.b16 %v2042
        %v2075 = vunpack.c.l.b16 %v2043
        %v2076 = vunpack.c.l.b16 %v2044
        %v2077 = vunpack.c.l.b16 %v2045
        %v2078 = vunpack.c.l.b16 %v2046
        %v2079 = vunpack.c.l.b16 %v2047
        %v2080 = vunpack.c.l.b16 %v2048
        %v2081 = vunpack.c.l.b16 %v2049
        %v2082 = vunpack.c.l.b16 %v2050
        %v2083 = vunpack.c.l.b16 %v2051
        %v2084 = vunpack.c.l.b16 %v2052
        %v2085 = vunpack.c.l.b16 %v2053
        %v2086 = vunpack.c.l.b16 %v2054
        %v2087 = vunpack.c.l.b16 %v2055
        %v2088 = vunpack.c.l.b16 %v2056
        %v2089 = vpack.c.b16 %v2074, %v2073
        %v2090 = vpack.c.b16 %v2076, %v2075
        %v2091 = vpack.c.b16 %v2078, %v2077
        %v2092 = vpack.c.b16 %v2080, %v2079
        %v2093 = vpack.c.b16 %v2082, %v2081
        %v2094 = vpack.c.b16 %v2084, %v2083
        %v2095 = vpack.c.b16 %v2086, %v2085
        %v2096 = vpack.c.b16 %v2088, %v2087
        %2105 = vmatpush.bf16.msra.mxu0 %v2096
        %2106 = vmatpush.bf16.msra.mxu0 %v2095
        %2107 = vmatpush.bf16.msra.mxu0 %v2094
        %2108 = vmatpush.bf16.msra.mxu0 %v2093
        %2109 = vmatpush.bf16.msra.mxu0 %v2092
        %2110 = vmatpush.bf16.msra.mxu0 %v2091
        %2111 = vmatpush.bf16.msra.mxu0 %v2090
        %2112 = vmatpush.bf16.msra.mxu0 %v2089
        %2113 = vmatmul.bf16.gmra.mxu0 %v2038
        %v2114 = vpop.f32.mrf.mxu0
        %v2115 = vadd.f32 0.0, %v2114
        %v2116 = vpop.f32.mrf.mxu0
        %v2117 = vadd.f32 0.0, %v2116
        %2118 = vmatmul.bf16.gmra.mxu0 %v2039
        %v2119 = vpop.f32.mrf.mxu0
        %v2120 = vadd.f32 0.0, %v2119
        %v2121 = vpop.f32.mrf.mxu0
        %2122 = vdwg.mxu0
        %v2123 = vadd.f32 %v2032, %v2115
        %v2124 = vadd.f32 %v2033, %v2117
        %v2125 = vadd.f32 %v2034, %v2120
        %v2126 = vld [vmem:[#allocation3 + $0xc] sm:$0xff]
        %v2127 = vld [vmem:[#allocation3 + $0x14] sm:$0xff]
        %v2128 = vld [vmem:[#allocation3 + $0x1c] sm:$0x3f]
        %v2129 = vpack.c.bf16 %v2127, %v2126
        %v2130 = vpack.c.bf16 %v2128, %v2128
        %s2131 = scalar_lea.vmem [#allocation4], 1024
        %v2132 = vld [vmem:[%s2131] sm:$0xf]
        %v2133 = vld [vmem:[%s2131 + $0x4] sm:$0xf]
        %v2134 = vld [vmem:[%s2131 + $0x8] sm:$0xf]
        %v2135 = vld [vmem:[%s2131 + $0xc] sm:$0xf]
        %v2136 = vld [vmem:[%s2131 + $0x10] sm:$0xf]
        %v2137 = vld [vmem:[%s2131 + $0x14] sm:$0xf]
        %v2138 = vld [vmem:[%s2131 + $0x18] sm:$0xf]
        %v2139 = vld [vmem:[%s2131 + $0x1c] sm:$0xf]
        %v2140 = vld [vmem:[%s2131 + $0x20] sm:$0xf]
        %v2141 = vld [vmem:[%s2131 + $0x24] sm:$0xf]
        %v2142 = vld [vmem:[%s2131 + $0x28] sm:$0xf]
        %v2143 = vld [vmem:[%s2131 + $0x2c] sm:$0xf]
        %v2144 = vld [vmem:[%s2131 + $0x30] sm:$0xf]
        %v2145 = vld [vmem:[%s2131 + $0x34] sm:$0xf]
        %v2146 = vld [vmem:[%s2131 + $0x38] sm:$0xf]
        %v2147 = vld [vmem:[%s2131 + $0x3c] sm:$0xf]
        %v2164 = vunpack.c.l.b16 %v2132
        %v2165 = vunpack.c.l.b16 %v2133
        %v2166 = vunpack.c.l.b16 %v2134
        %v2167 = vunpack.c.l.b16 %v2135
        %v2168 = vunpack.c.l.b16 %v2136
        %v2169 = vunpack.c.l.b16 %v2137
        %v2170 = vunpack.c.l.b16 %v2138
        %v2171 = vunpack.c.l.b16 %v2139
        %v2172 = vunpack.c.l.b16 %v2140
        %v2173 = vunpack.c.l.b16 %v2141
        %v2174 = vunpack.c.l.b16 %v2142
        %v2175 = vunpack.c.l.b16 %v2143
        %v2176 = vunpack.c.l.b16 %v2144
        %v2177 = vunpack.c.l.b16 %v2145
        %v2178 = vunpack.c.l.b16 %v2146
        %v2179 = vunpack.c.l.b16 %v2147
        %v2180 = vpack.c.b16 %v2165, %v2164
        %v2181 = vpack.c.b16 %v2167, %v2166
        %v2182 = vpack.c.b16 %v2169, %v2168
        %v2183 = vpack.c.b16 %v2171, %v2170
        %v2184 = vpack.c.b16 %v2173, %v2172
        %v2185 = vpack.c.b16 %v2175, %v2174
        %v2186 = vpack.c.b16 %v2177, %v2176
        %v2187 = vpack.c.b16 %v2179, %v2178
        %2196 = vmatpush.bf16.msra.mxu0 %v2187
        %2197 = vmatpush.bf16.msra.mxu0 %v2186
        %2198 = vmatpush.bf16.msra.mxu0 %v2185
        %2199 = vmatpush.bf16.msra.mxu0 %v2184
        %2200 = vmatpush.bf16.msra.mxu0 %v2183
        %2201 = vmatpush.bf16.msra.mxu0 %v2182
        %2202 = vmatpush.bf16.msra.mxu0 %v2181
        %2203 = vmatpush.bf16.msra.mxu0 %v2180
        %2204 = vmatmul.bf16.gmra.mxu0 %v2129
        %v2205 = vpop.f32.mrf.mxu0
        %v2206 = vadd.f32 0.0, %v2205
        %v2207 = vpop.f32.mrf.mxu0
        %v2208 = vadd.f32 0.0, %v2207
        %2209 = vmatmul.bf16.gmra.mxu0 %v2130
        %v2210 = vpop.f32.mrf.mxu0
        %v2211 = vadd.f32 0.0, %v2210
        %v2212 = vpop.f32.mrf.mxu0
        %2213 = vdwg.mxu0
        %v2214 = vadd.f32 %v2123, %v2206
        %v2215 = vadd.f32 %v2124, %v2208
        %v2216 = vadd.f32 %v2125, %v2211
        %v2217 = vld [vmem:[#allocation3 + $0xd] sm:$0xff]
        %v2218 = vld [vmem:[#allocation3 + $0x15] sm:$0xff]
        %v2219 = vld [vmem:[#allocation3 + $0x1d] sm:$0x3f]
        %v2220 = vpack.c.bf16 %v2218, %v2217
        %v2221 = vpack.c.bf16 %v2219, %v2219
        %s2222 = scalar_lea.vmem [#allocation4], 1088
        %v2223 = vld [vmem:[%s2222] sm:$0xf]
        %v2224 = vld [vmem:[%s2222 + $0x4] sm:$0xf]
        %v2225 = vld [vmem:[%s2222 + $0x8] sm:$0xf]
        %v2226 = vld [vmem:[%s2222 + $0xc] sm:$0xf]
        %v2227 = vld [vmem:[%s2222 + $0x10] sm:$0xf]
        %v2228 = vld [vmem:[%s2222 + $0x14] sm:$0xf]
        %v2229 = vld [vmem:[%s2222 + $0x18] sm:$0xf]
        %v2230 = vld [vmem:[%s2222 + $0x1c] sm:$0xf]
        %v2231 = vld [vmem:[%s2222 + $0x20] sm:$0xf]
        %v2232 = vld [vmem:[%s2222 + $0x24] sm:$0xf]
        %v2233 = vld [vmem:[%s2222 + $0x28] sm:$0xf]
        %v2234 = vld [vmem:[%s2222 + $0x2c] sm:$0xf]
        %v2235 = vld [vmem:[%s2222 + $0x30] sm:$0xf]
        %v2236 = vld [vmem:[%s2222 + $0x34] sm:$0xf]
        %v2237 = vld [vmem:[%s2222 + $0x38] sm:$0xf]
        %v2238 = vld [vmem:[%s2222 + $0x3c] sm:$0xf]
        %v2255 = vunpack.c.l.b16 %v2223
        %v2256 = vunpack.c.l.b16 %v2224
        %v2257 = vunpack.c.l.b16 %v2225
        %v2258 = vunpack.c.l.b16 %v2226
        %v2259 = vunpack.c.l.b16 %v2227
        %v2260 = vunpack.c.l.b16 %v2228
        %v2261 = vunpack.c.l.b16 %v2229
        %v2262 = vunpack.c.l.b16 %v2230
        %v2263 = vunpack.c.l.b16 %v2231
        %v2264 = vunpack.c.l.b16 %v2232
        %v2265 = vunpack.c.l.b16 %v2233
        %v2266 = vunpack.c.l.b16 %v2234
        %v2267 = vunpack.c.l.b16 %v2235
        %v2268 = vunpack.c.l.b16 %v2236
        %v2269 = vunpack.c.l.b16 %v2237
        %v2270 = vunpack.c.l.b16 %v2238
        %v2271 = vpack.c.b16 %v2256, %v2255
        %v2272 = vpack.c.b16 %v2258, %v2257
        %v2273 = vpack.c.b16 %v2260, %v2259
        %v2274 = vpack.c.b16 %v2262, %v2261
        %v2275 = vpack.c.b16 %v2264, %v2263
        %v2276 = vpack.c.b16 %v2266, %v2265
        %v2277 = vpack.c.b16 %v2268, %v2267
        %v2278 = vpack.c.b16 %v2270, %v2269
        %2287 = vmatpush.bf16.msra.mxu0 %v2278
        %2288 = vmatpush.bf16.msra.mxu0 %v2277
        %2289 = vmatpush.bf16.msra.mxu0 %v2276
        %2290 = vmatpush.bf16.msra.mxu0 %v2275
        %2291 = vmatpush.bf16.msra.mxu0 %v2274
        %2292 = vmatpush.bf16.msra.mxu0 %v2273
        %2293 = vmatpush.bf16.msra.mxu0 %v2272
        %2294 = vmatpush.bf16.msra.mxu0 %v2271
        %2295 = vmatmul.bf16.gmra.mxu0 %v2220
        %v2296 = vpop.f32.mrf.mxu0
        %v2297 = vadd.f32 0.0, %v2296
        %v2298 = vpop.f32.mrf.mxu0
        %v2299 = vadd.f32 0.0, %v2298
        %2300 = vmatmul.bf16.gmra.mxu0 %v2221
        %v2301 = vpop.f32.mrf.mxu0
        %v2302 = vadd.f32 0.0, %v2301
        %v2303 = vpop.f32.mrf.mxu0
        %2304 = vdwg.mxu0
        %v2305 = vadd.f32 %v2214, %v2297
        %v2306 = vadd.f32 %v2215, %v2299
        %v2307 = vadd.f32 %v2216, %v2302
        %v2308 = vld [vmem:[#allocation3 + $0xe] sm:$0xff]
        %v2309 = vld [vmem:[#allocation3 + $0x16] sm:$0xff]
        %v2310 = vld [vmem:[#allocation3 + $0x1e] sm:$0x3f]
        %v2311 = vpack.c.bf16 %v2309, %v2308
        %v2312 = vpack.c.bf16 %v2310, %v2310
        %s2313 = scalar_lea.vmem [#allocation4], 1152
        %v2314 = vld [vmem:[%s2313] sm:$0xf]
        %v2315 = vld [vmem:[%s2313 + $0x4] sm:$0xf]
        %v2316 = vld [vmem:[%s2313 + $0x8] sm:$0xf]
        %v2317 = vld [vmem:[%s2313 + $0xc] sm:$0xf]
        %v2318 = vld [vmem:[%s2313 + $0x10] sm:$0xf]
        %v2319 = vld [vmem:[%s2313 + $0x14] sm:$0xf]
        %v2320 = vld [vmem:[%s2313 + $0x18] sm:$0xf]
        %v2321 = vld [vmem:[%s2313 + $0x1c] sm:$0xf]
        %v2322 = vld [vmem:[%s2313 + $0x20] sm:$0xf]
        %v2323 = vld [vmem:[%s2313 + $0x24] sm:$0xf]
        %v2324 = vld [vmem:[%s2313 + $0x28] sm:$0xf]
        %v2325 = vld [vmem:[%s2313 + $0x2c] sm:$0xf]
        %v2326 = vld [vmem:[%s2313 + $0x30] sm:$0xf]
        %v2327 = vld [vmem:[%s2313 + $0x34] sm:$0xf]
        %v2328 = vld [vmem:[%s2313 + $0x38] sm:$0xf]
        %v2329 = vld [vmem:[%s2313 + $0x3c] sm:$0xf]
        %v2346 = vunpack.c.l.b16 %v2314
        %v2347 = vunpack.c.l.b16 %v2315
        %v2348 = vunpack.c.l.b16 %v2316
        %v2349 = vunpack.c.l.b16 %v2317
        %v2350 = vunpack.c.l.b16 %v2318
        %v2351 = vunpack.c.l.b16 %v2319
        %v2352 = vunpack.c.l.b16 %v2320
        %v2353 = vunpack.c.l.b16 %v2321
        %v2354 = vunpack.c.l.b16 %v2322
        %v2355 = vunpack.c.l.b16 %v2323
        %v2356 = vunpack.c.l.b16 %v2324
        %v2357 = vunpack.c.l.b16 %v2325
        %v2358 = vunpack.c.l.b16 %v2326
        %v2359 = vunpack.c.l.b16 %v2327
        %v2360 = vunpack.c.l.b16 %v2328
        %v2361 = vunpack.c.l.b16 %v2329
        %v2362 = vpack.c.b16 %v2347, %v2346
        %v2363 = vpack.c.b16 %v2349, %v2348
        %v2364 = vpack.c.b16 %v2351, %v2350
        %v2365 = vpack.c.b16 %v2353, %v2352
        %v2366 = vpack.c.b16 %v2355, %v2354
        %v2367 = vpack.c.b16 %v2357, %v2356
        %v2368 = vpack.c.b16 %v2359, %v2358
        %v2369 = vpack.c.b16 %v2361, %v2360
        %2378 = vmatpush.bf16.msra.mxu0 %v2369
        %2379 = vmatpush.bf16.msra.mxu0 %v2368
        %2380 = vmatpush.bf16.msra.mxu0 %v2367
        %2381 = vmatpush.bf16.msra.mxu0 %v2366
        %2382 = vmatpush.bf16.msra.mxu0 %v2365
        %2383 = vmatpush.bf16.msra.mxu0 %v2364
        %2384 = vmatpush.bf16.msra.mxu0 %v2363
        %2385 = vmatpush.bf16.msra.mxu0 %v2362
        %2386 = vmatmul.bf16.gmra.mxu0 %v2311
        %v2387 = vpop.f32.mrf.mxu0
        %v2388 = vadd.f32 0.0, %v2387
        %v2389 = vpop.f32.mrf.mxu0
        %v2390 = vadd.f32 0.0, %v2389
        %2391 = vmatmul.bf16.gmra.mxu0 %v2312
        %v2392 = vpop.f32.mrf.mxu0
        %v2393 = vadd.f32 0.0, %v2392
        %v2394 = vpop.f32.mrf.mxu0
        %2395 = vdwg.mxu0
        %v2396 = vadd.f32 %v2305, %v2388
        %v2397 = vadd.f32 %v2306, %v2390
        %v2398 = vadd.f32 %v2307, %v2393
        %v2399 = vld [vmem:[#allocation6 + $0x2] sm:$0x1]
        %v2400 = vperm.slane %v2399, 0
        %v2401 = vadd.f32 %v2396, %v2400
        %v2402 = vxor.u32 %v2401, 2147483648
        %v2403 = vmul.f32 %v2402, 1.442695
        %v2404 = vpow.pop %v2403
        %v2405 = vadd.f32 %v2404, 1.0
        %v2406 = vrcp.pop %v2405
        %v2407 = vmul.f32 %v2405, %v2406
        %v2408 = vsub.f32 1.0, %v2407
        %v2409 = vmul.f32 %v2406, %v2408
        %v2410 = vadd.f32 %v2406, %v2409
        %vm2411 = vweird.f32 %v2405
        %vm2412 = vweird.f32 %v2406
        %vm2413 = vmor %vm2411, %vm2412
        %v2414 = vsel %vm2413, %v2406, %v2410
        %v2415 = vand.u32 2147483647, %v2405
        %vm2416 = vcmp.eq.f32.partialorder %v2415, 8.507059e+37
        %v2417 = vand.u32 %v2405, 2147483648
        %v2418 = vor.u32 1.1754944e-38, %v2417
        %v2419 = vsel %vm2416, %v2418, %v2414
        %v2420 = vmul.f32 1.0, %v2419
        %v2421 = vmul.f32 %v2401, %v2420
        %2422 = vst [vmem:[#allocation2 + $0x7] sm:$0xf] %v2421
        %v2423 = vadd.f32 %v2397, %v2400
        %v2424 = vxor.u32 %v2423, 2147483648
        %v2425 = vmul.f32 %v2424, 1.442695
        %v2426 = vpow.pop %v2425
        %v2427 = vadd.f32 %v2426, 1.0
        %v2428 = vrcp.pop %v2427
        %v2429 = vmul.f32 %v2427, %v2428
        %v2430 = vsub.f32 1.0, %v2429
        %v2431 = vmul.f32 %v2428, %v2430
        %v2432 = vadd.f32 %v2428, %v2431
        %vm2433 = vweird.f32 %v2427
        %vm2434 = vweird.f32 %v2428
        %vm2435 = vmor %vm2433, %vm2434
        %v2436 = vsel %vm2435, %v2428, %v2432
        %v2437 = vand.u32 2147483647, %v2427
        %vm2438 = vcmp.eq.f32.partialorder %v2437, 8.507059e+37
        %v2439 = vand.u32 %v2427, 2147483648
        %v2440 = vor.u32 1.1754944e-38, %v2439
        %v2441 = vsel %vm2438, %v2440, %v2436
        %v2442 = vmul.f32 1.0, %v2441
        %v2443 = vmul.f32 %v2423, %v2442
        %2444 = vst [vmem:[#allocation2 + $0x7] sm:$0xc0] %v2421
        %2445 = vst [vmem:[#allocation2 + $0xf] sm:$0x3] %v2443
        %2446 = vst [vmem:[#allocation2 + $0xf] sm:$0xf0] %v2443
        %v2447 = vadd.f32 %v2398, %v2400
        %v2448 = vxor.u32 %v2447, 2147483648
        %v2449 = vmul.f32 %v2448, 1.442695
        %v2450 = vpow.pop %v2449
        %v2451 = vadd.f32 %v2450, 1.0
        %v2452 = vrcp.pop %v2451
        %v2453 = vmul.f32 %v2451, %v2452
        %v2454 = vsub.f32 1.0, %v2453
        %v2455 = vmul.f32 %v2452, %v2454
        %v2456 = vadd.f32 %v2452, %v2455
        %vm2457 = vweird.f32 %v2451
        %vm2458 = vweird.f32 %v2452
        %vm2459 = vmor %vm2457, %vm2458
        %v2460 = vsel %vm2459, %v2452, %v2456
        %v2461 = vand.u32 2147483647, %v2451
        %vm2462 = vcmp.eq.f32.partialorder %v2461, 8.507059e+37
        %v2463 = vand.u32 %v2451, 2147483648
        %v2464 = vor.u32 1.1754944e-38, %v2463
        %v2465 = vsel %vm2462, %v2464, %v2460
        %v2466 = vmul.f32 1.0, %v2465
        %v2467 = vmul.f32 %v2447, %v2466
        %2468 = vst [vmem:[#allocation2 + $0x17] sm:$0x3c] %v2467
        %2469 = vst [vmem:[#allocation3] sm:$0xff] 0.0
        %2470 = vst [vmem:[#allocation3 + $0x8] sm:$0xff] 0.0
        %2471 = vst [vmem:[#allocation3 + $0x10] sm:$0xff] 0.0
        %2472 = vst [vmem:[#allocation3 + $0x18] sm:$0xff] 0.0
        %2473 = vst [vmem:[#allocation3 + $0x20] sm:$0xff] 0.0
        %v2474 = vld [vmem:[#allocation2] sm:$0xff]
        %v2475 = vld [vmem:[#allocation2 + $0x8] sm:$0xff]
        %v2476 = vld [vmem:[#allocation2 + $0x10] sm:$0x3f]
        %v2477 = vpack.c.bf16 %v2475, %v2474
        %v2478 = vpack.c.bf16 %v2476, %v2476
        %s2479 = scalar_lea.vmem [#allocation4], 1216
        %v2480 = vld [vmem:[%s2479] sm:$0xf]
        %v2481 = vld [vmem:[%s2479 + $0x4] sm:$0xf]
        %v2482 = vld [vmem:[%s2479 + $0x8] sm:$0xf]
        %v2483 = vld [vmem:[%s2479 + $0xc] sm:$0xf]
        %v2484 = vld [vmem:[%s2479 + $0x10] sm:$0xf]
        %v2485 = vld [vmem:[%s2479 + $0x14] sm:$0xf]
        %v2486 = vld [vmem:[%s2479 + $0x18] sm:$0xf]
        %v2487 = vld [vmem:[%s2479 + $0x1c] sm:$0xf]
        %v2488 = vld [vmem:[%s2479 + $0x20] sm:$0xf]
        %v2489 = vld [vmem:[%s2479 + $0x24] sm:$0xf]
        %v2490 = vld [vmem:[%s2479 + $0x28] sm:$0xf]
        %v2491 = vld [vmem:[%s2479 + $0x2c] sm:$0xf]
        %v2492 = vld [vmem:[%s2479 + $0x30] sm:$0xf]
        %v2493 = vld [vmem:[%s2479 + $0x34] sm:$0xf]
        %v2494 = vld [vmem:[%s2479 + $0x38] sm:$0xf]
        %v2495 = vld [vmem:[%s2479 + $0x3c] sm:$0xf]
        %v2496 = vld [vmem:[#allocation2 + $0x1] sm:$0xff]
        %v2497 = vld [vmem:[#allocation2 + $0x9] sm:$0xff]
        %v2498 = vld [vmem:[#allocation2 + $0x11] sm:$0x3f]
        %v2499 = vpack.c.bf16 %v2497, %v2496
        %v2500 = vpack.c.bf16 %v2498, %v2498
        %s2501 = scalar_lea.vmem [#allocation4], 1280
        %v2502 = vld [vmem:[%s2501] sm:$0xf]
        %v2503 = vld [vmem:[%s2501 + $0x4] sm:$0xf]
        %v2504 = vld [vmem:[%s2501 + $0x8] sm:$0xf]
        %v2505 = vld [vmem:[%s2501 + $0xc] sm:$0xf]
        %v2506 = vld [vmem:[%s2501 + $0x10] sm:$0xf]
        %v2507 = vld [vmem:[%s2501 + $0x14] sm:$0xf]
        %v2508 = vld [vmem:[%s2501 + $0x18] sm:$0xf]
        %v2509 = vld [vmem:[%s2501 + $0x1c] sm:$0xf]
        %v2510 = vld [vmem:[%s2501 + $0x20] sm:$0xf]
        %v2511 = vld [vmem:[%s2501 + $0x24] sm:$0xf]
        %v2512 = vld [vmem:[%s2501 + $0x28] sm:$0xf]
        %v2513 = vld [vmem:[%s2501 + $0x2c] sm:$0xf]
        %v2514 = vld [vmem:[%s2501 + $0x30] sm:$0xf]
        %v2515 = vld [vmem:[%s2501 + $0x34] sm:$0xf]
        %v2516 = vld [vmem:[%s2501 + $0x38] sm:$0xf]
        %v2517 = vld [vmem:[%s2501 + $0x3c] sm:$0xf]
        %v2534 = vunpack.c.l.b16 %v2502
        %v2535 = vunpack.c.l.b16 %v2503
        %v2536 = vunpack.c.l.b16 %v2504
        %v2537 = vunpack.c.l.b16 %v2505
        %v2538 = vunpack.c.l.b16 %v2506
        %v2539 = vunpack.c.l.b16 %v2507
        %v2540 = vunpack.c.l.b16 %v2508
        %v2541 = vunpack.c.l.b16 %v2509
        %v2542 = vunpack.c.l.b16 %v2510
        %v2543 = vunpack.c.l.b16 %v2511
        %v2544 = vunpack.c.l.b16 %v2512
        %v2545 = vunpack.c.l.b16 %v2513
        %v2546 = vunpack.c.l.b16 %v2514
        %v2547 = vunpack.c.l.b16 %v2515
        %v2548 = vunpack.c.l.b16 %v2516
        %v2549 = vunpack.c.l.b16 %v2517
        %v2550 = vpack.c.b16 %v2535, %v2534
        %v2551 = vpack.c.b16 %v2537, %v2536
        %v2552 = vpack.c.b16 %v2539, %v2538
        %v2553 = vpack.c.b16 %v2541, %v2540
        %v2554 = vpack.c.b16 %v2543, %v2542
        %v2555 = vpack.c.b16 %v2545, %v2544
        %v2556 = vpack.c.b16 %v2547, %v2546
        %v2557 = vpack.c.b16 %v2549, %v2548
        %2566 = vmatpush.bf16.msra.mxu0 %v2557
        %2567 = vmatpush.bf16.msra.mxu0 %v2556
        %2568 = vmatpush.bf16.msra.mxu0 %v2555
        %2569 = vmatpush.bf16.msra.mxu0 %v2554
        %2570 = vmatpush.bf16.msra.mxu0 %v2553
        %2571 = vmatpush.bf16.msra.mxu0 %v2552
        %2572 = vmatpush.bf16.msra.mxu0 %v2551
        %2573 = vmatpush.bf16.msra.mxu0 %v2550
        %2574 = vmatmul.bf16.gmra.mxu0 %v2499
        %v2575 = vpop.f32.mrf.mxu0
        %v2576 = vadd.f32 0.0, %v2575
        %v2577 = vpop.f32.mrf.mxu0
        %v2578 = vadd.f32 0.0, %v2577
        %2579 = vmatmul.bf16.gmra.mxu0 %v2500
        %v2580 = vpop.f32.mrf.mxu0
        %v2581 = vadd.f32 0.0, %v2580
        %v2582 = vpop.f32.mrf.mxu0
        %2583 = vdwg.mxu0
        %v2600 = vunpack.c.l.b16 %v2480
        %v2601 = vunpack.c.l.b16 %v2481
        %v2602 = vunpack.c.l.b16 %v2482
        %v2603 = vunpack.c.l.b16 %v2483
        %v2604 = vunpack.c.l.b16 %v2484
        %v2605 = vunpack.c.l.b16 %v2485
        %v2606 = vunpack.c.l.b16 %v2486
        %v2607 = vunpack.c.l.b16 %v2487
        %v2608 = vunpack.c.l.b16 %v2488
        %v2609 = vunpack.c.l.b16 %v2489
        %v2610 = vunpack.c.l.b16 %v2490
        %v2611 = vunpack.c.l.b16 %v2491
        %v2612 = vunpack.c.l.b16 %v2492
        %v2613 = vunpack.c.l.b16 %v2493
        %v2614 = vunpack.c.l.b16 %v2494
        %v2615 = vunpack.c.l.b16 %v2495
        %v2616 = vpack.c.b16 %v2601, %v2600
        %v2617 = vpack.c.b16 %v2603, %v2602
        %v2618 = vpack.c.b16 %v2605, %v2604
        %v2619 = vpack.c.b16 %v2607, %v2606
        %v2620 = vpack.c.b16 %v2609, %v2608
        %v2621 = vpack.c.b16 %v2611, %v2610
        %v2622 = vpack.c.b16 %v2613, %v2612
        %v2623 = vpack.c.b16 %v2615, %v2614
        %2632 = vmatpush.bf16.msra.mxu0 %v2623
        %2633 = vmatpush.bf16.msra.mxu0 %v2622
        %2634 = vmatpush.bf16.msra.mxu0 %v2621
        %2635 = vmatpush.bf16.msra.mxu0 %v2620
        %2636 = vmatpush.bf16.msra.mxu0 %v2619
        %2637 = vmatpush.bf16.msra.mxu0 %v2618
        %2638 = vmatpush.bf16.msra.mxu0 %v2617
        %2639 = vmatpush.bf16.msra.mxu0 %v2616
        %2640 = vmatmul.bf16.gmra.mxu0 %v2477
        %v2641 = vpop.f32.mrf.mxu0
        %v2642 = vadd.f32 %v2576, %v2641
        %v2643 = vpop.f32.mrf.mxu0
        %v2644 = vadd.f32 %v2578, %v2643
        %2645 = vmatmul.bf16.gmra.mxu0 %v2478
        %v2646 = vpop.f32.mrf.mxu0
        %v2647 = vadd.f32 %v2581, %v2646
        %v2648 = vpop.f32.mrf.mxu0
        %2649 = vdwg.mxu0
        %v2650 = vld [vmem:[#allocation2 + $0x2] sm:$0xff]
        %v2651 = vld [vmem:[#allocation2 + $0xa] sm:$0xff]
        %v2652 = vld [vmem:[#allocation2 + $0x12] sm:$0x3f]
        %v2653 = vpack.c.bf16 %v2651, %v2650
        %v2654 = vpack.c.bf16 %v2652, %v2652
        %s2655 = scalar_lea.vmem [#allocation4], 1344
        %v2656 = vld [vmem:[%s2655] sm:$0xf]
        %v2657 = vld [vmem:[%s2655 + $0x4] sm:$0xf]
        %v2658 = vld [vmem:[%s2655 + $0x8] sm:$0xf]
        %v2659 = vld [vmem:[%s2655 + $0xc] sm:$0xf]
        %v2660 = vld [vmem:[%s2655 + $0x10] sm:$0xf]
        %v2661 = vld [vmem:[%s2655 + $0x14] sm:$0xf]
        %v2662 = vld [vmem:[%s2655 + $0x18] sm:$0xf]
        %v2663 = vld [vmem:[%s2655 + $0x1c] sm:$0xf]
        %v2664 = vld [vmem:[%s2655 + $0x20] sm:$0xf]
        %v2665 = vld [vmem:[%s2655 + $0x24] sm:$0xf]
        %v2666 = vld [vmem:[%s2655 + $0x28] sm:$0xf]
        %v2667 = vld [vmem:[%s2655 + $0x2c] sm:$0xf]
        %v2668 = vld [vmem:[%s2655 + $0x30] sm:$0xf]
        %v2669 = vld [vmem:[%s2655 + $0x34] sm:$0xf]
        %v2670 = vld [vmem:[%s2655 + $0x38] sm:$0xf]
        %v2671 = vld [vmem:[%s2655 + $0x3c] sm:$0xf]
        %v2688 = vunpack.c.l.b16 %v2656
        %v2689 = vunpack.c.l.b16 %v2657
        %v2690 = vunpack.c.l.b16 %v2658
        %v2691 = vunpack.c.l.b16 %v2659
        %v2692 = vunpack.c.l.b16 %v2660
        %v2693 = vunpack.c.l.b16 %v2661
        %v2694 = vunpack.c.l.b16 %v2662
        %v2695 = vunpack.c.l.b16 %v2663
        %v2696 = vunpack.c.l.b16 %v2664
        %v2697 = vunpack.c.l.b16 %v2665
        %v2698 = vunpack.c.l.b16 %v2666
        %v2699 = vunpack.c.l.b16 %v2667
        %v2700 = vunpack.c.l.b16 %v2668
        %v2701 = vunpack.c.l.b16 %v2669
        %v2702 = vunpack.c.l.b16 %v2670
        %v2703 = vunpack.c.l.b16 %v2671
        %v2704 = vpack.c.b16 %v2689, %v2688
        %v2705 = vpack.c.b16 %v2691, %v2690
        %v2706 = vpack.c.b16 %v2693, %v2692
        %v2707 = vpack.c.b16 %v2695, %v2694
        %v2708 = vpack.c.b16 %v2697, %v2696
        %v2709 = vpack.c.b16 %v2699, %v2698
        %v2710 = vpack.c.b16 %v2701, %v2700
        %v2711 = vpack.c.b16 %v2703, %v2702
        %2720 = vmatpush.bf16.msra.mxu0 %v2711
        %2721 = vmatpush.bf16.msra.mxu0 %v2710
        %2722 = vmatpush.bf16.msra.mxu0 %v2709
        %2723 = vmatpush.bf16.msra.mxu0 %v2708
        %2724 = vmatpush.bf16.msra.mxu0 %v2707
        %2725 = vmatpush.bf16.msra.mxu0 %v2706
        %2726 = vmatpush.bf16.msra.mxu0 %v2705
        %2727 = vmatpush.bf16.msra.mxu0 %v2704
        %2728 = vmatmul.bf16.gmra.mxu0 %v2653
        %v2729 = vpop.f32.mrf.mxu0
        %v2730 = vadd.f32 0.0, %v2729
        %v2731 = vpop.f32.mrf.mxu0
        %v2732 = vadd.f32 0.0, %v2731
        %2733 = vmatmul.bf16.gmra.mxu0 %v2654
        %v2734 = vpop.f32.mrf.mxu0
        %v2735 = vadd.f32 0.0, %v2734
        %v2736 = vpop.f32.mrf.mxu0
        %2737 = vdwg.mxu0
        %v2738 = vadd.f32 %v2642, %v2730
        %v2739 = vadd.f32 %v2644, %v2732
        %v2740 = vadd.f32 %v2647, %v2735
        %v2741 = vld [vmem:[#allocation2 + $0x6] sm:$0xff]
        %v2742 = vld [vmem:[#allocation2 + $0xe] sm:$0xff]
        %v2743 = vld [vmem:[#allocation2 + $0x16] sm:$0x3f]
        %v2744 = vpack.c.bf16 %v2742, %v2741
        %v2745 = vpack.c.bf16 %v2743, %v2743
        %s2746 = scalar_lea.vmem [#allocation4], 1408
        %v2747 = vld [vmem:[%s2746] sm:$0xf]
        %v2748 = vld [vmem:[%s2746 + $0x4] sm:$0xf]
        %v2749 = vld [vmem:[%s2746 + $0x8] sm:$0xf]
        %v2750 = vld [vmem:[%s2746 + $0xc] sm:$0xf]
        %v2751 = vld [vmem:[%s2746 + $0x10] sm:$0xf]
        %v2752 = vld [vmem:[%s2746 + $0x14] sm:$0xf]
        %v2753 = vld [vmem:[%s2746 + $0x18] sm:$0xf]
        %v2754 = vld [vmem:[%s2746 + $0x1c] sm:$0xf]
        %v2755 = vld [vmem:[%s2746 + $0x20] sm:$0xf]
        %v2756 = vld [vmem:[%s2746 + $0x24] sm:$0xf]
        %v2757 = vld [vmem:[%s2746 + $0x28] sm:$0xf]
        %v2758 = vld [vmem:[%s2746 + $0x2c] sm:$0xf]
        %v2759 = vld [vmem:[%s2746 + $0x30] sm:$0xf]
        %v2760 = vld [vmem:[%s2746 + $0x34] sm:$0xf]
        %v2761 = vld [vmem:[%s2746 + $0x38] sm:$0xf]
        %v2762 = vld [vmem:[%s2746 + $0x3c] sm:$0xf]
        %v2779 = vunpack.c.l.b16 %v2747
        %v2780 = vunpack.c.l.b16 %v2748
        %v2781 = vunpack.c.l.b16 %v2749
        %v2782 = vunpack.c.l.b16 %v2750
        %v2783 = vunpack.c.l.b16 %v2751
        %v2784 = vunpack.c.l.b16 %v2752
        %v2785 = vunpack.c.l.b16 %v2753
        %v2786 = vunpack.c.l.b16 %v2754
        %v2787 = vunpack.c.l.b16 %v2755
        %v2788 = vunpack.c.l.b16 %v2756
        %v2789 = vunpack.c.l.b16 %v2757
        %v2790 = vunpack.c.l.b16 %v2758
        %v2791 = vunpack.c.l.b16 %v2759
        %v2792 = vunpack.c.l.b16 %v2760
        %v2793 = vunpack.c.l.b16 %v2761
        %v2794 = vunpack.c.l.b16 %v2762
        %v2795 = vpack.c.b16 %v2780, %v2779
        %v2796 = vpack.c.b16 %v2782, %v2781
        %v2797 = vpack.c.b16 %v2784, %v2783
        %v2798 = vpack.c.b16 %v2786, %v2785
        %v2799 = vpack.c.b16 %v2788, %v2787
        %v2800 = vpack.c.b16 %v2790, %v2789
        %v2801 = vpack.c.b16 %v2792, %v2791
        %v2802 = vpack.c.b16 %v2794, %v2793
        %2811 = vmatpush.bf16.msra.mxu0 %v2802
        %2812 = vmatpush.bf16.msra.mxu0 %v2801
        %2813 = vmatpush.bf16.msra.mxu0 %v2800
        %2814 = vmatpush.bf16.msra.mxu0 %v2799
        %2815 = vmatpush.bf16.msra.mxu0 %v2798
        %2816 = vmatpush.bf16.msra.mxu0 %v2797
        %2817 = vmatpush.bf16.msra.mxu0 %v2796
        %2818 = vmatpush.bf16.msra.mxu0 %v2795
        %2819 = vmatmul.bf16.gmra.mxu0 %v2744
        %v2820 = vpop.f32.mrf.mxu0
        %v2821 = vadd.f32 0.0, %v2820
        %v2822 = vpop.f32.mrf.mxu0
        %v2823 = vadd.f32 0.0, %v2822
        %2824 = vmatmul.bf16.gmra.mxu0 %v2745
        %v2825 = vpop.f32.mrf.mxu0
        %v2826 = vadd.f32 0.0, %v2825
        %v2827 = vpop.f32.mrf.mxu0
        %2828 = vdwg.mxu0
        %v2829 = vadd.f32 %v2738, %v2821
        %v2830 = vadd.f32 %v2739, %v2823
        %v2831 = vadd.f32 %v2740, %v2826
        %v2832 = vld [vmem:[#allocation2 + $0x7] sm:$0xff]
        %v2833 = vld [vmem:[#allocation2 + $0xf] sm:$0xff]
        %v2834 = vld [vmem:[#allocation2 + $0x17] sm:$0x3f]
        %v2835 = vpack.c.bf16 %v2833, %v2832
        %v2836 = vpack.c.bf16 %v2834, %v2834
        %s2837 = scalar_lea.vmem [#allocation4], 1472
        %v2838 = vld [vmem:[%s2837] sm:$0xf]
        %v2839 = vld [vmem:[%s2837 + $0x4] sm:$0xf]
        %v2840 = vld [vmem:[%s2837 + $0x8] sm:$0xf]
        %v2841 = vld [vmem:[%s2837 + $0xc] sm:$0xf]
        %v2842 = vld [vmem:[%s2837 + $0x10] sm:$0xf]
        %v2843 = vld [vmem:[%s2837 + $0x14] sm:$0xf]
        %v2844 = vld [vmem:[%s2837 + $0x18] sm:$0xf]
        %v2845 = vld [vmem:[%s2837 + $0x1c] sm:$0xf]
        %v2846 = vld [vmem:[%s2837 + $0x20] sm:$0xf]
        %v2847 = vld [vmem:[%s2837 + $0x24] sm:$0xf]
        %v2848 = vld [vmem:[%s2837 + $0x28] sm:$0xf]
        %v2849 = vld [vmem:[%s2837 + $0x2c] sm:$0xf]
        %v2850 = vld [vmem:[%s2837 + $0x30] sm:$0xf]
        %v2851 = vld [vmem:[%s2837 + $0x34] sm:$0xf]
        %v2852 = vld [vmem:[%s2837 + $0x38] sm:$0xf]
        %v2853 = vld [vmem:[%s2837 + $0x3c] sm:$0xf]
        %v2870 = vunpack.c.l.b16 %v2838
        %v2871 = vunpack.c.l.b16 %v2839
        %v2872 = vunpack.c.l.b16 %v2840
        %v2873 = vunpack.c.l.b16 %v2841
        %v2874 = vunpack.c.l.b16 %v2842
        %v2875 = vunpack.c.l.b16 %v2843
        %v2876 = vunpack.c.l.b16 %v2844
        %v2877 = vunpack.c.l.b16 %v2845
        %v2878 = vunpack.c.l.b16 %v2846
        %v2879 = vunpack.c.l.b16 %v2847
        %v2880 = vunpack.c.l.b16 %v2848
        %v2881 = vunpack.c.l.b16 %v2849
        %v2882 = vunpack.c.l.b16 %v2850
        %v2883 = vunpack.c.l.b16 %v2851
        %v2884 = vunpack.c.l.b16 %v2852
        %v2885 = vunpack.c.l.b16 %v2853
        %v2886 = vpack.c.b16 %v2871, %v2870
        %v2887 = vpack.c.b16 %v2873, %v2872
        %v2888 = vpack.c.b16 %v2875, %v2874
        %v2889 = vpack.c.b16 %v2877, %v2876
        %v2890 = vpack.c.b16 %v2879, %v2878
        %v2891 = vpack.c.b16 %v2881, %v2880
        %v2892 = vpack.c.b16 %v2883, %v2882
        %v2893 = vpack.c.b16 %v2885, %v2884
        %2902 = vmatpush.bf16.msra.mxu0 %v2893
        %2903 = vmatpush.bf16.msra.mxu0 %v2892
        %2904 = vmatpush.bf16.msra.mxu0 %v2891
        %2905 = vmatpush.bf16.msra.mxu0 %v2890
        %2906 = vmatpush.bf16.msra.mxu0 %v2889
        %2907 = vmatpush.bf16.msra.mxu0 %v2888
        %2908 = vmatpush.bf16.msra.mxu0 %v2887
        %2909 = vmatpush.bf16.msra.mxu0 %v2886
        %2910 = vmatmul.bf16.gmra.mxu0 %v2835
        %v2911 = vpop.f32.mrf.mxu0
        %v2912 = vadd.f32 0.0, %v2911
        %v2913 = vpop.f32.mrf.mxu0
        %v2914 = vadd.f32 0.0, %v2913
        %2915 = vmatmul.bf16.gmra.mxu0 %v2836
        %v2916 = vpop.f32.mrf.mxu0
        %v2917 = vadd.f32 0.0, %v2916
        %v2918 = vpop.f32.mrf.mxu0
        %2919 = vdwg.mxu0
        %v2920 = vadd.f32 %v2829, %v2912
        %v2921 = vadd.f32 %v2830, %v2914
        %v2922 = vadd.f32 %v2831, %v2917
        %v2923 = vld [vmem:[#allocation2 + $0x8] sm:$0xff]
        %v2924 = vld [vmem:[#allocation2 + $0x10] sm:$0xff]
        %v2925 = vld [vmem:[#allocation2 + $0x18] sm:$0x3f]
        %v2926 = vpack.c.bf16 %v2924, %v2923
        %v2927 = vpack.c.bf16 %v2925, %v2925
        %s2928 = scalar_lea.vmem [#allocation4], 1536
        %v2929 = vld [vmem:[%s2928] sm:$0xf]
        %v2930 = vld [vmem:[%s2928 + $0x4] sm:$0xf]
        %v2931 = vld [vmem:[%s2928 + $0x8] sm:$0xf]
        %v2932 = vld [vmem:[%s2928 + $0xc] sm:$0xf]
        %v2933 = vld [vmem:[%s2928 + $0x10] sm:$0xf]
        %v2934 = vld [vmem:[%s2928 + $0x14] sm:$0xf]
        %v2935 = vld [vmem:[%s2928 + $0x18] sm:$0xf]
        %v2936 = vld [vmem:[%s2928 + $0x1c] sm:$0xf]
        %v2937 = vld [vmem:[%s2928 + $0x20] sm:$0xf]
        %v2938 = vld [vmem:[%s2928 + $0x24] sm:$0xf]
        %v2939 = vld [vmem:[%s2928 + $0x28] sm:$0xf]
        %v2940 = vld [vmem:[%s2928 + $0x2c] sm:$0xf]
        %v2941 = vld [vmem:[%s2928 + $0x30] sm:$0xf]
        %v2942 = vld [vmem:[%s2928 + $0x34] sm:$0xf]
        %v2943 = vld [vmem:[%s2928 + $0x38] sm:$0xf]
        %v2944 = vld [vmem:[%s2928 + $0x3c] sm:$0xf]
        %v2961 = vunpack.c.l.b16 %v2929
        %v2962 = vunpack.c.l.b16 %v2930
        %v2963 = vunpack.c.l.b16 %v2931
        %v2964 = vunpack.c.l.b16 %v2932
        %v2965 = vunpack.c.l.b16 %v2933
        %v2966 = vunpack.c.l.b16 %v2934
        %v2967 = vunpack.c.l.b16 %v2935
        %v2968 = vunpack.c.l.b16 %v2936
        %v2969 = vunpack.c.l.b16 %v2937
        %v2970 = vunpack.c.l.b16 %v2938
        %v2971 = vunpack.c.l.b16 %v2939
        %v2972 = vunpack.c.l.b16 %v2940
        %v2973 = vunpack.c.l.b16 %v2941
        %v2974 = vunpack.c.l.b16 %v2942
        %v2975 = vunpack.c.l.b16 %v2943
        %v2976 = vunpack.c.l.b16 %v2944
        %v2977 = vpack.c.b16 %v2962, %v2961
        %v2978 = vpack.c.b16 %v2964, %v2963
        %v2979 = vpack.c.b16 %v2966, %v2965
        %v2980 = vpack.c.b16 %v2968, %v2967
        %v2981 = vpack.c.b16 %v2970, %v2969
        %v2982 = vpack.c.b16 %v2972, %v2971
        %v2983 = vpack.c.b16 %v2974, %v2973
        %v2984 = vpack.c.b16 %v2976, %v2975
        %2993 = vmatpush.bf16.msra.mxu0 %v2984
        %2994 = vmatpush.bf16.msra.mxu0 %v2983
        %2995 = vmatpush.bf16.msra.mxu0 %v2982
        %2996 = vmatpush.bf16.msra.mxu0 %v2981
        %2997 = vmatpush.bf16.msra.mxu0 %v2980
        %2998 = vmatpush.bf16.msra.mxu0 %v2979
        %2999 = vmatpush.bf16.msra.mxu0 %v2978
        %3000 = vmatpush.bf16.msra.mxu0 %v2977
        %3001 = vmatmul.bf16.gmra.mxu0 %v2926
        %v3002 = vpop.f32.mrf.mxu0
        %v3003 = vadd.f32 0.0, %v3002
        %v3004 = vpop.f32.mrf.mxu0
        %v3005 = vadd.f32 0.0, %v3004
        %3006 = vmatmul.bf16.gmra.mxu0 %v2927
        %v3007 = vpop.f32.mrf.mxu0
        %v3008 = vadd.f32 0.0, %v3007
        %v3009 = vpop.f32.mrf.mxu0
        %3010 = vdwg.mxu0
        %v3011 = vadd.f32 %v2920, %v3003
        %v3012 = vadd.f32 %v2921, %v3005
        %v3013 = vadd.f32 %v2922, %v3008
        %v3014 = vld [vmem:[#allocation2 + $0xc] sm:$0xff]
        %v3015 = vld [vmem:[#allocation2 + $0x14] sm:$0xff]
        %v3016 = vld [vmem:[#allocation2 + $0x1c] sm:$0x3f]
        %v3017 = vpack.c.bf16 %v3015, %v3014
        %v3018 = vpack.c.bf16 %v3016, %v3016
        %s3019 = scalar_lea.vmem [#allocation4], 1600
        %v3020 = vld [vmem:[%s3019] sm:$0xf]
        %v3021 = vld [vmem:[%s3019 + $0x4] sm:$0xf]
        %v3022 = vld [vmem:[%s3019 + $0x8] sm:$0xf]
        %v3023 = vld [vmem:[%s3019 + $0xc] sm:$0xf]
        %v3024 = vld [vmem:[%s3019 + $0x10] sm:$0xf]
        %v3025 = vld [vmem:[%s3019 + $0x14] sm:$0xf]
        %v3026 = vld [vmem:[%s3019 + $0x18] sm:$0xf]
        %v3027 = vld [vmem:[%s3019 + $0x1c] sm:$0xf]
        %v3028 = vld [vmem:[%s3019 + $0x20] sm:$0xf]
        %v3029 = vld [vmem:[%s3019 + $0x24] sm:$0xf]
        %v3030 = vld [vmem:[%s3019 + $0x28] sm:$0xf]
        %v3031 = vld [vmem:[%s3019 + $0x2c] sm:$0xf]
        %v3032 = vld [vmem:[%s3019 + $0x30] sm:$0xf]
        %v3033 = vld [vmem:[%s3019 + $0x34] sm:$0xf]
        %v3034 = vld [vmem:[%s3019 + $0x38] sm:$0xf]
        %v3035 = vld [vmem:[%s3019 + $0x3c] sm:$0xf]
        %v3052 = vunpack.c.l.b16 %v3020
        %v3053 = vunpack.c.l.b16 %v3021
        %v3054 = vunpack.c.l.b16 %v3022
        %v3055 = vunpack.c.l.b16 %v3023
        %v3056 = vunpack.c.l.b16 %v3024
        %v3057 = vunpack.c.l.b16 %v3025
        %v3058 = vunpack.c.l.b16 %v3026
        %v3059 = vunpack.c.l.b16 %v3027
        %v3060 = vunpack.c.l.b16 %v3028
        %v3061 = vunpack.c.l.b16 %v3029
        %v3062 = vunpack.c.l.b16 %v3030
        %v3063 = vunpack.c.l.b16 %v3031
        %v3064 = vunpack.c.l.b16 %v3032
        %v3065 = vunpack.c.l.b16 %v3033
        %v3066 = vunpack.c.l.b16 %v3034
        %v3067 = vunpack.c.l.b16 %v3035
        %v3068 = vpack.c.b16 %v3053, %v3052
        %v3069 = vpack.c.b16 %v3055, %v3054
        %v3070 = vpack.c.b16 %v3057, %v3056
        %v3071 = vpack.c.b16 %v3059, %v3058
        %v3072 = vpack.c.b16 %v3061, %v3060
        %v3073 = vpack.c.b16 %v3063, %v3062
        %v3074 = vpack.c.b16 %v3065, %v3064
        %v3075 = vpack.c.b16 %v3067, %v3066
        %3084 = vmatpush.bf16.msra.mxu0 %v3075
        %3085 = vmatpush.bf16.msra.mxu0 %v3074
        %3086 = vmatpush.bf16.msra.mxu0 %v3073
        %3087 = vmatpush.bf16.msra.mxu0 %v3072
        %3088 = vmatpush.bf16.msra.mxu0 %v3071
        %3089 = vmatpush.bf16.msra.mxu0 %v3070
        %3090 = vmatpush.bf16.msra.mxu0 %v3069
        %3091 = vmatpush.bf16.msra.mxu0 %v3068
        %3092 = vmatmul.bf16.gmra.mxu0 %v3017
        %v3093 = vpop.f32.mrf.mxu0
        %v3094 = vadd.f32 0.0, %v3093
        %v3095 = vpop.f32.mrf.mxu0
        %v3096 = vadd.f32 0.0, %v3095
        %3097 = vmatmul.bf16.gmra.mxu0 %v3018
        %v3098 = vpop.f32.mrf.mxu0
        %v3099 = vadd.f32 0.0, %v3098
        %v3100 = vpop.f32.mrf.mxu0
        %3101 = vdwg.mxu0
        %v3102 = vadd.f32 %v3011, %v3094
        %v3103 = vadd.f32 %v3012, %v3096
        %v3104 = vadd.f32 %v3013, %v3099
        %v3105 = vld [vmem:[#allocation2 + $0xd] sm:$0xff]
        %v3106 = vld [vmem:[#allocation2 + $0x15] sm:$0xff]
        %v3107 = vld [vmem:[#allocation2 + $0x1d] sm:$0x3f]
        %v3108 = vpack.c.bf16 %v3106, %v3105
        %v3109 = vpack.c.bf16 %v3107, %v3107
        %s3110 = scalar_lea.vmem [#allocation4], 1664
        %v3111 = vld [vmem:[%s3110] sm:$0xf]
        %v3112 = vld [vmem:[%s3110 + $0x4] sm:$0xf]
        %v3113 = vld [vmem:[%s3110 + $0x8] sm:$0xf]
        %v3114 = vld [vmem:[%s3110 + $0xc] sm:$0xf]
        %v3115 = vld [vmem:[%s3110 + $0x10] sm:$0xf]
        %v3116 = vld [vmem:[%s3110 + $0x14] sm:$0xf]
        %v3117 = vld [vmem:[%s3110 + $0x18] sm:$0xf]
        %v3118 = vld [vmem:[%s3110 + $0x1c] sm:$0xf]
        %v3119 = vld [vmem:[%s3110 + $0x20] sm:$0xf]
        %v3120 = vld [vmem:[%s3110 + $0x24] sm:$0xf]
        %v3121 = vld [vmem:[%s3110 + $0x28] sm:$0xf]
        %v3122 = vld [vmem:[%s3110 + $0x2c] sm:$0xf]
        %v3123 = vld [vmem:[%s3110 + $0x30] sm:$0xf]
        %v3124 = vld [vmem:[%s3110 + $0x34] sm:$0xf]
        %v3125 = vld [vmem:[%s3110 + $0x38] sm:$0xf]
        %v3126 = vld [vmem:[%s3110 + $0x3c] sm:$0xf]
        %v3143 = vunpack.c.l.b16 %v3111
        %v3144 = vunpack.c.l.b16 %v3112
        %v3145 = vunpack.c.l.b16 %v3113
        %v3146 = vunpack.c.l.b16 %v3114
        %v3147 = vunpack.c.l.b16 %v3115
        %v3148 = vunpack.c.l.b16 %v3116
        %v3149 = vunpack.c.l.b16 %v3117
        %v3150 = vunpack.c.l.b16 %v3118
        %v3151 = vunpack.c.l.b16 %v3119
        %v3152 = vunpack.c.l.b16 %v3120
        %v3153 = vunpack.c.l.b16 %v3121
        %v3154 = vunpack.c.l.b16 %v3122
        %v3155 = vunpack.c.l.b16 %v3123
        %v3156 = vunpack.c.l.b16 %v3124
        %v3157 = vunpack.c.l.b16 %v3125
        %v3158 = vunpack.c.l.b16 %v3126
        %v3159 = vpack.c.b16 %v3144, %v3143
        %v3160 = vpack.c.b16 %v3146, %v3145
        %v3161 = vpack.c.b16 %v3148, %v3147
        %v3162 = vpack.c.b16 %v3150, %v3149
        %v3163 = vpack.c.b16 %v3152, %v3151
        %v3164 = vpack.c.b16 %v3154, %v3153
        %v3165 = vpack.c.b16 %v3156, %v3155
        %v3166 = vpack.c.b16 %v3158, %v3157
        %3175 = vmatpush.bf16.msra.mxu0 %v3166
        %3176 = vmatpush.bf16.msra.mxu0 %v3165
        %3177 = vmatpush.bf16.msra.mxu0 %v3164
        %3178 = vmatpush.bf16.msra.mxu0 %v3163
        %3179 = vmatpush.bf16.msra.mxu0 %v3162
        %3180 = vmatpush.bf16.msra.mxu0 %v3161
        %3181 = vmatpush.bf16.msra.mxu0 %v3160
        %3182 = vmatpush.bf16.msra.mxu0 %v3159
        %3183 = vmatmul.bf16.gmra.mxu0 %v3108
        %v3184 = vpop.f32.mrf.mxu0
        %v3185 = vadd.f32 0.0, %v3184
        %v3186 = vpop.f32.mrf.mxu0
        %v3187 = vadd.f32 0.0, %v3186
        %3188 = vmatmul.bf16.gmra.mxu0 %v3109
        %v3189 = vpop.f32.mrf.mxu0
        %v3190 = vadd.f32 0.0, %v3189
        %v3191 = vpop.f32.mrf.mxu0
        %3192 = vdwg.mxu0
        %v3193 = vadd.f32 %v3102, %v3185
        %v3194 = vadd.f32 %v3103, %v3187
        %v3195 = vadd.f32 %v3104, %v3190
        %v3196 = vld [vmem:[#allocation2 + $0xe] sm:$0xff]
        %v3197 = vld [vmem:[#allocation2 + $0x16] sm:$0xff]
        %v3198 = vld [vmem:[#allocation2 + $0x1e] sm:$0x3f]
        %v3199 = vpack.c.bf16 %v3197, %v3196
        %v3200 = vpack.c.bf16 %v3198, %v3198
        %s3201 = scalar_lea.vmem [#allocation4], 1728
        %v3202 = vld [vmem:[%s3201] sm:$0xf]
        %v3203 = vld [vmem:[%s3201 + $0x4] sm:$0xf]
        %v3204 = vld [vmem:[%s3201 + $0x8] sm:$0xf]
        %v3205 = vld [vmem:[%s3201 + $0xc] sm:$0xf]
        %v3206 = vld [vmem:[%s3201 + $0x10] sm:$0xf]
        %v3207 = vld [vmem:[%s3201 + $0x14] sm:$0xf]
        %v3208 = vld [vmem:[%s3201 + $0x18] sm:$0xf]
        %v3209 = vld [vmem:[%s3201 + $0x1c] sm:$0xf]
        %v3210 = vld [vmem:[%s3201 + $0x20] sm:$0xf]
        %v3211 = vld [vmem:[%s3201 + $0x24] sm:$0xf]
        %v3212 = vld [vmem:[%s3201 + $0x28] sm:$0xf]
        %v3213 = vld [vmem:[%s3201 + $0x2c] sm:$0xf]
        %v3214 = vld [vmem:[%s3201 + $0x30] sm:$0xf]
        %v3215 = vld [vmem:[%s3201 + $0x34] sm:$0xf]
        %v3216 = vld [vmem:[%s3201 + $0x38] sm:$0xf]
        %v3217 = vld [vmem:[%s3201 + $0x3c] sm:$0xf]
        %v3234 = vunpack.c.l.b16 %v3202
        %v3235 = vunpack.c.l.b16 %v3203
        %v3236 = vunpack.c.l.b16 %v3204
        %v3237 = vunpack.c.l.b16 %v3205
        %v3238 = vunpack.c.l.b16 %v3206
        %v3239 = vunpack.c.l.b16 %v3207
        %v3240 = vunpack.c.l.b16 %v3208
        %v3241 = vunpack.c.l.b16 %v3209
        %v3242 = vunpack.c.l.b16 %v3210
        %v3243 = vunpack.c.l.b16 %v3211
        %v3244 = vunpack.c.l.b16 %v3212
        %v3245 = vunpack.c.l.b16 %v3213
        %v3246 = vunpack.c.l.b16 %v3214
        %v3247 = vunpack.c.l.b16 %v3215
        %v3248 = vunpack.c.l.b16 %v3216
        %v3249 = vunpack.c.l.b16 %v3217
        %v3250 = vpack.c.b16 %v3235, %v3234
        %v3251 = vpack.c.b16 %v3237, %v3236
        %v3252 = vpack.c.b16 %v3239, %v3238
        %v3253 = vpack.c.b16 %v3241, %v3240
        %v3254 = vpack.c.b16 %v3243, %v3242
        %v3255 = vpack.c.b16 %v3245, %v3244
        %v3256 = vpack.c.b16 %v3247, %v3246
        %v3257 = vpack.c.b16 %v3249, %v3248
        %3266 = vmatpush.bf16.msra.mxu0 %v3257
        %3267 = vmatpush.bf16.msra.mxu0 %v3256
        %3268 = vmatpush.bf16.msra.mxu0 %v3255
        %3269 = vmatpush.bf16.msra.mxu0 %v3254
        %3270 = vmatpush.bf16.msra.mxu0 %v3253
        %3271 = vmatpush.bf16.msra.mxu0 %v3252
        %3272 = vmatpush.bf16.msra.mxu0 %v3251
        %3273 = vmatpush.bf16.msra.mxu0 %v3250
        %3274 = vmatmul.bf16.gmra.mxu0 %v3199
        %v3275 = vpop.f32.mrf.mxu0
        %v3276 = vadd.f32 0.0, %v3275
        %v3277 = vpop.f32.mrf.mxu0
        %v3278 = vadd.f32 0.0, %v3277
        %3279 = vmatmul.bf16.gmra.mxu0 %v3200
        %v3280 = vpop.f32.mrf.mxu0
        %v3281 = vadd.f32 0.0, %v3280
        %v3282 = vpop.f32.mrf.mxu0
        %3283 = vdwg.mxu0
        %v3284 = vadd.f32 %v3193, %v3276
        %v3285 = vadd.f32 %v3194, %v3278
        %v3286 = vadd.f32 %v3195, %v3281
        %v3287 = vld [vmem:[#allocation6 + $0x3] sm:$0x1]
        %v3288 = vperm.slane %v3287, 0
        %v3289 = vadd.f32 %v3284, %v3288
        %v3290 = vxor.u32 %v3289, 2147483648
        %v3291 = vmul.f32 %v3290, 1.442695
        %v3292 = vpow.pop %v3291
        %v3293 = vadd.f32 %v3292, 1.0
        %v3294 = vrcp.pop %v3293
        %v3295 = vmul.f32 %v3293, %v3294
        %v3296 = vsub.f32 1.0, %v3295
        %v3297 = vmul.f32 %v3294, %v3296
        %v3298 = vadd.f32 %v3294, %v3297
        %vm3299 = vweird.f32 %v3293
        %vm3300 = vweird.f32 %v3294
        %vm3301 = vmor %vm3299, %vm3300
        %v3302 = vsel %vm3301, %v3294, %v3298
        %v3303 = vand.u32 2147483647, %v3293
        %vm3304 = vcmp.eq.f32.partialorder %v3303, 8.507059e+37
        %v3305 = vand.u32 %v3293, 2147483648
        %v3306 = vor.u32 1.1754944e-38, %v3305
        %v3307 = vsel %vm3304, %v3306, %v3302
        %v3308 = vmul.f32 1.0, %v3307
        %v3309 = vmul.f32 %v3289, %v3308
        %3310 = vst [vmem:[#allocation3 + $0x7] sm:$0xf] %v3309
        %v3311 = vadd.f32 %v3285, %v3288
        %v3312 = vxor.u32 %v3311, 2147483648
        %v3313 = vmul.f32 %v3312, 1.442695
        %v3314 = vpow.pop %v3313
        %v3315 = vadd.f32 %v3314, 1.0
        %v3316 = vrcp.pop %v3315
        %v3317 = vmul.f32 %v3315, %v3316
        %v3318 = vsub.f32 1.0, %v3317
        %v3319 = vmul.f32 %v3316, %v3318
        %v3320 = vadd.f32 %v3316, %v3319
        %vm3321 = vweird.f32 %v3315
        %vm3322 = vweird.f32 %v3316
        %vm3323 = vmor %vm3321, %vm3322
        %v3324 = vsel %vm3323, %v3316, %v3320
        %v3325 = vand.u32 2147483647, %v3315
        %vm3326 = vcmp.eq.f32.partialorder %v3325, 8.507059e+37
        %v3327 = vand.u32 %v3315, 2147483648
        %v3328 = vor.u32 1.1754944e-38, %v3327
        %v3329 = vsel %vm3326, %v3328, %v3324
        %v3330 = vmul.f32 1.0, %v3329
        %v3331 = vmul.f32 %v3311, %v3330
        %3332 = vst [vmem:[#allocation3 + $0x7] sm:$0xc0] %v3309
        %3333 = vst [vmem:[#allocation3 + $0xf] sm:$0x3] %v3331
        %3334 = vst [vmem:[#allocation3 + $0xf] sm:$0xf0] %v3331
        %v3335 = vadd.f32 %v3286, %v3288
        %v3336 = vxor.u32 %v3335, 2147483648
        %v3337 = vmul.f32 %v3336, 1.442695
        %v3338 = vpow.pop %v3337
        %v3339 = vadd.f32 %v3338, 1.0
        %v3340 = vrcp.pop %v3339
        %v3341 = vmul.f32 %v3339, %v3340
        %v3342 = vsub.f32 1.0, %v3341
        %v3343 = vmul.f32 %v3340, %v3342
        %v3344 = vadd.f32 %v3340, %v3343
        %vm3345 = vweird.f32 %v3339
        %vm3346 = vweird.f32 %v3340
        %vm3347 = vmor %vm3345, %vm3346
        %v3348 = vsel %vm3347, %v3340, %v3344
        %v3349 = vand.u32 2147483647, %v3339
        %vm3350 = vcmp.eq.f32.partialorder %v3349, 8.507059e+37
        %v3351 = vand.u32 %v3339, 2147483648
        %v3352 = vor.u32 1.1754944e-38, %v3351
        %v3353 = vsel %vm3350, %v3352, %v3348
        %v3354 = vmul.f32 1.0, %v3353
        %v3355 = vmul.f32 %v3335, %v3354
        %3356 = vst [vmem:[#allocation3 + $0x17] sm:$0x3c] %v3355
        %3357 = vst [vmem:[#allocation2] sm:$0xff] 0.0
        %3358 = vst [vmem:[#allocation2 + $0x8] sm:$0xff] 0.0
        %v3359 = vld [vmem:[#allocation3] ss:$2 sm:$0xff]
        %v3360 = vpack.c.bf16 %v3359, %v3359
        %s3361 = scalar_lea.vmem [#allocation4], 1792
        %v3362 = vld [vmem:[%s3361] sm:$0xf]
        %v3363 = vld [vmem:[%s3361 + $0x4] sm:$0xf]
        %v3364 = vld [vmem:[%s3361 + $0x8] sm:$0xf]
        %v3365 = vld [vmem:[%s3361 + $0xc] sm:$0xf]
        %v3366 = vld [vmem:[%s3361 + $0x10] sm:$0xf]
        %v3367 = vld [vmem:[%s3361 + $0x14] sm:$0xf]
        %v3368 = vld [vmem:[%s3361 + $0x18] sm:$0xf]
        %v3369 = vld [vmem:[%s3361 + $0x1c] sm:$0xf]
        %v3370 = vld [vmem:[%s3361 + $0x20] sm:$0xf]
        %v3371 = vld [vmem:[%s3361 + $0x24] sm:$0xf]
        %v3372 = vld [vmem:[%s3361 + $0x28] sm:$0xf]
        %v3373 = vld [vmem:[%s3361 + $0x2c] sm:$0xf]
        %v3374 = vld [vmem:[%s3361 + $0x30] sm:$0xf]
        %v3375 = vld [vmem:[%s3361 + $0x34] sm:$0xf]
        %v3376 = vld [vmem:[%s3361 + $0x38] sm:$0xf]
        %v3377 = vld [vmem:[%s3361 + $0x3c] sm:$0xf]
        %s3378 = scalar_lea.vmem [#allocation3], 1
        %v3379 = vld [vmem:[%s3378] ss:$2 sm:$0xff]
        %v3380 = vpack.c.bf16 %v3379, %v3379
        %s3381 = scalar_lea.vmem [#allocation4], 1856
        %v3382 = vld [vmem:[%s3381] sm:$0xf]
        %v3383 = vld [vmem:[%s3381 + $0x4] sm:$0xf]
        %v3384 = vld [vmem:[%s3381 + $0x8] sm:$0xf]
        %v3385 = vld [vmem:[%s3381 + $0xc] sm:$0xf]
        %v3386 = vld [vmem:[%s3381 + $0x10] sm:$0xf]
        %v3387 = vld [vmem:[%s3381 + $0x14] sm:$0xf]
        %v3388 = vld [vmem:[%s3381 + $0x18] sm:$0xf]
        %v3389 = vld [vmem:[%s3381 + $0x1c] sm:$0xf]
        %v3390 = vld [vmem:[%s3381 + $0x20] sm:$0xf]
        %v3391 = vld [vmem:[%s3381 + $0x24] sm:$0xf]
        %v3392 = vld [vmem:[%s3381 + $0x28] sm:$0xf]
        %v3393 = vld [vmem:[%s3381 + $0x2c] sm:$0xf]
        %v3394 = vld [vmem:[%s3381 + $0x30] sm:$0xf]
        %v3395 = vld [vmem:[%s3381 + $0x34] sm:$0xf]
        %v3396 = vld [vmem:[%s3381 + $0x38] sm:$0xf]
        %v3397 = vld [vmem:[%s3381 + $0x3c] sm:$0xf]
        %v3414 = vunpack.c.l.b16 %v3382
        %v3415 = vunpack.c.l.b16 %v3383
        %v3416 = vunpack.c.l.b16 %v3384
        %v3417 = vunpack.c.l.b16 %v3385
        %v3418 = vunpack.c.l.b16 %v3386
        %v3419 = vunpack.c.l.b16 %v3387
        %v3420 = vunpack.c.l.b16 %v3388
        %v3421 = vunpack.c.l.b16 %v3389
        %v3422 = vunpack.c.l.b16 %v3390
        %v3423 = vunpack.c.l.b16 %v3391
        %v3424 = vunpack.c.l.b16 %v3392
        %v3425 = vunpack.c.l.b16 %v3393
        %v3426 = vunpack.c.l.b16 %v3394
        %v3427 = vunpack.c.l.b16 %v3395
        %v3428 = vunpack.c.l.b16 %v3396
        %v3429 = vunpack.c.l.b16 %v3397
        %v3430 = vpack.c.b16 %v3415, %v3414
        %v3431 = vpack.c.b16 %v3417, %v3416
        %v3432 = vpack.c.b16 %v3419, %v3418
        %v3433 = vpack.c.b16 %v3421, %v3420
        %v3434 = vpack.c.b16 %v3423, %v3422
        %v3435 = vpack.c.b16 %v3425, %v3424
        %v3436 = vpack.c.b16 %v3427, %v3426
        %v3437 = vpack.c.b16 %v3429, %v3428
        %3446 = vmatpush.bf16.msra.mxu0 %v3437
        %3447 = vmatpush.bf16.msra.mxu0 %v3436
        %3448 = vmatpush.bf16.msra.mxu0 %v3435
        %3449 = vmatpush.bf16.msra.mxu0 %v3434
        %3450 = vmatpush.bf16.msra.mxu0 %v3433
        %3451 = vmatpush.bf16.msra.mxu0 %v3432
        %3452 = vmatpush.bf16.msra.mxu0 %v3431
        %3453 = vmatpush.bf16.msra.mxu0 %v3430
        %3454 = vmatmul.bf16.gmra.mxu0 %v3380
        %v3455 = vpop.f32.mrf.mxu0
        %v3456 = vadd.f32 0.0, %v3455
        %v3457 = vpop.f32.mrf.mxu0
        %3458 = vdwg.mxu0
        %v3475 = vunpack.c.l.b16 %v3362
        %v3476 = vunpack.c.l.b16 %v3363
        %v3477 = vunpack.c.l.b16 %v3364
        %v3478 = vunpack.c.l.b16 %v3365
        %v3479 = vunpack.c.l.b16 %v3366
        %v3480 = vunpack.c.l.b16 %v3367
        %v3481 = vunpack.c.l.b16 %v3368
        %v3482 = vunpack.c.l.b16 %v3369
        %v3483 = vunpack.c.l.b16 %v3370
        %v3484 = vunpack.c.l.b16 %v3371
        %v3485 = vunpack.c.l.b16 %v3372
        %v3486 = vunpack.c.l.b16 %v3373
        %v3487 = vunpack.c.l.b16 %v3374
        %v3488 = vunpack.c.l.b16 %v3375
        %v3489 = vunpack.c.l.b16 %v3376
        %v3490 = vunpack.c.l.b16 %v3377
        %v3491 = vpack.c.b16 %v3476, %v3475
        %v3492 = vpack.c.b16 %v3478, %v3477
        %v3493 = vpack.c.b16 %v3480, %v3479
        %v3494 = vpack.c.b16 %v3482, %v3481
        %v3495 = vpack.c.b16 %v3484, %v3483
        %v3496 = vpack.c.b16 %v3486, %v3485
        %v3497 = vpack.c.b16 %v3488, %v3487
        %v3498 = vpack.c.b16 %v3490, %v3489
        %3507 = vmatpush.bf16.msra.mxu0 %v3498
        %3508 = vmatpush.bf16.msra.mxu0 %v3497
        %3509 = vmatpush.bf16.msra.mxu0 %v3496
        %3510 = vmatpush.bf16.msra.mxu0 %v3495
        %3511 = vmatpush.bf16.msra.mxu0 %v3494
        %3512 = vmatpush.bf16.msra.mxu0 %v3493
        %3513 = vmatpush.bf16.msra.mxu0 %v3492
        %3514 = vmatpush.bf16.msra.mxu0 %v3491
        %3515 = vmatmul.bf16.gmra.mxu0 %v3360
        %v3516 = vpop.f32.mrf.mxu0
        %v3517 = vadd.f32 %v3456, %v3516
        %v3518 = vpop.f32.mrf.mxu0
        %3519 = vdwg.mxu0
        %s3520 = scalar_lea.vmem [#allocation3], 2
        %v3521 = vld [vmem:[%s3520] ss:$2 sm:$0xff]
        %v3522 = vpack.c.bf16 %v3521, %v3521
        %s3523 = scalar_lea.vmem [#allocation4], 1920
        %v3524 = vld [vmem:[%s3523] sm:$0xf]
        %v3525 = vld [vmem:[%s3523 + $0x4] sm:$0xf]
        %v3526 = vld [vmem:[%s3523 + $0x8] sm:$0xf]
        %v3527 = vld [vmem:[%s3523 + $0xc] sm:$0xf]
        %v3528 = vld [vmem:[%s3523 + $0x10] sm:$0xf]
        %v3529 = vld [vmem:[%s3523 + $0x14] sm:$0xf]
        %v3530 = vld [vmem:[%s3523 + $0x18] sm:$0xf]
        %v3531 = vld [vmem:[%s3523 + $0x1c] sm:$0xf]
        %v3532 = vld [vmem:[%s3523 + $0x20] sm:$0xf]
        %v3533 = vld [vmem:[%s3523 + $0x24] sm:$0xf]
        %v3534 = vld [vmem:[%s3523 + $0x28] sm:$0xf]
        %v3535 = vld [vmem:[%s3523 + $0x2c] sm:$0xf]
        %v3536 = vld [vmem:[%s3523 + $0x30] sm:$0xf]
        %v3537 = vld [vmem:[%s3523 + $0x34] sm:$0xf]
        %v3538 = vld [vmem:[%s3523 + $0x38] sm:$0xf]
        %v3539 = vld [vmem:[%s3523 + $0x3c] sm:$0xf]
        %v3556 = vunpack.c.l.b16 %v3524
        %v3557 = vunpack.c.l.b16 %v3525
        %v3558 = vunpack.c.l.b16 %v3526
        %v3559 = vunpack.c.l.b16 %v3527
        %v3560 = vunpack.c.l.b16 %v3528
        %v3561 = vunpack.c.l.b16 %v3529
        %v3562 = vunpack.c.l.b16 %v3530
        %v3563 = vunpack.c.l.b16 %v3531
        %v3564 = vunpack.c.l.b16 %v3532
        %v3565 = vunpack.c.l.b16 %v3533
        %v3566 = vunpack.c.l.b16 %v3534
        %v3567 = vunpack.c.l.b16 %v3535
        %v3568 = vunpack.c.l.b16 %v3536
        %v3569 = vunpack.c.l.b16 %v3537
        %v3570 = vunpack.c.l.b16 %v3538
        %v3571 = vunpack.c.l.b16 %v3539
        %v3572 = vpack.c.b16 %v3557, %v3556
        %v3573 = vpack.c.b16 %v3559, %v3558
        %v3574 = vpack.c.b16 %v3561, %v3560
        %v3575 = vpack.c.b16 %v3563, %v3562
        %v3576 = vpack.c.b16 %v3565, %v3564
        %v3577 = vpack.c.b16 %v3567, %v3566
        %v3578 = vpack.c.b16 %v3569, %v3568
        %v3579 = vpack.c.b16 %v3571, %v3570
        %3588 = vmatpush.bf16.msra.mxu0 %v3579
        %3589 = vmatpush.bf16.msra.mxu0 %v3578
        %3590 = vmatpush.bf16.msra.mxu0 %v3577
        %3591 = vmatpush.bf16.msra.mxu0 %v3576
        %3592 = vmatpush.bf16.msra.mxu0 %v3575
        %3593 = vmatpush.bf16.msra.mxu0 %v3574
        %3594 = vmatpush.bf16.msra.mxu0 %v3573
        %3595 = vmatpush.bf16.msra.mxu0 %v3572
        %3596 = vmatmul.bf16.gmra.mxu0 %v3522
        %v3597 = vpop.f32.mrf.mxu0
        %v3598 = vadd.f32 0.0, %v3597
        %v3599 = vpop.f32.mrf.mxu0
        %3600 = vdwg.mxu0
        %v3601 = vadd.f32 %v3517, %v3598
        %s3602 = scalar_lea.vmem [#allocation3], 6
        %v3603 = vld [vmem:[%s3602] ss:$2 sm:$0xff]
        %v3604 = vpack.c.bf16 %v3603, %v3603
        %s3605 = scalar_lea.vmem [#allocation4], 1984
        %v3606 = vld [vmem:[%s3605] sm:$0xf]
        %v3607 = vld [vmem:[%s3605 + $0x4] sm:$0xf]
        %v3608 = vld [vmem:[%s3605 + $0x8] sm:$0xf]
        %v3609 = vld [vmem:[%s3605 + $0xc] sm:$0xf]
        %v3610 = vld [vmem:[%s3605 + $0x10] sm:$0xf]
        %v3611 = vld [vmem:[%s3605 + $0x14] sm:$0xf]
        %v3612 = vld [vmem:[%s3605 + $0x18] sm:$0xf]
        %v3613 = vld [vmem:[%s3605 + $0x1c] sm:$0xf]
        %v3614 = vld [vmem:[%s3605 + $0x20] sm:$0xf]
        %v3615 = vld [vmem:[%s3605 + $0x24] sm:$0xf]
        %v3616 = vld [vmem:[%s3605 + $0x28] sm:$0xf]
        %v3617 = vld [vmem:[%s3605 + $0x2c] sm:$0xf]
        %v3618 = vld [vmem:[%s3605 + $0x30] sm:$0xf]
        %v3619 = vld [vmem:[%s3605 + $0x34] sm:$0xf]
        %v3620 = vld [vmem:[%s3605 + $0x38] sm:$0xf]
        %v3621 = vld [vmem:[%s3605 + $0x3c] sm:$0xf]
        %v3638 = vunpack.c.l.b16 %v3606
        %v3639 = vunpack.c.l.b16 %v3607
        %v3640 = vunpack.c.l.b16 %v3608
        %v3641 = vunpack.c.l.b16 %v3609
        %v3642 = vunpack.c.l.b16 %v3610
        %v3643 = vunpack.c.l.b16 %v3611
        %v3644 = vunpack.c.l.b16 %v3612
        %v3645 = vunpack.c.l.b16 %v3613
        %v3646 = vunpack.c.l.b16 %v3614
        %v3647 = vunpack.c.l.b16 %v3615
        %v3648 = vunpack.c.l.b16 %v3616
        %v3649 = vunpack.c.l.b16 %v3617
        %v3650 = vunpack.c.l.b16 %v3618
        %v3651 = vunpack.c.l.b16 %v3619
        %v3652 = vunpack.c.l.b16 %v3620
        %v3653 = vunpack.c.l.b16 %v3621
        %v3654 = vpack.c.b16 %v3639, %v3638
        %v3655 = vpack.c.b16 %v3641, %v3640
        %v3656 = vpack.c.b16 %v3643, %v3642
        %v3657 = vpack.c.b16 %v3645, %v3644
        %v3658 = vpack.c.b16 %v3647, %v3646
        %v3659 = vpack.c.b16 %v3649, %v3648
        %v3660 = vpack.c.b16 %v3651, %v3650
        %v3661 = vpack.c.b16 %v3653, %v3652
        %3670 = vmatpush.bf16.msra.mxu0 %v3661
        %3671 = vmatpush.bf16.msra.mxu0 %v3660
        %3672 = vmatpush.bf16.msra.mxu0 %v3659
        %3673 = vmatpush.bf16.msra.mxu0 %v3658
        %3674 = vmatpush.bf16.msra.mxu0 %v3657
        %3675 = vmatpush.bf16.msra.mxu0 %v3656
        %3676 = vmatpush.bf16.msra.mxu0 %v3655
        %3677 = vmatpush.bf16.msra.mxu0 %v3654
        %3678 = vmatmul.bf16.gmra.mxu0 %v3604
        %v3679 = vpop.f32.mrf.mxu0
        %v3680 = vadd.f32 0.0, %v3679
        %v3681 = vpop.f32.mrf.mxu0
        %3682 = vdwg.mxu0
        %v3683 = vadd.f32 %v3601, %v3680
        %s3684 = scalar_lea.vmem [#allocation3], 7
        %v3685 = vld [vmem:[%s3684] ss:$2 sm:$0xff]
        %v3686 = vpack.c.bf16 %v3685, %v3685
        %s3687 = scalar_lea.vmem [#allocation4], 2048
        %v3688 = vld [vmem:[%s3687] sm:$0xf]
        %v3689 = vld [vmem:[%s3687 + $0x4] sm:$0xf]
        %v3690 = vld [vmem:[%s3687 + $0x8] sm:$0xf]
        %v3691 = vld [vmem:[%s3687 + $0xc] sm:$0xf]
        %v3692 = vld [vmem:[%s3687 + $0x10] sm:$0xf]
        %v3693 = vld [vmem:[%s3687 + $0x14] sm:$0xf]
        %v3694 = vld [vmem:[%s3687 + $0x18] sm:$0xf]
        %v3695 = vld [vmem:[%s3687 + $0x1c] sm:$0xf]
        %v3696 = vld [vmem:[%s3687 + $0x20] sm:$0xf]
        %v3697 = vld [vmem:[%s3687 + $0x24] sm:$0xf]
        %v3698 = vld [vmem:[%s3687 + $0x28] sm:$0xf]
        %v3699 = vld [vmem:[%s3687 + $0x2c] sm:$0xf]
        %v3700 = vld [vmem:[%s3687 + $0x30] sm:$0xf]
        %v3701 = vld [vmem:[%s3687 + $0x34] sm:$0xf]
        %v3702 = vld [vmem:[%s3687 + $0x38] sm:$0xf]
        %v3703 = vld [vmem:[%s3687 + $0x3c] sm:$0xf]
        %v3720 = vunpack.c.l.b16 %v3688
        %v3721 = vunpack.c.l.b16 %v3689
        %v3722 = vunpack.c.l.b16 %v3690
        %v3723 = vunpack.c.l.b16 %v3691
        %v3724 = vunpack.c.l.b16 %v3692
        %v3725 = vunpack.c.l.b16 %v3693
        %v3726 = vunpack.c.l.b16 %v3694
        %v3727 = vunpack.c.l.b16 %v3695
        %v3728 = vunpack.c.l.b16 %v3696
        %v3729 = vunpack.c.l.b16 %v3697
        %v3730 = vunpack.c.l.b16 %v3698
        %v3731 = vunpack.c.l.b16 %v3699
        %v3732 = vunpack.c.l.b16 %v3700
        %v3733 = vunpack.c.l.b16 %v3701
        %v3734 = vunpack.c.l.b16 %v3702
        %v3735 = vunpack.c.l.b16 %v3703
        %v3736 = vpack.c.b16 %v3721, %v3720
        %v3737 = vpack.c.b16 %v3723, %v3722
        %v3738 = vpack.c.b16 %v3725, %v3724
        %v3739 = vpack.c.b16 %v3727, %v3726
        %v3740 = vpack.c.b16 %v3729, %v3728
        %v3741 = vpack.c.b16 %v3731, %v3730
        %v3742 = vpack.c.b16 %v3733, %v3732
        %v3743 = vpack.c.b16 %v3735, %v3734
        %3752 = vmatpush.bf16.msra.mxu0 %v3743
        %3753 = vmatpush.bf16.msra.mxu0 %v3742
        %3754 = vmatpush.bf16.msra.mxu0 %v3741
        %3755 = vmatpush.bf16.msra.mxu0 %v3740
        %3756 = vmatpush.bf16.msra.mxu0 %v3739
        %3757 = vmatpush.bf16.msra.mxu0 %v3738
        %3758 = vmatpush.bf16.msra.mxu0 %v3737
        %3759 = vmatpush.bf16.msra.mxu0 %v3736
        %3760 = vmatmul.bf16.gmra.mxu0 %v3686
        %v3761 = vpop.f32.mrf.mxu0
        %v3762 = vadd.f32 0.0, %v3761
        %v3763 = vpop.f32.mrf.mxu0
        %3764 = vdwg.mxu0
        %v3765 = vadd.f32 %v3683, %v3762
        %s3766 = scalar_lea.vmem [#allocation3], 8
        %v3767 = vld [vmem:[%s3766] ss:$2 sm:$0xff]
        %v3768 = vpack.c.bf16 %v3767, %v3767
        %s3769 = scalar_lea.vmem [#allocation4], 2112
        %v3770 = vld [vmem:[%s3769] sm:$0xf]
        %v3771 = vld [vmem:[%s3769 + $0x4] sm:$0xf]
        %v3772 = vld [vmem:[%s3769 + $0x8] sm:$0xf]
        %v3773 = vld [vmem:[%s3769 + $0xc] sm:$0xf]
        %v3774 = vld [vmem:[%s3769 + $0x10] sm:$0xf]
        %v3775 = vld [vmem:[%s3769 + $0x14] sm:$0xf]
        %v3776 = vld [vmem:[%s3769 + $0x18] sm:$0xf]
        %v3777 = vld [vmem:[%s3769 + $0x1c] sm:$0xf]
        %v3778 = vld [vmem:[%s3769 + $0x20] sm:$0xf]
        %v3779 = vld [vmem:[%s3769 + $0x24] sm:$0xf]
        %v3780 = vld [vmem:[%s3769 + $0x28] sm:$0xf]
        %v3781 = vld [vmem:[%s3769 + $0x2c] sm:$0xf]
        %v3782 = vld [vmem:[%s3769 + $0x30] sm:$0xf]
        %v3783 = vld [vmem:[%s3769 + $0x34] sm:$0xf]
        %v3784 = vld [vmem:[%s3769 + $0x38] sm:$0xf]
        %v3785 = vld [vmem:[%s3769 + $0x3c] sm:$0xf]
        %v3802 = vunpack.c.l.b16 %v3770
        %v3803 = vunpack.c.l.b16 %v3771
        %v3804 = vunpack.c.l.b16 %v3772
        %v3805 = vunpack.c.l.b16 %v3773
        %v3806 = vunpack.c.l.b16 %v3774
        %v3807 = vunpack.c.l.b16 %v3775
        %v3808 = vunpack.c.l.b16 %v3776
        %v3809 = vunpack.c.l.b16 %v3777
        %v3810 = vunpack.c.l.b16 %v3778
        %v3811 = vunpack.c.l.b16 %v3779
        %v3812 = vunpack.c.l.b16 %v3780
        %v3813 = vunpack.c.l.b16 %v3781
        %v3814 = vunpack.c.l.b16 %v3782
        %v3815 = vunpack.c.l.b16 %v3783
        %v3816 = vunpack.c.l.b16 %v3784
        %v3817 = vunpack.c.l.b16 %v3785
        %v3818 = vpack.c.b16 %v3803, %v3802
        %v3819 = vpack.c.b16 %v3805, %v3804
        %v3820 = vpack.c.b16 %v3807, %v3806
        %v3821 = vpack.c.b16 %v3809, %v3808
        %v3822 = vpack.c.b16 %v3811, %v3810
        %v3823 = vpack.c.b16 %v3813, %v3812
        %v3824 = vpack.c.b16 %v3815, %v3814
        %v3825 = vpack.c.b16 %v3817, %v3816
        %3834 = vmatpush.bf16.msra.mxu0 %v3825
        %3835 = vmatpush.bf16.msra.mxu0 %v3824
        %3836 = vmatpush.bf16.msra.mxu0 %v3823
        %3837 = vmatpush.bf16.msra.mxu0 %v3822
        %3838 = vmatpush.bf16.msra.mxu0 %v3821
        %3839 = vmatpush.bf16.msra.mxu0 %v3820
        %3840 = vmatpush.bf16.msra.mxu0 %v3819
        %3841 = vmatpush.bf16.msra.mxu0 %v3818
        %3842 = vmatmul.bf16.gmra.mxu0 %v3768
        %v3843 = vpop.f32.mrf.mxu0
        %v3844 = vadd.f32 0.0, %v3843
        %v3845 = vpop.f32.mrf.mxu0
        %3846 = vdwg.mxu0
        %v3847 = vadd.f32 %v3765, %v3844
        %s3848 = scalar_lea.vmem [#allocation3], 12
        %v3849 = vld [vmem:[%s3848] ss:$2 sm:$0xff]
        %v3850 = vpack.c.bf16 %v3849, %v3849
        %s3851 = scalar_lea.vmem [#allocation4], 2176
        %v3852 = vld [vmem:[%s3851] sm:$0xf]
        %v3853 = vld [vmem:[%s3851 + $0x4] sm:$0xf]
        %v3854 = vld [vmem:[%s3851 + $0x8] sm:$0xf]
        %v3855 = vld [vmem:[%s3851 + $0xc] sm:$0xf]
        %v3856 = vld [vmem:[%s3851 + $0x10] sm:$0xf]
        %v3857 = vld [vmem:[%s3851 + $0x14] sm:$0xf]
        %v3858 = vld [vmem:[%s3851 + $0x18] sm:$0xf]
        %v3859 = vld [vmem:[%s3851 + $0x1c] sm:$0xf]
        %v3860 = vld [vmem:[%s3851 + $0x20] sm:$0xf]
        %v3861 = vld [vmem:[%s3851 + $0x24] sm:$0xf]
        %v3862 = vld [vmem:[%s3851 + $0x28] sm:$0xf]
        %v3863 = vld [vmem:[%s3851 + $0x2c] sm:$0xf]
        %v3864 = vld [vmem:[%s3851 + $0x30] sm:$0xf]
        %v3865 = vld [vmem:[%s3851 + $0x34] sm:$0xf]
        %v3866 = vld [vmem:[%s3851 + $0x38] sm:$0xf]
        %v3867 = vld [vmem:[%s3851 + $0x3c] sm:$0xf]
        %v3884 = vunpack.c.l.b16 %v3852
        %v3885 = vunpack.c.l.b16 %v3853
        %v3886 = vunpack.c.l.b16 %v3854
        %v3887 = vunpack.c.l.b16 %v3855
        %v3888 = vunpack.c.l.b16 %v3856
        %v3889 = vunpack.c.l.b16 %v3857
        %v3890 = vunpack.c.l.b16 %v3858
        %v3891 = vunpack.c.l.b16 %v3859
        %v3892 = vunpack.c.l.b16 %v3860
        %v3893 = vunpack.c.l.b16 %v3861
        %v3894 = vunpack.c.l.b16 %v3862
        %v3895 = vunpack.c.l.b16 %v3863
        %v3896 = vunpack.c.l.b16 %v3864
        %v3897 = vunpack.c.l.b16 %v3865
        %v3898 = vunpack.c.l.b16 %v3866
        %v3899 = vunpack.c.l.b16 %v3867
        %v3900 = vpack.c.b16 %v3885, %v3884
        %v3901 = vpack.c.b16 %v3887, %v3886
        %v3902 = vpack.c.b16 %v3889, %v3888
        %v3903 = vpack.c.b16 %v3891, %v3890
        %v3904 = vpack.c.b16 %v3893, %v3892
        %v3905 = vpack.c.b16 %v3895, %v3894
        %v3906 = vpack.c.b16 %v3897, %v3896
        %v3907 = vpack.c.b16 %v3899, %v3898
        %3916 = vmatpush.bf16.msra.mxu0 %v3907
        %3917 = vmatpush.bf16.msra.mxu0 %v3906
        %3918 = vmatpush.bf16.msra.mxu0 %v3905
        %3919 = vmatpush.bf16.msra.mxu0 %v3904
        %3920 = vmatpush.bf16.msra.mxu0 %v3903
        %3921 = vmatpush.bf16.msra.mxu0 %v3902
        %3922 = vmatpush.bf16.msra.mxu0 %v3901
        %3923 = vmatpush.bf16.msra.mxu0 %v3900
        %3924 = vmatmul.bf16.gmra.mxu0 %v3850
        %v3925 = vpop.f32.mrf.mxu0
        %v3926 = vadd.f32 0.0, %v3925
        %v3927 = vpop.f32.mrf.mxu0
        %3928 = vdwg.mxu0
        %v3929 = vadd.f32 %v3847, %v3926
        %s3930 = scalar_lea.vmem [#allocation3], 13
        %v3931 = vld [vmem:[%s3930] ss:$2 sm:$0xff]
        %v3932 = vpack.c.bf16 %v3931, %v3931
        %s3933 = scalar_lea.vmem [#allocation4], 2240
        %v3934 = vld [vmem:[%s3933] sm:$0xf]
        %v3935 = vld [vmem:[%s3933 + $0x4] sm:$0xf]
        %v3936 = vld [vmem:[%s3933 + $0x8] sm:$0xf]
        %v3937 = vld [vmem:[%s3933 + $0xc] sm:$0xf]
        %v3938 = vld [vmem:[%s3933 + $0x10] sm:$0xf]
        %v3939 = vld [vmem:[%s3933 + $0x14] sm:$0xf]
        %v3940 = vld [vmem:[%s3933 + $0x18] sm:$0xf]
        %v3941 = vld [vmem:[%s3933 + $0x1c] sm:$0xf]
        %v3942 = vld [vmem:[%s3933 + $0x20] sm:$0xf]
        %v3943 = vld [vmem:[%s3933 + $0x24] sm:$0xf]
        %v3944 = vld [vmem:[%s3933 + $0x28] sm:$0xf]
        %v3945 = vld [vmem:[%s3933 + $0x2c] sm:$0xf]
        %v3946 = vld [vmem:[%s3933 + $0x30] sm:$0xf]
        %v3947 = vld [vmem:[%s3933 + $0x34] sm:$0xf]
        %v3948 = vld [vmem:[%s3933 + $0x38] sm:$0xf]
        %v3949 = vld [vmem:[%s3933 + $0x3c] sm:$0xf]
        %v3966 = vunpack.c.l.b16 %v3934
        %v3967 = vunpack.c.l.b16 %v3935
        %v3968 = vunpack.c.l.b16 %v3936
        %v3969 = vunpack.c.l.b16 %v3937
        %v3970 = vunpack.c.l.b16 %v3938
        %v3971 = vunpack.c.l.b16 %v3939
        %v3972 = vunpack.c.l.b16 %v3940
        %v3973 = vunpack.c.l.b16 %v3941
        %v3974 = vunpack.c.l.b16 %v3942
        %v3975 = vunpack.c.l.b16 %v3943
        %v3976 = vunpack.c.l.b16 %v3944
        %v3977 = vunpack.c.l.b16 %v3945
        %v3978 = vunpack.c.l.b16 %v3946
        %v3979 = vunpack.c.l.b16 %v3947
        %v3980 = vunpack.c.l.b16 %v3948
        %v3981 = vunpack.c.l.b16 %v3949
        %v3982 = vpack.c.b16 %v3967, %v3966
        %v3983 = vpack.c.b16 %v3969, %v3968
        %v3984 = vpack.c.b16 %v3971, %v3970
        %v3985 = vpack.c.b16 %v3973, %v3972
        %v3986 = vpack.c.b16 %v3975, %v3974
        %v3987 = vpack.c.b16 %v3977, %v3976
        %v3988 = vpack.c.b16 %v3979, %v3978
        %v3989 = vpack.c.b16 %v3981, %v3980
        %3998 = vmatpush.bf16.msra.mxu0 %v3989
        %3999 = vmatpush.bf16.msra.mxu0 %v3988
        %4000 = vmatpush.bf16.msra.mxu0 %v3987
        %4001 = vmatpush.bf16.msra.mxu0 %v3986
        %4002 = vmatpush.bf16.msra.mxu0 %v3985
        %4003 = vmatpush.bf16.msra.mxu0 %v3984
        %4004 = vmatpush.bf16.msra.mxu0 %v3983
        %4005 = vmatpush.bf16.msra.mxu0 %v3982
        %4006 = vmatmul.bf16.gmra.mxu0 %v3932
        %v4007 = vpop.f32.mrf.mxu0
        %v4008 = vadd.f32 0.0, %v4007
        %v4009 = vpop.f32.mrf.mxu0
        %4010 = vdwg.mxu0
        %v4011 = vadd.f32 %v3929, %v4008
        %s4012 = scalar_lea.vmem [#allocation3], 14
        %v4013 = vld [vmem:[%s4012] ss:$2 sm:$0xff]
        %v4014 = vpack.c.bf16 %v4013, %v4013
        %s4015 = scalar_lea.vmem [#allocation4], 2304
        %v4016 = vld [vmem:[%s4015] sm:$0xf]
        %v4017 = vld [vmem:[%s4015 + $0x4] sm:$0xf]
        %v4018 = vld [vmem:[%s4015 + $0x8] sm:$0xf]
        %v4019 = vld [vmem:[%s4015 + $0xc] sm:$0xf]
        %v4020 = vld [vmem:[%s4015 + $0x10] sm:$0xf]
        %v4021 = vld [vmem:[%s4015 + $0x14] sm:$0xf]
        %v4022 = vld [vmem:[%s4015 + $0x18] sm:$0xf]
        %v4023 = vld [vmem:[%s4015 + $0x1c] sm:$0xf]
        %v4024 = vld [vmem:[%s4015 + $0x20] sm:$0xf]
        %v4025 = vld [vmem:[%s4015 + $0x24] sm:$0xf]
        %v4026 = vld [vmem:[%s4015 + $0x28] sm:$0xf]
        %v4027 = vld [vmem:[%s4015 + $0x2c] sm:$0xf]
        %v4028 = vld [vmem:[%s4015 + $0x30] sm:$0xf]
        %v4029 = vld [vmem:[%s4015 + $0x34] sm:$0xf]
        %v4030 = vld [vmem:[%s4015 + $0x38] sm:$0xf]
        %v4031 = vld [vmem:[%s4015 + $0x3c] sm:$0xf]
        %v4048 = vunpack.c.l.b16 %v4016
        %v4049 = vunpack.c.l.b16 %v4017
        %v4050 = vunpack.c.l.b16 %v4018
        %v4051 = vunpack.c.l.b16 %v4019
        %v4052 = vunpack.c.l.b16 %v4020
        %v4053 = vunpack.c.l.b16 %v4021
        %v4054 = vunpack.c.l.b16 %v4022
        %v4055 = vunpack.c.l.b16 %v4023
        %v4056 = vunpack.c.l.b16 %v4024
        %v4057 = vunpack.c.l.b16 %v4025
        %v4058 = vunpack.c.l.b16 %v4026
        %v4059 = vunpack.c.l.b16 %v4027
        %v4060 = vunpack.c.l.b16 %v4028
        %v4061 = vunpack.c.l.b16 %v4029
        %v4062 = vunpack.c.l.b16 %v4030
        %v4063 = vunpack.c.l.b16 %v4031
        %v4064 = vpack.c.b16 %v4049, %v4048
        %v4065 = vpack.c.b16 %v4051, %v4050
        %v4066 = vpack.c.b16 %v4053, %v4052
        %v4067 = vpack.c.b16 %v4055, %v4054
        %v4068 = vpack.c.b16 %v4057, %v4056
        %v4069 = vpack.c.b16 %v4059, %v4058
        %v4070 = vpack.c.b16 %v4061, %v4060
        %v4071 = vpack.c.b16 %v4063, %v4062
        %4080 = vmatpush.bf16.msra.mxu0 %v4071
        %4081 = vmatpush.bf16.msra.mxu0 %v4070
        %4082 = vmatpush.bf16.msra.mxu0 %v4069
        %4083 = vmatpush.bf16.msra.mxu0 %v4068
        %4084 = vmatpush.bf16.msra.mxu0 %v4067
        %4085 = vmatpush.bf16.msra.mxu0 %v4066
        %4086 = vmatpush.bf16.msra.mxu0 %v4065
        %4087 = vmatpush.bf16.msra.mxu0 %v4064
        %4088 = vmatmul.bf16.gmra.mxu0 %v4014
        %v4089 = vpop.f32.mrf.mxu0
        %v4090 = vadd.f32 0.0, %v4089
        %v4091 = vpop.f32.mrf.mxu0
        %4092 = vdwg.mxu0
        %v4093 = vadd.f32 %v4011, %v4090
        %v4094 = vld [vmem:[#allocation6 + $0x4] sm:$0x1]
        %v4095 = vperm.slane %v4094, 0
        %v4096 = vadd.f32 %v4093, %v4095
        %v4097 = vxor.u32 %v4096, 2147483648
        %v4098 = vmul.f32 %v4097, 1.442695
        %v4099 = vpow.pop %v4098
        %v4100 = vadd.f32 %v4099, 1.0
        %v4101 = vrcp.pop %v4100
        %v4102 = vmul.f32 %v4100, %v4101
        %v4103 = vsub.f32 1.0, %v4102
        %v4104 = vmul.f32 %v4101, %v4103
        %v4105 = vadd.f32 %v4101, %v4104
        %vm4106 = vweird.f32 %v4100
        %vm4107 = vweird.f32 %v4101
        %vm4108 = vmor %vm4106, %vm4107
        %v4109 = vsel %vm4108, %v4101, %v4105
        %v4110 = vand.u32 2147483647, %v4100
        %vm4111 = vcmp.eq.f32.partialorder %v4110, 8.507059e+37
        %v4112 = vand.u32 %v4100, 2147483648
        %v4113 = vor.u32 1.1754944e-38, %v4112
        %v4114 = vsel %vm4111, %v4113, %v4109
        %v4115 = vmul.f32 1.0, %v4114
        %v4116 = vmul.f32 %v4096, %v4115
        %4117 = vst [vmem:[#allocation2 + $0x5] sm:$0x3] %v4116
        %4118 = vst [vmem:[#allocation2 + $0x3] sm:$0xc0] %v4116
        %4119 = vst [vmem:[#allocation3] sm:$0xff] 0.0
        %4120 = vst [vmem:[#allocation3 + $0x8] sm:$0xff] 0.0
        %v4121 = vld [vmem:[#allocation2] sm:$0x3f]
        %v4122 = vpack.c.bf16 %v4121, %v4121
        %s4123 = scalar_lea.vmem [#allocation4], 2368
        %v4124 = vld [vmem:[%s4123] sm:$0xf]
        %v4125 = vld [vmem:[%s4123 + $0x4] sm:$0xf]
        %v4126 = vld [vmem:[%s4123 + $0x8] sm:$0xf]
        %v4127 = vld [vmem:[%s4123 + $0xc] sm:$0xf]
        %v4128 = vld [vmem:[%s4123 + $0x10] sm:$0xf]
        %v4129 = vld [vmem:[%s4123 + $0x14] sm:$0xf]
        %v4130 = vld [vmem:[%s4123 + $0x18] sm:$0xf]
        %v4131 = vld [vmem:[%s4123 + $0x1c] sm:$0xf]
        %v4132 = vld [vmem:[%s4123 + $0x20] sm:$0xf]
        %v4133 = vld [vmem:[%s4123 + $0x24] sm:$0xf]
        %v4134 = vld [vmem:[%s4123 + $0x28] sm:$0xf]
        %v4135 = vld [vmem:[%s4123 + $0x2c] sm:$0xf]
        %v4136 = vld [vmem:[%s4123 + $0x30] sm:$0xf]
        %v4137 = vld [vmem:[%s4123 + $0x34] sm:$0xf]
        %v4138 = vld [vmem:[%s4123 + $0x38] sm:$0xf]
        %v4139 = vld [vmem:[%s4123 + $0x3c] sm:$0xf]
        %v4140 = vld [vmem:[#allocation2 + $0x1] sm:$0x3f]
        %v4141 = vpack.c.bf16 %v4140, %v4140
        %s4142 = scalar_lea.vmem [#allocation4], 2432
        %v4143 = vld [vmem:[%s4142] sm:$0xf]
        %v4144 = vld [vmem:[%s4142 + $0x4] sm:$0xf]
        %v4145 = vld [vmem:[%s4142 + $0x8] sm:$0xf]
        %v4146 = vld [vmem:[%s4142 + $0xc] sm:$0xf]
        %v4147 = vld [vmem:[%s4142 + $0x10] sm:$0xf]
        %v4148 = vld [vmem:[%s4142 + $0x14] sm:$0xf]
        %v4149 = vld [vmem:[%s4142 + $0x18] sm:$0xf]
        %v4150 = vld [vmem:[%s4142 + $0x1c] sm:$0xf]
        %v4151 = vld [vmem:[%s4142 + $0x20] sm:$0xf]
        %v4152 = vld [vmem:[%s4142 + $0x24] sm:$0xf]
        %v4153 = vld [vmem:[%s4142 + $0x28] sm:$0xf]
        %v4154 = vld [vmem:[%s4142 + $0x2c] sm:$0xf]
        %v4155 = vld [vmem:[%s4142 + $0x30] sm:$0xf]
        %v4156 = vld [vmem:[%s4142 + $0x34] sm:$0xf]
        %v4157 = vld [vmem:[%s4142 + $0x38] sm:$0xf]
        %v4158 = vld [vmem:[%s4142 + $0x3c] sm:$0xf]
        %v4175 = vunpack.c.l.b16 %v4143
        %v4176 = vunpack.c.l.b16 %v4144
        %v4177 = vunpack.c.l.b16 %v4145
        %v4178 = vunpack.c.l.b16 %v4146
        %v4179 = vunpack.c.l.b16 %v4147
        %v4180 = vunpack.c.l.b16 %v4148
        %v4181 = vunpack.c.l.b16 %v4149
        %v4182 = vunpack.c.l.b16 %v4150
        %v4183 = vunpack.c.l.b16 %v4151
        %v4184 = vunpack.c.l.b16 %v4152
        %v4185 = vunpack.c.l.b16 %v4153
        %v4186 = vunpack.c.l.b16 %v4154
        %v4187 = vunpack.c.l.b16 %v4155
        %v4188 = vunpack.c.l.b16 %v4156
        %v4189 = vunpack.c.l.b16 %v4157
        %v4190 = vunpack.c.l.b16 %v4158
        %v4191 = vpack.c.b16 %v4176, %v4175
        %v4192 = vpack.c.b16 %v4178, %v4177
        %v4193 = vpack.c.b16 %v4180, %v4179
        %v4194 = vpack.c.b16 %v4182, %v4181
        %v4195 = vpack.c.b16 %v4184, %v4183
        %v4196 = vpack.c.b16 %v4186, %v4185
        %v4197 = vpack.c.b16 %v4188, %v4187
        %v4198 = vpack.c.b16 %v4190, %v4189
        %4207 = vmatpush.bf16.msra.mxu0 %v4198
        %4208 = vmatpush.bf16.msra.mxu0 %v4197
        %4209 = vmatpush.bf16.msra.mxu0 %v4196
        %4210 = vmatpush.bf16.msra.mxu0 %v4195
        %4211 = vmatpush.bf16.msra.mxu0 %v4194
        %4212 = vmatpush.bf16.msra.mxu0 %v4193
        %4213 = vmatpush.bf16.msra.mxu0 %v4192
        %4214 = vmatpush.bf16.msra.mxu0 %v4191
        %4215 = vmatmul.bf16.gmra.mxu0 %v4141
        %v4216 = vpop.f32.mrf.mxu0
        %v4217 = vadd.f32 0.0, %v4216
        %v4218 = vpop.f32.mrf.mxu0
        %4219 = vdwg.mxu0
        %v4236 = vunpack.c.l.b16 %v4124
        %v4237 = vunpack.c.l.b16 %v4125
        %v4238 = vunpack.c.l.b16 %v4126
        %v4239 = vunpack.c.l.b16 %v4127
        %v4240 = vunpack.c.l.b16 %v4128
        %v4241 = vunpack.c.l.b16 %v4129
        %v4242 = vunpack.c.l.b16 %v4130
        %v4243 = vunpack.c.l.b16 %v4131
        %v4244 = vunpack.c.l.b16 %v4132
        %v4245 = vunpack.c.l.b16 %v4133
        %v4246 = vunpack.c.l.b16 %v4134
        %v4247 = vunpack.c.l.b16 %v4135
        %v4248 = vunpack.c.l.b16 %v4136
        %v4249 = vunpack.c.l.b16 %v4137
        %v4250 = vunpack.c.l.b16 %v4138
        %v4251 = vunpack.c.l.b16 %v4139
        %v4252 = vpack.c.b16 %v4237, %v4236
        %v4253 = vpack.c.b16 %v4239, %v4238
        %v4254 = vpack.c.b16 %v4241, %v4240
        %v4255 = vpack.c.b16 %v4243, %v4242
        %v4256 = vpack.c.b16 %v4245, %v4244
        %v4257 = vpack.c.b16 %v4247, %v4246
        %v4258 = vpack.c.b16 %v4249, %v4248
        %v4259 = vpack.c.b16 %v4251, %v4250
        %4268 = vmatpush.bf16.msra.mxu0 %v4259
        %4269 = vmatpush.bf16.msra.mxu0 %v4258
        %4270 = vmatpush.bf16.msra.mxu0 %v4257
        %4271 = vmatpush.bf16.msra.mxu0 %v4256
        %4272 = vmatpush.bf16.msra.mxu0 %v4255
        %4273 = vmatpush.bf16.msra.mxu0 %v4254
        %4274 = vmatpush.bf16.msra.mxu0 %v4253
        %4275 = vmatpush.bf16.msra.mxu0 %v4252
        %4276 = vmatmul.bf16.gmra.mxu0 %v4122
        %v4277 = vpop.f32.mrf.mxu0
        %v4278 = vadd.f32 %v4217, %v4277
        %v4279 = vpop.f32.mrf.mxu0
        %4280 = vdwg.mxu0
        %v4281 = vld [vmem:[#allocation2 + $0x2] sm:$0x3f]
        %v4282 = vpack.c.bf16 %v4281, %v4281
        %s4283 = scalar_lea.vmem [#allocation4], 2496
        %v4284 = vld [vmem:[%s4283] sm:$0xf]
        %v4285 = vld [vmem:[%s4283 + $0x4] sm:$0xf]
        %v4286 = vld [vmem:[%s4283 + $0x8] sm:$0xf]
        %v4287 = vld [vmem:[%s4283 + $0xc] sm:$0xf]
        %v4288 = vld [vmem:[%s4283 + $0x10] sm:$0xf]
        %v4289 = vld [vmem:[%s4283 + $0x14] sm:$0xf]
        %v4290 = vld [vmem:[%s4283 + $0x18] sm:$0xf]
        %v4291 = vld [vmem:[%s4283 + $0x1c] sm:$0xf]
        %v4292 = vld [vmem:[%s4283 + $0x20] sm:$0xf]
        %v4293 = vld [vmem:[%s4283 + $0x24] sm:$0xf]
        %v4294 = vld [vmem:[%s4283 + $0x28] sm:$0xf]
        %v4295 = vld [vmem:[%s4283 + $0x2c] sm:$0xf]
        %v4296 = vld [vmem:[%s4283 + $0x30] sm:$0xf]
        %v4297 = vld [vmem:[%s4283 + $0x34] sm:$0xf]
        %v4298 = vld [vmem:[%s4283 + $0x38] sm:$0xf]
        %v4299 = vld [vmem:[%s4283 + $0x3c] sm:$0xf]
        %v4316 = vunpack.c.l.b16 %v4284
        %v4317 = vunpack.c.l.b16 %v4285
        %v4318 = vunpack.c.l.b16 %v4286
        %v4319 = vunpack.c.l.b16 %v4287
        %v4320 = vunpack.c.l.b16 %v4288
        %v4321 = vunpack.c.l.b16 %v4289
        %v4322 = vunpack.c.l.b16 %v4290
        %v4323 = vunpack.c.l.b16 %v4291
        %v4324 = vunpack.c.l.b16 %v4292
        %v4325 = vunpack.c.l.b16 %v4293
        %v4326 = vunpack.c.l.b16 %v4294
        %v4327 = vunpack.c.l.b16 %v4295
        %v4328 = vunpack.c.l.b16 %v4296
        %v4329 = vunpack.c.l.b16 %v4297
        %v4330 = vunpack.c.l.b16 %v4298
        %v4331 = vunpack.c.l.b16 %v4299
        %v4332 = vpack.c.b16 %v4317, %v4316
        %v4333 = vpack.c.b16 %v4319, %v4318
        %v4334 = vpack.c.b16 %v4321, %v4320
        %v4335 = vpack.c.b16 %v4323, %v4322
        %v4336 = vpack.c.b16 %v4325, %v4324
        %v4337 = vpack.c.b16 %v4327, %v4326
        %v4338 = vpack.c.b16 %v4329, %v4328
        %v4339 = vpack.c.b16 %v4331, %v4330
        %4348 = vmatpush.bf16.msra.mxu0 %v4339
        %4349 = vmatpush.bf16.msra.mxu0 %v4338
        %4350 = vmatpush.bf16.msra.mxu0 %v4337
        %4351 = vmatpush.bf16.msra.mxu0 %v4336
        %4352 = vmatpush.bf16.msra.mxu0 %v4335
        %4353 = vmatpush.bf16.msra.mxu0 %v4334
        %4354 = vmatpush.bf16.msra.mxu0 %v4333
        %4355 = vmatpush.bf16.msra.mxu0 %v4332
        %4356 = vmatmul.bf16.gmra.mxu0 %v4282
        %v4357 = vpop.f32.mrf.mxu0
        %v4358 = vadd.f32 0.0, %v4357
        %v4359 = vpop.f32.mrf.mxu0
        %4360 = vdwg.mxu0
        %v4361 = vadd.f32 %v4278, %v4358
        %v4362 = vld [vmem:[#allocation2 + $0x4] sm:$0x3f]
        %v4363 = vpack.c.bf16 %v4362, %v4362
        %s4364 = scalar_lea.vmem [#allocation4], 2560
        %v4365 = vld [vmem:[%s4364] sm:$0xf]
        %v4366 = vld [vmem:[%s4364 + $0x4] sm:$0xf]
        %v4367 = vld [vmem:[%s4364 + $0x8] sm:$0xf]
        %v4368 = vld [vmem:[%s4364 + $0xc] sm:$0xf]
        %v4369 = vld [vmem:[%s4364 + $0x10] sm:$0xf]
        %v4370 = vld [vmem:[%s4364 + $0x14] sm:$0xf]
        %v4371 = vld [vmem:[%s4364 + $0x18] sm:$0xf]
        %v4372 = vld [vmem:[%s4364 + $0x1c] sm:$0xf]
        %v4373 = vld [vmem:[%s4364 + $0x20] sm:$0xf]
        %v4374 = vld [vmem:[%s4364 + $0x24] sm:$0xf]
        %v4375 = vld [vmem:[%s4364 + $0x28] sm:$0xf]
        %v4376 = vld [vmem:[%s4364 + $0x2c] sm:$0xf]
        %v4377 = vld [vmem:[%s4364 + $0x30] sm:$0xf]
        %v4378 = vld [vmem:[%s4364 + $0x34] sm:$0xf]
        %v4379 = vld [vmem:[%s4364 + $0x38] sm:$0xf]
        %v4380 = vld [vmem:[%s4364 + $0x3c] sm:$0xf]
        %v4397 = vunpack.c.l.b16 %v4365
        %v4398 = vunpack.c.l.b16 %v4366
        %v4399 = vunpack.c.l.b16 %v4367
        %v4400 = vunpack.c.l.b16 %v4368
        %v4401 = vunpack.c.l.b16 %v4369
        %v4402 = vunpack.c.l.b16 %v4370
        %v4403 = vunpack.c.l.b16 %v4371
        %v4404 = vunpack.c.l.b16 %v4372
        %v4405 = vunpack.c.l.b16 %v4373
        %v4406 = vunpack.c.l.b16 %v4374
        %v4407 = vunpack.c.l.b16 %v4375
        %v4408 = vunpack.c.l.b16 %v4376
        %v4409 = vunpack.c.l.b16 %v4377
        %v4410 = vunpack.c.l.b16 %v4378
        %v4411 = vunpack.c.l.b16 %v4379
        %v4412 = vunpack.c.l.b16 %v4380
        %v4413 = vpack.c.b16 %v4398, %v4397
        %v4414 = vpack.c.b16 %v4400, %v4399
        %v4415 = vpack.c.b16 %v4402, %v4401
        %v4416 = vpack.c.b16 %v4404, %v4403
        %v4417 = vpack.c.b16 %v4406, %v4405
        %v4418 = vpack.c.b16 %v4408, %v4407
        %v4419 = vpack.c.b16 %v4410, %v4409
        %v4420 = vpack.c.b16 %v4412, %v4411
        %4429 = vmatpush.bf16.msra.mxu0 %v4420
        %4430 = vmatpush.bf16.msra.mxu0 %v4419
        %4431 = vmatpush.bf16.msra.mxu0 %v4418
        %4432 = vmatpush.bf16.msra.mxu0 %v4417
        %4433 = vmatpush.bf16.msra.mxu0 %v4416
        %4434 = vmatpush.bf16.msra.mxu0 %v4415
        %4435 = vmatpush.bf16.msra.mxu0 %v4414
        %4436 = vmatpush.bf16.msra.mxu0 %v4413
        %4437 = vmatmul.bf16.gmra.mxu0 %v4363
        %v4438 = vpop.f32.mrf.mxu0
        %v4439 = vadd.f32 0.0, %v4438
        %v4440 = vpop.f32.mrf.mxu0
        %4441 = vdwg.mxu0
        %v4442 = vadd.f32 %v4361, %v4439
        %v4443 = vld [vmem:[#allocation2 + $0x5] sm:$0x3f]
        %v4444 = vpack.c.bf16 %v4443, %v4443
        %s4445 = scalar_lea.vmem [#allocation4], 2624
        %v4446 = vld [vmem:[%s4445] sm:$0xf]
        %v4447 = vld [vmem:[%s4445 + $0x4] sm:$0xf]
        %v4448 = vld [vmem:[%s4445 + $0x8] sm:$0xf]
        %v4449 = vld [vmem:[%s4445 + $0xc] sm:$0xf]
        %v4450 = vld [vmem:[%s4445 + $0x10] sm:$0xf]
        %v4451 = vld [vmem:[%s4445 + $0x14] sm:$0xf]
        %v4452 = vld [vmem:[%s4445 + $0x18] sm:$0xf]
        %v4453 = vld [vmem:[%s4445 + $0x1c] sm:$0xf]
        %v4454 = vld [vmem:[%s4445 + $0x20] sm:$0xf]
        %v4455 = vld [vmem:[%s4445 + $0x24] sm:$0xf]
        %v4456 = vld [vmem:[%s4445 + $0x28] sm:$0xf]
        %v4457 = vld [vmem:[%s4445 + $0x2c] sm:$0xf]
        %v4458 = vld [vmem:[%s4445 + $0x30] sm:$0xf]
        %v4459 = vld [vmem:[%s4445 + $0x34] sm:$0xf]
        %v4460 = vld [vmem:[%s4445 + $0x38] sm:$0xf]
        %v4461 = vld [vmem:[%s4445 + $0x3c] sm:$0xf]
        %v4478 = vunpack.c.l.b16 %v4446
        %v4479 = vunpack.c.l.b16 %v4447
        %v4480 = vunpack.c.l.b16 %v4448
        %v4481 = vunpack.c.l.b16 %v4449
        %v4482 = vunpack.c.l.b16 %v4450
        %v4483 = vunpack.c.l.b16 %v4451
        %v4484 = vunpack.c.l.b16 %v4452
        %v4485 = vunpack.c.l.b16 %v4453
        %v4486 = vunpack.c.l.b16 %v4454
        %v4487 = vunpack.c.l.b16 %v4455
        %v4488 = vunpack.c.l.b16 %v4456
        %v4489 = vunpack.c.l.b16 %v4457
        %v4490 = vunpack.c.l.b16 %v4458
        %v4491 = vunpack.c.l.b16 %v4459
        %v4492 = vunpack.c.l.b16 %v4460
        %v4493 = vunpack.c.l.b16 %v4461
        %v4494 = vpack.c.b16 %v4479, %v4478
        %v4495 = vpack.c.b16 %v4481, %v4480
        %v4496 = vpack.c.b16 %v4483, %v4482
        %v4497 = vpack.c.b16 %v4485, %v4484
        %v4498 = vpack.c.b16 %v4487, %v4486
        %v4499 = vpack.c.b16 %v4489, %v4488
        %v4500 = vpack.c.b16 %v4491, %v4490
        %v4501 = vpack.c.b16 %v4493, %v4492
        %4510 = vmatpush.bf16.msra.mxu0 %v4501
        %4511 = vmatpush.bf16.msra.mxu0 %v4500
        %4512 = vmatpush.bf16.msra.mxu0 %v4499
        %4513 = vmatpush.bf16.msra.mxu0 %v4498
        %4514 = vmatpush.bf16.msra.mxu0 %v4497
        %4515 = vmatpush.bf16.msra.mxu0 %v4496
        %4516 = vmatpush.bf16.msra.mxu0 %v4495
        %4517 = vmatpush.bf16.msra.mxu0 %v4494
        %4518 = vmatmul.bf16.gmra.mxu0 %v4444
        %v4519 = vpop.f32.mrf.mxu0
        %v4520 = vadd.f32 0.0, %v4519
        %v4521 = vpop.f32.mrf.mxu0
        %4522 = vdwg.mxu0
        %v4523 = vadd.f32 %v4442, %v4520
        %v4524 = vld [vmem:[#allocation2 + $0x6] sm:$0x3f]
        %v4525 = vpack.c.bf16 %v4524, %v4524
        %s4526 = scalar_lea.vmem [#allocation4], 2688
        %v4527 = vld [vmem:[%s4526] sm:$0xf]
        %v4528 = vld [vmem:[%s4526 + $0x4] sm:$0xf]
        %v4529 = vld [vmem:[%s4526 + $0x8] sm:$0xf]
        %v4530 = vld [vmem:[%s4526 + $0xc] sm:$0xf]
        %v4531 = vld [vmem:[%s4526 + $0x10] sm:$0xf]
        %v4532 = vld [vmem:[%s4526 + $0x14] sm:$0xf]
        %v4533 = vld [vmem:[%s4526 + $0x18] sm:$0xf]
        %v4534 = vld [vmem:[%s4526 + $0x1c] sm:$0xf]
        %v4535 = vld [vmem:[%s4526 + $0x20] sm:$0xf]
        %v4536 = vld [vmem:[%s4526 + $0x24] sm:$0xf]
        %v4537 = vld [vmem:[%s4526 + $0x28] sm:$0xf]
        %v4538 = vld [vmem:[%s4526 + $0x2c] sm:$0xf]
        %v4539 = vld [vmem:[%s4526 + $0x30] sm:$0xf]
        %v4540 = vld [vmem:[%s4526 + $0x34] sm:$0xf]
        %v4541 = vld [vmem:[%s4526 + $0x38] sm:$0xf]
        %v4542 = vld [vmem:[%s4526 + $0x3c] sm:$0xf]
        %v4559 = vunpack.c.l.b16 %v4527
        %v4560 = vunpack.c.l.b16 %v4528
        %v4561 = vunpack.c.l.b16 %v4529
        %v4562 = vunpack.c.l.b16 %v4530
        %v4563 = vunpack.c.l.b16 %v4531
        %v4564 = vunpack.c.l.b16 %v4532
        %v4565 = vunpack.c.l.b16 %v4533
        %v4566 = vunpack.c.l.b16 %v4534
        %v4567 = vunpack.c.l.b16 %v4535
        %v4568 = vunpack.c.l.b16 %v4536
        %v4569 = vunpack.c.l.b16 %v4537
        %v4570 = vunpack.c.l.b16 %v4538
        %v4571 = vunpack.c.l.b16 %v4539
        %v4572 = vunpack.c.l.b16 %v4540
        %v4573 = vunpack.c.l.b16 %v4541
        %v4574 = vunpack.c.l.b16 %v4542
        %v4575 = vpack.c.b16 %v4560, %v4559
        %v4576 = vpack.c.b16 %v4562, %v4561
        %v4577 = vpack.c.b16 %v4564, %v4563
        %v4578 = vpack.c.b16 %v4566, %v4565
        %v4579 = vpack.c.b16 %v4568, %v4567
        %v4580 = vpack.c.b16 %v4570, %v4569
        %v4581 = vpack.c.b16 %v4572, %v4571
        %v4582 = vpack.c.b16 %v4574, %v4573
        %4591 = vmatpush.bf16.msra.mxu0 %v4582
        %4592 = vmatpush.bf16.msra.mxu0 %v4581
        %4593 = vmatpush.bf16.msra.mxu0 %v4580
        %4594 = vmatpush.bf16.msra.mxu0 %v4579
        %4595 = vmatpush.bf16.msra.mxu0 %v4578
        %4596 = vmatpush.bf16.msra.mxu0 %v4577
        %4597 = vmatpush.bf16.msra.mxu0 %v4576
        %4598 = vmatpush.bf16.msra.mxu0 %v4575
        %4599 = vmatmul.bf16.gmra.mxu0 %v4525
        %v4600 = vpop.f32.mrf.mxu0
        %v4601 = vadd.f32 0.0, %v4600
        %v4602 = vpop.f32.mrf.mxu0
        %4603 = vdwg.mxu0
        %v4604 = vadd.f32 %v4523, %v4601
        %v4605 = vld [vmem:[#allocation2 + $0x8] sm:$0x3f]
        %v4606 = vpack.c.bf16 %v4605, %v4605
        %s4607 = scalar_lea.vmem [#allocation4], 2752
        %v4608 = vld [vmem:[%s4607] sm:$0xf]
        %v4609 = vld [vmem:[%s4607 + $0x4] sm:$0xf]
        %v4610 = vld [vmem:[%s4607 + $0x8] sm:$0xf]
        %v4611 = vld [vmem:[%s4607 + $0xc] sm:$0xf]
        %v4612 = vld [vmem:[%s4607 + $0x10] sm:$0xf]
        %v4613 = vld [vmem:[%s4607 + $0x14] sm:$0xf]
        %v4614 = vld [vmem:[%s4607 + $0x18] sm:$0xf]
        %v4615 = vld [vmem:[%s4607 + $0x1c] sm:$0xf]
        %v4616 = vld [vmem:[%s4607 + $0x20] sm:$0xf]
        %v4617 = vld [vmem:[%s4607 + $0x24] sm:$0xf]
        %v4618 = vld [vmem:[%s4607 + $0x28] sm:$0xf]
        %v4619 = vld [vmem:[%s4607 + $0x2c] sm:$0xf]
        %v4620 = vld [vmem:[%s4607 + $0x30] sm:$0xf]
        %v4621 = vld [vmem:[%s4607 + $0x34] sm:$0xf]
        %v4622 = vld [vmem:[%s4607 + $0x38] sm:$0xf]
        %v4623 = vld [vmem:[%s4607 + $0x3c] sm:$0xf]
        %v4640 = vunpack.c.l.b16 %v4608
        %v4641 = vunpack.c.l.b16 %v4609
        %v4642 = vunpack.c.l.b16 %v4610
        %v4643 = vunpack.c.l.b16 %v4611
        %v4644 = vunpack.c.l.b16 %v4612
        %v4645 = vunpack.c.l.b16 %v4613
        %v4646 = vunpack.c.l.b16 %v4614
        %v4647 = vunpack.c.l.b16 %v4615
        %v4648 = vunpack.c.l.b16 %v4616
        %v4649 = vunpack.c.l.b16 %v4617
        %v4650 = vunpack.c.l.b16 %v4618
        %v4651 = vunpack.c.l.b16 %v4619
        %v4652 = vunpack.c.l.b16 %v4620
        %v4653 = vunpack.c.l.b16 %v4621
        %v4654 = vunpack.c.l.b16 %v4622
        %v4655 = vunpack.c.l.b16 %v4623
        %v4656 = vpack.c.b16 %v4641, %v4640
        %v4657 = vpack.c.b16 %v4643, %v4642
        %v4658 = vpack.c.b16 %v4645, %v4644
        %v4659 = vpack.c.b16 %v4647, %v4646
        %v4660 = vpack.c.b16 %v4649, %v4648
        %v4661 = vpack.c.b16 %v4651, %v4650
        %v4662 = vpack.c.b16 %v4653, %v4652
        %v4663 = vpack.c.b16 %v4655, %v4654
        %4672 = vmatpush.bf16.msra.mxu0 %v4663
        %4673 = vmatpush.bf16.msra.mxu0 %v4662
        %4674 = vmatpush.bf16.msra.mxu0 %v4661
        %4675 = vmatpush.bf16.msra.mxu0 %v4660
        %4676 = vmatpush.bf16.msra.mxu0 %v4659
        %4677 = vmatpush.bf16.msra.mxu0 %v4658
        %4678 = vmatpush.bf16.msra.mxu0 %v4657
        %4679 = vmatpush.bf16.msra.mxu0 %v4656
        %4680 = vmatmul.bf16.gmra.mxu0 %v4606
        %v4681 = vpop.f32.mrf.mxu0
        %v4682 = vadd.f32 0.0, %v4681
        %v4683 = vpop.f32.mrf.mxu0
        %4684 = vdwg.mxu0
        %v4685 = vadd.f32 %v4604, %v4682
        %v4686 = vld [vmem:[#allocation2 + $0x9] sm:$0x3f]
        %v4687 = vpack.c.bf16 %v4686, %v4686
        %s4688 = scalar_lea.vmem [#allocation4], 2816
        %v4689 = vld [vmem:[%s4688] sm:$0xf]
        %v4690 = vld [vmem:[%s4688 + $0x4] sm:$0xf]
        %v4691 = vld [vmem:[%s4688 + $0x8] sm:$0xf]
        %v4692 = vld [vmem:[%s4688 + $0xc] sm:$0xf]
        %v4693 = vld [vmem:[%s4688 + $0x10] sm:$0xf]
        %v4694 = vld [vmem:[%s4688 + $0x14] sm:$0xf]
        %v4695 = vld [vmem:[%s4688 + $0x18] sm:$0xf]
        %v4696 = vld [vmem:[%s4688 + $0x1c] sm:$0xf]
        %v4697 = vld [vmem:[%s4688 + $0x20] sm:$0xf]
        %v4698 = vld [vmem:[%s4688 + $0x24] sm:$0xf]
        %v4699 = vld [vmem:[%s4688 + $0x28] sm:$0xf]
        %v4700 = vld [vmem:[%s4688 + $0x2c] sm:$0xf]
        %v4701 = vld [vmem:[%s4688 + $0x30] sm:$0xf]
        %v4702 = vld [vmem:[%s4688 + $0x34] sm:$0xf]
        %v4703 = vld [vmem:[%s4688 + $0x38] sm:$0xf]
        %v4704 = vld [vmem:[%s4688 + $0x3c] sm:$0xf]
        %v4721 = vunpack.c.l.b16 %v4689
        %v4722 = vunpack.c.l.b16 %v4690
        %v4723 = vunpack.c.l.b16 %v4691
        %v4724 = vunpack.c.l.b16 %v4692
        %v4725 = vunpack.c.l.b16 %v4693
        %v4726 = vunpack.c.l.b16 %v4694
        %v4727 = vunpack.c.l.b16 %v4695
        %v4728 = vunpack.c.l.b16 %v4696
        %v4729 = vunpack.c.l.b16 %v4697
        %v4730 = vunpack.c.l.b16 %v4698
        %v4731 = vunpack.c.l.b16 %v4699
        %v4732 = vunpack.c.l.b16 %v4700
        %v4733 = vunpack.c.l.b16 %v4701
        %v4734 = vunpack.c.l.b16 %v4702
        %v4735 = vunpack.c.l.b16 %v4703
        %v4736 = vunpack.c.l.b16 %v4704
        %v4737 = vpack.c.b16 %v4722, %v4721
        %v4738 = vpack.c.b16 %v4724, %v4723
        %v4739 = vpack.c.b16 %v4726, %v4725
        %v4740 = vpack.c.b16 %v4728, %v4727
        %v4741 = vpack.c.b16 %v4730, %v4729
        %v4742 = vpack.c.b16 %v4732, %v4731
        %v4743 = vpack.c.b16 %v4734, %v4733
        %v4744 = vpack.c.b16 %v4736, %v4735
        %4753 = vmatpush.bf16.msra.mxu0 %v4744
        %4754 = vmatpush.bf16.msra.mxu0 %v4743
        %4755 = vmatpush.bf16.msra.mxu0 %v4742
        %4756 = vmatpush.bf16.msra.mxu0 %v4741
        %4757 = vmatpush.bf16.msra.mxu0 %v4740
        %4758 = vmatpush.bf16.msra.mxu0 %v4739
        %4759 = vmatpush.bf16.msra.mxu0 %v4738
        %4760 = vmatpush.bf16.msra.mxu0 %v4737
        %4761 = vmatmul.bf16.gmra.mxu0 %v4687
        %v4762 = vpop.f32.mrf.mxu0
        %v4763 = vadd.f32 0.0, %v4762
        %v4764 = vpop.f32.mrf.mxu0
        %4765 = vdwg.mxu0
        %v4766 = vadd.f32 %v4685, %v4763
        %v4767 = vld [vmem:[#allocation2 + $0xa] sm:$0x3f]
        %v4768 = vpack.c.bf16 %v4767, %v4767
        %s4769 = scalar_lea.vmem [#allocation4], 2880
        %v4770 = vld [vmem:[%s4769] sm:$0xf]
        %v4771 = vld [vmem:[%s4769 + $0x4] sm:$0xf]
        %v4772 = vld [vmem:[%s4769 + $0x8] sm:$0xf]
        %v4773 = vld [vmem:[%s4769 + $0xc] sm:$0xf]
        %v4774 = vld [vmem:[%s4769 + $0x10] sm:$0xf]
        %v4775 = vld [vmem:[%s4769 + $0x14] sm:$0xf]
        %v4776 = vld [vmem:[%s4769 + $0x18] sm:$0xf]
        %v4777 = vld [vmem:[%s4769 + $0x1c] sm:$0xf]
        %v4778 = vld [vmem:[%s4769 + $0x20] sm:$0xf]
        %v4779 = vld [vmem:[%s4769 + $0x24] sm:$0xf]
        %v4780 = vld [vmem:[%s4769 + $0x28] sm:$0xf]
        %v4781 = vld [vmem:[%s4769 + $0x2c] sm:$0xf]
        %v4782 = vld [vmem:[%s4769 + $0x30] sm:$0xf]
        %v4783 = vld [vmem:[%s4769 + $0x34] sm:$0xf]
        %v4784 = vld [vmem:[%s4769 + $0x38] sm:$0xf]
        %v4785 = vld [vmem:[%s4769 + $0x3c] sm:$0xf]
        %v4802 = vunpack.c.l.b16 %v4770
        %v4803 = vunpack.c.l.b16 %v4771
        %v4804 = vunpack.c.l.b16 %v4772
        %v4805 = vunpack.c.l.b16 %v4773
        %v4806 = vunpack.c.l.b16 %v4774
        %v4807 = vunpack.c.l.b16 %v4775
        %v4808 = vunpack.c.l.b16 %v4776
        %v4809 = vunpack.c.l.b16 %v4777
        %v4810 = vunpack.c.l.b16 %v4778
        %v4811 = vunpack.c.l.b16 %v4779
        %v4812 = vunpack.c.l.b16 %v4780
        %v4813 = vunpack.c.l.b16 %v4781
        %v4814 = vunpack.c.l.b16 %v4782
        %v4815 = vunpack.c.l.b16 %v4783
        %v4816 = vunpack.c.l.b16 %v4784
        %v4817 = vunpack.c.l.b16 %v4785
        %v4818 = vpack.c.b16 %v4803, %v4802
        %v4819 = vpack.c.b16 %v4805, %v4804
        %v4820 = vpack.c.b16 %v4807, %v4806
        %v4821 = vpack.c.b16 %v4809, %v4808
        %v4822 = vpack.c.b16 %v4811, %v4810
        %v4823 = vpack.c.b16 %v4813, %v4812
        %v4824 = vpack.c.b16 %v4815, %v4814
        %v4825 = vpack.c.b16 %v4817, %v4816
        %4834 = vmatpush.bf16.msra.mxu0 %v4825
        %4835 = vmatpush.bf16.msra.mxu0 %v4824
        %4836 = vmatpush.bf16.msra.mxu0 %v4823
        %4837 = vmatpush.bf16.msra.mxu0 %v4822
        %4838 = vmatpush.bf16.msra.mxu0 %v4821
        %4839 = vmatpush.bf16.msra.mxu0 %v4820
        %4840 = vmatpush.bf16.msra.mxu0 %v4819
        %4841 = vmatpush.bf16.msra.mxu0 %v4818
        %4842 = vmatmul.bf16.gmra.mxu0 %v4768
        %v4843 = vpop.f32.mrf.mxu0
        %v4844 = vadd.f32 0.0, %v4843
        %v4845 = vpop.f32.mrf.mxu0
        %4846 = vdwg.mxu0
        %v4847 = vadd.f32 %v4766, %v4844
        %v4848 = vld [vmem:[#allocation6 + $0x5] sm:$0x1]
        %v4849 = vperm.slane %v4848, 0
        %v4850 = vadd.f32 %v4847, %v4849
        %v4851 = vxor.u32 %v4850, 2147483648
        %v4852 = vmul.f32 %v4851, 1.442695
        %v4853 = vpow.pop %v4852
        %v4854 = vadd.f32 %v4853, 1.0
        %v4855 = vrcp.pop %v4854
        %v4856 = vmul.f32 %v4854, %v4855
        %v4857 = vsub.f32 1.0, %v4856
        %v4858 = vmul.f32 %v4855, %v4857
        %v4859 = vadd.f32 %v4855, %v4858
        %vm4860 = vweird.f32 %v4854
        %vm4861 = vweird.f32 %v4855
        %vm4862 = vmor %vm4860, %vm4861
        %v4863 = vsel %vm4862, %v4855, %v4859
        %v4864 = vand.u32 2147483647, %v4854
        %vm4865 = vcmp.eq.f32.partialorder %v4864, 8.507059e+37
        %v4866 = vand.u32 %v4854, 2147483648
        %v4867 = vor.u32 1.1754944e-38, %v4866
        %v4868 = vsel %vm4865, %v4867, %v4863
        %v4869 = vmul.f32 1.0, %v4868
        %v4870 = vmul.f32 %v4850, %v4869
        %4871 = vst [vmem:[#allocation3 + $0x5] sm:$0x3] %v4870
        %4872 = vst [vmem:[#allocation3 + $0x5] sm:$0x30] %v4870
        %4873 = vst [vmem:[#allocation2] sm:$0xff] 0.0
        %4874 = vst [vmem:[#allocation2 + $0x8] sm:$0xff] 0.0
        %v4875 = vld [vmem:[#allocation3] sm:$0x3f]
        %v4876 = vpack.c.bf16 %v4875, %v4875
        %s4877 = scalar_lea.vmem [#allocation4], 2944
        %v4878 = vld [vmem:[%s4877] sm:$0xf]
        %v4879 = vld [vmem:[%s4877 + $0x4] sm:$0xf]
        %v4880 = vld [vmem:[%s4877 + $0x8] sm:$0xf]
        %v4881 = vld [vmem:[%s4877 + $0xc] sm:$0xf]
        %v4882 = vld [vmem:[%s4877 + $0x10] sm:$0xf]
        %v4883 = vld [vmem:[%s4877 + $0x14] sm:$0xf]
        %v4884 = vld [vmem:[%s4877 + $0x18] sm:$0xf]
        %v4885 = vld [vmem:[%s4877 + $0x1c] sm:$0xf]
        %v4886 = vld [vmem:[%s4877 + $0x20] sm:$0xf]
        %v4887 = vld [vmem:[%s4877 + $0x24] sm:$0xf]
        %v4888 = vld [vmem:[%s4877 + $0x28] sm:$0xf]
        %v4889 = vld [vmem:[%s4877 + $0x2c] sm:$0xf]
        %v4890 = vld [vmem:[%s4877 + $0x30] sm:$0xf]
        %v4891 = vld [vmem:[%s4877 + $0x34] sm:$0xf]
        %v4892 = vld [vmem:[%s4877 + $0x38] sm:$0xf]
        %v4893 = vld [vmem:[%s4877 + $0x3c] sm:$0xf]
        %v4894 = vld [vmem:[#allocation3 + $0x1] sm:$0x3f]
        %v4895 = vpack.c.bf16 %v4894, %v4894
        %s4896 = scalar_lea.vmem [#allocation4], 3008
        %v4897 = vld [vmem:[%s4896] sm:$0xf]
        %v4898 = vld [vmem:[%s4896 + $0x4] sm:$0xf]
        %v4899 = vld [vmem:[%s4896 + $0x8] sm:$0xf]
        %v4900 = vld [vmem:[%s4896 + $0xc] sm:$0xf]
        %v4901 = vld [vmem:[%s4896 + $0x10] sm:$0xf]
        %v4902 = vld [vmem:[%s4896 + $0x14] sm:$0xf]
        %v4903 = vld [vmem:[%s4896 + $0x18] sm:$0xf]
        %v4904 = vld [vmem:[%s4896 + $0x1c] sm:$0xf]
        %v4905 = vld [vmem:[%s4896 + $0x20] sm:$0xf]
        %v4906 = vld [vmem:[%s4896 + $0x24] sm:$0xf]
        %v4907 = vld [vmem:[%s4896 + $0x28] sm:$0xf]
        %v4908 = vld [vmem:[%s4896 + $0x2c] sm:$0xf]
        %v4909 = vld [vmem:[%s4896 + $0x30] sm:$0xf]
        %v4910 = vld [vmem:[%s4896 + $0x34] sm:$0xf]
        %v4911 = vld [vmem:[%s4896 + $0x38] sm:$0xf]
        %v4912 = vld [vmem:[%s4896 + $0x3c] sm:$0xf]
        %v4929 = vunpack.c.l.b16 %v4897
        %v4930 = vunpack.c.l.b16 %v4898
        %v4931 = vunpack.c.l.b16 %v4899
        %v4932 = vunpack.c.l.b16 %v4900
        %v4933 = vunpack.c.l.b16 %v4901
        %v4934 = vunpack.c.l.b16 %v4902
        %v4935 = vunpack.c.l.b16 %v4903
        %v4936 = vunpack.c.l.b16 %v4904
        %v4937 = vunpack.c.l.b16 %v4905
        %v4938 = vunpack.c.l.b16 %v4906
        %v4939 = vunpack.c.l.b16 %v4907
        %v4940 = vunpack.c.l.b16 %v4908
        %v4941 = vunpack.c.l.b16 %v4909
        %v4942 = vunpack.c.l.b16 %v4910
        %v4943 = vunpack.c.l.b16 %v4911
        %v4944 = vunpack.c.l.b16 %v4912
        %v4945 = vpack.c.b16 %v4930, %v4929
        %v4946 = vpack.c.b16 %v4932, %v4931
        %v4947 = vpack.c.b16 %v4934, %v4933
        %v4948 = vpack.c.b16 %v4936, %v4935
        %v4949 = vpack.c.b16 %v4938, %v4937
        %v4950 = vpack.c.b16 %v4940, %v4939
        %v4951 = vpack.c.b16 %v4942, %v4941
        %v4952 = vpack.c.b16 %v4944, %v4943
        %4961 = vmatpush.bf16.msra.mxu0 %v4952
        %4962 = vmatpush.bf16.msra.mxu0 %v4951
        %4963 = vmatpush.bf16.msra.mxu0 %v4950
        %4964 = vmatpush.bf16.msra.mxu0 %v4949
        %4965 = vmatpush.bf16.msra.mxu0 %v4948
        %4966 = vmatpush.bf16.msra.mxu0 %v4947
        %4967 = vmatpush.bf16.msra.mxu0 %v4946
        %4968 = vmatpush.bf16.msra.mxu0 %v4945
        %4969 = vmatmul.bf16.gmra.mxu0 %v4895
        %v4970 = vpop.f32.mrf.mxu0
        %v4971 = vadd.f32 0.0, %v4970
        %v4972 = vpop.f32.mrf.mxu0
        %4973 = vdwg.mxu0
        %v4990 = vunpack.c.l.b16 %v4878
        %v4991 = vunpack.c.l.b16 %v4879
        %v4992 = vunpack.c.l.b16 %v4880
        %v4993 = vunpack.c.l.b16 %v4881
        %v4994 = vunpack.c.l.b16 %v4882
        %v4995 = vunpack.c.l.b16 %v4883
        %v4996 = vunpack.c.l.b16 %v4884
        %v4997 = vunpack.c.l.b16 %v4885
        %v4998 = vunpack.c.l.b16 %v4886
        %v4999 = vunpack.c.l.b16 %v4887
        %v5000 = vunpack.c.l.b16 %v4888
        %v5001 = vunpack.c.l.b16 %v4889
        %v5002 = vunpack.c.l.b16 %v4890
        %v5003 = vunpack.c.l.b16 %v4891
        %v5004 = vunpack.c.l.b16 %v4892
        %v5005 = vunpack.c.l.b16 %v4893
        %v5006 = vpack.c.b16 %v4991, %v4990
        %v5007 = vpack.c.b16 %v4993, %v4992
        %v5008 = vpack.c.b16 %v4995, %v4994
        %v5009 = vpack.c.b16 %v4997, %v4996
        %v5010 = vpack.c.b16 %v4999, %v4998
        %v5011 = vpack.c.b16 %v5001, %v5000
        %v5012 = vpack.c.b16 %v5003, %v5002
        %v5013 = vpack.c.b16 %v5005, %v5004
        %5022 = vmatpush.bf16.msra.mxu0 %v5013
        %5023 = vmatpush.bf16.msra.mxu0 %v5012
        %5024 = vmatpush.bf16.msra.mxu0 %v5011
        %5025 = vmatpush.bf16.msra.mxu0 %v5010
        %5026 = vmatpush.bf16.msra.mxu0 %v5009
        %5027 = vmatpush.bf16.msra.mxu0 %v5008
        %5028 = vmatpush.bf16.msra.mxu0 %v5007
        %5029 = vmatpush.bf16.msra.mxu0 %v5006
        %5030 = vmatmul.bf16.gmra.mxu0 %v4876
        %v5031 = vpop.f32.mrf.mxu0
        %v5032 = vadd.f32 %v4971, %v5031
        %v5033 = vpop.f32.mrf.mxu0
        %5034 = vdwg.mxu0
        %v5035 = vld [vmem:[#allocation3 + $0x2] sm:$0x3f]
        %v5036 = vpack.c.bf16 %v5035, %v5035
        %s5037 = scalar_lea.vmem [#allocation4], 3072
        %v5038 = vld [vmem:[%s5037] sm:$0xf]
        %v5039 = vld [vmem:[%s5037 + $0x4] sm:$0xf]
        %v5040 = vld [vmem:[%s5037 + $0x8] sm:$0xf]
        %v5041 = vld [vmem:[%s5037 + $0xc] sm:$0xf]
        %v5042 = vld [vmem:[%s5037 + $0x10] sm:$0xf]
        %v5043 = vld [vmem:[%s5037 + $0x14] sm:$0xf]
        %v5044 = vld [vmem:[%s5037 + $0x18] sm:$0xf]
        %v5045 = vld [vmem:[%s5037 + $0x1c] sm:$0xf]
        %v5046 = vld [vmem:[%s5037 + $0x20] sm:$0xf]
        %v5047 = vld [vmem:[%s5037 + $0x24] sm:$0xf]
        %v5048 = vld [vmem:[%s5037 + $0x28] sm:$0xf]
        %v5049 = vld [vmem:[%s5037 + $0x2c] sm:$0xf]
        %v5050 = vld [vmem:[%s5037 + $0x30] sm:$0xf]
        %v5051 = vld [vmem:[%s5037 + $0x34] sm:$0xf]
        %v5052 = vld [vmem:[%s5037 + $0x38] sm:$0xf]
        %v5053 = vld [vmem:[%s5037 + $0x3c] sm:$0xf]
        %v5070 = vunpack.c.l.b16 %v5038
        %v5071 = vunpack.c.l.b16 %v5039
        %v5072 = vunpack.c.l.b16 %v5040
        %v5073 = vunpack.c.l.b16 %v5041
        %v5074 = vunpack.c.l.b16 %v5042
        %v5075 = vunpack.c.l.b16 %v5043
        %v5076 = vunpack.c.l.b16 %v5044
        %v5077 = vunpack.c.l.b16 %v5045
        %v5078 = vunpack.c.l.b16 %v5046
        %v5079 = vunpack.c.l.b16 %v5047
        %v5080 = vunpack.c.l.b16 %v5048
        %v5081 = vunpack.c.l.b16 %v5049
        %v5082 = vunpack.c.l.b16 %v5050
        %v5083 = vunpack.c.l.b16 %v5051
        %v5084 = vunpack.c.l.b16 %v5052
        %v5085 = vunpack.c.l.b16 %v5053
        %v5086 = vpack.c.b16 %v5071, %v5070
        %v5087 = vpack.c.b16 %v5073, %v5072
        %v5088 = vpack.c.b16 %v5075, %v5074
        %v5089 = vpack.c.b16 %v5077, %v5076
        %v5090 = vpack.c.b16 %v5079, %v5078
        %v5091 = vpack.c.b16 %v5081, %v5080
        %v5092 = vpack.c.b16 %v5083, %v5082
        %v5093 = vpack.c.b16 %v5085, %v5084
        %5102 = vmatpush.bf16.msra.mxu0 %v5093
        %5103 = vmatpush.bf16.msra.mxu0 %v5092
        %5104 = vmatpush.bf16.msra.mxu0 %v5091
        %5105 = vmatpush.bf16.msra.mxu0 %v5090
        %5106 = vmatpush.bf16.msra.mxu0 %v5089
        %5107 = vmatpush.bf16.msra.mxu0 %v5088
        %5108 = vmatpush.bf16.msra.mxu0 %v5087
        %5109 = vmatpush.bf16.msra.mxu0 %v5086
        %5110 = vmatmul.bf16.gmra.mxu0 %v5036
        %v5111 = vpop.f32.mrf.mxu0
        %v5112 = vadd.f32 0.0, %v5111
        %v5113 = vpop.f32.mrf.mxu0
        %5114 = vdwg.mxu0
        %v5115 = vadd.f32 %v5032, %v5112
        %v5116 = vld [vmem:[#allocation3 + $0x4] sm:$0x3f]
        %v5117 = vpack.c.bf16 %v5116, %v5116
        %s5118 = scalar_lea.vmem [#allocation4], 3136
        %v5119 = vld [vmem:[%s5118] sm:$0xf]
        %v5120 = vld [vmem:[%s5118 + $0x4] sm:$0xf]
        %v5121 = vld [vmem:[%s5118 + $0x8] sm:$0xf]
        %v5122 = vld [vmem:[%s5118 + $0xc] sm:$0xf]
        %v5123 = vld [vmem:[%s5118 + $0x10] sm:$0xf]
        %v5124 = vld [vmem:[%s5118 + $0x14] sm:$0xf]
        %v5125 = vld [vmem:[%s5118 + $0x18] sm:$0xf]
        %v5126 = vld [vmem:[%s5118 + $0x1c] sm:$0xf]
        %v5127 = vld [vmem:[%s5118 + $0x20] sm:$0xf]
        %v5128 = vld [vmem:[%s5118 + $0x24] sm:$0xf]
        %v5129 = vld [vmem:[%s5118 + $0x28] sm:$0xf]
        %v5130 = vld [vmem:[%s5118 + $0x2c] sm:$0xf]
        %v5131 = vld [vmem:[%s5118 + $0x30] sm:$0xf]
        %v5132 = vld [vmem:[%s5118 + $0x34] sm:$0xf]
        %v5133 = vld [vmem:[%s5118 + $0x38] sm:$0xf]
        %v5134 = vld [vmem:[%s5118 + $0x3c] sm:$0xf]
        %v5151 = vunpack.c.l.b16 %v5119
        %v5152 = vunpack.c.l.b16 %v5120
        %v5153 = vunpack.c.l.b16 %v5121
        %v5154 = vunpack.c.l.b16 %v5122
        %v5155 = vunpack.c.l.b16 %v5123
        %v5156 = vunpack.c.l.b16 %v5124
        %v5157 = vunpack.c.l.b16 %v5125
        %v5158 = vunpack.c.l.b16 %v5126
        %v5159 = vunpack.c.l.b16 %v5127
        %v5160 = vunpack.c.l.b16 %v5128
        %v5161 = vunpack.c.l.b16 %v5129
        %v5162 = vunpack.c.l.b16 %v5130
        %v5163 = vunpack.c.l.b16 %v5131
        %v5164 = vunpack.c.l.b16 %v5132
        %v5165 = vunpack.c.l.b16 %v5133
        %v5166 = vunpack.c.l.b16 %v5134
        %v5167 = vpack.c.b16 %v5152, %v5151
        %v5168 = vpack.c.b16 %v5154, %v5153
        %v5169 = vpack.c.b16 %v5156, %v5155
        %v5170 = vpack.c.b16 %v5158, %v5157
        %v5171 = vpack.c.b16 %v5160, %v5159
        %v5172 = vpack.c.b16 %v5162, %v5161
        %v5173 = vpack.c.b16 %v5164, %v5163
        %v5174 = vpack.c.b16 %v5166, %v5165
        %5183 = vmatpush.bf16.msra.mxu0 %v5174
        %5184 = vmatpush.bf16.msra.mxu0 %v5173
        %5185 = vmatpush.bf16.msra.mxu0 %v5172
        %5186 = vmatpush.bf16.msra.mxu0 %v5171
        %5187 = vmatpush.bf16.msra.mxu0 %v5170
        %5188 = vmatpush.bf16.msra.mxu0 %v5169
        %5189 = vmatpush.bf16.msra.mxu0 %v5168
        %5190 = vmatpush.bf16.msra.mxu0 %v5167
        %5191 = vmatmul.bf16.gmra.mxu0 %v5117
        %v5192 = vpop.f32.mrf.mxu0
        %v5193 = vadd.f32 0.0, %v5192
        %v5194 = vpop.f32.mrf.mxu0
        %5195 = vdwg.mxu0
        %v5196 = vadd.f32 %v5115, %v5193
        %v5197 = vld [vmem:[#allocation3 + $0x5] sm:$0x3f]
        %v5198 = vpack.c.bf16 %v5197, %v5197
        %s5199 = scalar_lea.vmem [#allocation4], 3200
        %v5200 = vld [vmem:[%s5199] sm:$0xf]
        %v5201 = vld [vmem:[%s5199 + $0x4] sm:$0xf]
        %v5202 = vld [vmem:[%s5199 + $0x8] sm:$0xf]
        %v5203 = vld [vmem:[%s5199 + $0xc] sm:$0xf]
        %v5204 = vld [vmem:[%s5199 + $0x10] sm:$0xf]
        %v5205 = vld [vmem:[%s5199 + $0x14] sm:$0xf]
        %v5206 = vld [vmem:[%s5199 + $0x18] sm:$0xf]
        %v5207 = vld [vmem:[%s5199 + $0x1c] sm:$0xf]
        %v5208 = vld [vmem:[%s5199 + $0x20] sm:$0xf]
        %v5209 = vld [vmem:[%s5199 + $0x24] sm:$0xf]
        %v5210 = vld [vmem:[%s5199 + $0x28] sm:$0xf]
        %v5211 = vld [vmem:[%s5199 + $0x2c] sm:$0xf]
        %v5212 = vld [vmem:[%s5199 + $0x30] sm:$0xf]
        %v5213 = vld [vmem:[%s5199 + $0x34] sm:$0xf]
        %v5214 = vld [vmem:[%s5199 + $0x38] sm:$0xf]
        %v5215 = vld [vmem:[%s5199 + $0x3c] sm:$0xf]
        %v5232 = vunpack.c.l.b16 %v5200
        %v5233 = vunpack.c.l.b16 %v5201
        %v5234 = vunpack.c.l.b16 %v5202
        %v5235 = vunpack.c.l.b16 %v5203
        %v5236 = vunpack.c.l.b16 %v5204
        %v5237 = vunpack.c.l.b16 %v5205
        %v5238 = vunpack.c.l.b16 %v5206
        %v5239 = vunpack.c.l.b16 %v5207
        %v5240 = vunpack.c.l.b16 %v5208
        %v5241 = vunpack.c.l.b16 %v5209
        %v5242 = vunpack.c.l.b16 %v5210
        %v5243 = vunpack.c.l.b16 %v5211
        %v5244 = vunpack.c.l.b16 %v5212
        %v5245 = vunpack.c.l.b16 %v5213
        %v5246 = vunpack.c.l.b16 %v5214
        %v5247 = vunpack.c.l.b16 %v5215
        %v5248 = vpack.c.b16 %v5233, %v5232
        %v5249 = vpack.c.b16 %v5235, %v5234
        %v5250 = vpack.c.b16 %v5237, %v5236
        %v5251 = vpack.c.b16 %v5239, %v5238
        %v5252 = vpack.c.b16 %v5241, %v5240
        %v5253 = vpack.c.b16 %v5243, %v5242
        %v5254 = vpack.c.b16 %v5245, %v5244
        %v5255 = vpack.c.b16 %v5247, %v5246
        %5264 = vmatpush.bf16.msra.mxu0 %v5255
        %5265 = vmatpush.bf16.msra.mxu0 %v5254
        %5266 = vmatpush.bf16.msra.mxu0 %v5253
        %5267 = vmatpush.bf16.msra.mxu0 %v5252
        %5268 = vmatpush.bf16.msra.mxu0 %v5251
        %5269 = vmatpush.bf16.msra.mxu0 %v5250
        %5270 = vmatpush.bf16.msra.mxu0 %v5249
        %5271 = vmatpush.bf16.msra.mxu0 %v5248
        %5272 = vmatmul.bf16.gmra.mxu0 %v5198
        %v5273 = vpop.f32.mrf.mxu0
        %v5274 = vadd.f32 0.0, %v5273
        %v5275 = vpop.f32.mrf.mxu0
        %5276 = vdwg.mxu0
        %v5277 = vadd.f32 %v5196, %v5274
        %v5278 = vld [vmem:[#allocation3 + $0x6] sm:$0x3f]
        %v5279 = vpack.c.bf16 %v5278, %v5278
        %s5280 = scalar_lea.vmem [#allocation4], 3264
        %v5281 = vld [vmem:[%s5280] sm:$0xf]
        %v5282 = vld [vmem:[%s5280 + $0x4] sm:$0xf]
        %v5283 = vld [vmem:[%s5280 + $0x8] sm:$0xf]
        %v5284 = vld [vmem:[%s5280 + $0xc] sm:$0xf]
        %v5285 = vld [vmem:[%s5280 + $0x10] sm:$0xf]
        %v5286 = vld [vmem:[%s5280 + $0x14] sm:$0xf]
        %v5287 = vld [vmem:[%s5280 + $0x18] sm:$0xf]
        %v5288 = vld [vmem:[%s5280 + $0x1c] sm:$0xf]
        %v5289 = vld [vmem:[%s5280 + $0x20] sm:$0xf]
        %v5290 = vld [vmem:[%s5280 + $0x24] sm:$0xf]
        %v5291 = vld [vmem:[%s5280 + $0x28] sm:$0xf]
        %v5292 = vld [vmem:[%s5280 + $0x2c] sm:$0xf]
        %v5293 = vld [vmem:[%s5280 + $0x30] sm:$0xf]
        %v5294 = vld [vmem:[%s5280 + $0x34] sm:$0xf]
        %v5295 = vld [vmem:[%s5280 + $0x38] sm:$0xf]
        %v5296 = vld [vmem:[%s5280 + $0x3c] sm:$0xf]
        %v5313 = vunpack.c.l.b16 %v5281
        %v5314 = vunpack.c.l.b16 %v5282
        %v5315 = vunpack.c.l.b16 %v5283
        %v5316 = vunpack.c.l.b16 %v5284
        %v5317 = vunpack.c.l.b16 %v5285
        %v5318 = vunpack.c.l.b16 %v5286
        %v5319 = vunpack.c.l.b16 %v5287
        %v5320 = vunpack.c.l.b16 %v5288
        %v5321 = vunpack.c.l.b16 %v5289
        %v5322 = vunpack.c.l.b16 %v5290
        %v5323 = vunpack.c.l.b16 %v5291
        %v5324 = vunpack.c.l.b16 %v5292
        %v5325 = vunpack.c.l.b16 %v5293
        %v5326 = vunpack.c.l.b16 %v5294
        %v5327 = vunpack.c.l.b16 %v5295
        %v5328 = vunpack.c.l.b16 %v5296
        %v5329 = vpack.c.b16 %v5314, %v5313
        %v5330 = vpack.c.b16 %v5316, %v5315
        %v5331 = vpack.c.b16 %v5318, %v5317
        %v5332 = vpack.c.b16 %v5320, %v5319
        %v5333 = vpack.c.b16 %v5322, %v5321
        %v5334 = vpack.c.b16 %v5324, %v5323
        %v5335 = vpack.c.b16 %v5326, %v5325
        %v5336 = vpack.c.b16 %v5328, %v5327
        %5345 = vmatpush.bf16.msra.mxu0 %v5336
        %5346 = vmatpush.bf16.msra.mxu0 %v5335
        %5347 = vmatpush.bf16.msra.mxu0 %v5334
        %5348 = vmatpush.bf16.msra.mxu0 %v5333
        %5349 = vmatpush.bf16.msra.mxu0 %v5332
        %5350 = vmatpush.bf16.msra.mxu0 %v5331
        %5351 = vmatpush.bf16.msra.mxu0 %v5330
        %5352 = vmatpush.bf16.msra.mxu0 %v5329
        %5353 = vmatmul.bf16.gmra.mxu0 %v5279
        %v5354 = vpop.f32.mrf.mxu0
        %v5355 = vadd.f32 0.0, %v5354
        %v5356 = vpop.f32.mrf.mxu0
        %5357 = vdwg.mxu0
        %v5358 = vadd.f32 %v5277, %v5355
        %v5359 = vld [vmem:[#allocation3 + $0x8] sm:$0x3f]
        %v5360 = vpack.c.bf16 %v5359, %v5359
        %s5361 = scalar_lea.vmem [#allocation4], 3328
        %v5362 = vld [vmem:[%s5361] sm:$0xf]
        %v5363 = vld [vmem:[%s5361 + $0x4] sm:$0xf]
        %v5364 = vld [vmem:[%s5361 + $0x8] sm:$0xf]
        %v5365 = vld [vmem:[%s5361 + $0xc] sm:$0xf]
        %v5366 = vld [vmem:[%s5361 + $0x10] sm:$0xf]
        %v5367 = vld [vmem:[%s5361 + $0x14] sm:$0xf]
        %v5368 = vld [vmem:[%s5361 + $0x18] sm:$0xf]
        %v5369 = vld [vmem:[%s5361 + $0x1c] sm:$0xf]
        %v5370 = vld [vmem:[%s5361 + $0x20] sm:$0xf]
        %v5371 = vld [vmem:[%s5361 + $0x24] sm:$0xf]
        %v5372 = vld [vmem:[%s5361 + $0x28] sm:$0xf]
        %v5373 = vld [vmem:[%s5361 + $0x2c] sm:$0xf]
        %v5374 = vld [vmem:[%s5361 + $0x30] sm:$0xf]
        %v5375 = vld [vmem:[%s5361 + $0x34] sm:$0xf]
        %v5376 = vld [vmem:[%s5361 + $0x38] sm:$0xf]
        %v5377 = vld [vmem:[%s5361 + $0x3c] sm:$0xf]
        %v5394 = vunpack.c.l.b16 %v5362
        %v5395 = vunpack.c.l.b16 %v5363
        %v5396 = vunpack.c.l.b16 %v5364
        %v5397 = vunpack.c.l.b16 %v5365
        %v5398 = vunpack.c.l.b16 %v5366
        %v5399 = vunpack.c.l.b16 %v5367
        %v5400 = vunpack.c.l.b16 %v5368
        %v5401 = vunpack.c.l.b16 %v5369
        %v5402 = vunpack.c.l.b16 %v5370
        %v5403 = vunpack.c.l.b16 %v5371
        %v5404 = vunpack.c.l.b16 %v5372
        %v5405 = vunpack.c.l.b16 %v5373
        %v5406 = vunpack.c.l.b16 %v5374
        %v5407 = vunpack.c.l.b16 %v5375
        %v5408 = vunpack.c.l.b16 %v5376
        %v5409 = vunpack.c.l.b16 %v5377
        %v5410 = vpack.c.b16 %v5395, %v5394
        %v5411 = vpack.c.b16 %v5397, %v5396
        %v5412 = vpack.c.b16 %v5399, %v5398
        %v5413 = vpack.c.b16 %v5401, %v5400
        %v5414 = vpack.c.b16 %v5403, %v5402
        %v5415 = vpack.c.b16 %v5405, %v5404
        %v5416 = vpack.c.b16 %v5407, %v5406
        %v5417 = vpack.c.b16 %v5409, %v5408
        %5426 = vmatpush.bf16.msra.mxu0 %v5417
        %5427 = vmatpush.bf16.msra.mxu0 %v5416
        %5428 = vmatpush.bf16.msra.mxu0 %v5415
        %5429 = vmatpush.bf16.msra.mxu0 %v5414
        %5430 = vmatpush.bf16.msra.mxu0 %v5413
        %5431 = vmatpush.bf16.msra.mxu0 %v5412
        %5432 = vmatpush.bf16.msra.mxu0 %v5411
        %5433 = vmatpush.bf16.msra.mxu0 %v5410
        %5434 = vmatmul.bf16.gmra.mxu0 %v5360
        %v5435 = vpop.f32.mrf.mxu0
        %v5436 = vadd.f32 0.0, %v5435
        %v5437 = vpop.f32.mrf.mxu0
        %5438 = vdwg.mxu0
        %v5439 = vadd.f32 %v5358, %v5436
        %v5440 = vld [vmem:[#allocation3 + $0x9] sm:$0x3f]
        %v5441 = vpack.c.bf16 %v5440, %v5440
        %s5442 = scalar_lea.vmem [#allocation4], 3392
        %v5443 = vld [vmem:[%s5442] sm:$0xf]
        %v5444 = vld [vmem:[%s5442 + $0x4] sm:$0xf]
        %v5445 = vld [vmem:[%s5442 + $0x8] sm:$0xf]
        %v5446 = vld [vmem:[%s5442 + $0xc] sm:$0xf]
        %v5447 = vld [vmem:[%s5442 + $0x10] sm:$0xf]
        %v5448 = vld [vmem:[%s5442 + $0x14] sm:$0xf]
        %v5449 = vld [vmem:[%s5442 + $0x18] sm:$0xf]
        %v5450 = vld [vmem:[%s5442 + $0x1c] sm:$0xf]
        %v5451 = vld [vmem:[%s5442 + $0x20] sm:$0xf]
        %v5452 = vld [vmem:[%s5442 + $0x24] sm:$0xf]
        %v5453 = vld [vmem:[%s5442 + $0x28] sm:$0xf]
        %v5454 = vld [vmem:[%s5442 + $0x2c] sm:$0xf]
        %v5455 = vld [vmem:[%s5442 + $0x30] sm:$0xf]
        %v5456 = vld [vmem:[%s5442 + $0x34] sm:$0xf]
        %v5457 = vld [vmem:[%s5442 + $0x38] sm:$0xf]
        %v5458 = vld [vmem:[%s5442 + $0x3c] sm:$0xf]
        %v5475 = vunpack.c.l.b16 %v5443
        %v5476 = vunpack.c.l.b16 %v5444
        %v5477 = vunpack.c.l.b16 %v5445
        %v5478 = vunpack.c.l.b16 %v5446
        %v5479 = vunpack.c.l.b16 %v5447
        %v5480 = vunpack.c.l.b16 %v5448
        %v5481 = vunpack.c.l.b16 %v5449
        %v5482 = vunpack.c.l.b16 %v5450
        %v5483 = vunpack.c.l.b16 %v5451
        %v5484 = vunpack.c.l.b16 %v5452
        %v5485 = vunpack.c.l.b16 %v5453
        %v5486 = vunpack.c.l.b16 %v5454
        %v5487 = vunpack.c.l.b16 %v5455
        %v5488 = vunpack.c.l.b16 %v5456
        %v5489 = vunpack.c.l.b16 %v5457
        %v5490 = vunpack.c.l.b16 %v5458
        %v5491 = vpack.c.b16 %v5476, %v5475
        %v5492 = vpack.c.b16 %v5478, %v5477
        %v5493 = vpack.c.b16 %v5480, %v5479
        %v5494 = vpack.c.b16 %v5482, %v5481
        %v5495 = vpack.c.b16 %v5484, %v5483
        %v5496 = vpack.c.b16 %v5486, %v5485
        %v5497 = vpack.c.b16 %v5488, %v5487
        %v5498 = vpack.c.b16 %v5490, %v5489
        %5507 = vmatpush.bf16.msra.mxu0 %v5498
        %5508 = vmatpush.bf16.msra.mxu0 %v5497
        %5509 = vmatpush.bf16.msra.mxu0 %v5496
        %5510 = vmatpush.bf16.msra.mxu0 %v5495
        %5511 = vmatpush.bf16.msra.mxu0 %v5494
        %5512 = vmatpush.bf16.msra.mxu0 %v5493
        %5513 = vmatpush.bf16.msra.mxu0 %v5492
        %5514 = vmatpush.bf16.msra.mxu0 %v5491
        %5515 = vmatmul.bf16.gmra.mxu0 %v5441
        %v5516 = vpop.f32.mrf.mxu0
        %v5517 = vadd.f32 0.0, %v5516
        %v5518 = vpop.f32.mrf.mxu0
        %5519 = vdwg.mxu0
        %v5520 = vadd.f32 %v5439, %v5517
        %v5521 = vld [vmem:[#allocation3 + $0xa] sm:$0x3f]
        %v5522 = vpack.c.bf16 %v5521, %v5521
        %s5523 = scalar_lea.vmem [#allocation4], 3456
        %v5524 = vld [vmem:[%s5523] sm:$0xf]
        %v5525 = vld [vmem:[%s5523 + $0x4] sm:$0xf]
        %v5526 = vld [vmem:[%s5523 + $0x8] sm:$0xf]
        %v5527 = vld [vmem:[%s5523 + $0xc] sm:$0xf]
        %v5528 = vld [vmem:[%s5523 + $0x10] sm:$0xf]
        %v5529 = vld [vmem:[%s5523 + $0x14] sm:$0xf]
        %v5530 = vld [vmem:[%s5523 + $0x18] sm:$0xf]
        %v5531 = vld [vmem:[%s5523 + $0x1c] sm:$0xf]
        %v5532 = vld [vmem:[%s5523 + $0x20] sm:$0xf]
        %v5533 = vld [vmem:[%s5523 + $0x24] sm:$0xf]
        %v5534 = vld [vmem:[%s5523 + $0x28] sm:$0xf]
        %v5535 = vld [vmem:[%s5523 + $0x2c] sm:$0xf]
        %v5536 = vld [vmem:[%s5523 + $0x30] sm:$0xf]
        %v5537 = vld [vmem:[%s5523 + $0x34] sm:$0xf]
        %v5538 = vld [vmem:[%s5523 + $0x38] sm:$0xf]
        %v5539 = vld [vmem:[%s5523 + $0x3c] sm:$0xf]
        %v5556 = vunpack.c.l.b16 %v5524
        %v5557 = vunpack.c.l.b16 %v5525
        %v5558 = vunpack.c.l.b16 %v5526
        %v5559 = vunpack.c.l.b16 %v5527
        %v5560 = vunpack.c.l.b16 %v5528
        %v5561 = vunpack.c.l.b16 %v5529
        %v5562 = vunpack.c.l.b16 %v5530
        %v5563 = vunpack.c.l.b16 %v5531
        %v5564 = vunpack.c.l.b16 %v5532
        %v5565 = vunpack.c.l.b16 %v5533
        %v5566 = vunpack.c.l.b16 %v5534
        %v5567 = vunpack.c.l.b16 %v5535
        %v5568 = vunpack.c.l.b16 %v5536
        %v5569 = vunpack.c.l.b16 %v5537
        %v5570 = vunpack.c.l.b16 %v5538
        %v5571 = vunpack.c.l.b16 %v5539
        %v5572 = vpack.c.b16 %v5557, %v5556
        %v5573 = vpack.c.b16 %v5559, %v5558
        %v5574 = vpack.c.b16 %v5561, %v5560
        %v5575 = vpack.c.b16 %v5563, %v5562
        %v5576 = vpack.c.b16 %v5565, %v5564
        %v5577 = vpack.c.b16 %v5567, %v5566
        %v5578 = vpack.c.b16 %v5569, %v5568
        %v5579 = vpack.c.b16 %v5571, %v5570
        %5588 = vmatpush.bf16.msra.mxu0 %v5579
        %5589 = vmatpush.bf16.msra.mxu0 %v5578
        %5590 = vmatpush.bf16.msra.mxu0 %v5577
        %5591 = vmatpush.bf16.msra.mxu0 %v5576
        %5592 = vmatpush.bf16.msra.mxu0 %v5575
        %5593 = vmatpush.bf16.msra.mxu0 %v5574
        %5594 = vmatpush.bf16.msra.mxu0 %v5573
        %5595 = vmatpush.bf16.msra.mxu0 %v5572
        %5596 = vmatmul.bf16.gmra.mxu0 %v5522
        %v5597 = vpop.f32.mrf.mxu0
        %v5598 = vadd.f32 0.0, %v5597
        %v5599 = vpop.f32.mrf.mxu0
        %5600 = vdwg.mxu0
        %v5601 = vadd.f32 %v5520, %v5598
        %v5602 = vld [vmem:[#allocation6 + $0x6] sm:$0x1]
        %v5603 = vperm.slane %v5602, 0
        %v5604 = vadd.f32 %v5601, %v5603
        %v5605 = vxor.u32 %v5604, 2147483648
        %v5606 = vmul.f32 %v5605, 1.442695
        %v5607 = vpow.pop %v5606
        %v5608 = vadd.f32 %v5607, 1.0
        %v5609 = vrcp.pop %v5608
        %v5610 = vmul.f32 %v5608, %v5609
        %v5611 = vsub.f32 1.0, %v5610
        %v5612 = vmul.f32 %v5609, %v5611
        %v5613 = vadd.f32 %v5609, %v5612
        %vm5614 = vweird.f32 %v5608
        %vm5615 = vweird.f32 %v5609
        %vm5616 = vmor %vm5614, %vm5615
        %v5617 = vsel %vm5616, %v5609, %v5613
        %v5618 = vand.u32 2147483647, %v5608
        %vm5619 = vcmp.eq.f32.partialorder %v5618, 8.507059e+37
        %v5620 = vand.u32 %v5608, 2147483648
        %v5621 = vor.u32 1.1754944e-38, %v5620
        %v5622 = vsel %vm5619, %v5621, %v5617
        %v5623 = vmul.f32 1.0, %v5622
        %v5624 = vmul.f32 %v5604, %v5623
        %5625 = vst [vmem:[#allocation2 + $0x5] sm:$0x3] %v5624
        %5626 = vst [vmem:[#allocation2 + $0x5] sm:$0x30] %v5624
        %5627 = vst [vmem:[#allocation3] sm:$0xff] 0.0
        %5628 = vst [vmem:[#allocation3 + $0x8] sm:$0xff] 0.0
        %v5629 = vld [vmem:[#allocation2] ss:$2 sm:$0x1]
        %v5630 = vpack.c.bf16 %v5629, %v5629
        %s5631 = scalar_lea.vmem [#allocation4], 3520
        %v5632 = vld [vmem:[%s5631] sm:$0xf]
        %v5633 = vld [vmem:[%s5631 + $0x4] sm:$0xf]
        %v5634 = vld [vmem:[%s5631 + $0x8] sm:$0xf]
        %v5635 = vld [vmem:[%s5631 + $0xc] sm:$0xf]
        %v5636 = vld [vmem:[%s5631 + $0x10] sm:$0xf]
        %v5637 = vld [vmem:[%s5631 + $0x14] sm:$0xf]
        %v5638 = vld [vmem:[%s5631 + $0x18] sm:$0xf]
        %v5639 = vld [vmem:[%s5631 + $0x1c] sm:$0xf]
        %v5640 = vld [vmem:[%s5631 + $0x20] sm:$0xf]
        %v5641 = vld [vmem:[%s5631 + $0x24] sm:$0xf]
        %v5642 = vld [vmem:[%s5631 + $0x28] sm:$0xf]
        %v5643 = vld [vmem:[%s5631 + $0x2c] sm:$0xf]
        %v5644 = vld [vmem:[%s5631 + $0x30] sm:$0xf]
        %v5645 = vld [vmem:[%s5631 + $0x34] sm:$0xf]
        %v5646 = vld [vmem:[%s5631 + $0x38] sm:$0xf]
        %v5647 = vld [vmem:[%s5631 + $0x3c] sm:$0xf]
        %v5648 = vld [vmem:[%s555] ss:$2 sm:$0x1]
        %v5649 = vpack.c.bf16 %v5648, %v5648
        %s5650 = scalar_lea.vmem [#allocation4], 3584
        %v5651 = vld [vmem:[%s5650] sm:$0xf]
        %v5652 = vld [vmem:[%s5650 + $0x4] sm:$0xf]
        %v5653 = vld [vmem:[%s5650 + $0x8] sm:$0xf]
        %v5654 = vld [vmem:[%s5650 + $0xc] sm:$0xf]
        %v5655 = vld [vmem:[%s5650 + $0x10] sm:$0xf]
        %v5656 = vld [vmem:[%s5650 + $0x14] sm:$0xf]
        %v5657 = vld [vmem:[%s5650 + $0x18] sm:$0xf]
        %v5658 = vld [vmem:[%s5650 + $0x1c] sm:$0xf]
        %v5659 = vld [vmem:[%s5650 + $0x20] sm:$0xf]
        %v5660 = vld [vmem:[%s5650 + $0x24] sm:$0xf]
        %v5661 = vld [vmem:[%s5650 + $0x28] sm:$0xf]
        %v5662 = vld [vmem:[%s5650 + $0x2c] sm:$0xf]
        %v5663 = vld [vmem:[%s5650 + $0x30] sm:$0xf]
        %v5664 = vld [vmem:[%s5650 + $0x34] sm:$0xf]
        %v5665 = vld [vmem:[%s5650 + $0x38] sm:$0xf]
        %v5666 = vld [vmem:[%s5650 + $0x3c] sm:$0xf]
        %v5683 = vunpack.c.l.b16 %v5651
        %v5684 = vunpack.c.l.b16 %v5652
        %v5685 = vunpack.c.l.b16 %v5653
        %v5686 = vunpack.c.l.b16 %v5654
        %v5687 = vunpack.c.l.b16 %v5655
        %v5688 = vunpack.c.l.b16 %v5656
        %v5689 = vunpack.c.l.b16 %v5657
        %v5690 = vunpack.c.l.b16 %v5658
        %v5691 = vunpack.c.l.b16 %v5659
        %v5692 = vunpack.c.l.b16 %v5660
        %v5693 = vunpack.c.l.b16 %v5661
        %v5694 = vunpack.c.l.b16 %v5662
        %v5695 = vunpack.c.l.b16 %v5663
        %v5696 = vunpack.c.l.b16 %v5664
        %v5697 = vunpack.c.l.b16 %v5665
        %v5698 = vunpack.c.l.b16 %v5666
        %v5699 = vpack.c.b16 %v5684, %v5683
        %v5700 = vpack.c.b16 %v5686, %v5685
        %v5701 = vpack.c.b16 %v5688, %v5687
        %v5702 = vpack.c.b16 %v5690, %v5689
        %v5703 = vpack.c.b16 %v5692, %v5691
        %v5704 = vpack.c.b16 %v5694, %v5693
        %v5705 = vpack.c.b16 %v5696, %v5695
        %v5706 = vpack.c.b16 %v5698, %v5697
        %5715 = vmatpush.bf16.msra.mxu0 %v5706
        %5716 = vmatpush.bf16.msra.mxu0 %v5705
        %5717 = vmatpush.bf16.msra.mxu0 %v5704
        %5718 = vmatpush.bf16.msra.mxu0 %v5703
        %5719 = vmatpush.bf16.msra.mxu0 %v5702
        %5720 = vmatpush.bf16.msra.mxu0 %v5701
        %5721 = vmatpush.bf16.msra.mxu0 %v5700
        %5722 = vmatpush.bf16.msra.mxu0 %v5699
        %5723 = vmatmul.bf16.gmra.mxu0 %v5649
        %v5724 = vpop.f32.mrf.mxu0
        %v5725 = vadd.f32 0.0, %v5724
        %v5726 = vpop.f32.mrf.mxu0
        %5727 = vdwg.mxu0
        %v5744 = vunpack.c.l.b16 %v5632
        %v5745 = vunpack.c.l.b16 %v5633
        %v5746 = vunpack.c.l.b16 %v5634
        %v5747 = vunpack.c.l.b16 %v5635
        %v5748 = vunpack.c.l.b16 %v5636
        %v5749 = vunpack.c.l.b16 %v5637
        %v5750 = vunpack.c.l.b16 %v5638
        %v5751 = vunpack.c.l.b16 %v5639
        %v5752 = vunpack.c.l.b16 %v5640
        %v5753 = vunpack.c.l.b16 %v5641
        %v5754 = vunpack.c.l.b16 %v5642
        %v5755 = vunpack.c.l.b16 %v5643
        %v5756 = vunpack.c.l.b16 %v5644
        %v5757 = vunpack.c.l.b16 %v5645
        %v5758 = vunpack.c.l.b16 %v5646
        %v5759 = vunpack.c.l.b16 %v5647
        %v5760 = vpack.c.b16 %v5745, %v5744
        %v5761 = vpack.c.b16 %v5747, %v5746
        %v5762 = vpack.c.b16 %v5749, %v5748
        %v5763 = vpack.c.b16 %v5751, %v5750
        %v5764 = vpack.c.b16 %v5753, %v5752
        %v5765 = vpack.c.b16 %v5755, %v5754
        %v5766 = vpack.c.b16 %v5757, %v5756
        %v5767 = vpack.c.b16 %v5759, %v5758
        %5776 = vmatpush.bf16.msra.mxu0 %v5767
        %5777 = vmatpush.bf16.msra.mxu0 %v5766
        %5778 = vmatpush.bf16.msra.mxu0 %v5765
        %5779 = vmatpush.bf16.msra.mxu0 %v5764
        %5780 = vmatpush.bf16.msra.mxu0 %v5763
        %5781 = vmatpush.bf16.msra.mxu0 %v5762
        %5782 = vmatpush.bf16.msra.mxu0 %v5761
        %5783 = vmatpush.bf16.msra.mxu0 %v5760
        %5784 = vmatmul.bf16.gmra.mxu0 %v5630
        %v5785 = vpop.f32.mrf.mxu0
        %v5786 = vadd.f32 %v5725, %v5785
        %v5787 = vpop.f32.mrf.mxu0
        %5788 = vdwg.mxu0
        %v5789 = vld [vmem:[%s727] ss:$2 sm:$0x1]
        %v5790 = vpack.c.bf16 %v5789, %v5789
        %s5791 = scalar_lea.vmem [#allocation4], 3648
        %v5792 = vld [vmem:[%s5791] sm:$0xf]
        %v5793 = vld [vmem:[%s5791 + $0x4] sm:$0xf]
        %v5794 = vld [vmem:[%s5791 + $0x8] sm:$0xf]
        %v5795 = vld [vmem:[%s5791 + $0xc] sm:$0xf]
        %v5796 = vld [vmem:[%s5791 + $0x10] sm:$0xf]
        %v5797 = vld [vmem:[%s5791 + $0x14] sm:$0xf]
        %v5798 = vld [vmem:[%s5791 + $0x18] sm:$0xf]
        %v5799 = vld [vmem:[%s5791 + $0x1c] sm:$0xf]
        %v5800 = vld [vmem:[%s5791 + $0x20] sm:$0xf]
        %v5801 = vld [vmem:[%s5791 + $0x24] sm:$0xf]
        %v5802 = vld [vmem:[%s5791 + $0x28] sm:$0xf]
        %v5803 = vld [vmem:[%s5791 + $0x2c] sm:$0xf]
        %v5804 = vld [vmem:[%s5791 + $0x30] sm:$0xf]
        %v5805 = vld [vmem:[%s5791 + $0x34] sm:$0xf]
        %v5806 = vld [vmem:[%s5791 + $0x38] sm:$0xf]
        %v5807 = vld [vmem:[%s5791 + $0x3c] sm:$0xf]
        %v5824 = vunpack.c.l.b16 %v5792
        %v5825 = vunpack.c.l.b16 %v5793
        %v5826 = vunpack.c.l.b16 %v5794
        %v5827 = vunpack.c.l.b16 %v5795
        %v5828 = vunpack.c.l.b16 %v5796
        %v5829 = vunpack.c.l.b16 %v5797
        %v5830 = vunpack.c.l.b16 %v5798
        %v5831 = vunpack.c.l.b16 %v5799
        %v5832 = vunpack.c.l.b16 %v5800
        %v5833 = vunpack.c.l.b16 %v5801
        %v5834 = vunpack.c.l.b16 %v5802
        %v5835 = vunpack.c.l.b16 %v5803
        %v5836 = vunpack.c.l.b16 %v5804
        %v5837 = vunpack.c.l.b16 %v5805
        %v5838 = vunpack.c.l.b16 %v5806
        %v5839 = vunpack.c.l.b16 %v5807
        %v5840 = vpack.c.b16 %v5825, %v5824
        %v5841 = vpack.c.b16 %v5827, %v5826
        %v5842 = vpack.c.b16 %v5829, %v5828
        %v5843 = vpack.c.b16 %v5831, %v5830
        %v5844 = vpack.c.b16 %v5833, %v5832
        %v5845 = vpack.c.b16 %v5835, %v5834
        %v5846 = vpack.c.b16 %v5837, %v5836
        %v5847 = vpack.c.b16 %v5839, %v5838
        %5856 = vmatpush.bf16.msra.mxu0 %v5847
        %5857 = vmatpush.bf16.msra.mxu0 %v5846
        %5858 = vmatpush.bf16.msra.mxu0 %v5845
        %5859 = vmatpush.bf16.msra.mxu0 %v5844
        %5860 = vmatpush.bf16.msra.mxu0 %v5843
        %5861 = vmatpush.bf16.msra.mxu0 %v5842
        %5862 = vmatpush.bf16.msra.mxu0 %v5841
        %5863 = vmatpush.bf16.msra.mxu0 %v5840
        %5864 = vmatmul.bf16.gmra.mxu0 %v5790
        %v5865 = vpop.f32.mrf.mxu0
        %v5866 = vadd.f32 0.0, %v5865
        %v5867 = vpop.f32.mrf.mxu0
        %5868 = vdwg.mxu0
        %v5869 = vadd.f32 %v5786, %v5866
        %s5870 = scalar_lea.vmem [#allocation2], 4
        %v5871 = vld [vmem:[%s5870] ss:$2 sm:$0x1]
        %v5872 = vpack.c.bf16 %v5871, %v5871
        %s5873 = scalar_lea.vmem [#allocation4], 3712
        %v5874 = vld [vmem:[%s5873] sm:$0xf]
        %v5875 = vld [vmem:[%s5873 + $0x4] sm:$0xf]
        %v5876 = vld [vmem:[%s5873 + $0x8] sm:$0xf]
        %v5877 = vld [vmem:[%s5873 + $0xc] sm:$0xf]
        %v5878 = vld [vmem:[%s5873 + $0x10] sm:$0xf]
        %v5879 = vld [vmem:[%s5873 + $0x14] sm:$0xf]
        %v5880 = vld [vmem:[%s5873 + $0x18] sm:$0xf]
        %v5881 = vld [vmem:[%s5873 + $0x1c] sm:$0xf]
        %v5882 = vld [vmem:[%s5873 + $0x20] sm:$0xf]
        %v5883 = vld [vmem:[%s5873 + $0x24] sm:$0xf]
        %v5884 = vld [vmem:[%s5873 + $0x28] sm:$0xf]
        %v5885 = vld [vmem:[%s5873 + $0x2c] sm:$0xf]
        %v5886 = vld [vmem:[%s5873 + $0x30] sm:$0xf]
        %v5887 = vld [vmem:[%s5873 + $0x34] sm:$0xf]
        %v5888 = vld [vmem:[%s5873 + $0x38] sm:$0xf]
        %v5889 = vld [vmem:[%s5873 + $0x3c] sm:$0xf]
        %v5906 = vunpack.c.l.b16 %v5874
        %v5907 = vunpack.c.l.b16 %v5875
        %v5908 = vunpack.c.l.b16 %v5876
        %v5909 = vunpack.c.l.b16 %v5877
        %v5910 = vunpack.c.l.b16 %v5878
        %v5911 = vunpack.c.l.b16 %v5879
        %v5912 = vunpack.c.l.b16 %v5880
        %v5913 = vunpack.c.l.b16 %v5881
        %v5914 = vunpack.c.l.b16 %v5882
        %v5915 = vunpack.c.l.b16 %v5883
        %v5916 = vunpack.c.l.b16 %v5884
        %v5917 = vunpack.c.l.b16 %v5885
        %v5918 = vunpack.c.l.b16 %v5886
        %v5919 = vunpack.c.l.b16 %v5887
        %v5920 = vunpack.c.l.b16 %v5888
        %v5921 = vunpack.c.l.b16 %v5889
        %v5922 = vpack.c.b16 %v5907, %v5906
        %v5923 = vpack.c.b16 %v5909, %v5908
        %v5924 = vpack.c.b16 %v5911, %v5910
        %v5925 = vpack.c.b16 %v5913, %v5912
        %v5926 = vpack.c.b16 %v5915, %v5914
        %v5927 = vpack.c.b16 %v5917, %v5916
        %v5928 = vpack.c.b16 %v5919, %v5918
        %v5929 = vpack.c.b16 %v5921, %v5920
        %5938 = vmatpush.bf16.msra.mxu0 %v5929
        %5939 = vmatpush.bf16.msra.mxu0 %v5928
        %5940 = vmatpush.bf16.msra.mxu0 %v5927
        %5941 = vmatpush.bf16.msra.mxu0 %v5926
        %5942 = vmatpush.bf16.msra.mxu0 %v5925
        %5943 = vmatpush.bf16.msra.mxu0 %v5924
        %5944 = vmatpush.bf16.msra.mxu0 %v5923
        %5945 = vmatpush.bf16.msra.mxu0 %v5922
        %5946 = vmatmul.bf16.gmra.mxu0 %v5872
        %v5947 = vpop.f32.mrf.mxu0
        %v5948 = vadd.f32 0.0, %v5947
        %v5949 = vpop.f32.mrf.mxu0
        %5950 = vdwg.mxu0
        %v5951 = vadd.f32 %v5869, %v5948
        %s5952 = scalar_lea.vmem [#allocation2], 5
        %v5953 = vld [vmem:[%s5952] ss:$2 sm:$0x1]
        %v5954 = vpack.c.bf16 %v5953, %v5953
        %s5955 = scalar_lea.vmem [#allocation4], 3776
        %v5956 = vld [vmem:[%s5955] sm:$0xf]
        %v5957 = vld [vmem:[%s5955 + $0x4] sm:$0xf]
        %v5958 = vld [vmem:[%s5955 + $0x8] sm:$0xf]
        %v5959 = vld [vmem:[%s5955 + $0xc] sm:$0xf]
        %v5960 = vld [vmem:[%s5955 + $0x10] sm:$0xf]
        %v5961 = vld [vmem:[%s5955 + $0x14] sm:$0xf]
        %v5962 = vld [vmem:[%s5955 + $0x18] sm:$0xf]
        %v5963 = vld [vmem:[%s5955 + $0x1c] sm:$0xf]
        %v5964 = vld [vmem:[%s5955 + $0x20] sm:$0xf]
        %v5965 = vld [vmem:[%s5955 + $0x24] sm:$0xf]
        %v5966 = vld [vmem:[%s5955 + $0x28] sm:$0xf]
        %v5967 = vld [vmem:[%s5955 + $0x2c] sm:$0xf]
        %v5968 = vld [vmem:[%s5955 + $0x30] sm:$0xf]
        %v5969 = vld [vmem:[%s5955 + $0x34] sm:$0xf]
        %v5970 = vld [vmem:[%s5955 + $0x38] sm:$0xf]
        %v5971 = vld [vmem:[%s5955 + $0x3c] sm:$0xf]
        %v5988 = vunpack.c.l.b16 %v5956
        %v5989 = vunpack.c.l.b16 %v5957
        %v5990 = vunpack.c.l.b16 %v5958
        %v5991 = vunpack.c.l.b16 %v5959
        %v5992 = vunpack.c.l.b16 %v5960
        %v5993 = vunpack.c.l.b16 %v5961
        %v5994 = vunpack.c.l.b16 %v5962
        %v5995 = vunpack.c.l.b16 %v5963
        %v5996 = vunpack.c.l.b16 %v5964
        %v5997 = vunpack.c.l.b16 %v5965
        %v5998 = vunpack.c.l.b16 %v5966
        %v5999 = vunpack.c.l.b16 %v5967
        %v6000 = vunpack.c.l.b16 %v5968
        %v6001 = vunpack.c.l.b16 %v5969
        %v6002 = vunpack.c.l.b16 %v5970
        %v6003 = vunpack.c.l.b16 %v5971
        %v6004 = vpack.c.b16 %v5989, %v5988
        %v6005 = vpack.c.b16 %v5991, %v5990
        %v6006 = vpack.c.b16 %v5993, %v5992
        %v6007 = vpack.c.b16 %v5995, %v5994
        %v6008 = vpack.c.b16 %v5997, %v5996
        %v6009 = vpack.c.b16 %v5999, %v5998
        %v6010 = vpack.c.b16 %v6001, %v6000
        %v6011 = vpack.c.b16 %v6003, %v6002
        %6020 = vmatpush.bf16.msra.mxu0 %v6011
        %6021 = vmatpush.bf16.msra.mxu0 %v6010
        %6022 = vmatpush.bf16.msra.mxu0 %v6009
        %6023 = vmatpush.bf16.msra.mxu0 %v6008
        %6024 = vmatpush.bf16.msra.mxu0 %v6007
        %6025 = vmatpush.bf16.msra.mxu0 %v6006
        %6026 = vmatpush.bf16.msra.mxu0 %v6005
        %6027 = vmatpush.bf16.msra.mxu0 %v6004
        %6028 = vmatmul.bf16.gmra.mxu0 %v5954
        %v6029 = vpop.f32.mrf.mxu0
        %v6030 = vadd.f32 0.0, %v6029
        %v6031 = vpop.f32.mrf.mxu0
        %6032 = vdwg.mxu0
        %v6033 = vadd.f32 %v5951, %v6030
        %s6034 = scalar_lea.vmem [#allocation2], 6
        %v6035 = vld [vmem:[%s6034] ss:$2 sm:$0x1]
        %v6036 = vpack.c.bf16 %v6035, %v6035
        %s6037 = scalar_lea.vmem [#allocation4], 3840
        %v6038 = vld [vmem:[%s6037] sm:$0xf]
        %v6039 = vld [vmem:[%s6037 + $0x4] sm:$0xf]
        %v6040 = vld [vmem:[%s6037 + $0x8] sm:$0xf]
        %v6041 = vld [vmem:[%s6037 + $0xc] sm:$0xf]
        %v6042 = vld [vmem:[%s6037 + $0x10] sm:$0xf]
        %v6043 = vld [vmem:[%s6037 + $0x14] sm:$0xf]
        %v6044 = vld [vmem:[%s6037 + $0x18] sm:$0xf]
        %v6045 = vld [vmem:[%s6037 + $0x1c] sm:$0xf]
        %v6046 = vld [vmem:[%s6037 + $0x20] sm:$0xf]
        %v6047 = vld [vmem:[%s6037 + $0x24] sm:$0xf]
        %v6048 = vld [vmem:[%s6037 + $0x28] sm:$0xf]
        %v6049 = vld [vmem:[%s6037 + $0x2c] sm:$0xf]
        %v6050 = vld [vmem:[%s6037 + $0x30] sm:$0xf]
        %v6051 = vld [vmem:[%s6037 + $0x34] sm:$0xf]
        %v6052 = vld [vmem:[%s6037 + $0x38] sm:$0xf]
        %v6053 = vld [vmem:[%s6037 + $0x3c] sm:$0xf]
        %v6070 = vunpack.c.l.b16 %v6038
        %v6071 = vunpack.c.l.b16 %v6039
        %v6072 = vunpack.c.l.b16 %v6040
        %v6073 = vunpack.c.l.b16 %v6041
        %v6074 = vunpack.c.l.b16 %v6042
        %v6075 = vunpack.c.l.b16 %v6043
        %v6076 = vunpack.c.l.b16 %v6044
        %v6077 = vunpack.c.l.b16 %v6045
        %v6078 = vunpack.c.l.b16 %v6046
        %v6079 = vunpack.c.l.b16 %v6047
        %v6080 = vunpack.c.l.b16 %v6048
        %v6081 = vunpack.c.l.b16 %v6049
        %v6082 = vunpack.c.l.b16 %v6050
        %v6083 = vunpack.c.l.b16 %v6051
        %v6084 = vunpack.c.l.b16 %v6052
        %v6085 = vunpack.c.l.b16 %v6053
        %v6086 = vpack.c.b16 %v6071, %v6070
        %v6087 = vpack.c.b16 %v6073, %v6072
        %v6088 = vpack.c.b16 %v6075, %v6074
        %v6089 = vpack.c.b16 %v6077, %v6076
        %v6090 = vpack.c.b16 %v6079, %v6078
        %v6091 = vpack.c.b16 %v6081, %v6080
        %v6092 = vpack.c.b16 %v6083, %v6082
        %v6093 = vpack.c.b16 %v6085, %v6084
        %6102 = vmatpush.bf16.msra.mxu0 %v6093
        %6103 = vmatpush.bf16.msra.mxu0 %v6092
        %6104 = vmatpush.bf16.msra.mxu0 %v6091
        %6105 = vmatpush.bf16.msra.mxu0 %v6090
        %6106 = vmatpush.bf16.msra.mxu0 %v6089
        %6107 = vmatpush.bf16.msra.mxu0 %v6088
        %6108 = vmatpush.bf16.msra.mxu0 %v6087
        %6109 = vmatpush.bf16.msra.mxu0 %v6086
        %6110 = vmatmul.bf16.gmra.mxu0 %v6036
        %v6111 = vpop.f32.mrf.mxu0
        %v6112 = vadd.f32 0.0, %v6111
        %v6113 = vpop.f32.mrf.mxu0
        %6114 = vdwg.mxu0
        %v6115 = vadd.f32 %v6033, %v6112
        %s6116 = scalar_lea.vmem [#allocation2], 8
        %v6117 = vld [vmem:[%s6116] ss:$2 sm:$0x1]
        %v6118 = vpack.c.bf16 %v6117, %v6117
        %s6119 = scalar_lea.vmem [#allocation4], 3904
        %v6120 = vld [vmem:[%s6119] sm:$0xf]
        %v6121 = vld [vmem:[%s6119 + $0x4] sm:$0xf]
        %v6122 = vld [vmem:[%s6119 + $0x8] sm:$0xf]
        %v6123 = vld [vmem:[%s6119 + $0xc] sm:$0xf]
        %v6124 = vld [vmem:[%s6119 + $0x10] sm:$0xf]
        %v6125 = vld [vmem:[%s6119 + $0x14] sm:$0xf]
        %v6126 = vld [vmem:[%s6119 + $0x18] sm:$0xf]
        %v6127 = vld [vmem:[%s6119 + $0x1c] sm:$0xf]
        %v6128 = vld [vmem:[%s6119 + $0x20] sm:$0xf]
        %v6129 = vld [vmem:[%s6119 + $0x24] sm:$0xf]
        %v6130 = vld [vmem:[%s6119 + $0x28] sm:$0xf]
        %v6131 = vld [vmem:[%s6119 + $0x2c] sm:$0xf]
        %v6132 = vld [vmem:[%s6119 + $0x30] sm:$0xf]
        %v6133 = vld [vmem:[%s6119 + $0x34] sm:$0xf]
        %v6134 = vld [vmem:[%s6119 + $0x38] sm:$0xf]
        %v6135 = vld [vmem:[%s6119 + $0x3c] sm:$0xf]
        %v6152 = vunpack.c.l.b16 %v6120
        %v6153 = vunpack.c.l.b16 %v6121
        %v6154 = vunpack.c.l.b16 %v6122
        %v6155 = vunpack.c.l.b16 %v6123
        %v6156 = vunpack.c.l.b16 %v6124
        %v6157 = vunpack.c.l.b16 %v6125
        %v6158 = vunpack.c.l.b16 %v6126
        %v6159 = vunpack.c.l.b16 %v6127
        %v6160 = vunpack.c.l.b16 %v6128
        %v6161 = vunpack.c.l.b16 %v6129
        %v6162 = vunpack.c.l.b16 %v6130
        %v6163 = vunpack.c.l.b16 %v6131
        %v6164 = vunpack.c.l.b16 %v6132
        %v6165 = vunpack.c.l.b16 %v6133
        %v6166 = vunpack.c.l.b16 %v6134
        %v6167 = vunpack.c.l.b16 %v6135
        %v6168 = vpack.c.b16 %v6153, %v6152
        %v6169 = vpack.c.b16 %v6155, %v6154
        %v6170 = vpack.c.b16 %v6157, %v6156
        %v6171 = vpack.c.b16 %v6159, %v6158
        %v6172 = vpack.c.b16 %v6161, %v6160
        %v6173 = vpack.c.b16 %v6163, %v6162
        %v6174 = vpack.c.b16 %v6165, %v6164
        %v6175 = vpack.c.b16 %v6167, %v6166
        %6184 = vmatpush.bf16.msra.mxu0 %v6175
        %6185 = vmatpush.bf16.msra.mxu0 %v6174
        %6186 = vmatpush.bf16.msra.mxu0 %v6173
        %6187 = vmatpush.bf16.msra.mxu0 %v6172
        %6188 = vmatpush.bf16.msra.mxu0 %v6171
        %6189 = vmatpush.bf16.msra.mxu0 %v6170
        %6190 = vmatpush.bf16.msra.mxu0 %v6169
        %6191 = vmatpush.bf16.msra.mxu0 %v6168
        %6192 = vmatmul.bf16.gmra.mxu0 %v6118
        %v6193 = vpop.f32.mrf.mxu0
        %v6194 = vadd.f32 0.0, %v6193
        %v6195 = vpop.f32.mrf.mxu0
        %6196 = vdwg.mxu0
        %v6197 = vadd.f32 %v6115, %v6194
        %s6198 = scalar_lea.vmem [#allocation2], 9
        %v6199 = vld [vmem:[%s6198] ss:$2 sm:$0x1]
        %v6200 = vpack.c.bf16 %v6199, %v6199
        %s6201 = scalar_lea.vmem [#allocation4], 3968
        %v6202 = vld [vmem:[%s6201] sm:$0xf]
        %v6203 = vld [vmem:[%s6201 + $0x4] sm:$0xf]
        %v6204 = vld [vmem:[%s6201 + $0x8] sm:$0xf]
        %v6205 = vld [vmem:[%s6201 + $0xc] sm:$0xf]
        %v6206 = vld [vmem:[%s6201 + $0x10] sm:$0xf]
        %v6207 = vld [vmem:[%s6201 + $0x14] sm:$0xf]
        %v6208 = vld [vmem:[%s6201 + $0x18] sm:$0xf]
        %v6209 = vld [vmem:[%s6201 + $0x1c] sm:$0xf]
        %v6210 = vld [vmem:[%s6201 + $0x20] sm:$0xf]
        %v6211 = vld [vmem:[%s6201 + $0x24] sm:$0xf]
        %v6212 = vld [vmem:[%s6201 + $0x28] sm:$0xf]
        %v6213 = vld [vmem:[%s6201 + $0x2c] sm:$0xf]
        %v6214 = vld [vmem:[%s6201 + $0x30] sm:$0xf]
        %v6215 = vld [vmem:[%s6201 + $0x34] sm:$0xf]
        %v6216 = vld [vmem:[%s6201 + $0x38] sm:$0xf]
        %v6217 = vld [vmem:[%s6201 + $0x3c] sm:$0xf]
        %v6234 = vunpack.c.l.b16 %v6202
        %v6235 = vunpack.c.l.b16 %v6203
        %v6236 = vunpack.c.l.b16 %v6204
        %v6237 = vunpack.c.l.b16 %v6205
        %v6238 = vunpack.c.l.b16 %v6206
        %v6239 = vunpack.c.l.b16 %v6207
        %v6240 = vunpack.c.l.b16 %v6208
        %v6241 = vunpack.c.l.b16 %v6209
        %v6242 = vunpack.c.l.b16 %v6210
        %v6243 = vunpack.c.l.b16 %v6211
        %v6244 = vunpack.c.l.b16 %v6212
        %v6245 = vunpack.c.l.b16 %v6213
        %v6246 = vunpack.c.l.b16 %v6214
        %v6247 = vunpack.c.l.b16 %v6215
        %v6248 = vunpack.c.l.b16 %v6216
        %v6249 = vunpack.c.l.b16 %v6217
        %v6250 = vpack.c.b16 %v6235, %v6234
        %v6251 = vpack.c.b16 %v6237, %v6236
        %v6252 = vpack.c.b16 %v6239, %v6238
        %v6253 = vpack.c.b16 %v6241, %v6240
        %v6254 = vpack.c.b16 %v6243, %v6242
        %v6255 = vpack.c.b16 %v6245, %v6244
        %v6256 = vpack.c.b16 %v6247, %v6246
        %v6257 = vpack.c.b16 %v6249, %v6248
        %6266 = vmatpush.bf16.msra.mxu0 %v6257
        %6267 = vmatpush.bf16.msra.mxu0 %v6256
        %6268 = vmatpush.bf16.msra.mxu0 %v6255
        %6269 = vmatpush.bf16.msra.mxu0 %v6254
        %6270 = vmatpush.bf16.msra.mxu0 %v6253
        %6271 = vmatpush.bf16.msra.mxu0 %v6252
        %6272 = vmatpush.bf16.msra.mxu0 %v6251
        %6273 = vmatpush.bf16.msra.mxu0 %v6250
        %6274 = vmatmul.bf16.gmra.mxu0 %v6200
        %v6275 = vpop.f32.mrf.mxu0
        %v6276 = vadd.f32 0.0, %v6275
        %v6277 = vpop.f32.mrf.mxu0
        %6278 = vdwg.mxu0
        %v6279 = vadd.f32 %v6197, %v6276
        %v6280 = vld [vmem:[%s833] ss:$2 sm:$0x1]
        %v6281 = vpack.c.bf16 %v6280, %v6280
        %s6282 = scalar_lea.vmem [#allocation4], 4032
        %v6283 = vld [vmem:[%s6282] sm:$0xf]
        %v6284 = vld [vmem:[%s6282 + $0x4] sm:$0xf]
        %v6285 = vld [vmem:[%s6282 + $0x8] sm:$0xf]
        %v6286 = vld [vmem:[%s6282 + $0xc] sm:$0xf]
        %v6287 = vld [vmem:[%s6282 + $0x10] sm:$0xf]
        %v6288 = vld [vmem:[%s6282 + $0x14] sm:$0xf]
        %v6289 = vld [vmem:[%s6282 + $0x18] sm:$0xf]
        %v6290 = vld [vmem:[%s6282 + $0x1c] sm:$0xf]
        %v6291 = vld [vmem:[%s6282 + $0x20] sm:$0xf]
        %v6292 = vld [vmem:[%s6282 + $0x24] sm:$0xf]
        %v6293 = vld [vmem:[%s6282 + $0x28] sm:$0xf]
        %v6294 = vld [vmem:[%s6282 + $0x2c] sm:$0xf]
        %v6295 = vld [vmem:[%s6282 + $0x30] sm:$0xf]
        %v6296 = vld [vmem:[%s6282 + $0x34] sm:$0xf]
        %v6297 = vld [vmem:[%s6282 + $0x38] sm:$0xf]
        %v6298 = vld [vmem:[%s6282 + $0x3c] sm:$0xf]
        %v6315 = vunpack.c.l.b16 %v6283
        %v6316 = vunpack.c.l.b16 %v6284
        %v6317 = vunpack.c.l.b16 %v6285
        %v6318 = vunpack.c.l.b16 %v6286
        %v6319 = vunpack.c.l.b16 %v6287
        %v6320 = vunpack.c.l.b16 %v6288
        %v6321 = vunpack.c.l.b16 %v6289
        %v6322 = vunpack.c.l.b16 %v6290
        %v6323 = vunpack.c.l.b16 %v6291
        %v6324 = vunpack.c.l.b16 %v6292
        %v6325 = vunpack.c.l.b16 %v6293
        %v6326 = vunpack.c.l.b16 %v6294
        %v6327 = vunpack.c.l.b16 %v6295
        %v6328 = vunpack.c.l.b16 %v6296
        %v6329 = vunpack.c.l.b16 %v6297
        %v6330 = vunpack.c.l.b16 %v6298
        %v6331 = vpack.c.b16 %v6316, %v6315
        %v6332 = vpack.c.b16 %v6318, %v6317
        %v6333 = vpack.c.b16 %v6320, %v6319
        %v6334 = vpack.c.b16 %v6322, %v6321
        %v6335 = vpack.c.b16 %v6324, %v6323
        %v6336 = vpack.c.b16 %v6326, %v6325
        %v6337 = vpack.c.b16 %v6328, %v6327
        %v6338 = vpack.c.b16 %v6330, %v6329
        %6347 = vmatpush.bf16.msra.mxu0 %v6338
        %6348 = vmatpush.bf16.msra.mxu0 %v6337
        %6349 = vmatpush.bf16.msra.mxu0 %v6336
        %6350 = vmatpush.bf16.msra.mxu0 %v6335
        %6351 = vmatpush.bf16.msra.mxu0 %v6334
        %6352 = vmatpush.bf16.msra.mxu0 %v6333
        %6353 = vmatpush.bf16.msra.mxu0 %v6332
        %6354 = vmatpush.bf16.msra.mxu0 %v6331
        %6355 = vmatmul.bf16.gmra.mxu0 %v6281
        %v6356 = vpop.f32.mrf.mxu0
        %v6357 = vadd.f32 0.0, %v6356
        %v6358 = vpop.f32.mrf.mxu0
        %6359 = vdwg.mxu0
        %v6360 = vadd.f32 %v6279, %v6357
        %v6361 = vld [vmem:[#allocation6 + $0x7] sm:$0x1]
        %v6362 = vadd.f32 %v6360, %v6361
        %v6363 = vxor.u32 %v6362, 2147483648
        %v6364 = vmul.f32 %v6363, 1.442695
        %v6365 = vpow.pop %v6364
        %v6366 = vadd.f32 %v6365, 1.0
        %v6367 = vrcp.pop %v6366
        %v6368 = vmul.f32 %v6366, %v6367
        %v6369 = vsub.f32 1.0, %v6368
        %v6370 = vmul.f32 %v6367, %v6369
        %v6371 = vadd.f32 %v6367, %v6370
        %vm6372 = vweird.f32 %v6366
        %vm6373 = vweird.f32 %v6367
        %vm6374 = vmor %vm6372, %vm6373
        %v6375 = vsel %vm6374, %v6367, %v6371
        %v6376 = vand.u32 2147483647, %v6366
        %vm6377 = vcmp.eq.f32.partialorder %v6376, 8.507059e+37
        %v6378 = vand.u32 %v6366, 2147483648
        %v6379 = vor.u32 1.1754944e-38, %v6378
        %v6380 = vsel %vm6377, %v6379, %v6375
        %v6381 = vmul.f32 1.0, %v6380
        %v6382 = vmul.f32 %v6362, %v6381
        %6383 = vst [vmem:[#allocation3 + $0x4] sm:$0x1] %v6382
        %6384 = vst [vmem:[#allocation2] sm:$0xff] 0.0
        %v6385 = vld [vmem:[#allocation3] sm:$0x1]
        %v6386 = vpack.c.bf16 %v6385, %v6385
        %s6387 = scalar_lea.vmem [#allocation4], 4096
        %v6388 = vld [vmem:[%s6387] sm:$0xf]
        %v6389 = vld [vmem:[%s6387 + $0x4] sm:$0xf]
        %v6390 = vld [vmem:[%s6387 + $0x8] sm:$0xf]
        %v6391 = vld [vmem:[%s6387 + $0xc] sm:$0xf]
        %v6392 = vld [vmem:[%s6387 + $0x10] sm:$0xf]
        %v6393 = vld [vmem:[%s6387 + $0x14] sm:$0xf]
        %v6394 = vld [vmem:[%s6387 + $0x18] sm:$0xf]
        %v6395 = vld [vmem:[%s6387 + $0x1c] sm:$0xf]
        %v6396 = vld [vmem:[%s6387 + $0x20] sm:$0xf]
        %v6397 = vld [vmem:[%s6387 + $0x24] sm:$0xf]
        %v6398 = vld [vmem:[%s6387 + $0x28] sm:$0xf]
        %v6399 = vld [vmem:[%s6387 + $0x2c] sm:$0xf]
        %v6400 = vld [vmem:[%s6387 + $0x30] sm:$0xf]
        %v6401 = vld [vmem:[%s6387 + $0x34] sm:$0xf]
        %v6402 = vld [vmem:[%s6387 + $0x38] sm:$0xf]
        %v6403 = vld [vmem:[%s6387 + $0x3c] sm:$0xf]
        %v6404 = vld [vmem:[#allocation3 + $0x1] sm:$0x1]
        %v6405 = vpack.c.bf16 %v6404, %v6404
        %s6406 = scalar_lea.vmem [#allocation4], 4160
        %v6407 = vld [vmem:[%s6406] sm:$0xf]
        %v6408 = vld [vmem:[%s6406 + $0x4] sm:$0xf]
        %v6409 = vld [vmem:[%s6406 + $0x8] sm:$0xf]
        %v6410 = vld [vmem:[%s6406 + $0xc] sm:$0xf]
        %v6411 = vld [vmem:[%s6406 + $0x10] sm:$0xf]
        %v6412 = vld [vmem:[%s6406 + $0x14] sm:$0xf]
        %v6413 = vld [vmem:[%s6406 + $0x18] sm:$0xf]
        %v6414 = vld [vmem:[%s6406 + $0x1c] sm:$0xf]
        %v6415 = vld [vmem:[%s6406 + $0x20] sm:$0xf]
        %v6416 = vld [vmem:[%s6406 + $0x24] sm:$0xf]
        %v6417 = vld [vmem:[%s6406 + $0x28] sm:$0xf]
        %v6418 = vld [vmem:[%s6406 + $0x2c] sm:$0xf]
        %v6419 = vld [vmem:[%s6406 + $0x30] sm:$0xf]
        %v6420 = vld [vmem:[%s6406 + $0x34] sm:$0xf]
        %v6421 = vld [vmem:[%s6406 + $0x38] sm:$0xf]
        %v6422 = vld [vmem:[%s6406 + $0x3c] sm:$0xf]
        %v6439 = vunpack.c.l.b16 %v6407
        %v6440 = vunpack.c.l.b16 %v6408
        %v6441 = vunpack.c.l.b16 %v6409
        %v6442 = vunpack.c.l.b16 %v6410
        %v6443 = vunpack.c.l.b16 %v6411
        %v6444 = vunpack.c.l.b16 %v6412
        %v6445 = vunpack.c.l.b16 %v6413
        %v6446 = vunpack.c.l.b16 %v6414
        %v6447 = vunpack.c.l.b16 %v6415
        %v6448 = vunpack.c.l.b16 %v6416
        %v6449 = vunpack.c.l.b16 %v6417
        %v6450 = vunpack.c.l.b16 %v6418
        %v6451 = vunpack.c.l.b16 %v6419
        %v6452 = vunpack.c.l.b16 %v6420
        %v6453 = vunpack.c.l.b16 %v6421
        %v6454 = vunpack.c.l.b16 %v6422
        %v6455 = vpack.c.b16 %v6440, %v6439
        %v6456 = vpack.c.b16 %v6442, %v6441
        %v6457 = vpack.c.b16 %v6444, %v6443
        %v6458 = vpack.c.b16 %v6446, %v6445
        %v6459 = vpack.c.b16 %v6448, %v6447
        %v6460 = vpack.c.b16 %v6450, %v6449
        %v6461 = vpack.c.b16 %v6452, %v6451
        %v6462 = vpack.c.b16 %v6454, %v6453
        %6471 = vmatpush.bf16.msra.mxu0 %v6462
        %6472 = vmatpush.bf16.msra.mxu0 %v6461
        %6473 = vmatpush.bf16.msra.mxu0 %v6460
        %6474 = vmatpush.bf16.msra.mxu0 %v6459
        %6475 = vmatpush.bf16.msra.mxu0 %v6458
        %6476 = vmatpush.bf16.msra.mxu0 %v6457
        %6477 = vmatpush.bf16.msra.mxu0 %v6456
        %6478 = vmatpush.bf16.msra.mxu0 %v6455
        %6479 = vmatmul.bf16.gmra.mxu0 %v6405
        %v6480 = vpop.f32.mrf.mxu0
        %v6481 = vadd.f32 0.0, %v6480
        %v6482 = vpop.f32.mrf.mxu0
        %6483 = vdwg.mxu0
        %v6500 = vunpack.c.l.b16 %v6388
        %v6501 = vunpack.c.l.b16 %v6389
        %v6502 = vunpack.c.l.b16 %v6390
        %v6503 = vunpack.c.l.b16 %v6391
        %v6504 = vunpack.c.l.b16 %v6392
        %v6505 = vunpack.c.l.b16 %v6393
        %v6506 = vunpack.c.l.b16 %v6394
        %v6507 = vunpack.c.l.b16 %v6395
        %v6508 = vunpack.c.l.b16 %v6396
        %v6509 = vunpack.c.l.b16 %v6397
        %v6510 = vunpack.c.l.b16 %v6398
        %v6511 = vunpack.c.l.b16 %v6399
        %v6512 = vunpack.c.l.b16 %v6400
        %v6513 = vunpack.c.l.b16 %v6401
        %v6514 = vunpack.c.l.b16 %v6402
        %v6515 = vunpack.c.l.b16 %v6403
        %v6516 = vpack.c.b16 %v6501, %v6500
        %v6517 = vpack.c.b16 %v6503, %v6502
        %v6518 = vpack.c.b16 %v6505, %v6504
        %v6519 = vpack.c.b16 %v6507, %v6506
        %v6520 = vpack.c.b16 %v6509, %v6508
        %v6521 = vpack.c.b16 %v6511, %v6510
        %v6522 = vpack.c.b16 %v6513, %v6512
        %v6523 = vpack.c.b16 %v6515, %v6514
        %6532 = vmatpush.bf16.msra.mxu0 %v6523
        %6533 = vmatpush.bf16.msra.mxu0 %v6522
        %6534 = vmatpush.bf16.msra.mxu0 %v6521
        %6535 = vmatpush.bf16.msra.mxu0 %v6520
        %6536 = vmatpush.bf16.msra.mxu0 %v6519
        %6537 = vmatpush.bf16.msra.mxu0 %v6518
        %6538 = vmatpush.bf16.msra.mxu0 %v6517
        %6539 = vmatpush.bf16.msra.mxu0 %v6516
        %6540 = vmatmul.bf16.gmra.mxu0 %v6386
        %v6541 = vpop.f32.mrf.mxu0
        %v6542 = vadd.f32 %v6481, %v6541
        %v6543 = vpop.f32.mrf.mxu0
        %6544 = vdwg.mxu0
        %v6545 = vld [vmem:[#allocation3 + $0x2] sm:$0x1]
        %v6546 = vpack.c.bf16 %v6545, %v6545
        %s6547 = scalar_lea.vmem [#allocation4], 4224
        %v6548 = vld [vmem:[%s6547] sm:$0xf]
        %v6549 = vld [vmem:[%s6547 + $0x4] sm:$0xf]
        %v6550 = vld [vmem:[%s6547 + $0x8] sm:$0xf]
        %v6551 = vld [vmem:[%s6547 + $0xc] sm:$0xf]
        %v6552 = vld [vmem:[%s6547 + $0x10] sm:$0xf]
        %v6553 = vld [vmem:[%s6547 + $0x14] sm:$0xf]
        %v6554 = vld [vmem:[%s6547 + $0x18] sm:$0xf]
        %v6555 = vld [vmem:[%s6547 + $0x1c] sm:$0xf]
        %v6556 = vld [vmem:[%s6547 + $0x20] sm:$0xf]
        %v6557 = vld [vmem:[%s6547 + $0x24] sm:$0xf]
        %v6558 = vld [vmem:[%s6547 + $0x28] sm:$0xf]
        %v6559 = vld [vmem:[%s6547 + $0x2c] sm:$0xf]
        %v6560 = vld [vmem:[%s6547 + $0x30] sm:$0xf]
        %v6561 = vld [vmem:[%s6547 + $0x34] sm:$0xf]
        %v6562 = vld [vmem:[%s6547 + $0x38] sm:$0xf]
        %v6563 = vld [vmem:[%s6547 + $0x3c] sm:$0xf]
        %v6580 = vunpack.c.l.b16 %v6548
        %v6581 = vunpack.c.l.b16 %v6549
        %v6582 = vunpack.c.l.b16 %v6550
        %v6583 = vunpack.c.l.b16 %v6551
        %v6584 = vunpack.c.l.b16 %v6552
        %v6585 = vunpack.c.l.b16 %v6553
        %v6586 = vunpack.c.l.b16 %v6554
        %v6587 = vunpack.c.l.b16 %v6555
        %v6588 = vunpack.c.l.b16 %v6556
        %v6589 = vunpack.c.l.b16 %v6557
        %v6590 = vunpack.c.l.b16 %v6558
        %v6591 = vunpack.c.l.b16 %v6559
        %v6592 = vunpack.c.l.b16 %v6560
        %v6593 = vunpack.c.l.b16 %v6561
        %v6594 = vunpack.c.l.b16 %v6562
        %v6595 = vunpack.c.l.b16 %v6563
        %v6596 = vpack.c.b16 %v6581, %v6580
        %v6597 = vpack.c.b16 %v6583, %v6582
        %v6598 = vpack.c.b16 %v6585, %v6584
        %v6599 = vpack.c.b16 %v6587, %v6586
        %v6600 = vpack.c.b16 %v6589, %v6588
        %v6601 = vpack.c.b16 %v6591, %v6590
        %v6602 = vpack.c.b16 %v6593, %v6592
        %v6603 = vpack.c.b16 %v6595, %v6594
        %6612 = vmatpush.bf16.msra.mxu0 %v6603
        %6613 = vmatpush.bf16.msra.mxu0 %v6602
        %6614 = vmatpush.bf16.msra.mxu0 %v6601
        %6615 = vmatpush.bf16.msra.mxu0 %v6600
        %6616 = vmatpush.bf16.msra.mxu0 %v6599
        %6617 = vmatpush.bf16.msra.mxu0 %v6598
        %6618 = vmatpush.bf16.msra.mxu0 %v6597
        %6619 = vmatpush.bf16.msra.mxu0 %v6596
        %6620 = vmatmul.bf16.gmra.mxu0 %v6546
        %v6621 = vpop.f32.mrf.mxu0
        %v6622 = vadd.f32 0.0, %v6621
        %v6623 = vpop.f32.mrf.mxu0
        %6624 = vdwg.mxu0
        %v6625 = vadd.f32 %v6542, %v6622
        %v6626 = vld [vmem:[#allocation3 + $0x3] sm:$0x1]
        %v6627 = vpack.c.bf16 %v6626, %v6626
        %s6628 = scalar_lea.vmem [#allocation4], 4288
        %v6629 = vld [vmem:[%s6628] sm:$0xf]
        %v6630 = vld [vmem:[%s6628 + $0x4] sm:$0xf]
        %v6631 = vld [vmem:[%s6628 + $0x8] sm:$0xf]
        %v6632 = vld [vmem:[%s6628 + $0xc] sm:$0xf]
        %v6633 = vld [vmem:[%s6628 + $0x10] sm:$0xf]
        %v6634 = vld [vmem:[%s6628 + $0x14] sm:$0xf]
        %v6635 = vld [vmem:[%s6628 + $0x18] sm:$0xf]
        %v6636 = vld [vmem:[%s6628 + $0x1c] sm:$0xf]
        %v6637 = vld [vmem:[%s6628 + $0x20] sm:$0xf]
        %v6638 = vld [vmem:[%s6628 + $0x24] sm:$0xf]
        %v6639 = vld [vmem:[%s6628 + $0x28] sm:$0xf]
        %v6640 = vld [vmem:[%s6628 + $0x2c] sm:$0xf]
        %v6641 = vld [vmem:[%s6628 + $0x30] sm:$0xf]
        %v6642 = vld [vmem:[%s6628 + $0x34] sm:$0xf]
        %v6643 = vld [vmem:[%s6628 + $0x38] sm:$0xf]
        %v6644 = vld [vmem:[%s6628 + $0x3c] sm:$0xf]
        %v6661 = vunpack.c.l.b16 %v6629
        %v6662 = vunpack.c.l.b16 %v6630
        %v6663 = vunpack.c.l.b16 %v6631
        %v6664 = vunpack.c.l.b16 %v6632
        %v6665 = vunpack.c.l.b16 %v6633
        %v6666 = vunpack.c.l.b16 %v6634
        %v6667 = vunpack.c.l.b16 %v6635
        %v6668 = vunpack.c.l.b16 %v6636
        %v6669 = vunpack.c.l.b16 %v6637
        %v6670 = vunpack.c.l.b16 %v6638
        %v6671 = vunpack.c.l.b16 %v6639
        %v6672 = vunpack.c.l.b16 %v6640
        %v6673 = vunpack.c.l.b16 %v6641
        %v6674 = vunpack.c.l.b16 %v6642
        %v6675 = vunpack.c.l.b16 %v6643
        %v6676 = vunpack.c.l.b16 %v6644
        %v6677 = vpack.c.b16 %v6662, %v6661
        %v6678 = vpack.c.b16 %v6664, %v6663
        %v6679 = vpack.c.b16 %v6666, %v6665
        %v6680 = vpack.c.b16 %v6668, %v6667
        %v6681 = vpack.c.b16 %v6670, %v6669
        %v6682 = vpack.c.b16 %v6672, %v6671
        %v6683 = vpack.c.b16 %v6674, %v6673
        %v6684 = vpack.c.b16 %v6676, %v6675
        %6693 = vmatpush.bf16.msra.mxu0 %v6684
        %6694 = vmatpush.bf16.msra.mxu0 %v6683
        %6695 = vmatpush.bf16.msra.mxu0 %v6682
        %6696 = vmatpush.bf16.msra.mxu0 %v6681
        %6697 = vmatpush.bf16.msra.mxu0 %v6680
        %6698 = vmatpush.bf16.msra.mxu0 %v6679
        %6699 = vmatpush.bf16.msra.mxu0 %v6678
        %6700 = vmatpush.bf16.msra.mxu0 %v6677
        %6701 = vmatmul.bf16.gmra.mxu0 %v6627
        %v6702 = vpop.f32.mrf.mxu0
        %v6703 = vadd.f32 0.0, %v6702
        %v6704 = vpop.f32.mrf.mxu0
        %6705 = vdwg.mxu0
        %v6706 = vadd.f32 %v6625, %v6703
        %v6707 = vld [vmem:[#allocation3 + $0x4] sm:$0x1]
        %v6708 = vpack.c.bf16 %v6707, %v6707
        %s6709 = scalar_lea.vmem [#allocation4], 4352
        %v6710 = vld [vmem:[%s6709] sm:$0xf]
        %v6711 = vld [vmem:[%s6709 + $0x4] sm:$0xf]
        %v6712 = vld [vmem:[%s6709 + $0x8] sm:$0xf]
        %v6713 = vld [vmem:[%s6709 + $0xc] sm:$0xf]
        %v6714 = vld [vmem:[%s6709 + $0x10] sm:$0xf]
        %v6715 = vld [vmem:[%s6709 + $0x14] sm:$0xf]
        %v6716 = vld [vmem:[%s6709 + $0x18] sm:$0xf]
        %v6717 = vld [vmem:[%s6709 + $0x1c] sm:$0xf]
        %v6718 = vld [vmem:[%s6709 + $0x20] sm:$0xf]
        %v6719 = vld [vmem:[%s6709 + $0x24] sm:$0xf]
        %v6720 = vld [vmem:[%s6709 + $0x28] sm:$0xf]
        %v6721 = vld [vmem:[%s6709 + $0x2c] sm:$0xf]
        %v6722 = vld [vmem:[%s6709 + $0x30] sm:$0xf]
        %v6723 = vld [vmem:[%s6709 + $0x34] sm:$0xf]
        %v6724 = vld [vmem:[%s6709 + $0x38] sm:$0xf]
        %v6725 = vld [vmem:[%s6709 + $0x3c] sm:$0xf]
        %v6742 = vunpack.c.l.b16 %v6710
        %v6743 = vunpack.c.l.b16 %v6711
        %v6744 = vunpack.c.l.b16 %v6712
        %v6745 = vunpack.c.l.b16 %v6713
        %v6746 = vunpack.c.l.b16 %v6714
        %v6747 = vunpack.c.l.b16 %v6715
        %v6748 = vunpack.c.l.b16 %v6716
        %v6749 = vunpack.c.l.b16 %v6717
        %v6750 = vunpack.c.l.b16 %v6718
        %v6751 = vunpack.c.l.b16 %v6719
        %v6752 = vunpack.c.l.b16 %v6720
        %v6753 = vunpack.c.l.b16 %v6721
        %v6754 = vunpack.c.l.b16 %v6722
        %v6755 = vunpack.c.l.b16 %v6723
        %v6756 = vunpack.c.l.b16 %v6724
        %v6757 = vunpack.c.l.b16 %v6725
        %v6758 = vpack.c.b16 %v6743, %v6742
        %v6759 = vpack.c.b16 %v6745, %v6744
        %v6760 = vpack.c.b16 %v6747, %v6746
        %v6761 = vpack.c.b16 %v6749, %v6748
        %v6762 = vpack.c.b16 %v6751, %v6750
        %v6763 = vpack.c.b16 %v6753, %v6752
        %v6764 = vpack.c.b16 %v6755, %v6754
        %v6765 = vpack.c.b16 %v6757, %v6756
        %6774 = vmatpush.bf16.msra.mxu0 %v6765
        %6775 = vmatpush.bf16.msra.mxu0 %v6764
        %6776 = vmatpush.bf16.msra.mxu0 %v6763
        %6777 = vmatpush.bf16.msra.mxu0 %v6762
        %6778 = vmatpush.bf16.msra.mxu0 %v6761
        %6779 = vmatpush.bf16.msra.mxu0 %v6760
        %6780 = vmatpush.bf16.msra.mxu0 %v6759
        %6781 = vmatpush.bf16.msra.mxu0 %v6758
        %6782 = vmatmul.bf16.gmra.mxu0 %v6708
        %v6783 = vpop.f32.mrf.mxu0
        %v6784 = vadd.f32 0.0, %v6783
        %v6785 = vpop.f32.mrf.mxu0
        %6786 = vdwg.mxu0
        %v6787 = vadd.f32 %v6706, %v6784
        %v6788 = vld [vmem:[#allocation3 + $0x5] sm:$0x1]
        %v6789 = vpack.c.bf16 %v6788, %v6788
        %s6790 = scalar_lea.vmem [#allocation4], 4416
        %v6791 = vld [vmem:[%s6790] sm:$0xf]
        %v6792 = vld [vmem:[%s6790 + $0x4] sm:$0xf]
        %v6793 = vld [vmem:[%s6790 + $0x8] sm:$0xf]
        %v6794 = vld [vmem:[%s6790 + $0xc] sm:$0xf]
        %v6795 = vld [vmem:[%s6790 + $0x10] sm:$0xf]
        %v6796 = vld [vmem:[%s6790 + $0x14] sm:$0xf]
        %v6797 = vld [vmem:[%s6790 + $0x18] sm:$0xf]
        %v6798 = vld [vmem:[%s6790 + $0x1c] sm:$0xf]
        %v6799 = vld [vmem:[%s6790 + $0x20] sm:$0xf]
        %v6800 = vld [vmem:[%s6790 + $0x24] sm:$0xf]
        %v6801 = vld [vmem:[%s6790 + $0x28] sm:$0xf]
        %v6802 = vld [vmem:[%s6790 + $0x2c] sm:$0xf]
        %v6803 = vld [vmem:[%s6790 + $0x30] sm:$0xf]
        %v6804 = vld [vmem:[%s6790 + $0x34] sm:$0xf]
        %v6805 = vld [vmem:[%s6790 + $0x38] sm:$0xf]
        %v6806 = vld [vmem:[%s6790 + $0x3c] sm:$0xf]
        %v6823 = vunpack.c.l.b16 %v6791
        %v6824 = vunpack.c.l.b16 %v6792
        %v6825 = vunpack.c.l.b16 %v6793
        %v6826 = vunpack.c.l.b16 %v6794
        %v6827 = vunpack.c.l.b16 %v6795
        %v6828 = vunpack.c.l.b16 %v6796
        %v6829 = vunpack.c.l.b16 %v6797
        %v6830 = vunpack.c.l.b16 %v6798
        %v6831 = vunpack.c.l.b16 %v6799
        %v6832 = vunpack.c.l.b16 %v6800
        %v6833 = vunpack.c.l.b16 %v6801
        %v6834 = vunpack.c.l.b16 %v6802
        %v6835 = vunpack.c.l.b16 %v6803
        %v6836 = vunpack.c.l.b16 %v6804
        %v6837 = vunpack.c.l.b16 %v6805
        %v6838 = vunpack.c.l.b16 %v6806
        %v6839 = vpack.c.b16 %v6824, %v6823
        %v6840 = vpack.c.b16 %v6826, %v6825
        %v6841 = vpack.c.b16 %v6828, %v6827
        %v6842 = vpack.c.b16 %v6830, %v6829
        %v6843 = vpack.c.b16 %v6832, %v6831
        %v6844 = vpack.c.b16 %v6834, %v6833
        %v6845 = vpack.c.b16 %v6836, %v6835
        %v6846 = vpack.c.b16 %v6838, %v6837
        %6855 = vmatpush.bf16.msra.mxu0 %v6846
        %6856 = vmatpush.bf16.msra.mxu0 %v6845
        %6857 = vmatpush.bf16.msra.mxu0 %v6844
        %6858 = vmatpush.bf16.msra.mxu0 %v6843
        %6859 = vmatpush.bf16.msra.mxu0 %v6842
        %6860 = vmatpush.bf16.msra.mxu0 %v6841
        %6861 = vmatpush.bf16.msra.mxu0 %v6840
        %6862 = vmatpush.bf16.msra.mxu0 %v6839
        %6863 = vmatmul.bf16.gmra.mxu0 %v6789
        %v6864 = vpop.f32.mrf.mxu0
        %v6865 = vadd.f32 0.0, %v6864
        %v6866 = vpop.f32.mrf.mxu0
        %6867 = vdwg.mxu0
        %v6868 = vadd.f32 %v6787, %v6865
        %v6869 = vld [vmem:[#allocation3 + $0x6] sm:$0x1]
        %v6870 = vpack.c.bf16 %v6869, %v6869
        %s6871 = scalar_lea.vmem [#allocation4], 4480
        %v6872 = vld [vmem:[%s6871] sm:$0xf]
        %v6873 = vld [vmem:[%s6871 + $0x4] sm:$0xf]
        %v6874 = vld [vmem:[%s6871 + $0x8] sm:$0xf]
        %v6875 = vld [vmem:[%s6871 + $0xc] sm:$0xf]
        %v6876 = vld [vmem:[%s6871 + $0x10] sm:$0xf]
        %v6877 = vld [vmem:[%s6871 + $0x14] sm:$0xf]
        %v6878 = vld [vmem:[%s6871 + $0x18] sm:$0xf]
        %v6879 = vld [vmem:[%s6871 + $0x1c] sm:$0xf]
        %v6880 = vld [vmem:[%s6871 + $0x20] sm:$0xf]
        %v6881 = vld [vmem:[%s6871 + $0x24] sm:$0xf]
        %v6882 = vld [vmem:[%s6871 + $0x28] sm:$0xf]
        %v6883 = vld [vmem:[%s6871 + $0x2c] sm:$0xf]
        %v6884 = vld [vmem:[%s6871 + $0x30] sm:$0xf]
        %v6885 = vld [vmem:[%s6871 + $0x34] sm:$0xf]
        %v6886 = vld [vmem:[%s6871 + $0x38] sm:$0xf]
        %v6887 = vld [vmem:[%s6871 + $0x3c] sm:$0xf]
        %v6904 = vunpack.c.l.b16 %v6872
        %v6905 = vunpack.c.l.b16 %v6873
        %v6906 = vunpack.c.l.b16 %v6874
        %v6907 = vunpack.c.l.b16 %v6875
        %v6908 = vunpack.c.l.b16 %v6876
        %v6909 = vunpack.c.l.b16 %v6877
        %v6910 = vunpack.c.l.b16 %v6878
        %v6911 = vunpack.c.l.b16 %v6879
        %v6912 = vunpack.c.l.b16 %v6880
        %v6913 = vunpack.c.l.b16 %v6881
        %v6914 = vunpack.c.l.b16 %v6882
        %v6915 = vunpack.c.l.b16 %v6883
        %v6916 = vunpack.c.l.b16 %v6884
        %v6917 = vunpack.c.l.b16 %v6885
        %v6918 = vunpack.c.l.b16 %v6886
        %v6919 = vunpack.c.l.b16 %v6887
        %v6920 = vpack.c.b16 %v6905, %v6904
        %v6921 = vpack.c.b16 %v6907, %v6906
        %v6922 = vpack.c.b16 %v6909, %v6908
        %v6923 = vpack.c.b16 %v6911, %v6910
        %v6924 = vpack.c.b16 %v6913, %v6912
        %v6925 = vpack.c.b16 %v6915, %v6914
        %v6926 = vpack.c.b16 %v6917, %v6916
        %v6927 = vpack.c.b16 %v6919, %v6918
        %6936 = vmatpush.bf16.msra.mxu0 %v6927
        %6937 = vmatpush.bf16.msra.mxu0 %v6926
        %6938 = vmatpush.bf16.msra.mxu0 %v6925
        %6939 = vmatpush.bf16.msra.mxu0 %v6924
        %6940 = vmatpush.bf16.msra.mxu0 %v6923
        %6941 = vmatpush.bf16.msra.mxu0 %v6922
        %6942 = vmatpush.bf16.msra.mxu0 %v6921
        %6943 = vmatpush.bf16.msra.mxu0 %v6920
        %6944 = vmatmul.bf16.gmra.mxu0 %v6870
        %v6945 = vpop.f32.mrf.mxu0
        %v6946 = vadd.f32 0.0, %v6945
        %v6947 = vpop.f32.mrf.mxu0
        %6948 = vdwg.mxu0
        %v6949 = vadd.f32 %v6868, %v6946
        %v6950 = vld [vmem:[#allocation3 + $0x7] sm:$0x1]
        %v6951 = vpack.c.bf16 %v6950, %v6950
        %s6952 = scalar_lea.vmem [#allocation4], 4544
        %v6953 = vld [vmem:[%s6952] sm:$0xf]
        %v6954 = vld [vmem:[%s6952 + $0x4] sm:$0xf]
        %v6955 = vld [vmem:[%s6952 + $0x8] sm:$0xf]
        %v6956 = vld [vmem:[%s6952 + $0xc] sm:$0xf]
        %v6957 = vld [vmem:[%s6952 + $0x10] sm:$0xf]
        %v6958 = vld [vmem:[%s6952 + $0x14] sm:$0xf]
        %v6959 = vld [vmem:[%s6952 + $0x18] sm:$0xf]
        %v6960 = vld [vmem:[%s6952 + $0x1c] sm:$0xf]
        %v6961 = vld [vmem:[%s6952 + $0x20] sm:$0xf]
        %v6962 = vld [vmem:[%s6952 + $0x24] sm:$0xf]
        %v6963 = vld [vmem:[%s6952 + $0x28] sm:$0xf]
        %v6964 = vld [vmem:[%s6952 + $0x2c] sm:$0xf]
        %v6965 = vld [vmem:[%s6952 + $0x30] sm:$0xf]
        %v6966 = vld [vmem:[%s6952 + $0x34] sm:$0xf]
        %v6967 = vld [vmem:[%s6952 + $0x38] sm:$0xf]
        %v6968 = vld [vmem:[%s6952 + $0x3c] sm:$0xf]
        %v6985 = vunpack.c.l.b16 %v6953
        %v6986 = vunpack.c.l.b16 %v6954
        %v6987 = vunpack.c.l.b16 %v6955
        %v6988 = vunpack.c.l.b16 %v6956
        %v6989 = vunpack.c.l.b16 %v6957
        %v6990 = vunpack.c.l.b16 %v6958
        %v6991 = vunpack.c.l.b16 %v6959
        %v6992 = vunpack.c.l.b16 %v6960
        %v6993 = vunpack.c.l.b16 %v6961
        %v6994 = vunpack.c.l.b16 %v6962
        %v6995 = vunpack.c.l.b16 %v6963
        %v6996 = vunpack.c.l.b16 %v6964
        %v6997 = vunpack.c.l.b16 %v6965
        %v6998 = vunpack.c.l.b16 %v6966
        %v6999 = vunpack.c.l.b16 %v6967
        %v7000 = vunpack.c.l.b16 %v6968
        %v7001 = vpack.c.b16 %v6986, %v6985
        %v7002 = vpack.c.b16 %v6988, %v6987
        %v7003 = vpack.c.b16 %v6990, %v6989
        %v7004 = vpack.c.b16 %v6992, %v6991
        %v7005 = vpack.c.b16 %v6994, %v6993
        %v7006 = vpack.c.b16 %v6996, %v6995
        %v7007 = vpack.c.b16 %v6998, %v6997
        %v7008 = vpack.c.b16 %v7000, %v6999
        %7017 = vmatpush.bf16.msra.mxu0 %v7008
        %7018 = vmatpush.bf16.msra.mxu0 %v7007
        %7019 = vmatpush.bf16.msra.mxu0 %v7006
        %7020 = vmatpush.bf16.msra.mxu0 %v7005
        %7021 = vmatpush.bf16.msra.mxu0 %v7004
        %7022 = vmatpush.bf16.msra.mxu0 %v7003
        %7023 = vmatpush.bf16.msra.mxu0 %v7002
        %7024 = vmatpush.bf16.msra.mxu0 %v7001
        %7025 = vmatmul.bf16.gmra.mxu0 %v6951
        %v7026 = vpop.f32.mrf.mxu0
        %v7027 = vadd.f32 0.0, %v7026
        %v7028 = vpop.f32.mrf.mxu0
        %7029 = vdwg.mxu0
        %v7030 = vadd.f32 %v6949, %v7027
        %v7031 = vld [vmem:[#allocation3 + $0x8] sm:$0x1]
        %v7032 = vpack.c.bf16 %v7031, %v7031
        %s7033 = scalar_lea.vmem [#allocation4], 4608
        %v7034 = vld [vmem:[%s7033] sm:$0xf]
        %v7035 = vld [vmem:[%s7033 + $0x4] sm:$0xf]
        %v7036 = vld [vmem:[%s7033 + $0x8] sm:$0xf]
        %v7037 = vld [vmem:[%s7033 + $0xc] sm:$0xf]
        %v7038 = vld [vmem:[%s7033 + $0x10] sm:$0xf]
        %v7039 = vld [vmem:[%s7033 + $0x14] sm:$0xf]
        %v7040 = vld [vmem:[%s7033 + $0x18] sm:$0xf]
        %v7041 = vld [vmem:[%s7033 + $0x1c] sm:$0xf]
        %v7042 = vld [vmem:[%s7033 + $0x20] sm:$0xf]
        %v7043 = vld [vmem:[%s7033 + $0x24] sm:$0xf]
        %v7044 = vld [vmem:[%s7033 + $0x28] sm:$0xf]
        %v7045 = vld [vmem:[%s7033 + $0x2c] sm:$0xf]
        %v7046 = vld [vmem:[%s7033 + $0x30] sm:$0xf]
        %v7047 = vld [vmem:[%s7033 + $0x34] sm:$0xf]
        %v7048 = vld [vmem:[%s7033 + $0x38] sm:$0xf]
        %v7049 = vld [vmem:[%s7033 + $0x3c] sm:$0xf]
        %v7066 = vunpack.c.l.b16 %v7034
        %v7067 = vunpack.c.l.b16 %v7035
        %v7068 = vunpack.c.l.b16 %v7036
        %v7069 = vunpack.c.l.b16 %v7037
        %v7070 = vunpack.c.l.b16 %v7038
        %v7071 = vunpack.c.l.b16 %v7039
        %v7072 = vunpack.c.l.b16 %v7040
        %v7073 = vunpack.c.l.b16 %v7041
        %v7074 = vunpack.c.l.b16 %v7042
        %v7075 = vunpack.c.l.b16 %v7043
        %v7076 = vunpack.c.l.b16 %v7044
        %v7077 = vunpack.c.l.b16 %v7045
        %v7078 = vunpack.c.l.b16 %v7046
        %v7079 = vunpack.c.l.b16 %v7047
        %v7080 = vunpack.c.l.b16 %v7048
        %v7081 = vunpack.c.l.b16 %v7049
        %v7082 = vpack.c.b16 %v7067, %v7066
        %v7083 = vpack.c.b16 %v7069, %v7068
        %v7084 = vpack.c.b16 %v7071, %v7070
        %v7085 = vpack.c.b16 %v7073, %v7072
        %v7086 = vpack.c.b16 %v7075, %v7074
        %v7087 = vpack.c.b16 %v7077, %v7076
        %v7088 = vpack.c.b16 %v7079, %v7078
        %v7089 = vpack.c.b16 %v7081, %v7080
        %7098 = vmatpush.bf16.msra.mxu0 %v7089
        %7099 = vmatpush.bf16.msra.mxu0 %v7088
        %7100 = vmatpush.bf16.msra.mxu0 %v7087
        %7101 = vmatpush.bf16.msra.mxu0 %v7086
        %7102 = vmatpush.bf16.msra.mxu0 %v7085
        %7103 = vmatpush.bf16.msra.mxu0 %v7084
        %7104 = vmatpush.bf16.msra.mxu0 %v7083
        %7105 = vmatpush.bf16.msra.mxu0 %v7082
        %7106 = vmatmul.bf16.gmra.mxu0 %v7032
        %v7107 = vpop.f32.mrf.mxu0
        %v7108 = vadd.f32 0.0, %v7107
        %v7109 = vpop.f32.mrf.mxu0
        %7110 = vdwg.mxu0
        %v7111 = vadd.f32 %v7030, %v7108
        %v7112 = vld [vmem:[#allocation6 + $0x8] sm:$0x1]
        %v7113 = vadd.f32 %v7111, %v7112
        %v7114 = vxor.u32 %v7113, 2147483648
        %v7115 = vmul.f32 %v7114, 1.442695
        %v7116 = vpow.pop %v7115
        %v7117 = vadd.f32 %v7116, 1.0
        %v7118 = vrcp.pop %v7117
        %v7119 = vmul.f32 %v7117, %v7118
        %v7120 = vsub.f32 1.0, %v7119
        %v7121 = vmul.f32 %v7118, %v7120
        %v7122 = vadd.f32 %v7118, %v7121
        %vm7123 = vweird.f32 %v7117
        %vm7124 = vweird.f32 %v7118
        %vm7125 = vmor %vm7123, %vm7124
        %v7126 = vsel %vm7125, %v7118, %v7122
        %v7127 = vand.u32 2147483647, %v7117
        %vm7128 = vcmp.eq.f32.partialorder %v7127, 8.507059e+37
        %v7129 = vand.u32 %v7117, 2147483648
        %v7130 = vor.u32 1.1754944e-38, %v7129
        %v7131 = vsel %vm7128, %v7130, %v7126
        %v7132 = vmul.f32 1.0, %v7131
        %v7133 = vmul.f32 %v7113, %v7132
        %7134 = vst [vmem:[#allocation2] sm:$0x1] %v7133
        %7135 = vst [vmem:[%s204] sm:$0xff] 0.0
        %v7136 = vld [vmem:[#allocation2] sm:$0x1]
        %v7137 = vpack.c.bf16 %v7136, %v7136
        %s7138 = scalar_lea.vmem [#allocation4], 4672
        %v7139 = vld [vmem:[%s7138] sm:$0xf]
        %v7140 = vld [vmem:[%s7138 + $0x4] sm:$0xf]
        %v7141 = vld [vmem:[%s7138 + $0x8] sm:$0xf]
        %v7142 = vld [vmem:[%s7138 + $0xc] sm:$0xf]
        %v7143 = vld [vmem:[%s7138 + $0x10] sm:$0xf]
        %v7144 = vld [vmem:[%s7138 + $0x14] sm:$0xf]
        %v7145 = vld [vmem:[%s7138 + $0x18] sm:$0xf]
        %v7146 = vld [vmem:[%s7138 + $0x1c] sm:$0xf]
        %v7147 = vld [vmem:[%s7138 + $0x20] sm:$0xf]
        %v7148 = vld [vmem:[%s7138 + $0x24] sm:$0xf]
        %v7149 = vld [vmem:[%s7138 + $0x28] sm:$0xf]
        %v7150 = vld [vmem:[%s7138 + $0x2c] sm:$0xf]
        %v7151 = vld [vmem:[%s7138 + $0x30] sm:$0xf]
        %v7152 = vld [vmem:[%s7138 + $0x34] sm:$0xf]
        %v7153 = vld [vmem:[%s7138 + $0x38] sm:$0xf]
        %v7154 = vld [vmem:[%s7138 + $0x3c] sm:$0xf]
        %v7155 = vld [vmem:[#allocation6 + $0x9] sm:$0x1]
        %v7172 = vunpack.c.l.b16 %v7139
        %v7173 = vunpack.c.l.b16 %v7140
        %v7174 = vunpack.c.l.b16 %v7141
        %v7175 = vunpack.c.l.b16 %v7142
        %v7176 = vunpack.c.l.b16 %v7143
        %v7177 = vunpack.c.l.b16 %v7144
        %v7178 = vunpack.c.l.b16 %v7145
        %v7179 = vunpack.c.l.b16 %v7146
        %v7180 = vunpack.c.l.b16 %v7147
        %v7181 = vunpack.c.l.b16 %v7148
        %v7182 = vunpack.c.l.b16 %v7149
        %v7183 = vunpack.c.l.b16 %v7150
        %v7184 = vunpack.c.l.b16 %v7151
        %v7185 = vunpack.c.l.b16 %v7152
        %v7186 = vunpack.c.l.b16 %v7153
        %v7187 = vunpack.c.l.b16 %v7154
        %v7188 = vpack.c.b16 %v7173, %v7172
        %v7189 = vpack.c.b16 %v7175, %v7174
        %v7190 = vpack.c.b16 %v7177, %v7176
        %v7191 = vpack.c.b16 %v7179, %v7178
        %v7192 = vpack.c.b16 %v7181, %v7180
        %v7193 = vpack.c.b16 %v7183, %v7182
        %v7194 = vpack.c.b16 %v7185, %v7184
        %v7195 = vpack.c.b16 %v7187, %v7186
        %7204 = vmatpush.bf16.msra.mxu0 %v7195
        %7205 = vmatpush.bf16.msra.mxu0 %v7194
        %7206 = vmatpush.bf16.msra.mxu0 %v7193
        %7207 = vmatpush.bf16.msra.mxu0 %v7192
        %7208 = vmatpush.bf16.msra.mxu0 %v7191
        %7209 = vmatpush.bf16.msra.mxu0 %v7190
        %7210 = vmatpush.bf16.msra.mxu0 %v7189
        %7211 = vmatpush.bf16.msra.mxu0 %v7188
        %7212 = vmatmul.bf16.gmra.mxu0 %v7137
        %v7213 = vpop.f32.mrf.mxu0
        %v7214 = vadd.f32 %v7155, %v7213
        %v7215 = vpop.f32.mrf.mxu0
        %7216 = vdwg.mxu0
        %v7217 = vxor.u32 %v7214, 2147483648
        %v7218 = vmul.f32 %v7217, 1.442695
        %v7219 = vpow.pop %v7218
        %v7220 = vadd.f32 %v7219, 1.0
        %v7221 = vrcp.pop %v7220
        %v7222 = vmul.f32 %v7220, %v7221
        %v7223 = vsub.f32 1.0, %v7222
        %v7224 = vmul.f32 %v7221, %v7223
        %v7225 = vadd.f32 %v7221, %v7224
        %vm7226 = vweird.f32 %v7220
        %vm7227 = vweird.f32 %v7221
        %vm7228 = vmor %vm7226, %vm7227
        %v7229 = vsel %vm7228, %v7221, %v7225
        %v7230 = vand.u32 2147483647, %v7220
        %vm7231 = vcmp.eq.f32.partialorder %v7230, 8.507059e+37
        %v7232 = vand.u32 %v7220, 2147483648
        %v7233 = vor.u32 1.1754944e-38, %v7232
        %v7234 = vsel %vm7231, %v7233, %v7229
        %v7235 = vmul.f32 1.0, %v7234
        %v7236 = vmul.f32 %v7214, %v7235
        %7237 = vst [vmem:[%s204] sm:$0x1] %v7236
        %p7238 = scmp.lt.s32.totalorder %s16, 1
        %s7239 = scalar_select %p7238, %s16, 1
        %s7240 = smul.addr %s7239, 8
        %s7241 = scalar_lea.vmem %s3, %s7240
        // Predicated region
        $region41: #{cam_wrapper_forward.1} parent=31 // pred_check
          %p7242 = pneg %p102
        $region42: #{cam_wrapper_forward.1} parent=31 // pred_check_branch
          %7244 = sbr.rel (%p7242) target = $region44
        $region43: #{cam_wrapper_forward.1} parent=31 // pred_region
          _
        $region44: #{cam_wrapper_forward.1} parent=31 // pred_fallthru
          _
      $region32: #{cam_wrapper_forward.1} parent=5 // pred_fallthru
        _
      %p7245 = scmp.le.s32.totalorder 2, %s11
      // Predicated region
      $region45: #{cam_wrapper_forward.1} parent=5 // pred_check
        %p7246 = pneg %p7245
      $region46: #{cam_wrapper_forward.1} parent=5 // pred_check_branch
        %7248 = sbr.rel (%p7246) target = $region48
      $region47: #{cam_wrapper_forward.1} parent=5 // pred_region
        %s7249 = ssub.s32 %s11, 2
        // Predicated region
        $region49: #{cam_wrapper_forward.1} parent=47 // pred_check
          %p7250 = pneg %p108
        $region50: #{cam_wrapper_forward.1} parent=47 // pred_check_branch
          %7252 = sbr.rel (%p7250) target = $region52
        $region51: #{cam_wrapper_forward.1} parent=47 // pred_region
          %p7253 = scmp.lt.s32.totalorder %s17, 1
          %s7254 = scalar_select %p7253, %s17, 1
          %s7255 = smul.addr %s7254, 8
          %s7256 = scalar_lea.vmem %s3, %s7255
        $region52: #{cam_wrapper_forward.1} parent=47 // pred_fallthru
          _
      $region48: #{cam_wrapper_forward.1} parent=5 // pred_fallthru
        _
    $region6: #{cam_wrapper_forward.1} parent=1 // loop_footer
      %s15 = sadd.s32 1, %s11
    $region7: #{cam_wrapper_forward.1} parent=1 // loop_footer_branch
      %10 = sbr.rel target = $region3
    $region8: #{cam_wrapper_forward.1} parent=1 // loop_exit
      _
    %7257 = vsyncpa [#allocation5], 1
    %s7258 = scalar_lea.sflag [#allocation5], 1
    %7259 = vsyncpa %s7258, 1
    %7260 = vsyncpa [#allocation7], 1

</llo_original>
